<compile_context>
chip_gen: v7x
topology: tpu7x:2x2x1
jax: 0.10.0
libtpu: 0.0.40
codegen_flags: <defaults>
</compile_context>

<pallas_src>
import jax
import jax.numpy as jnp
from jax.experimental import pallas as pl
from jax.experimental.pallas import tpu as pltpu

N_GLOBAL = 128
N_HIDDEN = 2000          # n_hidden_regularizer (PyTorch module)
N_HIDDEN_PAD = 2048      # padded to a multiple of 128 / MXU width
TILE_N = 1024            # streamed, contiguous column tile of w2 / b2 / w3
NSPLIT = 2               # leading "parallel" axis (2 TensorCores on v7x)
N_BLOCKS = N_HIDDEN_PAD // TILE_N
TILES_PER_SPLIT = N_BLOCKS // NSPLIT


def _leaky_relu(x, slope=0.2):
    return jnp.where(x > 0, x, slope * x)


def regularizer_kernel(z_ref, w1_ref, b1_ref, w2_ref, b2_ref, w3_ref,
                       o_ref, h1_ref, acc_ref):
    j = pl.program_id(1)

    @pl.when(j == 0)
    def _():
        # fc1 + leaky_relu(0.2): computed once per core, kept resident as bf16.
        h1 = jnp.dot(z_ref[...], w1_ref[...],
                     preferred_element_type=jnp.float32) + b1_ref[...]
        h1_ref[...] = _leaky_relu(h1).astype(jnp.bfloat16)
        acc_ref[...] = jnp.zeros_like(acc_ref)

    # fc2 on one streamed (contiguous) column tile of w2 + leaky_relu(0.2).
    h2 = jnp.dot(h1_ref[...], w2_ref[...],
                 preferred_element_type=jnp.float32) + b2_ref[...]
    h2 = _leaky_relu(h2)

    # fc3 partial products: lane-dense VPU accumulation only in the hot loop.
    acc_ref[...] += h2 * w3_ref[...].astype(jnp.float32)

    @pl.when(j == pl.num_programs(1) - 1)
    def _():
        # Single cross-lane reduce + narrow store, once per core.
        o_ref[...] = jnp.sum(acc_ref[...], axis=-1, keepdims=True)


@jax.jit
def regularizer_forward(z, w1p, b1p, w2p, b2p, w3p, b3p):
    """z: (B, N_GLOBAL) float; params as produced by pack_params (padded, bf16)."""
    B = z.shape[0]
    B_pad = ((B + 15) // 16) * 16          # bf16 packs 2 rows / sublane
    zb = z.astype(jnp.bfloat16)
    if B_pad != B:
        zb = jnp.pad(zb, ((0, B_pad - B), (0, 0)))

    grid_spec = pltpu.PrefetchScalarGridSpec(
        num_scalar_prefetch=0,
        grid=(NSPLIT, TILES_PER_SPLIT),
        in_specs=[
            # resident operands
            pl.BlockSpec((B_pad, N_GLOBAL), lambda c, j: (0, 0)),          # z
            pl.BlockSpec((N_GLOBAL, N_HIDDEN_PAD), lambda c, j: (0, 0)),   # w1
            pl.BlockSpec((1, N_HIDDEN_PAD), lambda c, j: (0, 0)),          # b1
            # streamed operands (contiguous pre-tiled w2 blocks)
            pl.BlockSpec((None, N_HIDDEN_PAD, TILE_N),
                         lambda c, j: (c * TILES_PER_SPLIT + j, 0, 0)),    # w2
            pl.BlockSpec((1, TILE_N),
                         lambda c, j: (0, c * TILES_PER_SPLIT + j)),       # b2
            pl.BlockSpec((1, TILE_N),
                         lambda c, j: (0, c * TILES_PER_SPLIT + j)),       # w3
        ],
        out_specs=pl.BlockSpec((None, B_pad, 1), lambda c, j: (c, 0, 0)),
        scratch_shapes=[
            pltpu.VMEM((B_pad, N_HIDDEN_PAD), jnp.bfloat16),   # resident h1
            pltpu.VMEM((B_pad, TILE_N), jnp.float32),          # lane-dense fc3 acc
        ],
    )

    partials = pl.pallas_call(
        regularizer_kernel,
        out_shape=jax.ShapeDtypeStruct((NSPLIT, B_pad, 1), jnp.float32),
        grid_spec=grid_spec,
        compiler_params=pltpu.CompilerParams(
            dimension_semantics=("parallel", "arbitrary"),
            vmem_limit_bytes=32 << 20,
        ),
    )(zb, w1p, b1p, w2p, b2p, w3p)

    out = jnp.sum(partials, axis=0) + b3p     # (B_pad, 1)
    return out[:B]


def init_params(key):
    """Unpadded f32 params, math-equivalent layout: W (in, out), b (out,)."""
    k1, k2, k3 = jax.random.split(key, 3)
    std = 0.02
    w1 = std * jax.random.normal(k1, (N_GLOBAL, N_HIDDEN), jnp.float32)
    b1 = jnp.zeros((N_HIDDEN,), jnp.float32)
    w2 = std * jax.random.normal(k2, (N_HIDDEN, N_HIDDEN), jnp.float32)
    b2 = jnp.zeros((N_HIDDEN,), jnp.float32)
    w3 = std * jax.random.normal(k3, (N_HIDDEN, 1), jnp.float32)
    b3 = jnp.zeros((1,), jnp.float32)
    return w1, b1, w2, b2, w3, b3


def pack_params(w1, b1, w2, b2, w3, b3):
    """Zero-pad hidden 2000 -> 2048, cast weights to bf16, pre-tile w2 so each
    streamed (N_HIDDEN_PAD, TILE_N) block is contiguous in HBM."""
    pad = N_HIDDEN_PAD - N_HIDDEN
    w1p = jnp.pad(w1, ((0, 0), (0, pad))).astype(jnp.bfloat16)
    b1p = jnp.pad(b1, (0, pad)).reshape(1, N_HIDDEN_PAD).astype(jnp.float32)

    w2_full = jnp.pad(w2, ((0, pad), (0, pad))).astype(jnp.bfloat16)
    # (2048, 2048) -> (n_blocks, 2048, TILE_N), block-contiguous
    w2p = w2_full.reshape(N_HIDDEN_PAD, N_BLOCKS, TILE_N).transpose(1, 0, 2)

    b2p = jnp.pad(b2, (0, pad)).reshape(1, N_HIDDEN_PAD).astype(jnp.float32)
    w3p = jnp.pad(w3.reshape(1, N_HIDDEN), ((0, 0), (0, pad))).astype(jnp.bfloat16)
    b3p = b3.reshape(1, 1).astype(jnp.float32)
    return w1p, b1p, w2p, b2p, w3p, b3p


if __name__ == "__main__":
    key = jax.random.PRNGKey(0)
    k_z, k_p = jax.random.split(key)

    B = 8  # small example batch; wrapper supports arbitrary B (padded to 16)
    z = jax.random.normal(k_z, (B, N_GLOBAL), jnp.float32)
    params = init_params(k_p)
    packed = pack_params(*params)

    out = regularizer_forward(z, *packed)
    out = jax.block_until_ready(out)

    # Pure-JAX f32 reference (kernel uses bf16 weights -> loose tolerance).
    w1, b1, w2, b2, w3, b3 = params
    h1 = _leaky_relu(z @ w1 + b1)
    h2 = _leaky_relu(h1 @ w2 + b2)
    ref = h2 @ w3 + b3
    assert out.shape == (B, 1)
    max_err = float(jnp.max(jnp.abs(out - ref)))
    assert max_err < 5e-2, f"max abs error {max_err}"

    print("KERNEL_OK")
</pallas_src>

<mosaic_0001>
module attributes {stable_mosaic.version = 11 : i64} {
  func.func @regularizer_kernel(%arg0: i32, %arg1: i32, %arg2: memref<16x128xbf16, #tpu.memory_space<vmem>>, %arg3: memref<128x2048xbf16, #tpu.memory_space<vmem>>, %arg4: memref<1x2048xf32, #tpu.memory_space<vmem>>, %arg5: memref<1x2048x1024xbf16, #tpu.memory_space<vmem>>, %arg6: memref<1x1024xf32, #tpu.memory_space<vmem>>, %arg7: memref<1x1024xbf16, #tpu.memory_space<vmem>>, %arg8: memref<1x16x1xf32, #tpu.memory_space<vmem>>, %arg9: memref<16x2048xbf16, #tpu.memory_space<vmem>>, %arg10: memref<16x1024xf32, #tpu.memory_space<vmem>>) attributes {dimension_semantics = [#tpu.dimension_semantics<parallel>, #tpu.dimension_semantics<arbitrary>], iteration_bounds = array<i64: 2, 1>, scalar_prefetch = 0 : i64, scratch_operands = 2 : i64, tpu.core_type = #tpu.core_type<tc>, window_params = [{pipeline_mode = #tpu.pipeline_mode<synchronous>, transform_indices = @transform_0, window_bounds = array<i64: 16, 128>}, {pipeline_mode = #tpu.pipeline_mode<synchronous>, transform_indices = @transform_1, window_bounds = array<i64: 128, 2048>}, {pipeline_mode = #tpu.pipeline_mode<synchronous>, transform_indices = @transform_2, window_bounds = array<i64: 1, 2048>}, {transform_indices = @transform_3, window_bounds = array<i64: 1, 2048, 1024>}, {transform_indices = @transform_4, window_bounds = array<i64: 1, 1024>}, {transform_indices = @transform_5, window_bounds = array<i64: 1, 1024>}, {transform_indices = @transform_6, window_bounds = array<i64: 1, 16, 1>}]} {
    %c0_i32 = arith.constant 0 : i32
    %0 = arith.cmpi eq, %arg1, %c0_i32 : i32
    %1 = arith.extui %0 : i1 to i32
    %c0_i32_0 = arith.constant 0 : i32
    %2 = arith.cmpi ne, %1, %c0_i32_0 : i32
    scf.if %2 {
      %c0_17 = arith.constant 0 : index
      %c0_18 = arith.constant 0 : index
      %25 = vector.load %arg2[%c0_17, %c0_18] : memref<16x128xbf16, #tpu.memory_space<vmem>>, vector<16x128xbf16>
      %c0_19 = arith.constant 0 : index
      %c0_20 = arith.constant 0 : index
      %26 = vector.load %arg3[%c0_19, %c0_20] : memref<128x2048xbf16, #tpu.memory_space<vmem>>, vector<128x2048xbf16>
      %cst_21 = arith.constant dense<0.000000e+00> : vector<16x2048xf32>
      %27 = tpu.matmul %25, %26, %cst_21 {dimension_numbers = #tpu.dot_dimension_numbers<[1], [0], [0], [1], [0, 0, 1, 1], [], []>} : vector<16x128xbf16>, vector<128x2048xbf16>, vector<16x2048xf32> -> vector<16x2048xf32>
      %c0_22 = arith.constant 0 : index
      %c0_23 = arith.constant 0 : index
      %28 = vector.load %arg4[%c0_22, %c0_23] : memref<1x2048xf32, #tpu.memory_space<vmem>>, vector<1x2048xf32>
      %29 = vector.broadcast %28 : vector<1x2048xf32> to vector<16x2048xf32>
      %30 = arith.addf %27, %29 : vector<16x2048xf32>
      %cst_24 = arith.constant 0.000000e+00 : f32
      %31 = vector.broadcast %cst_24 : f32 to vector<16x2048xf32>
      %32 = arith.cmpf ogt, %30, %31 : vector<16x2048xf32>
      %cst_25 = arith.constant 2.000000e-01 : f32
      %33 = vector.broadcast %cst_25 : f32 to vector<16x2048xf32>
      %34 = arith.mulf %33, %30 : vector<16x2048xf32>
      %35 = arith.select %32, %30, %34 : vector<16x2048xi1>, vector<16x2048xf32>
      %36 = arith.truncf %35 : vector<16x2048xf32> to vector<16x2048xbf16>
      %c0_26 = arith.constant 0 : index
      %c0_27 = arith.constant 0 : index
      %37 = vector.load %arg9[%c0_26, %c0_27] : memref<16x2048xbf16, #tpu.memory_space<vmem>>, vector<16x2048xbf16>
      tpu.vector_store %arg9[%c0_26, %c0_27], %36 {strides = array<i32>} : memref<16x2048xbf16, #tpu.memory_space<vmem>>, vector<16x2048xbf16>,
      %cst_28 = arith.constant 0.000000e+00 : f32
      %38 = vector.broadcast %cst_28 : f32 to vector<16x1024xf32>
      %c0_29 = arith.constant 0 : index
      %c0_30 = arith.constant 0 : index
      %39 = vector.load %arg10[%c0_29, %c0_30] : memref<16x1024xf32, #tpu.memory_space<vmem>>, vector<16x1024xf32>
      tpu.vector_store %arg10[%c0_29, %c0_30], %38 {strides = array<i32>} : memref<16x1024xf32, #tpu.memory_space<vmem>>, vector<16x1024xf32>,
    } else {
    }
    %c0 = arith.constant 0 : index
    %c0_1 = arith.constant 0 : index
    %3 = vector.load %arg9[%c0, %c0_1] : memref<16x2048xbf16, #tpu.memory_space<vmem>>, vector<16x2048xbf16>
    %c0_2 = arith.constant 0 : index
    %c0_3 = arith.constant 0 : index
    %c0_4 = arith.constant 0 : index
    %4 = vector.load %arg5[%c0_2, %c0_3, %c0_4] : memref<1x2048x1024xbf16, #tpu.memory_space<vmem>>, vector<1x2048x1024xbf16>
    %5 = vector.shape_cast %4 : vector<1x2048x1024xbf16> to vector<2048x1024xbf16>
    %cst = arith.constant dense<0.000000e+00> : vector<16x1024xf32>
    %6 = tpu.matmul %3, %5, %cst {dimension_numbers = #tpu.dot_dimension_numbers<[1], [0], [0], [1], [0, 0, 1, 1], [], []>} : vector<16x2048xbf16>, vector<2048x1024xbf16>, vector<16x1024xf32> -> vector<16x1024xf32>
    %c0_5 = arith.constant 0 : index
    %c0_6 = arith.constant 0 : index
    %7 = vector.load %arg6[%c0_5, %c0_6] : memref<1x1024xf32, #tpu.memory_space<vmem>>, vector<1x1024xf32>
    %8 = vector.broadcast %7 : vector<1x1024xf32> to vector<16x1024xf32>
    %9 = arith.addf %6, %8 : vector<16x1024xf32>
    %cst_7 = arith.constant 0.000000e+00 : f32
    %10 = vector.broadcast %cst_7 : f32 to vector<16x1024xf32>
    %11 = arith.cmpf ogt, %9, %10 : vector<16x1024xf32>
    %cst_8 = arith.constant 2.000000e-01 : f32
    %12 = vector.broadcast %cst_8 : f32 to vector<16x1024xf32>
    %13 = arith.mulf %12, %9 : vector<16x1024xf32>
    %14 = arith.select %11, %9, %13 : vector<16x1024xi1>, vector<16x1024xf32>
    %c0_9 = arith.constant 0 : index
    %c0_10 = arith.constant 0 : index
    %15 = vector.load %arg10[%c0_9, %c0_10] : memref<16x1024xf32, #tpu.memory_space<vmem>>, vector<16x1024xf32>
    %c0_11 = arith.constant 0 : index
    %c0_12 = arith.constant 0 : index
    %16 = vector.load %arg7[%c0_11, %c0_12] : memref<1x1024xbf16, #tpu.memory_space<vmem>>, vector<1x1024xbf16>
    %17 = arith.extf %16 : vector<1x1024xbf16> to vector<1x1024xf32>
    %18 = vector.broadcast %17 : vector<1x1024xf32> to vector<16x1024xf32>
    %19 = arith.mulf %14, %18 : vector<16x1024xf32>
    %20 = arith.addf %15, %19 : vector<16x1024xf32>
    %c0_13 = arith.constant 0 : index
    %c0_14 = arith.constant 0 : index
    %21 = vector.load %arg10[%c0_13, %c0_14] : memref<16x1024xf32, #tpu.memory_space<vmem>>, vector<16x1024xf32>
    tpu.vector_store %arg10[%c0_13, %c0_14], %20 {strides = array<i32>} : memref<16x1024xf32, #tpu.memory_space<vmem>>, vector<16x1024xf32>,
    %c0_i32_15 = arith.constant 0 : i32
    %22 = arith.cmpi eq, %arg1, %c0_i32_15 : i32
    %23 = arith.extui %22 : i1 to i32
    %c0_i32_16 = arith.constant 0 : i32
    %24 = arith.cmpi ne, %23, %c0_i32_16 : i32
    scf.if %24 {
      %c0_17 = arith.constant 0 : index
      %c0_18 = arith.constant 0 : index
      %25 = vector.load %arg10[%c0_17, %c0_18] : memref<16x1024xf32, #tpu.memory_space<vmem>>, vector<16x1024xf32>
      %cst_19 = arith.constant dense<0.000000e+00> : vector<16xf32>
      %26 = vector.multi_reduction <add>, %25, %cst_19 [1] : vector<16x1024xf32> to vector<16xf32>
      %27 = vector.shape_cast %26 : vector<16xf32> to vector<16x1xf32>
      %c0_20 = arith.constant 0 : index
      %c0_21 = arith.constant 0 : index
      %c0_22 = arith.constant 0 : index
      %28 = vector.load %arg8[%c0_20, %c0_21, %c0_22] : memref<1x16x1xf32, #tpu.memory_space<vmem>>, vector<1x16x1xf32>
      %29 = vector.shape_cast %28 : vector<1x16x1xf32> to vector<16x1xf32>
      %30 = vector.shape_cast %27 : vector<16x1xf32> to vector<1x16x1xf32>
      tpu.vector_store %arg8[%c0_20, %c0_21, %c0_22], %30 {strides = array<i32>} : memref<1x16x1xf32, #tpu.memory_space<vmem>>, vector<1x16x1xf32>,
    } else {
    }
    return
  }
  func.func @transform_0(%arg0: i32, %arg1: i32) -> (i32, i32) {
    %c0_i32 = arith.constant 0 : i32
    %c0_i32_0 = arith.constant 0 : i32
    %c0_i32_1 = arith.constant 0 : i32
    return %c0_i32, %c0_i32_0 : i32, i32
  }
  func.func @transform_1(%arg0: i32, %arg1: i32) -> (i32, i32) {
    %c0_i32 = arith.constant 0 : i32
    %c0_i32_0 = arith.constant 0 : i32
    %c0_i32_1 = arith.constant 0 : i32
    return %c0_i32, %c0_i32_0 : i32, i32
  }
  func.func @transform_2(%arg0: i32, %arg1: i32) -> (i32, i32) {
    %c0_i32 = arith.constant 0 : i32
    %c0_i32_0 = arith.constant 0 : i32
    %c0_i32_1 = arith.constant 0 : i32
    return %c0_i32, %c0_i32_0 : i32, i32
  }
  func.func @transform_3(%arg0: i32, %arg1: i32) -> (i32, i32, i32) {
    %c1_i32 = arith.constant 1 : i32
    %0 = arith.muli %arg0, %c1_i32 : i32
    %1 = arith.addi %0, %arg1 : i32
    %c0_i32 = arith.constant 0 : i32
    %c0_i32_0 = arith.constant 0 : i32
    %c0_i32_1 = arith.constant 0 : i32
    return %1, %c0_i32, %c0_i32_0 : i32, i32, i32
  }
  func.func @transform_4(%arg0: i32, %arg1: i32) -> (i32, i32) {
    %c1_i32 = arith.constant 1 : i32
    %0 = arith.muli %arg0, %c1_i32 : i32
    %1 = arith.addi %0, %arg1 : i32
    %c0_i32 = arith.constant 0 : i32
    %c0_i32_0 = arith.constant 0 : i32
    return %c0_i32, %1 : i32, i32
  }
  func.func @transform_5(%arg0: i32, %arg1: i32) -> (i32, i32) {
    %c1_i32 = arith.constant 1 : i32
    %0 = arith.muli %arg0, %c1_i32 : i32
    %1 = arith.addi %0, %arg1 : i32
    %c0_i32 = arith.constant 0 : i32
    %c0_i32_0 = arith.constant 0 : i32
    return %c0_i32, %1 : i32, i32
  }
  func.func @transform_6(%arg0: i32, %arg1: i32) -> (i32, i32, i32) {
    %c0_i32 = arith.constant 0 : i32
    %c0_i32_0 = arith.constant 0 : i32
    %c0_i32_1 = arith.constant 0 : i32
    return %arg0, %c0_i32, %c0_i32_0 : i32, i32, i32
  }
}

</mosaic_0001>

<llo_original>
// kernel: regularizer_forward.1
$region0: #{regularizer_forward.1}
  #allocation0 [shape = 'u32[]', space=smem, size = 0x4, offset = 0x4, fixed_abs, tag = 'smem constant byte address 0x4 - core index']
  #allocation1 [shape = 'u32[144,128]{1,0:T(1,128)}', space=vmem, size = 0x12000, scoped, tag = 'internal scratch']
  #allocation2 [shape = 'bf16[16,2048]{1,0:T(16,128)(2,1)}', space=vmem, size = 0x10000, scoped, tag = 'scratch operand']
  #allocation3 [shape = 'f32[16,1024]{1,0:T(8,128)}', space=vmem, size = 0x10000, scoped, tag = 'scratch operand']
  %s0 = inlined_call_operand.vmem [shape: bf16[16,128], index: 0, kind: input, shape index: {}]
  %s1 = inlined_call_operand.hbm [shape: bf16[128,2048], index: 1, kind: input, shape index: {}]
  %s2 = inlined_call_operand.hbm [shape: f32[1,2048], index: 2, kind: input, shape index: {}]
  %s3 = inlined_call_operand.hbm [shape: bf16[2,2048,1024], index: 3, kind: input, shape index: {}]
  %s4 = inlined_call_operand.hbm [shape: f32[1,2048], index: 4, kind: input, shape index: {}]
  %s5 = inlined_call_operand.hbm [shape: bf16[1,2048], index: 5, kind: input, shape index: {}]
  %s6 = inlined_call_operand.vmem [shape: f32[2,16,1], index: 6, kind: output, shape index: {}]
  %s7 = sld [smem:[#allocation0]]
  $region85: #{regularizer_forward.1} parent=0
    _
  %s9 = ssub.s32 1, %s7
  %s10 = scalar_select 0, %s9, %s7
  $region1: #{regularizer_forward.1} parent=0
    #allocation4 [shape = 'u8[524288]{0}', space=vmem, size = 0x80000, scoped, tag = 'input window, operand 1, single buffered']
    #allocation5 [shape = 's32[2]{0}', space=sflag, size = 0x8, scoped, tag = 'scoped memory for regularizer_forward.1']
    #allocation6 [shape = 'u8[8192]{0}', space=vmem, size = 0x2000, scoped, tag = 'input window, operand 2, single buffered']
    #allocation7 [shape = 's32[1]{0}', space=sflag, size = 0x4, scoped, tag = 'scoped memory for regularizer_forward.1']
    #allocation8 [shape = 'u8[8388608]{0}', space=vmem, size = 0x800000, scoped, tag = 'input window, operand 3']
    #allocation9 [shape = 'u8[8192]{0}', space=vmem, size = 0x2000, scoped, tag = 'input window, operand 4']
    #allocation10 [shape = 'u8[8192]{0}', space=vmem, size = 0x2000, scoped, tag = 'input window, operand 5']
    %11 = vsyncpa [#allocation5], 0
    %12 = vsyncpa [#allocation7], 0
    loop: start=0, step=1, limit=4
    $region2: #{regularizer_forward.1} parent=1 // loop_pre_header
      _
    $region3: #{regularizer_forward.1} parent=1 // loop_header
      %s14 = sphi 0, %s18
      %p15 = scmp.ge.s32.totalorder %s14, 4
      %s21 = sphi 0, %s33
      %s22 = sphi 0, %s29
      %s23 = sphi 0, %s21
      %s24 = sphi 0, %s22
      %s25 = sphi 0, %s23
      %s26 = sphi 0, %s24
      %s34 = sphi 0, %s34
      %s36 = sphi 0, %s34
      %s37 = sphi 0, %s36
      %s51 = sphi 0, %s37
      %s55 = sphi 0, %s55
      %s57 = sphi 0, %s55
      %s58 = sphi 0, %s57
      %s72 = sphi 0, %s58
      %s76 = sphi 0, %s76
      %s78 = sphi 0, %s76
      %s79 = sphi 0, %s78
      %s93 = sphi 0, %s79
      %s101 = sphi 0, %s103
      %s104 = sphi 0, %s101
      %s105 = sphi 0, %s104
      %s121 = sphi 0, %s105
      %s129 = sphi 0, %s131
      %s132 = sphi 0, %s129
      %s133 = sphi 0, %s132
      %s149 = sphi 0, %s133
      %s157 = sphi 0, %s159
      %s160 = sphi 0, %s157
      %s161 = sphi 0, %s160
      %s177 = sphi 0, %s161
      %s183 = sphi 0, %s185
      %s186 = sphi 0, %s183
      %s187 = sphi 0, %s186
      %s203 = sphi 0, %s187
    $region4: #{regularizer_forward.1} parent=1 // loop_header_branch
      %17 = sbr.rel (%p15) target = $region8
    $region5: #{regularizer_forward.1} parent=1 // loop_body
      %s19 = ssub.s32 %s14, 1
      %s20 = ssub.s32 %s14, 2
      %s27 = sadd.s32 1, %s22
      %p28 = scmp.ge.s32.totalorder %s27, 1
      %s29 = scalar_select %p28, 0, %s27
      %s30 = sadd.s32 1, %s21
      %s31 = scalar_select %p28, %s30, %s21
      %p32 = scmp.ge.s32.totalorder %s31, 2
      %s33 = scalar_select %p32, 0, %s31
      %s35 = sadd.s32 %s34, 1
      %p38 = scmp.eq.s32.totalorder %s14, 1
      %p39 = scmp.ne.s32.totalorder %s34, %s36
      %p40 = scmp.eq.s32.totalorder %s14, 0
      %p41 = por %p39, %p40
      %p42 = scmp.ne.s32.totalorder %s34, %s36
      %p43 = scmp.eq.s32.totalorder %s19, 1
      %p44 = por %p42, %p43
      %p45 = scmp.ne.s32.totalorder %s36, %s37
      %p46 = scmp.eq.s32.totalorder %s19, 0
      %p47 = por %p45, %p46
      %p48 = scmp.ne.s32.totalorder %s36, %s37
      %p49 = scmp.eq.s32.totalorder %s20, 1
      %p50 = por %p48, %p49
      %p52 = scmp.ne.s32.totalorder %s37, %s51
      %p53 = scmp.eq.s32.totalorder %s20, 0
      %p54 = por %p52, %p53
      %s56 = sadd.s32 %s55, 1
      %p59 = scmp.eq.s32.totalorder %s14, 1
      %p60 = scmp.ne.s32.totalorder %s55, %s57
      %p61 = scmp.eq.s32.totalorder %s14, 0
      %p62 = por %p60, %p61
      %p63 = scmp.ne.s32.totalorder %s55, %s57
      %p64 = scmp.eq.s32.totalorder %s19, 1
      %p65 = por %p63, %p64
      %p66 = scmp.ne.s32.totalorder %s57, %s58
      %p67 = scmp.eq.s32.totalorder %s19, 0
      %p68 = por %p66, %p67
      %p69 = scmp.ne.s32.totalorder %s57, %s58
      %p70 = scmp.eq.s32.totalorder %s20, 1
      %p71 = por %p69, %p70
      %p73 = scmp.ne.s32.totalorder %s58, %s72
      %p74 = scmp.eq.s32.totalorder %s20, 0
      %p75 = por %p73, %p74
      %s77 = sadd.s32 %s76, 1
      %p80 = scmp.eq.s32.totalorder %s14, 1
      %p81 = scmp.ne.s32.totalorder %s76, %s78
      %p82 = scmp.eq.s32.totalorder %s14, 0
      %p83 = por %p81, %p82
      %p84 = scmp.ne.s32.totalorder %s76, %s78
      %p85 = scmp.eq.s32.totalorder %s19, 1
      %p86 = por %p84, %p85
      %p87 = scmp.ne.s32.totalorder %s78, %s79
      %p88 = scmp.eq.s32.totalorder %s19, 0
      %p89 = por %p87, %p88
      %p90 = scmp.ne.s32.totalorder %s78, %s79
      %p91 = scmp.eq.s32.totalorder %s20, 1
      %p92 = por %p90, %p91
      %p94 = scmp.ne.s32.totalorder %s79, %s93
      %p95 = scmp.eq.s32.totalorder %s20, 0
      %p96 = por %p94, %p95
      %s97 = sadd.s32 %s21, %s22
      %s98 = sadd.s32 %s33, %s29
      %s99 = ssub.s32 %s97, %s98
      %p100 = scmp.eq.s32.totalorder %s99, 0
      %s102 = sadd.s32 %s101, 1
      %s103 = scalar_select %p100, %s101, %s102
      %p106 = pneg %p100
      %p107 = scmp.eq.s32.totalorder %s14, 1
      %p108 = por %p106, %p107
      %p109 = scmp.ne.s32.totalorder %s101, %s104
      %p110 = scmp.eq.s32.totalorder %s14, 0
      %p111 = por %p109, %p110
      %p112 = scmp.ne.s32.totalorder %s101, %s104
      %p113 = scmp.eq.s32.totalorder %s19, 1
      %p114 = por %p112, %p113
      %p115 = scmp.ne.s32.totalorder %s104, %s105
      %p116 = scmp.eq.s32.totalorder %s19, 0
      %p117 = por %p115, %p116
      %p118 = scmp.ne.s32.totalorder %s104, %s105
      %p119 = scmp.eq.s32.totalorder %s20, 1
      %p120 = por %p118, %p119
      %p122 = scmp.ne.s32.totalorder %s105, %s121
      %p123 = scmp.eq.s32.totalorder %s20, 0
      %p124 = por %p122, %p123
      %s125 = sadd.s32 %s21, %s22
      %s126 = sadd.s32 %s33, %s29
      %s127 = ssub.s32 %s125, %s126
      %p128 = scmp.eq.s32.totalorder %s127, 0
      %s130 = sadd.s32 %s129, 1
      %s131 = scalar_select %p128, %s129, %s130
      %p134 = pneg %p128
      %p135 = scmp.eq.s32.totalorder %s14, 1
      %p136 = por %p134, %p135
      %p137 = scmp.ne.s32.totalorder %s129, %s132
      %p138 = scmp.eq.s32.totalorder %s14, 0
      %p139 = por %p137, %p138
      %p140 = scmp.ne.s32.totalorder %s129, %s132
      %p141 = scmp.eq.s32.totalorder %s19, 1
      %p142 = por %p140, %p141
      %p143 = scmp.ne.s32.totalorder %s132, %s133
      %p144 = scmp.eq.s32.totalorder %s19, 0
      %p145 = por %p143, %p144
      %p146 = scmp.ne.s32.totalorder %s132, %s133
      %p147 = scmp.eq.s32.totalorder %s20, 1
      %p148 = por %p146, %p147
      %p150 = scmp.ne.s32.totalorder %s133, %s149
      %p151 = scmp.eq.s32.totalorder %s20, 0
      %p152 = por %p150, %p151
      %s153 = sadd.s32 %s21, %s22
      %s154 = sadd.s32 %s33, %s29
      %s155 = ssub.s32 %s153, %s154
      %p156 = scmp.eq.s32.totalorder %s155, 0
      %s158 = sadd.s32 %s157, 1
      %s159 = scalar_select %p156, %s157, %s158
      %p162 = pneg %p156
      %p163 = scmp.eq.s32.totalorder %s14, 1
      %p164 = por %p162, %p163
      %p165 = scmp.ne.s32.totalorder %s157, %s160
      %p166 = scmp.eq.s32.totalorder %s14, 0
      %p167 = por %p165, %p166
      %p168 = scmp.ne.s32.totalorder %s157, %s160
      %p169 = scmp.eq.s32.totalorder %s19, 1
      %p170 = por %p168, %p169
      %p171 = scmp.ne.s32.totalorder %s160, %s161
      %p172 = scmp.eq.s32.totalorder %s19, 0
      %p173 = por %p171, %p172
      %p174 = scmp.ne.s32.totalorder %s160, %s161
      %p175 = scmp.eq.s32.totalorder %s20, 1
      %p176 = por %p174, %p175
      %p178 = scmp.ne.s32.totalorder %s161, %s177
      %p179 = scmp.eq.s32.totalorder %s20, 0
      %p180 = por %p178, %p179
      %s181 = ssub.s32 %s21, %s33
      %p182 = scmp.eq.s32.totalorder %s181, 0
      %s184 = sadd.s32 %s183, 1
      %s185 = scalar_select %p182, %s183, %s184
      %p188 = pneg %p182
      %p189 = scmp.eq.s32.totalorder %s14, 1
      %p190 = por %p188, %p189
      %p191 = scmp.ne.s32.totalorder %s183, %s186
      %p192 = scmp.eq.s32.totalorder %s14, 0
      %p193 = por %p191, %p192
      %p194 = scmp.ne.s32.totalorder %s183, %s186
      %p195 = scmp.eq.s32.totalorder %s19, 1
      %p196 = por %p194, %p195
      %p197 = scmp.ne.s32.totalorder %s186, %s187
      %p198 = scmp.eq.s32.totalorder %s19, 0
      %p199 = por %p197, %p198
      %p200 = scmp.ne.s32.totalorder %s186, %s187
      %p201 = scmp.eq.s32.totalorder %s20, 1
      %p202 = por %p200, %p201
      %p204 = scmp.ne.s32.totalorder %s187, %s203
      %p205 = scmp.eq.s32.totalorder %s20, 0
      %p206 = por %p204, %p205
      %p207 = scmp.le.s32.totalorder 1, %s14
      %p208 = scmp.lt.s32.totalorder %s14, 3
      %p209 = pnand %p207, %p208
      %p210 = pneg %p209
      // Predicated region
      $region9: #{regularizer_forward.1} parent=5 // pred_check
        _
      $region10: #{regularizer_forward.1} parent=5 // pred_check_branch
        %212 = sbr.rel (%p209) target = $region12
      $region11: #{regularizer_forward.1} parent=5 // pred_region
        %s213 = ssub.s32 %s14, 1
        // Predicated region
        $region13: #{regularizer_forward.1} parent=11 // pred_check
          %p214 = pneg %p47
        $region14: #{regularizer_forward.1} parent=11 // pred_check_branch
          %216 = sbr.rel (%p214) target = $region16
        $region15: #{regularizer_forward.1} parent=11 // pred_region
          _
        $region16: #{regularizer_forward.1} parent=11 // pred_fallthru
          _
        // Predicated region
        $region17: #{regularizer_forward.1} parent=11 // pred_check
          %p217 = pneg %p68
        $region18: #{regularizer_forward.1} parent=11 // pred_check_branch
          %219 = sbr.rel (%p217) target = $region20
        $region19: #{regularizer_forward.1} parent=11 // pred_region
          %s221 = ssub.s32 16384, 16384
          %222 = vsyncadd [#allocation5], %s221
          %s223 = sshll.u32 [#allocation4], 4
          %s224 = int_to_ptr.vmem [resolvable:$true] %s223
          %229 = dma.hbm_to_vmem [thread:$0]  %s1, 16384, %s224, [#allocation5], 1024, 1024, 64
        $region20: #{regularizer_forward.1} parent=11 // pred_fallthru
          _
        // Predicated region
        $region21: #{regularizer_forward.1} parent=11 // pred_check
          %p230 = pneg %p89
        $region22: #{regularizer_forward.1} parent=11 // pred_check_branch
          %232 = sbr.rel (%p230) target = $region24
        $region23: #{regularizer_forward.1} parent=11 // pred_region
          %s234 = ssub.s32 256, 256
          %235 = vsyncadd [#allocation7], %s234
          %s237 = sshll.u32 [#allocation6], 4
          %s238 = int_to_ptr.vmem [resolvable:$true] %s237
          %240 = dma.hbm_to_vmem [thread:$0]  %s2, 256, %s238, [#allocation7]
        $region24: #{regularizer_forward.1} parent=11 // pred_fallthru
          _
      $region12: #{regularizer_forward.1} parent=5 // pred_fallthru
        _
      %p241 = scmp.lt.s32.totalorder %s14, 2
      // Predicated region
      $region25: #{regularizer_forward.1} parent=5 // pred_check
        %p242 = pneg %p241
      $region26: #{regularizer_forward.1} parent=5 // pred_check_branch
        %244 = sbr.rel (%p242) target = $region28
      $region27: #{regularizer_forward.1} parent=5 // pred_region
        // Predicated region
        $region29: #{regularizer_forward.1} parent=27 // pred_check
          %p245 = pneg %p111
        $region30: #{regularizer_forward.1} parent=27 // pred_check_branch
          %247 = sbr.rel (%p245) target = $region32
        $region31: #{regularizer_forward.1} parent=27 // pred_region
          %s248 = sand.u32 %s14, 1
          %s249 = scalar_lea.sflag [#allocation5], %s248
          %s250 = sand.u32 %s101, 1
          %s251 = smul.addr %s250, 8192
          %s252 = scalar_lea.vmem [#allocation8], %s251
          %s253 = sadd.s32 %s21, %s22
          %s255 = ssub.s32 131072, 131072
          %256 = vsyncadd %s249, %s255
          %s257 = smul.addr %s253, 2048
          %s258 = smul.addr %s257, 64
          %s259 = scalar_lea.hbm %s3, %s258
          %s260 = sshll.u32 %s252, 4
          %s261 = int_to_ptr.vmem [resolvable:$true] %s260
          %266 = dma.hbm_to_vmem [thread:$0]  %s259, 131072, %s261, %s249, 512, 512, 32
        $region32: #{regularizer_forward.1} parent=27 // pred_fallthru
          _
        // Predicated region
        $region33: #{regularizer_forward.1} parent=27 // pred_check
          %p267 = pneg %p139
        $region34: #{regularizer_forward.1} parent=27 // pred_check_branch
          %269 = sbr.rel (%p267) target = $region36
        $region35: #{regularizer_forward.1} parent=27 // pred_region
          %s270 = sand.u32 %s14, 1
          %s271 = scalar_lea.sflag [#allocation5], %s270
          %s272 = sand.u32 %s129, 1
          %s273 = smul.addr %s272, 8
          %s274 = scalar_lea.vmem [#allocation9], %s273
          %s275 = sadd.s32 %s21, %s22
          %s276 = smul.u32 8, %s275
          %s278 = ssub.s32 128, 128
          %279 = vsyncadd %s271, %s278
          %s280 = smul.addr %s276, 16
          %s281 = scalar_lea.hbm %s4, %s280
          %s283 = sshll.u32 %s274, 4
          %s284 = int_to_ptr.vmem [resolvable:$true] %s283
          %286 = dma.hbm_to_vmem [thread:$0]  %s281, 128, %s284, %s271
        $region36: #{regularizer_forward.1} parent=27 // pred_fallthru
          _
        // Predicated region
        $region37: #{regularizer_forward.1} parent=27 // pred_check
          %p287 = pneg %p167
        $region38: #{regularizer_forward.1} parent=27 // pred_check_branch
          %289 = sbr.rel (%p287) target = $region40
        $region39: #{regularizer_forward.1} parent=27 // pred_region
          %s290 = sand.u32 %s14, 1
          %s291 = scalar_lea.sflag [#allocation5], %s290
          %s292 = sand.u32 %s157, 1
          %s293 = smul.addr %s292, 8
          %s294 = scalar_lea.vmem [#allocation10], %s293
          %s295 = sadd.s32 %s21, %s22
          %s296 = smul.u32 8, %s295
          %s298 = ssub.s32 128, 128
          %299 = vsyncadd %s291, %s298
          %s300 = smul.addr %s296, 16
          %s301 = scalar_lea.hbm %s5, %s300
          %s303 = sshll.u32 %s294, 4
          %s304 = int_to_ptr.vmem [resolvable:$true] %s303
          %306 = dma.hbm_to_vmem [thread:$0]  %s301, 128, %s304, %s291
        $region40: #{regularizer_forward.1} parent=27 // pred_fallthru
          _
      $region28: #{regularizer_forward.1} parent=5 // pred_fallthru
        _
      %p307 = scmp.le.s32.totalorder 1, %s14
      %p308 = scmp.lt.s32.totalorder %s14, 3
      %p309 = pnand %p307, %p308
      %p310 = pneg %p309
      // Predicated region
      $region41: #{regularizer_forward.1} parent=5 // pred_check
        _
      $region42: #{regularizer_forward.1} parent=5 // pred_check_branch
        %312 = sbr.rel (%p309) target = $region44
      $region43: #{regularizer_forward.1} parent=5 // pred_region
        %s313 = ssub.s32 %s14, 1
        // Predicated region
        $region45: #{regularizer_forward.1} parent=43 // pred_check
          %p314 = pneg %p68
        $region46: #{regularizer_forward.1} parent=43 // pred_check_branch
          %316 = sbr.rel (%p314) target = $region48
        $region47: #{regularizer_forward.1} parent=43 // pred_region
          %317 = dma.done [#allocation5], 16384
        $region48: #{regularizer_forward.1} parent=43 // pred_fallthru
          _
        // Predicated region
        $region49: #{regularizer_forward.1} parent=43 // pred_check
          %p318 = pneg %p89
        $region50: #{regularizer_forward.1} parent=43 // pred_check_branch
          %320 = sbr.rel (%p318) target = $region52
        $region51: #{regularizer_forward.1} parent=43 // pred_region
          %321 = dma.done [#allocation7], 256
        $region52: #{regularizer_forward.1} parent=43 // pred_fallthru
          _
        %s322 = sand.u32 %s19, 1
        %s323 = scalar_lea.sflag [#allocation5], %s322
        %s324 = sand.u32 %s104, 1
        %s325 = smul.addr %s324, 8192
        %s326 = scalar_lea.vmem [#allocation8], %s325
        // Predicated region
        $region53: #{regularizer_forward.1} parent=43 // pred_check
          %p327 = pneg %p117
        $region54: #{regularizer_forward.1} parent=43 // pred_check_branch
          %329 = sbr.rel (%p327) target = $region56
        $region55: #{regularizer_forward.1} parent=43 // pred_region
          %330 = dma.done %s323, 131072
        $region56: #{regularizer_forward.1} parent=43 // pred_fallthru
          _
        %s331 = sand.u32 %s19, 1
        %s332 = scalar_lea.sflag [#allocation5], %s331
        %s333 = sand.u32 %s132, 1
        %s334 = smul.addr %s333, 8
        %s335 = scalar_lea.vmem [#allocation9], %s334
        // Predicated region
        $region57: #{regularizer_forward.1} parent=43 // pred_check
          %p336 = pneg %p145
        $region58: #{regularizer_forward.1} parent=43 // pred_check_branch
          %338 = sbr.rel (%p336) target = $region60
        $region59: #{regularizer_forward.1} parent=43 // pred_region
          %339 = dma.done %s332, 128
        $region60: #{regularizer_forward.1} parent=43 // pred_fallthru
          _
        %s340 = sand.u32 %s19, 1
        %s341 = scalar_lea.sflag [#allocation5], %s340
        %s342 = sand.u32 %s160, 1
        %s343 = smul.addr %s342, 8
        %s344 = scalar_lea.vmem [#allocation10], %s343
        // Predicated region
        $region61: #{regularizer_forward.1} parent=43 // pred_check
          %p345 = pneg %p173
        $region62: #{regularizer_forward.1} parent=43 // pred_check_branch
          %347 = sbr.rel (%p345) target = $region64
        $region63: #{regularizer_forward.1} parent=43 // pred_region
          %348 = dma.done %s341, 128
        $region64: #{regularizer_forward.1} parent=43 // pred_fallthru
          _
        %p349 = pneg %p47
        %p350 = pneg %p44
        %p351 = pneg %p68
        %p352 = pneg %p65
        %p353 = pneg %p89
        %p354 = pneg %p86
        %s355 = sand.u32 %s19, 1
        %s356 = scalar_lea.sflag [#allocation5], %s355
        %s357 = sand.u32 %s104, 1
        %s358 = smul.addr %s357, 8192
        %s359 = scalar_lea.vmem [#allocation8], %s358
        %p360 = pneg %p117
        %p361 = pneg %p114
        %s362 = sand.u32 %s19, 1
        %s363 = scalar_lea.sflag [#allocation5], %s362
        %s364 = sand.u32 %s132, 1
        %s365 = smul.addr %s364, 8
        %s366 = scalar_lea.vmem [#allocation9], %s365
        %p367 = pneg %p145
        %p368 = pneg %p142
        %s369 = sand.u32 %s19, 1
        %s370 = scalar_lea.sflag [#allocation5], %s369
        %s371 = sand.u32 %s160, 1
        %s372 = smul.addr %s371, 8
        %s373 = scalar_lea.vmem [#allocation10], %s372
        %p374 = pneg %p173
        %p375 = pneg %p170
        %p376 = pneg %p199
        %p377 = pneg %p196
        %p378 = scmp.lt.s32.totalorder %s23, 1
        %s379 = scalar_select %p378, %s23, 1
        %s380 = smul.addr %s379, 2
        %s381 = smul.addr %s380, 8
        %s382 = scalar_lea.vmem %s6, %s381
        %s383 = sadd.s32 %s23, %s24
        %s384 = sadd.s32 %s23, %s24
        %s385 = smul.u32 8, %s384
        %s386 = sadd.s32 %s23, %s24
        %s387 = smul.u32 8, %s386
        %p388 = scmp.lt.s32.totalorder %s23, 1
        %s389 = scalar_select %p388, %s23, 1
        %s390 = smul.addr %s389, 2
        %s391 = smul.addr %s390, 8
        %s392 = scalar_lea.vmem %s6, %s391
        %p394 = scmp.eq.s32.totalorder %s24, 0
        // Predicated region
        $region65: #{regularizer_forward.1} parent=43 // pred_check
          %p395 = pneg %p394
        $region66: #{regularizer_forward.1} parent=43 // pred_check_branch
          %397 = sbr.rel (%p395) target = $region68
        $region67: #{regularizer_forward.1} parent=43 // pred_region
          %v398 = vld [vmem:[%s0] sm:$0xf]
          %v399 = vld [vmem:[%s0 + $0x4] sm:$0xf]
          %v400 = vld [vmem:[#allocation4] sm:$0xff]
          %v401 = vld [vmem:[#allocation4 + $0x8] sm:$0xff]
          %v402 = vld [vmem:[#allocation4 + $0x10] sm:$0xff]
          %v403 = vld [vmem:[#allocation4 + $0x18] sm:$0xff]
          %v404 = vld [vmem:[#allocation4 + $0x20] sm:$0xff]
          %v405 = vld [vmem:[#allocation4 + $0x28] sm:$0xff]
          %v406 = vld [vmem:[#allocation4 + $0x30] sm:$0xff]
          %v407 = vld [vmem:[#allocation4 + $0x38] sm:$0xff]
          %v408 = vld [vmem:[#allocation4 + $0x40] sm:$0xff]
          %v409 = vld [vmem:[#allocation4 + $0x48] sm:$0xff]
          %v410 = vld [vmem:[#allocation4 + $0x50] sm:$0xff]
          %v411 = vld [vmem:[#allocation4 + $0x58] sm:$0xff]
          %v412 = vld [vmem:[#allocation4 + $0x60] sm:$0xff]
          %v413 = vld [vmem:[#allocation4 + $0x68] sm:$0xff]
          %v414 = vld [vmem:[#allocation4 + $0x70] sm:$0xff]
          %v415 = vld [vmem:[#allocation4 + $0x78] sm:$0xff]
          %v416 = vld [vmem:[#allocation4 + $0x80] sm:$0xff]
          %v417 = vld [vmem:[#allocation4 + $0x88] sm:$0xff]
          %v418 = vld [vmem:[#allocation4 + $0x90] sm:$0xff]
          %v419 = vld [vmem:[#allocation4 + $0x98] sm:$0xff]
          %v420 = vld [vmem:[#allocation4 + $0xa0] sm:$0xff]
          %v421 = vld [vmem:[#allocation4 + $0xa8] sm:$0xff]
          %v422 = vld [vmem:[#allocation4 + $0xb0] sm:$0xff]
          %v423 = vld [vmem:[#allocation4 + $0xb8] sm:$0xff]
          %v424 = vld [vmem:[#allocation4 + $0xc0] sm:$0xff]
          %v425 = vld [vmem:[#allocation4 + $0xc8] sm:$0xff]
          %v426 = vld [vmem:[#allocation4 + $0xd0] sm:$0xff]
          %v427 = vld [vmem:[#allocation4 + $0xd8] sm:$0xff]
          %v428 = vld [vmem:[#allocation4 + $0xe0] sm:$0xff]
          %v429 = vld [vmem:[#allocation4 + $0xe8] sm:$0xff]
          %v430 = vld [vmem:[#allocation4 + $0xf0] sm:$0xff]
          %v431 = vld [vmem:[#allocation4 + $0xf8] sm:$0xff]
          %v432 = vld [vmem:[#allocation4 + $0x100] sm:$0xff]
          %v433 = vld [vmem:[#allocation4 + $0x108] sm:$0xff]
          %v434 = vld [vmem:[#allocation4 + $0x110] sm:$0xff]
          %v435 = vld [vmem:[#allocation4 + $0x118] sm:$0xff]
          %v436 = vld [vmem:[#allocation4 + $0x120] sm:$0xff]
          %v437 = vld [vmem:[#allocation4 + $0x128] sm:$0xff]
          %v438 = vld [vmem:[#allocation4 + $0x130] sm:$0xff]
          %v439 = vld [vmem:[#allocation4 + $0x138] sm:$0xff]
          %v440 = vld [vmem:[#allocation4 + $0x140] sm:$0xff]
          %v441 = vld [vmem:[#allocation4 + $0x148] sm:$0xff]
          %v442 = vld [vmem:[#allocation4 + $0x150] sm:$0xff]
          %v443 = vld [vmem:[#allocation4 + $0x158] sm:$0xff]
          %v444 = vld [vmem:[#allocation4 + $0x160] sm:$0xff]
          %v445 = vld [vmem:[#allocation4 + $0x168] sm:$0xff]
          %v446 = vld [vmem:[#allocation4 + $0x170] sm:$0xff]
          %v447 = vld [vmem:[#allocation4 + $0x178] sm:$0xff]
          %v448 = vld [vmem:[#allocation4 + $0x180] sm:$0xff]
          %v449 = vld [vmem:[#allocation4 + $0x188] sm:$0xff]
          %v450 = vld [vmem:[#allocation4 + $0x190] sm:$0xff]
          %v451 = vld [vmem:[#allocation4 + $0x198] sm:$0xff]
          %v452 = vld [vmem:[#allocation4 + $0x1a0] sm:$0xff]
          %v453 = vld [vmem:[#allocation4 + $0x1a8] sm:$0xff]
          %v454 = vld [vmem:[#allocation4 + $0x1b0] sm:$0xff]
          %v455 = vld [vmem:[#allocation4 + $0x1b8] sm:$0xff]
          %v456 = vld [vmem:[#allocation4 + $0x1c0] sm:$0xff]
          %v457 = vld [vmem:[#allocation4 + $0x1c8] sm:$0xff]
          %v458 = vld [vmem:[#allocation4 + $0x1d0] sm:$0xff]
          %v459 = vld [vmem:[#allocation4 + $0x1d8] sm:$0xff]
          %v460 = vld [vmem:[#allocation4 + $0x1e0] sm:$0xff]
          %v461 = vld [vmem:[#allocation4 + $0x1e8] sm:$0xff]
          %v462 = vld [vmem:[#allocation4 + $0x1f0] sm:$0xff]
          %v463 = vld [vmem:[#allocation4 + $0x1f8] sm:$0xff]
          %v464 = vld [vmem:[#allocation4 + $0x200] sm:$0xff]
          %v465 = vld [vmem:[#allocation4 + $0x208] sm:$0xff]
          %v466 = vld [vmem:[#allocation4 + $0x210] sm:$0xff]
          %v467 = vld [vmem:[#allocation4 + $0x218] sm:$0xff]
          %v468 = vld [vmem:[#allocation4 + $0x220] sm:$0xff]
          %v469 = vld [vmem:[#allocation4 + $0x228] sm:$0xff]
          %v470 = vld [vmem:[#allocation4 + $0x230] sm:$0xff]
          %v471 = vld [vmem:[#allocation4 + $0x238] sm:$0xff]
          %v472 = vld [vmem:[#allocation4 + $0x240] sm:$0xff]
          %v473 = vld [vmem:[#allocation4 + $0x248] sm:$0xff]
          %v474 = vld [vmem:[#allocation4 + $0x250] sm:$0xff]
          %v475 = vld [vmem:[#allocation4 + $0x258] sm:$0xff]
          %v476 = vld [vmem:[#allocation4 + $0x260] sm:$0xff]
          %v477 = vld [vmem:[#allocation4 + $0x268] sm:$0xff]
          %v478 = vld [vmem:[#allocation4 + $0x270] sm:$0xff]
          %v479 = vld [vmem:[#allocation4 + $0x278] sm:$0xff]
          %v480 = vld [vmem:[#allocation4 + $0x280] sm:$0xff]
          %v481 = vld [vmem:[#allocation4 + $0x288] sm:$0xff]
          %v482 = vld [vmem:[#allocation4 + $0x290] sm:$0xff]
          %v483 = vld [vmem:[#allocation4 + $0x298] sm:$0xff]
          %v484 = vld [vmem:[#allocation4 + $0x2a0] sm:$0xff]
          %v485 = vld [vmem:[#allocation4 + $0x2a8] sm:$0xff]
          %v486 = vld [vmem:[#allocation4 + $0x2b0] sm:$0xff]
          %v487 = vld [vmem:[#allocation4 + $0x2b8] sm:$0xff]
          %v488 = vld [vmem:[#allocation4 + $0x2c0] sm:$0xff]
          %v489 = vld [vmem:[#allocation4 + $0x2c8] sm:$0xff]
          %v490 = vld [vmem:[#allocation4 + $0x2d0] sm:$0xff]
          %v491 = vld [vmem:[#allocation4 + $0x2d8] sm:$0xff]
          %v492 = vld [vmem:[#allocation4 + $0x2e0] sm:$0xff]
          %v493 = vld [vmem:[#allocation4 + $0x2e8] sm:$0xff]
          %v494 = vld [vmem:[#allocation4 + $0x2f0] sm:$0xff]
          %v495 = vld [vmem:[#allocation4 + $0x2f8] sm:$0xff]
          %v496 = vld [vmem:[#allocation4 + $0x300] sm:$0xff]
          %v497 = vld [vmem:[#allocation4 + $0x308] sm:$0xff]
          %v498 = vld [vmem:[#allocation4 + $0x310] sm:$0xff]
          %v499 = vld [vmem:[#allocation4 + $0x318] sm:$0xff]
          %v500 = vld [vmem:[#allocation4 + $0x320] sm:$0xff]
          %v501 = vld [vmem:[#allocation4 + $0x328] sm:$0xff]
          %v502 = vld [vmem:[#allocation4 + $0x330] sm:$0xff]
          %v503 = vld [vmem:[#allocation4 + $0x338] sm:$0xff]
          %v504 = vld [vmem:[#allocation4 + $0x340] sm:$0xff]
          %v505 = vld [vmem:[#allocation4 + $0x348] sm:$0xff]
          %v506 = vld [vmem:[#allocation4 + $0x350] sm:$0xff]
          %v507 = vld [vmem:[#allocation4 + $0x358] sm:$0xff]
          %v508 = vld [vmem:[#allocation4 + $0x360] sm:$0xff]
          %v509 = vld [vmem:[#allocation4 + $0x368] sm:$0xff]
          %v510 = vld [vmem:[#allocation4 + $0x370] sm:$0xff]
          %v511 = vld [vmem:[#allocation4 + $0x378] sm:$0xff]
          %v512 = vld [vmem:[#allocation4 + $0x380] sm:$0xff]
          %v513 = vld [vmem:[#allocation4 + $0x388] sm:$0xff]
          %v514 = vld [vmem:[#allocation4 + $0x390] sm:$0xff]
          %v515 = vld [vmem:[#allocation4 + $0x398] sm:$0xff]
          %v516 = vld [vmem:[#allocation4 + $0x3a0] sm:$0xff]
          %v517 = vld [vmem:[#allocation4 + $0x3a8] sm:$0xff]
          %v518 = vld [vmem:[#allocation4 + $0x3b0] sm:$0xff]
          %v519 = vld [vmem:[#allocation4 + $0x3b8] sm:$0xff]
          %v520 = vld [vmem:[#allocation4 + $0x3c0] sm:$0xff]
          %v521 = vld [vmem:[#allocation4 + $0x3c8] sm:$0xff]
          %v522 = vld [vmem:[#allocation4 + $0x3d0] sm:$0xff]
          %v523 = vld [vmem:[#allocation4 + $0x3d8] sm:$0xff]
          %v524 = vld [vmem:[#allocation4 + $0x3e0] sm:$0xff]
          %v525 = vld [vmem:[#allocation4 + $0x3e8] sm:$0xff]
          %v526 = vld [vmem:[#allocation4 + $0x3f0] sm:$0xff]
          %v527 = vld [vmem:[#allocation4 + $0x3f8] sm:$0xff]
          %v528 = vld [vmem:[#allocation6] sm:$0xff]
          %v529 = vld [vmem:[#allocation6 + $0x8] sm:$0xff]
          %v532 = vlaneseq
          %v533 = vshrl.u32 %v532, 7
          %v534 = vsub.s32 0, %v533
          %v535 = vrot.slane %v528, %v534
          %v536 = vlaneseq
          %v537 = vshrl.u32 %v536, 7
          %v538 = vsub.s32 1, %v537
          %v539 = vrot.slane %v528, %v538
          %v540 = vlaneseq
          %v541 = vshrl.u32 %v540, 7
          %v542 = vsub.s32 2, %v541
          %v543 = vrot.slane %v528, %v542
          %v544 = vlaneseq
          %v545 = vshrl.u32 %v544, 7
          %v546 = vsub.s32 3, %v545
          %v547 = vrot.slane %v528, %v546
          %v548 = vlaneseq
          %v549 = vshrl.u32 %v548, 7
          %v550 = vsub.s32 4, %v549
          %v551 = vrot.slane %v528, %v550
          %v552 = vlaneseq
          %v553 = vshrl.u32 %v552, 7
          %v554 = vsub.s32 5, %v553
          %v555 = vrot.slane %v528, %v554
          %v556 = vlaneseq
          %v557 = vshrl.u32 %v556, 7
          %v558 = vsub.s32 6, %v557
          %v559 = vrot.slane %v528, %v558
          %v560 = vlaneseq
          %v561 = vshrl.u32 %v560, 7
          %v562 = vsub.s32 7, %v561
          %v563 = vrot.slane %v528, %v562
          %v564 = vlaneseq
          %v565 = vshrl.u32 %v564, 7
          %v566 = vsub.s32 0, %v565
          %v567 = vrot.slane %v529, %v566
          %v568 = vlaneseq
          %v569 = vshrl.u32 %v568, 7
          %v570 = vsub.s32 1, %v569
          %v571 = vrot.slane %v529, %v570
          %v572 = vlaneseq
          %v573 = vshrl.u32 %v572, 7
          %v574 = vsub.s32 2, %v573
          %v575 = vrot.slane %v529, %v574
          %v576 = vlaneseq
          %v577 = vshrl.u32 %v576, 7
          %v578 = vsub.s32 3, %v577
          %v579 = vrot.slane %v529, %v578
          %v580 = vlaneseq
          %v581 = vshrl.u32 %v580, 7
          %v582 = vsub.s32 4, %v581
          %v583 = vrot.slane %v529, %v582
          %v584 = vlaneseq
          %v585 = vshrl.u32 %v584, 7
          %v586 = vsub.s32 5, %v585
          %v587 = vrot.slane %v529, %v586
          %v588 = vlaneseq
          %v589 = vshrl.u32 %v588, 7
          %v590 = vsub.s32 6, %v589
          %v591 = vrot.slane %v529, %v590
          %v592 = vlaneseq
          %v593 = vshrl.u32 %v592, 7
          %v594 = vsub.s32 7, %v593
          %v595 = vrot.slane %v529, %v594
          %v614 = vunpack.c.l.b16 %v398
          %v615 = vunpack.c.l.b16 %v399
          %v616 = vpack.c.b16 %v615, %v614
          %v746 = vunpack.c.l.b16 %v400
          %v747 = vunpack.c.h.b16 %v400
          %v748 = vunpack.c.l.b16 %v401
          %v749 = vunpack.c.h.b16 %v401
          %v750 = vunpack.c.l.b16 %v402
          %v751 = vunpack.c.h.b16 %v402
          %v752 = vunpack.c.l.b16 %v403
          %v753 = vunpack.c.h.b16 %v403
          %v754 = vunpack.c.l.b16 %v404
          %v755 = vunpack.c.h.b16 %v404
          %v756 = vunpack.c.l.b16 %v405
          %v757 = vunpack.c.h.b16 %v405
          %v758 = vunpack.c.l.b16 %v406
          %v759 = vunpack.c.h.b16 %v406
          %v760 = vunpack.c.l.b16 %v407
          %v761 = vunpack.c.h.b16 %v407
          %v762 = vunpack.c.l.b16 %v408
          %v763 = vunpack.c.h.b16 %v408
          %v764 = vunpack.c.l.b16 %v409
          %v765 = vunpack.c.h.b16 %v409
          %v766 = vunpack.c.l.b16 %v410
          %v767 = vunpack.c.h.b16 %v410
          %v768 = vunpack.c.l.b16 %v411
          %v769 = vunpack.c.h.b16 %v411
          %v770 = vunpack.c.l.b16 %v412
          %v771 = vunpack.c.h.b16 %v412
          %v772 = vunpack.c.l.b16 %v413
          %v773 = vunpack.c.h.b16 %v413
          %v774 = vunpack.c.l.b16 %v414
          %v775 = vunpack.c.h.b16 %v414
          %v776 = vunpack.c.l.b16 %v415
          %v777 = vunpack.c.h.b16 %v415
          %v778 = vunpack.c.l.b16 %v416
          %v779 = vunpack.c.h.b16 %v416
          %v780 = vunpack.c.l.b16 %v417
          %v781 = vunpack.c.h.b16 %v417
          %v782 = vunpack.c.l.b16 %v418
          %v783 = vunpack.c.h.b16 %v418
          %v784 = vunpack.c.l.b16 %v419
          %v785 = vunpack.c.h.b16 %v419
          %v786 = vunpack.c.l.b16 %v420
          %v787 = vunpack.c.h.b16 %v420
          %v788 = vunpack.c.l.b16 %v421
          %v789 = vunpack.c.h.b16 %v421
          %v790 = vunpack.c.l.b16 %v422
          %v791 = vunpack.c.h.b16 %v422
          %v792 = vunpack.c.l.b16 %v423
          %v793 = vunpack.c.h.b16 %v423
          %v794 = vunpack.c.l.b16 %v424
          %v795 = vunpack.c.h.b16 %v424
          %v796 = vunpack.c.l.b16 %v425
          %v797 = vunpack.c.h.b16 %v425
          %v798 = vunpack.c.l.b16 %v426
          %v799 = vunpack.c.h.b16 %v426
          %v800 = vunpack.c.l.b16 %v427
          %v801 = vunpack.c.h.b16 %v427
          %v802 = vunpack.c.l.b16 %v428
          %v803 = vunpack.c.h.b16 %v428
          %v804 = vunpack.c.l.b16 %v429
          %v805 = vunpack.c.h.b16 %v429
          %v806 = vunpack.c.l.b16 %v430
          %v807 = vunpack.c.h.b16 %v430
          %v808 = vunpack.c.l.b16 %v431
          %v809 = vunpack.c.h.b16 %v431
          %v810 = vunpack.c.l.b16 %v432
          %v811 = vunpack.c.h.b16 %v432
          %v812 = vunpack.c.l.b16 %v433
          %v813 = vunpack.c.h.b16 %v433
          %v814 = vunpack.c.l.b16 %v434
          %v815 = vunpack.c.h.b16 %v434
          %v816 = vunpack.c.l.b16 %v435
          %v817 = vunpack.c.h.b16 %v435
          %v818 = vunpack.c.l.b16 %v436
          %v819 = vunpack.c.h.b16 %v436
          %v820 = vunpack.c.l.b16 %v437
          %v821 = vunpack.c.h.b16 %v437
          %v822 = vunpack.c.l.b16 %v438
          %v823 = vunpack.c.h.b16 %v438
          %v824 = vunpack.c.l.b16 %v439
          %v825 = vunpack.c.h.b16 %v439
          %v826 = vunpack.c.l.b16 %v440
          %v827 = vunpack.c.h.b16 %v440
          %v828 = vunpack.c.l.b16 %v441
          %v829 = vunpack.c.h.b16 %v441
          %v830 = vunpack.c.l.b16 %v442
          %v831 = vunpack.c.h.b16 %v442
          %v832 = vunpack.c.l.b16 %v443
          %v833 = vunpack.c.h.b16 %v443
          %v834 = vunpack.c.l.b16 %v444
          %v835 = vunpack.c.h.b16 %v444
          %v836 = vunpack.c.l.b16 %v445
          %v837 = vunpack.c.h.b16 %v445
          %v838 = vunpack.c.l.b16 %v446
          %v839 = vunpack.c.h.b16 %v446
          %v840 = vunpack.c.l.b16 %v447
          %v841 = vunpack.c.h.b16 %v447
          %v842 = vunpack.c.l.b16 %v448
          %v843 = vunpack.c.h.b16 %v448
          %v844 = vunpack.c.l.b16 %v449
          %v845 = vunpack.c.h.b16 %v449
          %v846 = vunpack.c.l.b16 %v450
          %v847 = vunpack.c.h.b16 %v450
          %v848 = vunpack.c.l.b16 %v451
          %v849 = vunpack.c.h.b16 %v451
          %v850 = vunpack.c.l.b16 %v452
          %v851 = vunpack.c.h.b16 %v452
          %v852 = vunpack.c.l.b16 %v453
          %v853 = vunpack.c.h.b16 %v453
          %v854 = vunpack.c.l.b16 %v454
          %v855 = vunpack.c.h.b16 %v454
          %v856 = vunpack.c.l.b16 %v455
          %v857 = vunpack.c.h.b16 %v455
          %v858 = vunpack.c.l.b16 %v456
          %v859 = vunpack.c.h.b16 %v456
          %v860 = vunpack.c.l.b16 %v457
          %v861 = vunpack.c.h.b16 %v457
          %v862 = vunpack.c.l.b16 %v458
          %v863 = vunpack.c.h.b16 %v458
          %v864 = vunpack.c.l.b16 %v459
          %v865 = vunpack.c.h.b16 %v459
          %v866 = vunpack.c.l.b16 %v460
          %v867 = vunpack.c.h.b16 %v460
          %v868 = vunpack.c.l.b16 %v461
          %v869 = vunpack.c.h.b16 %v461
          %v870 = vunpack.c.l.b16 %v462
          %v871 = vunpack.c.h.b16 %v462
          %v872 = vunpack.c.l.b16 %v463
          %v873 = vunpack.c.h.b16 %v463
          %v874 = vunpack.c.l.b16 %v464
          %v875 = vunpack.c.h.b16 %v464
          %v876 = vunpack.c.l.b16 %v465
          %v877 = vunpack.c.h.b16 %v465
          %v878 = vunpack.c.l.b16 %v466
          %v879 = vunpack.c.h.b16 %v466
          %v880 = vunpack.c.l.b16 %v467
          %v881 = vunpack.c.h.b16 %v467
          %v882 = vunpack.c.l.b16 %v468
          %v883 = vunpack.c.h.b16 %v468
          %v884 = vunpack.c.l.b16 %v469
          %v885 = vunpack.c.h.b16 %v469
          %v886 = vunpack.c.l.b16 %v470
          %v887 = vunpack.c.h.b16 %v470
          %v888 = vunpack.c.l.b16 %v471
          %v889 = vunpack.c.h.b16 %v471
          %v890 = vunpack.c.l.b16 %v472
          %v891 = vunpack.c.h.b16 %v472
          %v892 = vunpack.c.l.b16 %v473
          %v893 = vunpack.c.h.b16 %v473
          %v894 = vunpack.c.l.b16 %v474
          %v895 = vunpack.c.h.b16 %v474
          %v896 = vunpack.c.l.b16 %v475
          %v897 = vunpack.c.h.b16 %v475
          %v898 = vunpack.c.l.b16 %v476
          %v899 = vunpack.c.h.b16 %v476
          %v900 = vunpack.c.l.b16 %v477
          %v901 = vunpack.c.h.b16 %v477
          %v902 = vunpack.c.l.b16 %v478
          %v903 = vunpack.c.h.b16 %v478
          %v904 = vunpack.c.l.b16 %v479
          %v905 = vunpack.c.h.b16 %v479
          %v906 = vunpack.c.l.b16 %v480
          %v907 = vunpack.c.h.b16 %v480
          %v908 = vunpack.c.l.b16 %v481
          %v909 = vunpack.c.h.b16 %v481
          %v910 = vunpack.c.l.b16 %v482
          %v911 = vunpack.c.h.b16 %v482
          %v912 = vunpack.c.l.b16 %v483
          %v913 = vunpack.c.h.b16 %v483
          %v914 = vunpack.c.l.b16 %v484
          %v915 = vunpack.c.h.b16 %v484
          %v916 = vunpack.c.l.b16 %v485
          %v917 = vunpack.c.h.b16 %v485
          %v918 = vunpack.c.l.b16 %v486
          %v919 = vunpack.c.h.b16 %v486
          %v920 = vunpack.c.l.b16 %v487
          %v921 = vunpack.c.h.b16 %v487
          %v922 = vunpack.c.l.b16 %v488
          %v923 = vunpack.c.h.b16 %v488
          %v924 = vunpack.c.l.b16 %v489
          %v925 = vunpack.c.h.b16 %v489
          %v926 = vunpack.c.l.b16 %v490
          %v927 = vunpack.c.h.b16 %v490
          %v928 = vunpack.c.l.b16 %v491
          %v929 = vunpack.c.h.b16 %v491
          %v930 = vunpack.c.l.b16 %v492
          %v931 = vunpack.c.h.b16 %v492
          %v932 = vunpack.c.l.b16 %v493
          %v933 = vunpack.c.h.b16 %v493
          %v934 = vunpack.c.l.b16 %v494
          %v935 = vunpack.c.h.b16 %v494
          %v936 = vunpack.c.l.b16 %v495
          %v937 = vunpack.c.h.b16 %v495
          %v938 = vunpack.c.l.b16 %v496
          %v939 = vunpack.c.h.b16 %v496
          %v940 = vunpack.c.l.b16 %v497
          %v941 = vunpack.c.h.b16 %v497
          %v942 = vunpack.c.l.b16 %v498
          %v943 = vunpack.c.h.b16 %v498
          %v944 = vunpack.c.l.b16 %v499
          %v945 = vunpack.c.h.b16 %v499
          %v946 = vunpack.c.l.b16 %v500
          %v947 = vunpack.c.h.b16 %v500
          %v948 = vunpack.c.l.b16 %v501
          %v949 = vunpack.c.h.b16 %v501
          %v950 = vunpack.c.l.b16 %v502
          %v951 = vunpack.c.h.b16 %v502
          %v952 = vunpack.c.l.b16 %v503
          %v953 = vunpack.c.h.b16 %v503
          %v954 = vunpack.c.l.b16 %v504
          %v955 = vunpack.c.h.b16 %v504
          %v956 = vunpack.c.l.b16 %v505
          %v957 = vunpack.c.h.b16 %v505
          %v958 = vunpack.c.l.b16 %v506
          %v959 = vunpack.c.h.b16 %v506
          %v960 = vunpack.c.l.b16 %v507
          %v961 = vunpack.c.h.b16 %v507
          %v962 = vunpack.c.l.b16 %v508
          %v963 = vunpack.c.h.b16 %v508
          %v964 = vunpack.c.l.b16 %v509
          %v965 = vunpack.c.h.b16 %v509
          %v966 = vunpack.c.l.b16 %v510
          %v967 = vunpack.c.h.b16 %v510
          %v968 = vunpack.c.l.b16 %v511
          %v969 = vunpack.c.h.b16 %v511
          %v970 = vunpack.c.l.b16 %v512
          %v971 = vunpack.c.h.b16 %v512
          %v972 = vunpack.c.l.b16 %v513
          %v973 = vunpack.c.h.b16 %v513
          %v974 = vunpack.c.l.b16 %v514
          %v975 = vunpack.c.h.b16 %v514
          %v976 = vunpack.c.l.b16 %v515
          %v977 = vunpack.c.h.b16 %v515
          %v978 = vunpack.c.l.b16 %v516
          %v979 = vunpack.c.h.b16 %v516
          %v980 = vunpack.c.l.b16 %v517
          %v981 = vunpack.c.h.b16 %v517
          %v982 = vunpack.c.l.b16 %v518
          %v983 = vunpack.c.h.b16 %v518
          %v984 = vunpack.c.l.b16 %v519
          %v985 = vunpack.c.h.b16 %v519
          %v986 = vunpack.c.l.b16 %v520
          %v987 = vunpack.c.h.b16 %v520
          %v988 = vunpack.c.l.b16 %v521
          %v989 = vunpack.c.h.b16 %v521
          %v990 = vunpack.c.l.b16 %v522
          %v991 = vunpack.c.h.b16 %v522
          %v992 = vunpack.c.l.b16 %v523
          %v993 = vunpack.c.h.b16 %v523
          %v994 = vunpack.c.l.b16 %v524
          %v995 = vunpack.c.h.b16 %v524
          %v996 = vunpack.c.l.b16 %v525
          %v997 = vunpack.c.h.b16 %v525
          %v998 = vunpack.c.l.b16 %v526
          %v999 = vunpack.c.h.b16 %v526
          %v1000 = vunpack.c.l.b16 %v527
          %v1001 = vunpack.c.h.b16 %v527
          %v1002 = vpack.c.b16 %v762, %v746
          %v1003 = vpack.c.b16 %v763, %v747
          %v1004 = vpack.c.b16 %v764, %v748
          %v1005 = vpack.c.b16 %v765, %v749
          %v1006 = vpack.c.b16 %v766, %v750
          %v1007 = vpack.c.b16 %v767, %v751
          %v1008 = vpack.c.b16 %v768, %v752
          %v1009 = vpack.c.b16 %v769, %v753
          %v1010 = vpack.c.b16 %v770, %v754
          %v1011 = vpack.c.b16 %v771, %v755
          %v1012 = vpack.c.b16 %v772, %v756
          %v1013 = vpack.c.b16 %v773, %v757
          %v1014 = vpack.c.b16 %v774, %v758
          %v1015 = vpack.c.b16 %v775, %v759
          %v1016 = vpack.c.b16 %v776, %v760
          %v1017 = vpack.c.b16 %v777, %v761
          %v1018 = vpack.c.b16 %v794, %v778
          %v1019 = vpack.c.b16 %v795, %v779
          %v1020 = vpack.c.b16 %v796, %v780
          %v1021 = vpack.c.b16 %v797, %v781
          %v1022 = vpack.c.b16 %v798, %v782
          %v1023 = vpack.c.b16 %v799, %v783
          %v1024 = vpack.c.b16 %v800, %v784
          %v1025 = vpack.c.b16 %v801, %v785
          %v1026 = vpack.c.b16 %v802, %v786
          %v1027 = vpack.c.b16 %v803, %v787
          %v1028 = vpack.c.b16 %v804, %v788
          %v1029 = vpack.c.b16 %v805, %v789
          %v1030 = vpack.c.b16 %v806, %v790
          %v1031 = vpack.c.b16 %v807, %v791
          %v1032 = vpack.c.b16 %v808, %v792
          %v1033 = vpack.c.b16 %v809, %v793
          %v1034 = vpack.c.b16 %v826, %v810
          %v1035 = vpack.c.b16 %v827, %v811
          %v1036 = vpack.c.b16 %v828, %v812
          %v1037 = vpack.c.b16 %v829, %v813
          %v1038 = vpack.c.b16 %v830, %v814
          %v1039 = vpack.c.b16 %v831, %v815
          %v1040 = vpack.c.b16 %v832, %v816
          %v1041 = vpack.c.b16 %v833, %v817
          %v1042 = vpack.c.b16 %v834, %v818
          %v1043 = vpack.c.b16 %v835, %v819
          %v1044 = vpack.c.b16 %v836, %v820
          %v1045 = vpack.c.b16 %v837, %v821
          %v1046 = vpack.c.b16 %v838, %v822
          %v1047 = vpack.c.b16 %v839, %v823
          %v1048 = vpack.c.b16 %v840, %v824
          %v1049 = vpack.c.b16 %v841, %v825
          %v1050 = vpack.c.b16 %v858, %v842
          %v1051 = vpack.c.b16 %v859, %v843
          %v1052 = vpack.c.b16 %v860, %v844
          %v1053 = vpack.c.b16 %v861, %v845
          %v1054 = vpack.c.b16 %v862, %v846
          %v1055 = vpack.c.b16 %v863, %v847
          %v1056 = vpack.c.b16 %v864, %v848
          %v1057 = vpack.c.b16 %v865, %v849
          %v1058 = vpack.c.b16 %v866, %v850
          %v1059 = vpack.c.b16 %v867, %v851
          %v1060 = vpack.c.b16 %v868, %v852
          %v1061 = vpack.c.b16 %v869, %v853
          %v1062 = vpack.c.b16 %v870, %v854
          %v1063 = vpack.c.b16 %v871, %v855
          %v1064 = vpack.c.b16 %v872, %v856
          %v1065 = vpack.c.b16 %v873, %v857
          %v1066 = vpack.c.b16 %v890, %v874
          %v1067 = vpack.c.b16 %v891, %v875
          %v1068 = vpack.c.b16 %v892, %v876
          %v1069 = vpack.c.b16 %v893, %v877
          %v1070 = vpack.c.b16 %v894, %v878
          %v1071 = vpack.c.b16 %v895, %v879
          %v1072 = vpack.c.b16 %v896, %v880
          %v1073 = vpack.c.b16 %v897, %v881
          %v1074 = vpack.c.b16 %v898, %v882
          %v1075 = vpack.c.b16 %v899, %v883
          %v1076 = vpack.c.b16 %v900, %v884
          %v1077 = vpack.c.b16 %v901, %v885
          %v1078 = vpack.c.b16 %v902, %v886
          %v1079 = vpack.c.b16 %v903, %v887
          %v1080 = vpack.c.b16 %v904, %v888
          %v1081 = vpack.c.b16 %v905, %v889
          %v1082 = vpack.c.b16 %v922, %v906
          %v1083 = vpack.c.b16 %v923, %v907
          %v1084 = vpack.c.b16 %v924, %v908
          %v1085 = vpack.c.b16 %v925, %v909
          %v1086 = vpack.c.b16 %v926, %v910
          %v1087 = vpack.c.b16 %v927, %v911
          %v1088 = vpack.c.b16 %v928, %v912
          %v1089 = vpack.c.b16 %v929, %v913
          %v1090 = vpack.c.b16 %v930, %v914
          %v1091 = vpack.c.b16 %v931, %v915
          %v1092 = vpack.c.b16 %v932, %v916
          %v1093 = vpack.c.b16 %v933, %v917
          %v1094 = vpack.c.b16 %v934, %v918
          %v1095 = vpack.c.b16 %v935, %v919
          %v1096 = vpack.c.b16 %v936, %v920
          %v1097 = vpack.c.b16 %v937, %v921
          %v1098 = vpack.c.b16 %v954, %v938
          %v1099 = vpack.c.b16 %v955, %v939
          %v1100 = vpack.c.b16 %v956, %v940
          %v1101 = vpack.c.b16 %v957, %v941
          %v1102 = vpack.c.b16 %v958, %v942
          %v1103 = vpack.c.b16 %v959, %v943
          %v1104 = vpack.c.b16 %v960, %v944
          %v1105 = vpack.c.b16 %v961, %v945
          %v1106 = vpack.c.b16 %v962, %v946
          %v1107 = vpack.c.b16 %v963, %v947
          %v1108 = vpack.c.b16 %v964, %v948
          %v1109 = vpack.c.b16 %v965, %v949
          %v1110 = vpack.c.b16 %v966, %v950
          %v1111 = vpack.c.b16 %v967, %v951
          %v1112 = vpack.c.b16 %v968, %v952
          %v1113 = vpack.c.b16 %v969, %v953
          %v1114 = vpack.c.b16 %v986, %v970
          %v1115 = vpack.c.b16 %v987, %v971
          %v1116 = vpack.c.b16 %v988, %v972
          %v1117 = vpack.c.b16 %v989, %v973
          %v1118 = vpack.c.b16 %v990, %v974
          %v1119 = vpack.c.b16 %v991, %v975
          %v1120 = vpack.c.b16 %v992, %v976
          %v1121 = vpack.c.b16 %v993, %v977
          %v1122 = vpack.c.b16 %v994, %v978
          %v1123 = vpack.c.b16 %v995, %v979
          %v1124 = vpack.c.b16 %v996, %v980
          %v1125 = vpack.c.b16 %v997, %v981
          %v1126 = vpack.c.b16 %v998, %v982
          %v1127 = vpack.c.b16 %v999, %v983
          %v1128 = vpack.c.b16 %v1000, %v984
          %v1129 = vpack.c.b16 %v1001, %v985
          %1258 = vmatprep.subr.bf16.mxu0 %v1003
          %1259 = vmatpush1.bf16.msra.mxu0 %v1002
          %1260 = vmatprep.subr.bf16.mxu0 %v1019
          %1261 = vmatpush1.bf16.msra.mxu0 %v1018
          %1262 = vmatprep.subr.bf16.mxu0 %v1035
          %1263 = vmatpush1.bf16.msra.mxu0 %v1034
          %1264 = vmatprep.subr.bf16.mxu0 %v1051
          %1265 = vmatpush1.bf16.msra.mxu0 %v1050
          %1266 = vmatprep.subr.bf16.mxu0 %v1067
          %1267 = vmatpush1.bf16.msra.mxu0 %v1066
          %1268 = vmatprep.subr.bf16.mxu0 %v1083
          %1269 = vmatpush1.bf16.msra.mxu0 %v1082
          %1270 = vmatprep.subr.bf16.mxu0 %v1099
          %1271 = vmatpush1.bf16.msra.mxu0 %v1098
          %1272 = vmatprep.subr.bf16.mxu0 %v1115
          %1273 = vmatpush1.bf16.msra.mxu0 %v1114
          %1274 = vmatprep.subr.bf16.mxu0 0
          %1275 = vmatpush1.bf16.msra.mxu0 0
          %1276 = vmatprep.subr.bf16.mxu0 0
          %1277 = vmatpush1.bf16.msra.mxu0 0
          %1278 = vmatprep.subr.bf16.mxu0 0
          %1279 = vmatpush1.bf16.msra.mxu0 0
          %1280 = vmatprep.subr.bf16.mxu0 0
          %1281 = vmatpush1.bf16.msra.mxu0 0
          %1282 = vmatprep.subr.bf16.mxu0 0
          %1283 = vmatpush1.bf16.msra.mxu0 0
          %1284 = vmatprep.subr.bf16.mxu0 0
          %1285 = vmatpush1.bf16.msra.mxu0 0
          %1286 = vmatprep.subr.bf16.mxu0 0
          %1287 = vmatpush1.bf16.msra.mxu0 0
          %1288 = vmatprep.subr.bf16.mxu0 0
          %1289 = vmatpush1.bf16.msra.mxu0 0
          %1290 = vmatprep.mubr.bf16.mxu0 0
          %1291 = vmatmul.mubr.bf16.gmra.mrb[0].mxu0 %v616
          %v1292 = vpop.f32.mrb[0].mxu0
          %v1293 = vadd.f32 %v535, %v1292
          %v1294 = vpop.f32.mrb[0].mxu0
          %v1295 = vadd.f32 %v539, %v1294
          %v1296 = vpop.f32.mrb[0].mxu0
          %v1297 = vadd.f32 %v535, %v1296
          %v1298 = vpop.f32.mrb[0].mxu0
          %v1299 = vadd.f32 %v539, %v1298
          %1300 = vdwg.mxu0
          %1301 = vmatprep.subr.bf16.mxu0 %v1005
          %1302 = vmatpush1.bf16.msra.mxu0 %v1004
          %1303 = vmatprep.subr.bf16.mxu0 %v1021
          %1304 = vmatpush1.bf16.msra.mxu0 %v1020
          %1305 = vmatprep.subr.bf16.mxu0 %v1037
          %1306 = vmatpush1.bf16.msra.mxu0 %v1036
          %1307 = vmatprep.subr.bf16.mxu0 %v1053
          %1308 = vmatpush1.bf16.msra.mxu0 %v1052
          %1309 = vmatprep.subr.bf16.mxu0 %v1069
          %1310 = vmatpush1.bf16.msra.mxu0 %v1068
          %1311 = vmatprep.subr.bf16.mxu0 %v1085
          %1312 = vmatpush1.bf16.msra.mxu0 %v1084
          %1313 = vmatprep.subr.bf16.mxu0 %v1101
          %1314 = vmatpush1.bf16.msra.mxu0 %v1100
          %1315 = vmatprep.subr.bf16.mxu0 %v1117
          %1316 = vmatpush1.bf16.msra.mxu0 %v1116
          %1317 = vmatprep.subr.bf16.mxu0 0
          %1318 = vmatpush1.bf16.msra.mxu0 0
          %1319 = vmatprep.subr.bf16.mxu0 0
          %1320 = vmatpush1.bf16.msra.mxu0 0
          %1321 = vmatprep.subr.bf16.mxu0 0
          %1322 = vmatpush1.bf16.msra.mxu0 0
          %1323 = vmatprep.subr.bf16.mxu0 0
          %1324 = vmatpush1.bf16.msra.mxu0 0
          %1325 = vmatprep.subr.bf16.mxu0 0
          %1326 = vmatpush1.bf16.msra.mxu0 0
          %1327 = vmatprep.subr.bf16.mxu0 0
          %1328 = vmatpush1.bf16.msra.mxu0 0
          %1329 = vmatprep.subr.bf16.mxu0 0
          %1330 = vmatpush1.bf16.msra.mxu0 0
          %1331 = vmatprep.subr.bf16.mxu0 0
          %1332 = vmatpush1.bf16.msra.mxu0 0
          %1333 = vmatprep.mubr.bf16.mxu0 0
          %1334 = vmatmul.mubr.bf16.gmra.mrb[0].mxu0 %v616
          %v1335 = vpop.f32.mrb[0].mxu0
          %v1336 = vadd.f32 %v543, %v1335
          %v1337 = vpop.f32.mrb[0].mxu0
          %v1338 = vadd.f32 %v547, %v1337
          %v1339 = vpop.f32.mrb[0].mxu0
          %v1340 = vadd.f32 %v543, %v1339
          %v1341 = vpop.f32.mrb[0].mxu0
          %v1342 = vadd.f32 %v547, %v1341
          %1343 = vdwg.mxu0
          %1344 = vmatprep.subr.bf16.mxu0 %v1007
          %1345 = vmatpush1.bf16.msra.mxu0 %v1006
          %1346 = vmatprep.subr.bf16.mxu0 %v1023
          %1347 = vmatpush1.bf16.msra.mxu0 %v1022
          %1348 = vmatprep.subr.bf16.mxu0 %v1039
          %1349 = vmatpush1.bf16.msra.mxu0 %v1038
          %1350 = vmatprep.subr.bf16.mxu0 %v1055
          %1351 = vmatpush1.bf16.msra.mxu0 %v1054
          %1352 = vmatprep.subr.bf16.mxu0 %v1071
          %1353 = vmatpush1.bf16.msra.mxu0 %v1070
          %1354 = vmatprep.subr.bf16.mxu0 %v1087
          %1355 = vmatpush1.bf16.msra.mxu0 %v1086
          %1356 = vmatprep.subr.bf16.mxu0 %v1103
          %1357 = vmatpush1.bf16.msra.mxu0 %v1102
          %1358 = vmatprep.subr.bf16.mxu0 %v1119
          %1359 = vmatpush1.bf16.msra.mxu0 %v1118
          %1360 = vmatprep.subr.bf16.mxu0 0
          %1361 = vmatpush1.bf16.msra.mxu0 0
          %1362 = vmatprep.subr.bf16.mxu0 0
          %1363 = vmatpush1.bf16.msra.mxu0 0
          %1364 = vmatprep.subr.bf16.mxu0 0
          %1365 = vmatpush1.bf16.msra.mxu0 0
          %1366 = vmatprep.subr.bf16.mxu0 0
          %1367 = vmatpush1.bf16.msra.mxu0 0
          %1368 = vmatprep.subr.bf16.mxu0 0
          %1369 = vmatpush1.bf16.msra.mxu0 0
          %1370 = vmatprep.subr.bf16.mxu0 0
          %1371 = vmatpush1.bf16.msra.mxu0 0
          %1372 = vmatprep.subr.bf16.mxu0 0
          %1373 = vmatpush1.bf16.msra.mxu0 0
          %1374 = vmatprep.subr.bf16.mxu0 0
          %1375 = vmatpush1.bf16.msra.mxu0 0
          %1376 = vmatprep.mubr.bf16.mxu0 0
          %1377 = vmatmul.mubr.bf16.gmra.mrb[0].mxu0 %v616
          %v1378 = vpop.f32.mrb[0].mxu0
          %v1379 = vadd.f32 %v551, %v1378
          %v1380 = vpop.f32.mrb[0].mxu0
          %v1381 = vadd.f32 %v555, %v1380
          %v1382 = vpop.f32.mrb[0].mxu0
          %v1383 = vadd.f32 %v551, %v1382
          %v1384 = vpop.f32.mrb[0].mxu0
          %v1385 = vadd.f32 %v555, %v1384
          %1386 = vdwg.mxu0
          %1387 = vmatprep.subr.bf16.mxu0 %v1009
          %1388 = vmatpush1.bf16.msra.mxu0 %v1008
          %1389 = vmatprep.subr.bf16.mxu0 %v1025
          %1390 = vmatpush1.bf16.msra.mxu0 %v1024
          %1391 = vmatprep.subr.bf16.mxu0 %v1041
          %1392 = vmatpush1.bf16.msra.mxu0 %v1040
          %1393 = vmatprep.subr.bf16.mxu0 %v1057
          %1394 = vmatpush1.bf16.msra.mxu0 %v1056
          %1395 = vmatprep.subr.bf16.mxu0 %v1073
          %1396 = vmatpush1.bf16.msra.mxu0 %v1072
          %1397 = vmatprep.subr.bf16.mxu0 %v1089
          %1398 = vmatpush1.bf16.msra.mxu0 %v1088
          %1399 = vmatprep.subr.bf16.mxu0 %v1105
          %1400 = vmatpush1.bf16.msra.mxu0 %v1104
          %1401 = vmatprep.subr.bf16.mxu0 %v1121
          %1402 = vmatpush1.bf16.msra.mxu0 %v1120
          %1403 = vmatprep.subr.bf16.mxu0 0
          %1404 = vmatpush1.bf16.msra.mxu0 0
          %1405 = vmatprep.subr.bf16.mxu0 0
          %1406 = vmatpush1.bf16.msra.mxu0 0
          %1407 = vmatprep.subr.bf16.mxu0 0
          %1408 = vmatpush1.bf16.msra.mxu0 0
          %1409 = vmatprep.subr.bf16.mxu0 0
          %1410 = vmatpush1.bf16.msra.mxu0 0
          %1411 = vmatprep.subr.bf16.mxu0 0
          %1412 = vmatpush1.bf16.msra.mxu0 0
          %1413 = vmatprep.subr.bf16.mxu0 0
          %1414 = vmatpush1.bf16.msra.mxu0 0
          %1415 = vmatprep.subr.bf16.mxu0 0
          %1416 = vmatpush1.bf16.msra.mxu0 0
          %1417 = vmatprep.subr.bf16.mxu0 0
          %1418 = vmatpush1.bf16.msra.mxu0 0
          %1419 = vmatprep.mubr.bf16.mxu0 0
          %1420 = vmatmul.mubr.bf16.gmra.mrb[0].mxu0 %v616
          %v1421 = vpop.f32.mrb[0].mxu0
          %v1422 = vadd.f32 %v559, %v1421
          %v1423 = vpop.f32.mrb[0].mxu0
          %v1424 = vadd.f32 %v563, %v1423
          %v1425 = vpop.f32.mrb[0].mxu0
          %v1426 = vadd.f32 %v559, %v1425
          %v1427 = vpop.f32.mrb[0].mxu0
          %v1428 = vadd.f32 %v563, %v1427
          %1429 = vdwg.mxu0
          %1430 = vmatprep.subr.bf16.mxu0 %v1011
          %1431 = vmatpush1.bf16.msra.mxu0 %v1010
          %1432 = vmatprep.subr.bf16.mxu0 %v1027
          %1433 = vmatpush1.bf16.msra.mxu0 %v1026
          %1434 = vmatprep.subr.bf16.mxu0 %v1043
          %1435 = vmatpush1.bf16.msra.mxu0 %v1042
          %1436 = vmatprep.subr.bf16.mxu0 %v1059
          %1437 = vmatpush1.bf16.msra.mxu0 %v1058
          %1438 = vmatprep.subr.bf16.mxu0 %v1075
          %1439 = vmatpush1.bf16.msra.mxu0 %v1074
          %1440 = vmatprep.subr.bf16.mxu0 %v1091
          %1441 = vmatpush1.bf16.msra.mxu0 %v1090
          %1442 = vmatprep.subr.bf16.mxu0 %v1107
          %1443 = vmatpush1.bf16.msra.mxu0 %v1106
          %1444 = vmatprep.subr.bf16.mxu0 %v1123
          %1445 = vmatpush1.bf16.msra.mxu0 %v1122
          %1446 = vmatprep.subr.bf16.mxu0 0
          %1447 = vmatpush1.bf16.msra.mxu0 0
          %1448 = vmatprep.subr.bf16.mxu0 0
          %1449 = vmatpush1.bf16.msra.mxu0 0
          %1450 = vmatprep.subr.bf16.mxu0 0
          %1451 = vmatpush1.bf16.msra.mxu0 0
          %1452 = vmatprep.subr.bf16.mxu0 0
          %1453 = vmatpush1.bf16.msra.mxu0 0
          %1454 = vmatprep.subr.bf16.mxu0 0
          %1455 = vmatpush1.bf16.msra.mxu0 0
          %1456 = vmatprep.subr.bf16.mxu0 0
          %1457 = vmatpush1.bf16.msra.mxu0 0
          %1458 = vmatprep.subr.bf16.mxu0 0
          %1459 = vmatpush1.bf16.msra.mxu0 0
          %1460 = vmatprep.subr.bf16.mxu0 0
          %1461 = vmatpush1.bf16.msra.mxu0 0
          %1462 = vmatprep.mubr.bf16.mxu0 0
          %1463 = vmatmul.mubr.bf16.gmra.mrb[0].mxu0 %v616
          %v1464 = vpop.f32.mrb[0].mxu0
          %v1465 = vadd.f32 %v567, %v1464
          %v1466 = vpop.f32.mrb[0].mxu0
          %v1467 = vadd.f32 %v571, %v1466
          %v1468 = vpop.f32.mrb[0].mxu0
          %v1469 = vadd.f32 %v567, %v1468
          %v1470 = vpop.f32.mrb[0].mxu0
          %v1471 = vadd.f32 %v571, %v1470
          %1472 = vdwg.mxu0
          %1473 = vmatprep.subr.bf16.mxu0 %v1013
          %1474 = vmatpush1.bf16.msra.mxu0 %v1012
          %1475 = vmatprep.subr.bf16.mxu0 %v1029
          %1476 = vmatpush1.bf16.msra.mxu0 %v1028
          %1477 = vmatprep.subr.bf16.mxu0 %v1045
          %1478 = vmatpush1.bf16.msra.mxu0 %v1044
          %1479 = vmatprep.subr.bf16.mxu0 %v1061
          %1480 = vmatpush1.bf16.msra.mxu0 %v1060
          %1481 = vmatprep.subr.bf16.mxu0 %v1077
          %1482 = vmatpush1.bf16.msra.mxu0 %v1076
          %1483 = vmatprep.subr.bf16.mxu0 %v1093
          %1484 = vmatpush1.bf16.msra.mxu0 %v1092
          %1485 = vmatprep.subr.bf16.mxu0 %v1109
          %1486 = vmatpush1.bf16.msra.mxu0 %v1108
          %1487 = vmatprep.subr.bf16.mxu0 %v1125
          %1488 = vmatpush1.bf16.msra.mxu0 %v1124
          %1489 = vmatprep.subr.bf16.mxu0 0
          %1490 = vmatpush1.bf16.msra.mxu0 0
          %1491 = vmatprep.subr.bf16.mxu0 0
          %1492 = vmatpush1.bf16.msra.mxu0 0
          %1493 = vmatprep.subr.bf16.mxu0 0
          %1494 = vmatpush1.bf16.msra.mxu0 0
          %1495 = vmatprep.subr.bf16.mxu0 0
          %1496 = vmatpush1.bf16.msra.mxu0 0
          %1497 = vmatprep.subr.bf16.mxu0 0
          %1498 = vmatpush1.bf16.msra.mxu0 0
          %1499 = vmatprep.subr.bf16.mxu0 0
          %1500 = vmatpush1.bf16.msra.mxu0 0
          %1501 = vmatprep.subr.bf16.mxu0 0
          %1502 = vmatpush1.bf16.msra.mxu0 0
          %1503 = vmatprep.subr.bf16.mxu0 0
          %1504 = vmatpush1.bf16.msra.mxu0 0
          %1505 = vmatprep.mubr.bf16.mxu0 0
          %1506 = vmatmul.mubr.bf16.gmra.mrb[0].mxu0 %v616
          %v1507 = vpop.f32.mrb[0].mxu0
          %v1508 = vadd.f32 %v575, %v1507
          %v1509 = vpop.f32.mrb[0].mxu0
          %v1510 = vadd.f32 %v579, %v1509
          %v1511 = vpop.f32.mrb[0].mxu0
          %v1512 = vadd.f32 %v575, %v1511
          %v1513 = vpop.f32.mrb[0].mxu0
          %v1514 = vadd.f32 %v579, %v1513
          %1515 = vdwg.mxu0
          %1516 = vmatprep.subr.bf16.mxu0 %v1015
          %1517 = vmatpush1.bf16.msra.mxu0 %v1014
          %1518 = vmatprep.subr.bf16.mxu0 %v1031
          %1519 = vmatpush1.bf16.msra.mxu0 %v1030
          %1520 = vmatprep.subr.bf16.mxu0 %v1047
          %1521 = vmatpush1.bf16.msra.mxu0 %v1046
          %1522 = vmatprep.subr.bf16.mxu0 %v1063
          %1523 = vmatpush1.bf16.msra.mxu0 %v1062
          %1524 = vmatprep.subr.bf16.mxu0 %v1079
          %1525 = vmatpush1.bf16.msra.mxu0 %v1078
          %1526 = vmatprep.subr.bf16.mxu0 %v1095
          %1527 = vmatpush1.bf16.msra.mxu0 %v1094
          %1528 = vmatprep.subr.bf16.mxu0 %v1111
          %1529 = vmatpush1.bf16.msra.mxu0 %v1110
          %1530 = vmatprep.subr.bf16.mxu0 %v1127
          %1531 = vmatpush1.bf16.msra.mxu0 %v1126
          %1532 = vmatprep.subr.bf16.mxu0 0
          %1533 = vmatpush1.bf16.msra.mxu0 0
          %1534 = vmatprep.subr.bf16.mxu0 0
          %1535 = vmatpush1.bf16.msra.mxu0 0
          %1536 = vmatprep.subr.bf16.mxu0 0
          %1537 = vmatpush1.bf16.msra.mxu0 0
          %1538 = vmatprep.subr.bf16.mxu0 0
          %1539 = vmatpush1.bf16.msra.mxu0 0
          %1540 = vmatprep.subr.bf16.mxu0 0
          %1541 = vmatpush1.bf16.msra.mxu0 0
          %1542 = vmatprep.subr.bf16.mxu0 0
          %1543 = vmatpush1.bf16.msra.mxu0 0
          %1544 = vmatprep.subr.bf16.mxu0 0
          %1545 = vmatpush1.bf16.msra.mxu0 0
          %1546 = vmatprep.subr.bf16.mxu0 0
          %1547 = vmatpush1.bf16.msra.mxu0 0
          %1548 = vmatprep.mubr.bf16.mxu0 0
          %1549 = vmatmul.mubr.bf16.gmra.mrb[0].mxu0 %v616
          %v1550 = vpop.f32.mrb[0].mxu0
          %v1551 = vadd.f32 %v583, %v1550
          %v1552 = vpop.f32.mrb[0].mxu0
          %v1553 = vadd.f32 %v587, %v1552
          %v1554 = vpop.f32.mrb[0].mxu0
          %v1555 = vadd.f32 %v583, %v1554
          %v1556 = vpop.f32.mrb[0].mxu0
          %v1557 = vadd.f32 %v587, %v1556
          %1558 = vdwg.mxu0
          %1559 = vmatprep.subr.bf16.mxu0 %v1017
          %1560 = vmatpush1.bf16.msra.mxu0 %v1016
          %1561 = vmatprep.subr.bf16.mxu0 %v1033
          %1562 = vmatpush1.bf16.msra.mxu0 %v1032
          %1563 = vmatprep.subr.bf16.mxu0 %v1049
          %1564 = vmatpush1.bf16.msra.mxu0 %v1048
          %1565 = vmatprep.subr.bf16.mxu0 %v1065
          %1566 = vmatpush1.bf16.msra.mxu0 %v1064
          %1567 = vmatprep.subr.bf16.mxu0 %v1081
          %1568 = vmatpush1.bf16.msra.mxu0 %v1080
          %1569 = vmatprep.subr.bf16.mxu0 %v1097
          %1570 = vmatpush1.bf16.msra.mxu0 %v1096
          %1571 = vmatprep.subr.bf16.mxu0 %v1113
          %1572 = vmatpush1.bf16.msra.mxu0 %v1112
          %1573 = vmatprep.subr.bf16.mxu0 %v1129
          %1574 = vmatpush1.bf16.msra.mxu0 %v1128
          %1575 = vmatprep.subr.bf16.mxu0 0
          %1576 = vmatpush1.bf16.msra.mxu0 0
          %1577 = vmatprep.subr.bf16.mxu0 0
          %1578 = vmatpush1.bf16.msra.mxu0 0
          %1579 = vmatprep.subr.bf16.mxu0 0
          %1580 = vmatpush1.bf16.msra.mxu0 0
          %1581 = vmatprep.subr.bf16.mxu0 0
          %1582 = vmatpush1.bf16.msra.mxu0 0
          %1583 = vmatprep.subr.bf16.mxu0 0
          %1584 = vmatpush1.bf16.msra.mxu0 0
          %1585 = vmatprep.subr.bf16.mxu0 0
          %1586 = vmatpush1.bf16.msra.mxu0 0
          %1587 = vmatprep.subr.bf16.mxu0 0
          %1588 = vmatpush1.bf16.msra.mxu0 0
          %1589 = vmatprep.subr.bf16.mxu0 0
          %1590 = vmatpush1.bf16.msra.mxu0 0
          %1591 = vmatprep.mubr.bf16.mxu0 0
          %1592 = vmatmul.mubr.bf16.gmra.mrb[0].mxu0 %v616
          %v1593 = vpop.f32.mrb[0].mxu0
          %v1594 = vadd.f32 %v591, %v1593
          %v1595 = vpop.f32.mrb[0].mxu0
          %v1596 = vadd.f32 %v595, %v1595
          %v1597 = vpop.f32.mrb[0].mxu0
          %v1598 = vadd.f32 %v591, %v1597
          %v1599 = vpop.f32.mrb[0].mxu0
          %v1600 = vadd.f32 %v595, %v1599
          %1601 = vdwg.mxu0
          %vm1602 = vcmp.gt.f32.partialorder %v1293, 0.0
          %vm1603 = vcmp.gt.f32.partialorder %v1295, 0.0
          %vm1604 = vcmp.gt.f32.partialorder %v1336, 0.0
          %vm1605 = vcmp.gt.f32.partialorder %v1338, 0.0
          %vm1606 = vcmp.gt.f32.partialorder %v1379, 0.0
          %vm1607 = vcmp.gt.f32.partialorder %v1381, 0.0
          %vm1608 = vcmp.gt.f32.partialorder %v1422, 0.0
          %vm1609 = vcmp.gt.f32.partialorder %v1424, 0.0
          %vm1610 = vcmp.gt.f32.partialorder %v1465, 0.0
          %vm1611 = vcmp.gt.f32.partialorder %v1467, 0.0
          %vm1612 = vcmp.gt.f32.partialorder %v1508, 0.0
          %vm1613 = vcmp.gt.f32.partialorder %v1510, 0.0
          %vm1614 = vcmp.gt.f32.partialorder %v1551, 0.0
          %vm1615 = vcmp.gt.f32.partialorder %v1553, 0.0
          %vm1616 = vcmp.gt.f32.partialorder %v1594, 0.0
          %vm1617 = vcmp.gt.f32.partialorder %v1596, 0.0
          %vm1618 = vcmp.gt.f32.partialorder %v1297, 0.0
          %vm1619 = vcmp.gt.f32.partialorder %v1299, 0.0
          %vm1620 = vcmp.gt.f32.partialorder %v1340, 0.0
          %vm1621 = vcmp.gt.f32.partialorder %v1342, 0.0
          %vm1622 = vcmp.gt.f32.partialorder %v1383, 0.0
          %vm1623 = vcmp.gt.f32.partialorder %v1385, 0.0
          %vm1624 = vcmp.gt.f32.partialorder %v1426, 0.0
          %vm1625 = vcmp.gt.f32.partialorder %v1428, 0.0
          %vm1626 = vcmp.gt.f32.partialorder %v1469, 0.0
          %vm1627 = vcmp.gt.f32.partialorder %v1471, 0.0
          %vm1628 = vcmp.gt.f32.partialorder %v1512, 0.0
          %vm1629 = vcmp.gt.f32.partialorder %v1514, 0.0
          %vm1630 = vcmp.gt.f32.partialorder %v1555, 0.0
          %vm1631 = vcmp.gt.f32.partialorder %v1557, 0.0
          %vm1632 = vcmp.gt.f32.partialorder %v1598, 0.0
          %vm1633 = vcmp.gt.f32.partialorder %v1600, 0.0
          %v1634 = vmul.f32 %v1293, 0.2
          %v1635 = vmul.f32 %v1295, 0.2
          %v1636 = vmul.f32 %v1336, 0.2
          %v1637 = vmul.f32 %v1338, 0.2
          %v1638 = vmul.f32 %v1379, 0.2
          %v1639 = vmul.f32 %v1381, 0.2
          %v1640 = vmul.f32 %v1422, 0.2
          %v1641 = vmul.f32 %v1424, 0.2
          %v1642 = vmul.f32 %v1465, 0.2
          %v1643 = vmul.f32 %v1467, 0.2
          %v1644 = vmul.f32 %v1508, 0.2
          %v1645 = vmul.f32 %v1510, 0.2
          %v1646 = vmul.f32 %v1551, 0.2
          %v1647 = vmul.f32 %v1553, 0.2
          %v1648 = vmul.f32 %v1594, 0.2
          %v1649 = vmul.f32 %v1596, 0.2
          %v1650 = vmul.f32 %v1297, 0.2
          %v1651 = vmul.f32 %v1299, 0.2
          %v1652 = vmul.f32 %v1340, 0.2
          %v1653 = vmul.f32 %v1342, 0.2
          %v1654 = vmul.f32 %v1383, 0.2
          %v1655 = vmul.f32 %v1385, 0.2
          %v1656 = vmul.f32 %v1426, 0.2
          %v1657 = vmul.f32 %v1428, 0.2
          %v1658 = vmul.f32 %v1469, 0.2
          %v1659 = vmul.f32 %v1471, 0.2
          %v1660 = vmul.f32 %v1512, 0.2
          %v1661 = vmul.f32 %v1514, 0.2
          %v1662 = vmul.f32 %v1555, 0.2
          %v1663 = vmul.f32 %v1557, 0.2
          %v1664 = vmul.f32 %v1598, 0.2
          %v1665 = vmul.f32 %v1600, 0.2
          %v1666 = vsel %vm1602, %v1293, %v1634
          %v1667 = vsel %vm1603, %v1295, %v1635
          %v1668 = vsel %vm1604, %v1336, %v1636
          %v1669 = vsel %vm1605, %v1338, %v1637
          %v1670 = vsel %vm1606, %v1379, %v1638
          %v1671 = vsel %vm1607, %v1381, %v1639
          %v1672 = vsel %vm1608, %v1422, %v1640
          %v1673 = vsel %vm1609, %v1424, %v1641
          %v1674 = vsel %vm1610, %v1465, %v1642
          %v1675 = vsel %vm1611, %v1467, %v1643
          %v1676 = vsel %vm1612, %v1508, %v1644
          %v1677 = vsel %vm1613, %v1510, %v1645
          %v1678 = vsel %vm1614, %v1551, %v1646
          %v1679 = vsel %vm1615, %v1553, %v1647
          %v1680 = vsel %vm1616, %v1594, %v1648
          %v1681 = vsel %vm1617, %v1596, %v1649
          %v1682 = vsel %vm1618, %v1297, %v1650
          %v1683 = vsel %vm1619, %v1299, %v1651
          %v1684 = vsel %vm1620, %v1340, %v1652
          %v1685 = vsel %vm1621, %v1342, %v1653
          %v1686 = vsel %vm1622, %v1383, %v1654
          %v1687 = vsel %vm1623, %v1385, %v1655
          %v1688 = vsel %vm1624, %v1426, %v1656
          %v1689 = vsel %vm1625, %v1428, %v1657
          %v1690 = vsel %vm1626, %v1469, %v1658
          %v1691 = vsel %vm1627, %v1471, %v1659
          %v1692 = vsel %vm1628, %v1512, %v1660
          %v1693 = vsel %vm1629, %v1514, %v1661
          %v1694 = vsel %vm1630, %v1555, %v1662
          %v1695 = vsel %vm1631, %v1557, %v1663
          %v1696 = vsel %vm1632, %v1598, %v1664
          %v1697 = vsel %vm1633, %v1600, %v1665
          %v1698 = vpack.c.bf16 %v1682, %v1666
          %v1699 = vpack.c.bf16 %v1683, %v1667
          %v1700 = vpack.c.bf16 %v1684, %v1668
          %v1701 = vpack.c.bf16 %v1685, %v1669
          %v1702 = vpack.c.bf16 %v1686, %v1670
          %v1703 = vpack.c.bf16 %v1687, %v1671
          %v1704 = vpack.c.bf16 %v1688, %v1672
          %v1705 = vpack.c.bf16 %v1689, %v1673
          %v1706 = vpack.c.bf16 %v1690, %v1674
          %v1707 = vpack.c.bf16 %v1691, %v1675
          %v1708 = vpack.c.bf16 %v1692, %v1676
          %v1709 = vpack.c.bf16 %v1693, %v1677
          %v1710 = vpack.c.bf16 %v1694, %v1678
          %v1711 = vpack.c.bf16 %v1695, %v1679
          %v1712 = vpack.c.bf16 %v1696, %v1680
          %v1713 = vpack.c.bf16 %v1697, %v1681
          %1714 = vst [vmem:[#allocation2] sm:$0xff] %v1698
          %1715 = vst [vmem:[#allocation2 + $0x8] sm:$0xff] %v1699
          %1716 = vst [vmem:[#allocation2 + $0x10] sm:$0xff] %v1700
          %1717 = vst [vmem:[#allocation2 + $0x18] sm:$0xff] %v1701
          %1718 = vst [vmem:[#allocation2 + $0x20] sm:$0xff] %v1702
          %1719 = vst [vmem:[#allocation2 + $0x28] sm:$0xff] %v1703
          %1720 = vst [vmem:[#allocation2 + $0x30] sm:$0xff] %v1704
          %1721 = vst [vmem:[#allocation2 + $0x38] sm:$0xff] %v1705
          %1722 = vst [vmem:[#allocation2 + $0x40] sm:$0xff] %v1706
          %1723 = vst [vmem:[#allocation2 + $0x48] sm:$0xff] %v1707
          %1724 = vst [vmem:[#allocation2 + $0x50] sm:$0xff] %v1708
          %1725 = vst [vmem:[#allocation2 + $0x58] sm:$0xff] %v1709
          %1726 = vst [vmem:[#allocation2 + $0x60] sm:$0xff] %v1710
          %1727 = vst [vmem:[#allocation2 + $0x68] sm:$0xff] %v1711
          %1728 = vst [vmem:[#allocation2 + $0x70] sm:$0xff] %v1712
          %1729 = vst [vmem:[#allocation2 + $0x78] sm:$0xff] %v1713
          %1730 = vst [vmem:[#allocation3] sm:$0xff] 0.0
          %1731 = vst [vmem:[#allocation3 + $0x8] sm:$0xff] 0.0
          %1732 = vst [vmem:[#allocation3 + $0x10] sm:$0xff] 0.0
          %1733 = vst [vmem:[#allocation3 + $0x18] sm:$0xff] 0.0
          %1734 = vst [vmem:[#allocation3 + $0x20] sm:$0xff] 0.0
          %1735 = vst [vmem:[#allocation3 + $0x28] sm:$0xff] 0.0
          %1736 = vst [vmem:[#allocation3 + $0x30] sm:$0xff] 0.0
          %1737 = vst [vmem:[#allocation3 + $0x38] sm:$0xff] 0.0
          %1738 = vst [vmem:[#allocation3 + $0x40] sm:$0xff] 0.0
          %1739 = vst [vmem:[#allocation3 + $0x48] sm:$0xff] 0.0
          %1740 = vst [vmem:[#allocation3 + $0x50] sm:$0xff] 0.0
          %1741 = vst [vmem:[#allocation3 + $0x58] sm:$0xff] 0.0
          %1742 = vst [vmem:[#allocation3 + $0x60] sm:$0xff] 0.0
          %1743 = vst [vmem:[#allocation3 + $0x68] sm:$0xff] 0.0
          %1744 = vst [vmem:[#allocation3 + $0x70] sm:$0xff] 0.0
          %1745 = vst [vmem:[#allocation3 + $0x78] sm:$0xff] 0.0
        $region68: #{regularizer_forward.1} parent=43 // pred_fallthru
          _
        %v1746 = vld [vmem:[#allocation2] sm:$0xff]
        %v1747 = vld [vmem:[#allocation2 + $0x8] sm:$0xff]
        %v1748 = vld [vmem:[#allocation2 + $0x10] sm:$0xff]
        %v1749 = vld [vmem:[#allocation2 + $0x18] sm:$0xff]
        %v1750 = vld [vmem:[#allocation2 + $0x20] sm:$0xff]
        %v1751 = vld [vmem:[#allocation2 + $0x28] sm:$0xff]
        %v1752 = vld [vmem:[#allocation2 + $0x30] sm:$0xff]
        %v1753 = vld [vmem:[#allocation2 + $0x38] sm:$0xff]
        %v1754 = vld [vmem:[#allocation2 + $0x40] sm:$0xff]
        %v1755 = vld [vmem:[#allocation2 + $0x48] sm:$0xff]
        %v1756 = vld [vmem:[#allocation2 + $0x50] sm:$0xff]
        %v1757 = vld [vmem:[#allocation2 + $0x58] sm:$0xff]
        %v1758 = vld [vmem:[#allocation2 + $0x60] sm:$0xff]
        %v1759 = vld [vmem:[#allocation2 + $0x68] sm:$0xff]
        %v1760 = vld [vmem:[#allocation2 + $0x70] sm:$0xff]
        %v1761 = vld [vmem:[#allocation2 + $0x78] sm:$0xff]
        %v1762 = vld [vmem:[%s326] sm:$0xff]
        %v1763 = vld [vmem:[%s326 + $0x8] sm:$0xff]
        %v1764 = vld [vmem:[%s326 + $0x10] sm:$0xff]
        %v1765 = vld [vmem:[%s326 + $0x18] sm:$0xff]
        %v1766 = vld [vmem:[%s326 + $0x20] sm:$0xff]
        %v1767 = vld [vmem:[%s326 + $0x28] sm:$0xff]
        %v1768 = vld [vmem:[%s326 + $0x30] sm:$0xff]
        %v1769 = vld [vmem:[%s326 + $0x38] sm:$0xff]
        %v1770 = vld [vmem:[%s326 + $0x40] sm:$0xff]
        %v1771 = vld [vmem:[%s326 + $0x48] sm:$0xff]
        %v1772 = vld [vmem:[%s326 + $0x50] sm:$0xff]
        %v1773 = vld [vmem:[%s326 + $0x58] sm:$0xff]
        %v1774 = vld [vmem:[%s326 + $0x60] sm:$0xff]
        %v1775 = vld [vmem:[%s326 + $0x68] sm:$0xff]
        %v1776 = vld [vmem:[%s326 + $0x70] sm:$0xff]
        %v1777 = vld [vmem:[%s326 + $0x78] sm:$0xff]
        %v1778 = vld [vmem:[%s326 + $0x80] sm:$0xff]
        %v1779 = vld [vmem:[%s326 + $0x88] sm:$0xff]
        %v1780 = vld [vmem:[%s326 + $0x90] sm:$0xff]
        %v1781 = vld [vmem:[%s326 + $0x98] sm:$0xff]
        %v1782 = vld [vmem:[%s326 + $0xa0] sm:$0xff]
        %v1783 = vld [vmem:[%s326 + $0xa8] sm:$0xff]
        %v1784 = vld [vmem:[%s326 + $0xb0] sm:$0xff]
        %v1785 = vld [vmem:[%s326 + $0xb8] sm:$0xff]
        %v1786 = vld [vmem:[%s326 + $0xc0] sm:$0xff]
        %v1787 = vld [vmem:[%s326 + $0xc8] sm:$0xff]
        %v1788 = vld [vmem:[%s326 + $0xd0] sm:$0xff]
        %v1789 = vld [vmem:[%s326 + $0xd8] sm:$0xff]
        %v1790 = vld [vmem:[%s326 + $0xe0] sm:$0xff]
        %v1791 = vld [vmem:[%s326 + $0xe8] sm:$0xff]
        %v1792 = vld [vmem:[%s326 + $0xf0] sm:$0xff]
        %v1793 = vld [vmem:[%s326 + $0xf8] sm:$0xff]
        %v1794 = vld [vmem:[%s326 + $0x100] sm:$0xff]
        %v1795 = vld [vmem:[%s326 + $0x108] sm:$0xff]
        %v1796 = vld [vmem:[%s326 + $0x110] sm:$0xff]
        %v1797 = vld [vmem:[%s326 + $0x118] sm:$0xff]
        %v1798 = vld [vmem:[%s326 + $0x120] sm:$0xff]
        %v1799 = vld [vmem:[%s326 + $0x128] sm:$0xff]
        %v1800 = vld [vmem:[%s326 + $0x130] sm:$0xff]
        %v1801 = vld [vmem:[%s326 + $0x138] sm:$0xff]
        %v1802 = vld [vmem:[%s326 + $0x140] sm:$0xff]
        %v1803 = vld [vmem:[%s326 + $0x148] sm:$0xff]
        %v1804 = vld [vmem:[%s326 + $0x150] sm:$0xff]
        %v1805 = vld [vmem:[%s326 + $0x158] sm:$0xff]
        %v1806 = vld [vmem:[%s326 + $0x160] sm:$0xff]
        %v1807 = vld [vmem:[%s326 + $0x168] sm:$0xff]
        %v1808 = vld [vmem:[%s326 + $0x170] sm:$0xff]
        %v1809 = vld [vmem:[%s326 + $0x178] sm:$0xff]
        %v1810 = vld [vmem:[%s326 + $0x180] sm:$0xff]
        %v1811 = vld [vmem:[%s326 + $0x188] sm:$0xff]
        %v1812 = vld [vmem:[%s326 + $0x190] sm:$0xff]
        %v1813 = vld [vmem:[%s326 + $0x198] sm:$0xff]
        %v1814 = vld [vmem:[%s326 + $0x1a0] sm:$0xff]
        %v1815 = vld [vmem:[%s326 + $0x1a8] sm:$0xff]
        %v1816 = vld [vmem:[%s326 + $0x1b0] sm:$0xff]
        %v1817 = vld [vmem:[%s326 + $0x1b8] sm:$0xff]
        %v1818 = vld [vmem:[%s326 + $0x1c0] sm:$0xff]
        %v1819 = vld [vmem:[%s326 + $0x1c8] sm:$0xff]
        %v1820 = vld [vmem:[%s326 + $0x1d0] sm:$0xff]
        %v1821 = vld [vmem:[%s326 + $0x1d8] sm:$0xff]
        %v1822 = vld [vmem:[%s326 + $0x1e0] sm:$0xff]
        %v1823 = vld [vmem:[%s326 + $0x1e8] sm:$0xff]
        %v1824 = vld [vmem:[%s326 + $0x1f0] sm:$0xff]
        %v1825 = vld [vmem:[%s326 + $0x1f8] sm:$0xff]
        %v1826 = vld [vmem:[%s326 + $0x200] sm:$0xff]
        %v1827 = vld [vmem:[%s326 + $0x208] sm:$0xff]
        %v1828 = vld [vmem:[%s326 + $0x210] sm:$0xff]
        %v1829 = vld [vmem:[%s326 + $0x218] sm:$0xff]
        %v1830 = vld [vmem:[%s326 + $0x220] sm:$0xff]
        %v1831 = vld [vmem:[%s326 + $0x228] sm:$0xff]
        %v1832 = vld [vmem:[%s326 + $0x230] sm:$0xff]
        %v1833 = vld [vmem:[%s326 + $0x238] sm:$0xff]
        %v1834 = vld [vmem:[%s326 + $0x240] sm:$0xff]
        %v1835 = vld [vmem:[%s326 + $0x248] sm:$0xff]
        %v1836 = vld [vmem:[%s326 + $0x250] sm:$0xff]
        %v1837 = vld [vmem:[%s326 + $0x258] sm:$0xff]
        %v1838 = vld [vmem:[%s326 + $0x260] sm:$0xff]
        %v1839 = vld [vmem:[%s326 + $0x268] sm:$0xff]
        %v1840 = vld [vmem:[%s326 + $0x270] sm:$0xff]
        %v1841 = vld [vmem:[%s326 + $0x278] sm:$0xff]
        %v1842 = vld [vmem:[%s326 + $0x280] sm:$0xff]
        %v1843 = vld [vmem:[%s326 + $0x288] sm:$0xff]
        %v1844 = vld [vmem:[%s326 + $0x290] sm:$0xff]
        %v1845 = vld [vmem:[%s326 + $0x298] sm:$0xff]
        %v1846 = vld [vmem:[%s326 + $0x2a0] sm:$0xff]
        %v1847 = vld [vmem:[%s326 + $0x2a8] sm:$0xff]
        %v1848 = vld [vmem:[%s326 + $0x2b0] sm:$0xff]
        %v1849 = vld [vmem:[%s326 + $0x2b8] sm:$0xff]
        %v1850 = vld [vmem:[%s326 + $0x2c0] sm:$0xff]
        %v1851 = vld [vmem:[%s326 + $0x2c8] sm:$0xff]
        %v1852 = vld [vmem:[%s326 + $0x2d0] sm:$0xff]
        %v1853 = vld [vmem:[%s326 + $0x2d8] sm:$0xff]
        %v1854 = vld [vmem:[%s326 + $0x2e0] sm:$0xff]
        %v1855 = vld [vmem:[%s326 + $0x2e8] sm:$0xff]
        %v1856 = vld [vmem:[%s326 + $0x2f0] sm:$0xff]
        %v1857 = vld [vmem:[%s326 + $0x2f8] sm:$0xff]
        %v1858 = vld [vmem:[%s326 + $0x300] sm:$0xff]
        %v1859 = vld [vmem:[%s326 + $0x308] sm:$0xff]
        %v1860 = vld [vmem:[%s326 + $0x310] sm:$0xff]
        %v1861 = vld [vmem:[%s326 + $0x318] sm:$0xff]
        %v1862 = vld [vmem:[%s326 + $0x320] sm:$0xff]
        %v1863 = vld [vmem:[%s326 + $0x328] sm:$0xff]
        %v1864 = vld [vmem:[%s326 + $0x330] sm:$0xff]
        %v1865 = vld [vmem:[%s326 + $0x338] sm:$0xff]
        %v1866 = vld [vmem:[%s326 + $0x340] sm:$0xff]
        %v1867 = vld [vmem:[%s326 + $0x348] sm:$0xff]
        %v1868 = vld [vmem:[%s326 + $0x350] sm:$0xff]
        %v1869 = vld [vmem:[%s326 + $0x358] sm:$0xff]
        %v1870 = vld [vmem:[%s326 + $0x360] sm:$0xff]
        %v1871 = vld [vmem:[%s326 + $0x368] sm:$0xff]
        %v1872 = vld [vmem:[%s326 + $0x370] sm:$0xff]
        %v1873 = vld [vmem:[%s326 + $0x378] sm:$0xff]
        %v1874 = vld [vmem:[%s326 + $0x380] sm:$0xff]
        %v1875 = vld [vmem:[%s326 + $0x388] sm:$0xff]
        %v1876 = vld [vmem:[%s326 + $0x390] sm:$0xff]
        %v1877 = vld [vmem:[%s326 + $0x398] sm:$0xff]
        %v1878 = vld [vmem:[%s326 + $0x3a0] sm:$0xff]
        %v1879 = vld [vmem:[%s326 + $0x3a8] sm:$0xff]
        %v1880 = vld [vmem:[%s326 + $0x3b0] sm:$0xff]
        %v1881 = vld [vmem:[%s326 + $0x3b8] sm:$0xff]
        %v1882 = vld [vmem:[%s326 + $0x3c0] sm:$0xff]
        %v1883 = vld [vmem:[%s326 + $0x3c8] sm:$0xff]
        %v1884 = vld [vmem:[%s326 + $0x3d0] sm:$0xff]
        %v1885 = vld [vmem:[%s326 + $0x3d8] sm:$0xff]
        %v1886 = vld [vmem:[%s326 + $0x3e0] sm:$0xff]
        %v1887 = vld [vmem:[%s326 + $0x3e8] sm:$0xff]
        %v1888 = vld [vmem:[%s326 + $0x3f0] sm:$0xff]
        %v1889 = vld [vmem:[%s326 + $0x3f8] sm:$0xff]
        %v1890 = vld [vmem:[%s326 + $0x400] sm:$0xff]
        %v1891 = vld [vmem:[%s326 + $0x408] sm:$0xff]
        %v1892 = vld [vmem:[%s326 + $0x410] sm:$0xff]
        %v1893 = vld [vmem:[%s326 + $0x418] sm:$0xff]
        %v1894 = vld [vmem:[%s326 + $0x420] sm:$0xff]
        %v1895 = vld [vmem:[%s326 + $0x428] sm:$0xff]
        %v1896 = vld [vmem:[%s326 + $0x430] sm:$0xff]
        %v1897 = vld [vmem:[%s326 + $0x438] sm:$0xff]
        %v1898 = vld [vmem:[%s326 + $0x440] sm:$0xff]
        %v1899 = vld [vmem:[%s326 + $0x448] sm:$0xff]
        %v1900 = vld [vmem:[%s326 + $0x450] sm:$0xff]
        %v1901 = vld [vmem:[%s326 + $0x458] sm:$0xff]
        %v1902 = vld [vmem:[%s326 + $0x460] sm:$0xff]
        %v1903 = vld [vmem:[%s326 + $0x468] sm:$0xff]
        %v1904 = vld [vmem:[%s326 + $0x470] sm:$0xff]
        %v1905 = vld [vmem:[%s326 + $0x478] sm:$0xff]
        %v1906 = vld [vmem:[%s326 + $0x480] sm:$0xff]
        %v1907 = vld [vmem:[%s326 + $0x488] sm:$0xff]
        %v1908 = vld [vmem:[%s326 + $0x490] sm:$0xff]
        %v1909 = vld [vmem:[%s326 + $0x498] sm:$0xff]
        %v1910 = vld [vmem:[%s326 + $0x4a0] sm:$0xff]
        %v1911 = vld [vmem:[%s326 + $0x4a8] sm:$0xff]
        %v1912 = vld [vmem:[%s326 + $0x4b0] sm:$0xff]
        %v1913 = vld [vmem:[%s326 + $0x4b8] sm:$0xff]
        %v1914 = vld [vmem:[%s326 + $0x4c0] sm:$0xff]
        %v1915 = vld [vmem:[%s326 + $0x4c8] sm:$0xff]
        %v1916 = vld [vmem:[%s326 + $0x4d0] sm:$0xff]
        %v1917 = vld [vmem:[%s326 + $0x4d8] sm:$0xff]
        %v1918 = vld [vmem:[%s326 + $0x4e0] sm:$0xff]
        %v1919 = vld [vmem:[%s326 + $0x4e8] sm:$0xff]
        %v1920 = vld [vmem:[%s326 + $0x4f0] sm:$0xff]
        %v1921 = vld [vmem:[%s326 + $0x4f8] sm:$0xff]
        %v1922 = vld [vmem:[%s326 + $0x500] sm:$0xff]
        %v1923 = vld [vmem:[%s326 + $0x508] sm:$0xff]
        %v1924 = vld [vmem:[%s326 + $0x510] sm:$0xff]
        %v1925 = vld [vmem:[%s326 + $0x518] sm:$0xff]
        %v1926 = vld [vmem:[%s326 + $0x520] sm:$0xff]
        %v1927 = vld [vmem:[%s326 + $0x528] sm:$0xff]
        %v1928 = vld [vmem:[%s326 + $0x530] sm:$0xff]
        %v1929 = vld [vmem:[%s326 + $0x538] sm:$0xff]
        %v1930 = vld [vmem:[%s326 + $0x540] sm:$0xff]
        %v1931 = vld [vmem:[%s326 + $0x548] sm:$0xff]
        %v1932 = vld [vmem:[%s326 + $0x550] sm:$0xff]
        %v1933 = vld [vmem:[%s326 + $0x558] sm:$0xff]
        %v1934 = vld [vmem:[%s326 + $0x560] sm:$0xff]
        %v1935 = vld [vmem:[%s326 + $0x568] sm:$0xff]
        %v1936 = vld [vmem:[%s326 + $0x570] sm:$0xff]
        %v1937 = vld [vmem:[%s326 + $0x578] sm:$0xff]
        %v1938 = vld [vmem:[%s326 + $0x580] sm:$0xff]
        %v1939 = vld [vmem:[%s326 + $0x588] sm:$0xff]
        %v1940 = vld [vmem:[%s326 + $0x590] sm:$0xff]
        %v1941 = vld [vmem:[%s326 + $0x598] sm:$0xff]
        %v1942 = vld [vmem:[%s326 + $0x5a0] sm:$0xff]
        %v1943 = vld [vmem:[%s326 + $0x5a8] sm:$0xff]
        %v1944 = vld [vmem:[%s326 + $0x5b0] sm:$0xff]
        %v1945 = vld [vmem:[%s326 + $0x5b8] sm:$0xff]
        %v1946 = vld [vmem:[%s326 + $0x5c0] sm:$0xff]
        %v1947 = vld [vmem:[%s326 + $0x5c8] sm:$0xff]
        %v1948 = vld [vmem:[%s326 + $0x5d0] sm:$0xff]
        %v1949 = vld [vmem:[%s326 + $0x5d8] sm:$0xff]
        %v1950 = vld [vmem:[%s326 + $0x5e0] sm:$0xff]
        %v1951 = vld [vmem:[%s326 + $0x5e8] sm:$0xff]
        %v1952 = vld [vmem:[%s326 + $0x5f0] sm:$0xff]
        %v1953 = vld [vmem:[%s326 + $0x5f8] sm:$0xff]
        %v1954 = vld [vmem:[%s326 + $0x600] sm:$0xff]
        %v1955 = vld [vmem:[%s326 + $0x608] sm:$0xff]
        %v1956 = vld [vmem:[%s326 + $0x610] sm:$0xff]
        %v1957 = vld [vmem:[%s326 + $0x618] sm:$0xff]
        %v1958 = vld [vmem:[%s326 + $0x620] sm:$0xff]
        %v1959 = vld [vmem:[%s326 + $0x628] sm:$0xff]
        %v1960 = vld [vmem:[%s326 + $0x630] sm:$0xff]
        %v1961 = vld [vmem:[%s326 + $0x638] sm:$0xff]
        %v1962 = vld [vmem:[%s326 + $0x640] sm:$0xff]
        %v1963 = vld [vmem:[%s326 + $0x648] sm:$0xff]
        %v1964 = vld [vmem:[%s326 + $0x650] sm:$0xff]
        %v1965 = vld [vmem:[%s326 + $0x658] sm:$0xff]
        %v1966 = vld [vmem:[%s326 + $0x660] sm:$0xff]
        %v1967 = vld [vmem:[%s326 + $0x668] sm:$0xff]
        %v1968 = vld [vmem:[%s326 + $0x670] sm:$0xff]
        %v1969 = vld [vmem:[%s326 + $0x678] sm:$0xff]
        %v1970 = vld [vmem:[%s326 + $0x680] sm:$0xff]
        %v1971 = vld [vmem:[%s326 + $0x688] sm:$0xff]
        %v1972 = vld [vmem:[%s326 + $0x690] sm:$0xff]
        %v1973 = vld [vmem:[%s326 + $0x698] sm:$0xff]
        %v1974 = vld [vmem:[%s326 + $0x6a0] sm:$0xff]
        %v1975 = vld [vmem:[%s326 + $0x6a8] sm:$0xff]
        %v1976 = vld [vmem:[%s326 + $0x6b0] sm:$0xff]
        %v1977 = vld [vmem:[%s326 + $0x6b8] sm:$0xff]
        %v1978 = vld [vmem:[%s326 + $0x6c0] sm:$0xff]
        %v1979 = vld [vmem:[%s326 + $0x6c8] sm:$0xff]
        %v1980 = vld [vmem:[%s326 + $0x6d0] sm:$0xff]
        %v1981 = vld [vmem:[%s326 + $0x6d8] sm:$0xff]
        %v1982 = vld [vmem:[%s326 + $0x6e0] sm:$0xff]
        %v1983 = vld [vmem:[%s326 + $0x6e8] sm:$0xff]
        %v1984 = vld [vmem:[%s326 + $0x6f0] sm:$0xff]
        %v1985 = vld [vmem:[%s326 + $0x6f8] sm:$0xff]
        %v1986 = vld [vmem:[%s326 + $0x700] sm:$0xff]
        %v1987 = vld [vmem:[%s326 + $0x708] sm:$0xff]
        %v1988 = vld [vmem:[%s326 + $0x710] sm:$0xff]
        %v1989 = vld [vmem:[%s326 + $0x718] sm:$0xff]
        %v1990 = vld [vmem:[%s326 + $0x720] sm:$0xff]
        %v1991 = vld [vmem:[%s326 + $0x728] sm:$0xff]
        %v1992 = vld [vmem:[%s326 + $0x730] sm:$0xff]
        %v1993 = vld [vmem:[%s326 + $0x738] sm:$0xff]
        %v1994 = vld [vmem:[%s326 + $0x740] sm:$0xff]
        %v1995 = vld [vmem:[%s326 + $0x748] sm:$0xff]
        %v1996 = vld [vmem:[%s326 + $0x750] sm:$0xff]
        %v1997 = vld [vmem:[%s326 + $0x758] sm:$0xff]
        %v1998 = vld [vmem:[%s326 + $0x760] sm:$0xff]
        %v1999 = vld [vmem:[%s326 + $0x768] sm:$0xff]
        %v2000 = vld [vmem:[%s326 + $0x770] sm:$0xff]
        %v2001 = vld [vmem:[%s326 + $0x778] sm:$0xff]
        %v2002 = vld [vmem:[%s326 + $0x780] sm:$0xff]
        %v2003 = vld [vmem:[%s326 + $0x788] sm:$0xff]
        %v2004 = vld [vmem:[%s326 + $0x790] sm:$0xff]
        %v2005 = vld [vmem:[%s326 + $0x798] sm:$0xff]
        %v2006 = vld [vmem:[%s326 + $0x7a0] sm:$0xff]
        %v2007 = vld [vmem:[%s326 + $0x7a8] sm:$0xff]
        %v2008 = vld [vmem:[%s326 + $0x7b0] sm:$0xff]
        %v2009 = vld [vmem:[%s326 + $0x7b8] sm:$0xff]
        %v2010 = vld [vmem:[%s326 + $0x7c0] sm:$0xff]
        %v2011 = vld [vmem:[%s326 + $0x7c8] sm:$0xff]
        %v2012 = vld [vmem:[%s326 + $0x7d0] sm:$0xff]
        %v2013 = vld [vmem:[%s326 + $0x7d8] sm:$0xff]
        %v2014 = vld [vmem:[%s326 + $0x7e0] sm:$0xff]
        %v2015 = vld [vmem:[%s326 + $0x7e8] sm:$0xff]
        %v2016 = vld [vmem:[%s326 + $0x7f0] sm:$0xff]
        %v2017 = vld [vmem:[%s326 + $0x7f8] sm:$0xff]
        %v2018 = vld [vmem:[%s326 + $0x800] sm:$0xff]
        %v2019 = vld [vmem:[%s326 + $0x808] sm:$0xff]
        %v2020 = vld [vmem:[%s326 + $0x810] sm:$0xff]
        %v2021 = vld [vmem:[%s326 + $0x818] sm:$0xff]
        %v2022 = vld [vmem:[%s326 + $0x820] sm:$0xff]
        %v2023 = vld [vmem:[%s326 + $0x828] sm:$0xff]
        %v2024 = vld [vmem:[%s326 + $0x830] sm:$0xff]
        %v2025 = vld [vmem:[%s326 + $0x838] sm:$0xff]
        %v2026 = vld [vmem:[%s326 + $0x840] sm:$0xff]
        %v2027 = vld [vmem:[%s326 + $0x848] sm:$0xff]
        %v2028 = vld [vmem:[%s326 + $0x850] sm:$0xff]
        %v2029 = vld [vmem:[%s326 + $0x858] sm:$0xff]
        %v2030 = vld [vmem:[%s326 + $0x860] sm:$0xff]
        %v2031 = vld [vmem:[%s326 + $0x868] sm:$0xff]
        %v2032 = vld [vmem:[%s326 + $0x870] sm:$0xff]
        %v2033 = vld [vmem:[%s326 + $0x878] sm:$0xff]
        %v2034 = vld [vmem:[%s326 + $0x880] sm:$0xff]
        %v2035 = vld [vmem:[%s326 + $0x888] sm:$0xff]
        %v2036 = vld [vmem:[%s326 + $0x890] sm:$0xff]
        %v2037 = vld [vmem:[%s326 + $0x898] sm:$0xff]
        %v2038 = vld [vmem:[%s326 + $0x8a0] sm:$0xff]
        %v2039 = vld [vmem:[%s326 + $0x8a8] sm:$0xff]
        %v2040 = vld [vmem:[%s326 + $0x8b0] sm:$0xff]
        %v2041 = vld [vmem:[%s326 + $0x8b8] sm:$0xff]
        %v2042 = vld [vmem:[%s326 + $0x8c0] sm:$0xff]
        %v2043 = vld [vmem:[%s326 + $0x8c8] sm:$0xff]
        %v2044 = vld [vmem:[%s326 + $0x8d0] sm:$0xff]
        %v2045 = vld [vmem:[%s326 + $0x8d8] sm:$0xff]
        %v2046 = vld [vmem:[%s326 + $0x8e0] sm:$0xff]
        %v2047 = vld [vmem:[%s326 + $0x8e8] sm:$0xff]
        %v2048 = vld [vmem:[%s326 + $0x8f0] sm:$0xff]
        %v2049 = vld [vmem:[%s326 + $0x8f8] sm:$0xff]
        %v2050 = vld [vmem:[%s326 + $0x900] sm:$0xff]
        %v2051 = vld [vmem:[%s326 + $0x908] sm:$0xff]
        %v2052 = vld [vmem:[%s326 + $0x910] sm:$0xff]
        %v2053 = vld [vmem:[%s326 + $0x918] sm:$0xff]
        %v2054 = vld [vmem:[%s326 + $0x920] sm:$0xff]
        %v2055 = vld [vmem:[%s326 + $0x928] sm:$0xff]
        %v2056 = vld [vmem:[%s326 + $0x930] sm:$0xff]
        %v2057 = vld [vmem:[%s326 + $0x938] sm:$0xff]
        %v2058 = vld [vmem:[%s326 + $0x940] sm:$0xff]
        %v2059 = vld [vmem:[%s326 + $0x948] sm:$0xff]
        %v2060 = vld [vmem:[%s326 + $0x950] sm:$0xff]
        %v2061 = vld [vmem:[%s326 + $0x958] sm:$0xff]
        %v2062 = vld [vmem:[%s326 + $0x960] sm:$0xff]
        %v2063 = vld [vmem:[%s326 + $0x968] sm:$0xff]
        %v2064 = vld [vmem:[%s326 + $0x970] sm:$0xff]
        %v2065 = vld [vmem:[%s326 + $0x978] sm:$0xff]
        %v2066 = vld [vmem:[%s326 + $0x980] sm:$0xff]
        %v2067 = vld [vmem:[%s326 + $0x988] sm:$0xff]
        %v2068 = vld [vmem:[%s326 + $0x990] sm:$0xff]
        %v2069 = vld [vmem:[%s326 + $0x998] sm:$0xff]
        %v2070 = vld [vmem:[%s326 + $0x9a0] sm:$0xff]
        %v2071 = vld [vmem:[%s326 + $0x9a8] sm:$0xff]
        %v2072 = vld [vmem:[%s326 + $0x9b0] sm:$0xff]
        %v2073 = vld [vmem:[%s326 + $0x9b8] sm:$0xff]
        %v2074 = vld [vmem:[%s326 + $0x9c0] sm:$0xff]
        %v2075 = vld [vmem:[%s326 + $0x9c8] sm:$0xff]
        %v2076 = vld [vmem:[%s326 + $0x9d0] sm:$0xff]
        %v2077 = vld [vmem:[%s326 + $0x9d8] sm:$0xff]
        %v2078 = vld [vmem:[%s326 + $0x9e0] sm:$0xff]
        %v2079 = vld [vmem:[%s326 + $0x9e8] sm:$0xff]
        %v2080 = vld [vmem:[%s326 + $0x9f0] sm:$0xff]
        %v2081 = vld [vmem:[%s326 + $0x9f8] sm:$0xff]
        %v2082 = vld [vmem:[%s326 + $0xa00] sm:$0xff]
        %v2083 = vld [vmem:[%s326 + $0xa08] sm:$0xff]
        %v2084 = vld [vmem:[%s326 + $0xa10] sm:$0xff]
        %v2085 = vld [vmem:[%s326 + $0xa18] sm:$0xff]
        %v2086 = vld [vmem:[%s326 + $0xa20] sm:$0xff]
        %v2087 = vld [vmem:[%s326 + $0xa28] sm:$0xff]
        %v2088 = vld [vmem:[%s326 + $0xa30] sm:$0xff]
        %v2089 = vld [vmem:[%s326 + $0xa38] sm:$0xff]
        %v2090 = vld [vmem:[%s326 + $0xa40] sm:$0xff]
        %v2091 = vld [vmem:[%s326 + $0xa48] sm:$0xff]
        %v2092 = vld [vmem:[%s326 + $0xa50] sm:$0xff]
        %v2093 = vld [vmem:[%s326 + $0xa58] sm:$0xff]
        %v2094 = vld [vmem:[%s326 + $0xa60] sm:$0xff]
        %v2095 = vld [vmem:[%s326 + $0xa68] sm:$0xff]
        %v2096 = vld [vmem:[%s326 + $0xa70] sm:$0xff]
        %v2097 = vld [vmem:[%s326 + $0xa78] sm:$0xff]
        %v2098 = vld [vmem:[%s326 + $0xa80] sm:$0xff]
        %v2099 = vld [vmem:[%s326 + $0xa88] sm:$0xff]
        %v2100 = vld [vmem:[%s326 + $0xa90] sm:$0xff]
        %v2101 = vld [vmem:[%s326 + $0xa98] sm:$0xff]
        %v2102 = vld [vmem:[%s326 + $0xaa0] sm:$0xff]
        %v2103 = vld [vmem:[%s326 + $0xaa8] sm:$0xff]
        %v2104 = vld [vmem:[%s326 + $0xab0] sm:$0xff]
        %v2105 = vld [vmem:[%s326 + $0xab8] sm:$0xff]
        %v2106 = vld [vmem:[%s326 + $0xac0] sm:$0xff]
        %v2107 = vld [vmem:[%s326 + $0xac8] sm:$0xff]
        %v2108 = vld [vmem:[%s326 + $0xad0] sm:$0xff]
        %v2109 = vld [vmem:[%s326 + $0xad8] sm:$0xff]
        %v2110 = vld [vmem:[%s326 + $0xae0] sm:$0xff]
        %v2111 = vld [vmem:[%s326 + $0xae8] sm:$0xff]
        %v2112 = vld [vmem:[%s326 + $0xaf0] sm:$0xff]
        %v2113 = vld [vmem:[%s326 + $0xaf8] sm:$0xff]
        %v2114 = vld [vmem:[%s326 + $0xb00] sm:$0xff]
        %v2115 = vld [vmem:[%s326 + $0xb08] sm:$0xff]
        %v2116 = vld [vmem:[%s326 + $0xb10] sm:$0xff]
        %v2117 = vld [vmem:[%s326 + $0xb18] sm:$0xff]
        %v2118 = vld [vmem:[%s326 + $0xb20] sm:$0xff]
        %v2119 = vld [vmem:[%s326 + $0xb28] sm:$0xff]
        %v2120 = vld [vmem:[%s326 + $0xb30] sm:$0xff]
        %v2121 = vld [vmem:[%s326 + $0xb38] sm:$0xff]
        %v2122 = vld [vmem:[%s326 + $0xb40] sm:$0xff]
        %v2123 = vld [vmem:[%s326 + $0xb48] sm:$0xff]
        %v2124 = vld [vmem:[%s326 + $0xb50] sm:$0xff]
        %v2125 = vld [vmem:[%s326 + $0xb58] sm:$0xff]
        %v2126 = vld [vmem:[%s326 + $0xb60] sm:$0xff]
        %v2127 = vld [vmem:[%s326 + $0xb68] sm:$0xff]
        %v2128 = vld [vmem:[%s326 + $0xb70] sm:$0xff]
        %v2129 = vld [vmem:[%s326 + $0xb78] sm:$0xff]
        %v2130 = vld [vmem:[%s326 + $0xb80] sm:$0xff]
        %v2131 = vld [vmem:[%s326 + $0xb88] sm:$0xff]
        %v2132 = vld [vmem:[%s326 + $0xb90] sm:$0xff]
        %v2133 = vld [vmem:[%s326 + $0xb98] sm:$0xff]
        %v2134 = vld [vmem:[%s326 + $0xba0] sm:$0xff]
        %v2135 = vld [vmem:[%s326 + $0xba8] sm:$0xff]
        %v2136 = vld [vmem:[%s326 + $0xbb0] sm:$0xff]
        %v2137 = vld [vmem:[%s326 + $0xbb8] sm:$0xff]
        %v2138 = vld [vmem:[%s326 + $0xbc0] sm:$0xff]
        %v2139 = vld [vmem:[%s326 + $0xbc8] sm:$0xff]
        %v2140 = vld [vmem:[%s326 + $0xbd0] sm:$0xff]
        %v2141 = vld [vmem:[%s326 + $0xbd8] sm:$0xff]
        %v2142 = vld [vmem:[%s326 + $0xbe0] sm:$0xff]
        %v2143 = vld [vmem:[%s326 + $0xbe8] sm:$0xff]
        %v2144 = vld [vmem:[%s326 + $0xbf0] sm:$0xff]
        %v2145 = vld [vmem:[%s326 + $0xbf8] sm:$0xff]
        %v2146 = vld [vmem:[%s326 + $0xc00] sm:$0xff]
        %v2147 = vld [vmem:[%s326 + $0xc08] sm:$0xff]
        %v2148 = vld [vmem:[%s326 + $0xc10] sm:$0xff]
        %v2149 = vld [vmem:[%s326 + $0xc18] sm:$0xff]
        %v2150 = vld [vmem:[%s326 + $0xc20] sm:$0xff]
        %v2151 = vld [vmem:[%s326 + $0xc28] sm:$0xff]
        %v2152 = vld [vmem:[%s326 + $0xc30] sm:$0xff]
        %v2153 = vld [vmem:[%s326 + $0xc38] sm:$0xff]
        %v2154 = vld [vmem:[%s326 + $0xc40] sm:$0xff]
        %v2155 = vld [vmem:[%s326 + $0xc48] sm:$0xff]
        %v2156 = vld [vmem:[%s326 + $0xc50] sm:$0xff]
        %v2157 = vld [vmem:[%s326 + $0xc58] sm:$0xff]
        %v2158 = vld [vmem:[%s326 + $0xc60] sm:$0xff]
        %v2159 = vld [vmem:[%s326 + $0xc68] sm:$0xff]
        %v2160 = vld [vmem:[%s326 + $0xc70] sm:$0xff]
        %v2161 = vld [vmem:[%s326 + $0xc78] sm:$0xff]
        %v2162 = vld [vmem:[%s326 + $0xc80] sm:$0xff]
        %v2163 = vld [vmem:[%s326 + $0xc88] sm:$0xff]
        %v2164 = vld [vmem:[%s326 + $0xc90] sm:$0xff]
        %v2165 = vld [vmem:[%s326 + $0xc98] sm:$0xff]
        %v2166 = vld [vmem:[%s326 + $0xca0] sm:$0xff]
        %v2167 = vld [vmem:[%s326 + $0xca8] sm:$0xff]
        %v2168 = vld [vmem:[%s326 + $0xcb0] sm:$0xff]
        %v2169 = vld [vmem:[%s326 + $0xcb8] sm:$0xff]
        %v2170 = vld [vmem:[%s326 + $0xcc0] sm:$0xff]
        %v2171 = vld [vmem:[%s326 + $0xcc8] sm:$0xff]
        %v2172 = vld [vmem:[%s326 + $0xcd0] sm:$0xff]
        %v2173 = vld [vmem:[%s326 + $0xcd8] sm:$0xff]
        %v2174 = vld [vmem:[%s326 + $0xce0] sm:$0xff]
        %v2175 = vld [vmem:[%s326 + $0xce8] sm:$0xff]
        %v2176 = vld [vmem:[%s326 + $0xcf0] sm:$0xff]
        %v2177 = vld [vmem:[%s326 + $0xcf8] sm:$0xff]
        %v2178 = vld [vmem:[%s326 + $0xd00] sm:$0xff]
        %v2179 = vld [vmem:[%s326 + $0xd08] sm:$0xff]
        %v2180 = vld [vmem:[%s326 + $0xd10] sm:$0xff]
        %v2181 = vld [vmem:[%s326 + $0xd18] sm:$0xff]
        %v2182 = vld [vmem:[%s326 + $0xd20] sm:$0xff]
        %v2183 = vld [vmem:[%s326 + $0xd28] sm:$0xff]
        %v2184 = vld [vmem:[%s326 + $0xd30] sm:$0xff]
        %v2185 = vld [vmem:[%s326 + $0xd38] sm:$0xff]
        %v2186 = vld [vmem:[%s326 + $0xd40] sm:$0xff]
        %v2187 = vld [vmem:[%s326 + $0xd48] sm:$0xff]
        %v2188 = vld [vmem:[%s326 + $0xd50] sm:$0xff]
        %v2189 = vld [vmem:[%s326 + $0xd58] sm:$0xff]
        %v2190 = vld [vmem:[%s326 + $0xd60] sm:$0xff]
        %v2191 = vld [vmem:[%s326 + $0xd68] sm:$0xff]
        %v2192 = vld [vmem:[%s326 + $0xd70] sm:$0xff]
        %v2193 = vld [vmem:[%s326 + $0xd78] sm:$0xff]
        %v2194 = vld [vmem:[%s326 + $0xd80] sm:$0xff]
        %v2195 = vld [vmem:[%s326 + $0xd88] sm:$0xff]
        %v2196 = vld [vmem:[%s326 + $0xd90] sm:$0xff]
        %v2197 = vld [vmem:[%s326 + $0xd98] sm:$0xff]
        %v2198 = vld [vmem:[%s326 + $0xda0] sm:$0xff]
        %v2199 = vld [vmem:[%s326 + $0xda8] sm:$0xff]
        %v2200 = vld [vmem:[%s326 + $0xdb0] sm:$0xff]
        %v2201 = vld [vmem:[%s326 + $0xdb8] sm:$0xff]
        %v2202 = vld [vmem:[%s326 + $0xdc0] sm:$0xff]
        %v2203 = vld [vmem:[%s326 + $0xdc8] sm:$0xff]
        %v2204 = vld [vmem:[%s326 + $0xdd0] sm:$0xff]
        %v2205 = vld [vmem:[%s326 + $0xdd8] sm:$0xff]
        %v2206 = vld [vmem:[%s326 + $0xde0] sm:$0xff]
        %v2207 = vld [vmem:[%s326 + $0xde8] sm:$0xff]
        %v2208 = vld [vmem:[%s326 + $0xdf0] sm:$0xff]
        %v2209 = vld [vmem:[%s326 + $0xdf8] sm:$0xff]
        %v2210 = vld [vmem:[%s326 + $0xe00] sm:$0xff]
        %v2211 = vld [vmem:[%s326 + $0xe08] sm:$0xff]
        %v2212 = vld [vmem:[%s326 + $0xe10] sm:$0xff]
        %v2213 = vld [vmem:[%s326 + $0xe18] sm:$0xff]
        %v2214 = vld [vmem:[%s326 + $0xe20] sm:$0xff]
        %v2215 = vld [vmem:[%s326 + $0xe28] sm:$0xff]
        %v2216 = vld [vmem:[%s326 + $0xe30] sm:$0xff]
        %v2217 = vld [vmem:[%s326 + $0xe38] sm:$0xff]
        %v2218 = vld [vmem:[%s326 + $0xe40] sm:$0xff]
        %v2219 = vld [vmem:[%s326 + $0xe48] sm:$0xff]
        %v2220 = vld [vmem:[%s326 + $0xe50] sm:$0xff]
        %v2221 = vld [vmem:[%s326 + $0xe58] sm:$0xff]
        %v2222 = vld [vmem:[%s326 + $0xe60] sm:$0xff]
        %v2223 = vld [vmem:[%s326 + $0xe68] sm:$0xff]
        %v2224 = vld [vmem:[%s326 + $0xe70] sm:$0xff]
        %v2225 = vld [vmem:[%s326 + $0xe78] sm:$0xff]
        %v2226 = vld [vmem:[%s326 + $0xe80] sm:$0xff]
        %v2227 = vld [vmem:[%s326 + $0xe88] sm:$0xff]
        %v2228 = vld [vmem:[%s326 + $0xe90] sm:$0xff]
        %v2229 = vld [vmem:[%s326 + $0xe98] sm:$0xff]
        %v2230 = vld [vmem:[%s326 + $0xea0] sm:$0xff]
        %v2231 = vld [vmem:[%s326 + $0xea8] sm:$0xff]
        %v2232 = vld [vmem:[%s326 + $0xeb0] sm:$0xff]
        %v2233 = vld [vmem:[%s326 + $0xeb8] sm:$0xff]
        %v2234 = vld [vmem:[%s326 + $0xec0] sm:$0xff]
        %v2235 = vld [vmem:[%s326 + $0xec8] sm:$0xff]
        %v2236 = vld [vmem:[%s326 + $0xed0] sm:$0xff]
        %v2237 = vld [vmem:[%s326 + $0xed8] sm:$0xff]
        %v2238 = vld [vmem:[%s326 + $0xee0] sm:$0xff]
        %v2239 = vld [vmem:[%s326 + $0xee8] sm:$0xff]
        %v2240 = vld [vmem:[%s326 + $0xef0] sm:$0xff]
        %v2241 = vld [vmem:[%s326 + $0xef8] sm:$0xff]
        %v2242 = vld [vmem:[%s326 + $0xf00] sm:$0xff]
        %v2243 = vld [vmem:[%s326 + $0xf08] sm:$0xff]
        %v2244 = vld [vmem:[%s326 + $0xf10] sm:$0xff]
        %v2245 = vld [vmem:[%s326 + $0xf18] sm:$0xff]
        %v2246 = vld [vmem:[%s326 + $0xf20] sm:$0xff]
        %v2247 = vld [vmem:[%s326 + $0xf28] sm:$0xff]
        %v2248 = vld [vmem:[%s326 + $0xf30] sm:$0xff]
        %v2249 = vld [vmem:[%s326 + $0xf38] sm:$0xff]
        %v2250 = vld [vmem:[%s326 + $0xf40] sm:$0xff]
        %v2251 = vld [vmem:[%s326 + $0xf48] sm:$0xff]
        %v2252 = vld [vmem:[%s326 + $0xf50] sm:$0xff]
        %v2253 = vld [vmem:[%s326 + $0xf58] sm:$0xff]
        %v2254 = vld [vmem:[%s326 + $0xf60] sm:$0xff]
        %v2255 = vld [vmem:[%s326 + $0xf68] sm:$0xff]
        %v2256 = vld [vmem:[%s326 + $0xf70] sm:$0xff]
        %v2257 = vld [vmem:[%s326 + $0xf78] sm:$0xff]
        %v2258 = vld [vmem:[%s326 + $0xf80] sm:$0xff]
        %v2259 = vld [vmem:[%s326 + $0xf88] sm:$0xff]
        %v2260 = vld [vmem:[%s326 + $0xf90] sm:$0xff]
        %v2261 = vld [vmem:[%s326 + $0xf98] sm:$0xff]
        %v2262 = vld [vmem:[%s326 + $0xfa0] sm:$0xff]
        %v2263 = vld [vmem:[%s326 + $0xfa8] sm:$0xff]
        %v2264 = vld [vmem:[%s326 + $0xfb0] sm:$0xff]
        %v2265 = vld [vmem:[%s326 + $0xfb8] sm:$0xff]
        %v2266 = vld [vmem:[%s326 + $0xfc0] sm:$0xff]
        %v2267 = vld [vmem:[%s326 + $0xfc8] sm:$0xff]
        %v2268 = vld [vmem:[%s326 + $0xfd0] sm:$0xff]
        %v2269 = vld [vmem:[%s326 + $0xfd8] sm:$0xff]
        %v2270 = vld [vmem:[%s326 + $0xfe0] sm:$0xff]
        %v2271 = vld [vmem:[%s326 + $0xfe8] sm:$0xff]
        %v2272 = vld [vmem:[%s326 + $0xff0] sm:$0xff]
        %v2273 = vld [vmem:[%s326 + $0xff8] sm:$0xff]
        %v2274 = vld [vmem:[%s326 + $0x1000] sm:$0xff]
        %v2275 = vld [vmem:[%s326 + $0x1008] sm:$0xff]
        %v2276 = vld [vmem:[%s326 + $0x1010] sm:$0xff]
        %v2277 = vld [vmem:[%s326 + $0x1018] sm:$0xff]
        %v2278 = vld [vmem:[%s326 + $0x1020] sm:$0xff]
        %v2279 = vld [vmem:[%s326 + $0x1028] sm:$0xff]
        %v2280 = vld [vmem:[%s326 + $0x1030] sm:$0xff]
        %v2281 = vld [vmem:[%s326 + $0x1038] sm:$0xff]
        %v2282 = vld [vmem:[%s326 + $0x1040] sm:$0xff]
        %v2283 = vld [vmem:[%s326 + $0x1048] sm:$0xff]
        %v2284 = vld [vmem:[%s326 + $0x1050] sm:$0xff]
        %v2285 = vld [vmem:[%s326 + $0x1058] sm:$0xff]
        %v2286 = vld [vmem:[%s326 + $0x1060] sm:$0xff]
        %v2287 = vld [vmem:[%s326 + $0x1068] sm:$0xff]
        %v2288 = vld [vmem:[%s326 + $0x1070] sm:$0xff]
        %v2289 = vld [vmem:[%s326 + $0x1078] sm:$0xff]
        %v2290 = vld [vmem:[%s326 + $0x1080] sm:$0xff]
        %v2291 = vld [vmem:[%s326 + $0x1088] sm:$0xff]
        %v2292 = vld [vmem:[%s326 + $0x1090] sm:$0xff]
        %v2293 = vld [vmem:[%s326 + $0x1098] sm:$0xff]
        %v2294 = vld [vmem:[%s326 + $0x10a0] sm:$0xff]
        %v2295 = vld [vmem:[%s326 + $0x10a8] sm:$0xff]
        %v2296 = vld [vmem:[%s326 + $0x10b0] sm:$0xff]
        %v2297 = vld [vmem:[%s326 + $0x10b8] sm:$0xff]
        %v2298 = vld [vmem:[%s326 + $0x10c0] sm:$0xff]
        %v2299 = vld [vmem:[%s326 + $0x10c8] sm:$0xff]
        %v2300 = vld [vmem:[%s326 + $0x10d0] sm:$0xff]
        %v2301 = vld [vmem:[%s326 + $0x10d8] sm:$0xff]
        %v2302 = vld [vmem:[%s326 + $0x10e0] sm:$0xff]
        %v2303 = vld [vmem:[%s326 + $0x10e8] sm:$0xff]
        %v2304 = vld [vmem:[%s326 + $0x10f0] sm:$0xff]
        %v2305 = vld [vmem:[%s326 + $0x10f8] sm:$0xff]
        %v2306 = vld [vmem:[%s326 + $0x1100] sm:$0xff]
        %v2307 = vld [vmem:[%s326 + $0x1108] sm:$0xff]
        %v2308 = vld [vmem:[%s326 + $0x1110] sm:$0xff]
        %v2309 = vld [vmem:[%s326 + $0x1118] sm:$0xff]
        %v2310 = vld [vmem:[%s326 + $0x1120] sm:$0xff]
        %v2311 = vld [vmem:[%s326 + $0x1128] sm:$0xff]
        %v2312 = vld [vmem:[%s326 + $0x1130] sm:$0xff]
        %v2313 = vld [vmem:[%s326 + $0x1138] sm:$0xff]
        %v2314 = vld [vmem:[%s326 + $0x1140] sm:$0xff]
        %v2315 = vld [vmem:[%s326 + $0x1148] sm:$0xff]
        %v2316 = vld [vmem:[%s326 + $0x1150] sm:$0xff]
        %v2317 = vld [vmem:[%s326 + $0x1158] sm:$0xff]
        %v2318 = vld [vmem:[%s326 + $0x1160] sm:$0xff]
        %v2319 = vld [vmem:[%s326 + $0x1168] sm:$0xff]
        %v2320 = vld [vmem:[%s326 + $0x1170] sm:$0xff]
        %v2321 = vld [vmem:[%s326 + $0x1178] sm:$0xff]
        %v2322 = vld [vmem:[%s326 + $0x1180] sm:$0xff]
        %v2323 = vld [vmem:[%s326 + $0x1188] sm:$0xff]
        %v2324 = vld [vmem:[%s326 + $0x1190] sm:$0xff]
        %v2325 = vld [vmem:[%s326 + $0x1198] sm:$0xff]
        %v2326 = vld [vmem:[%s326 + $0x11a0] sm:$0xff]
        %v2327 = vld [vmem:[%s326 + $0x11a8] sm:$0xff]
        %v2328 = vld [vmem:[%s326 + $0x11b0] sm:$0xff]
        %v2329 = vld [vmem:[%s326 + $0x11b8] sm:$0xff]
        %v2330 = vld [vmem:[%s326 + $0x11c0] sm:$0xff]
        %v2331 = vld [vmem:[%s326 + $0x11c8] sm:$0xff]
        %v2332 = vld [vmem:[%s326 + $0x11d0] sm:$0xff]
        %v2333 = vld [vmem:[%s326 + $0x11d8] sm:$0xff]
        %v2334 = vld [vmem:[%s326 + $0x11e0] sm:$0xff]
        %v2335 = vld [vmem:[%s326 + $0x11e8] sm:$0xff]
        %v2336 = vld [vmem:[%s326 + $0x11f0] sm:$0xff]
        %v2337 = vld [vmem:[%s326 + $0x11f8] sm:$0xff]
        %v2338 = vld [vmem:[%s326 + $0x1200] sm:$0xff]
        %v2339 = vld [vmem:[%s326 + $0x1208] sm:$0xff]
        %v2340 = vld [vmem:[%s326 + $0x1210] sm:$0xff]
        %v2341 = vld [vmem:[%s326 + $0x1218] sm:$0xff]
        %v2342 = vld [vmem:[%s326 + $0x1220] sm:$0xff]
        %v2343 = vld [vmem:[%s326 + $0x1228] sm:$0xff]
        %v2344 = vld [vmem:[%s326 + $0x1230] sm:$0xff]
        %v2345 = vld [vmem:[%s326 + $0x1238] sm:$0xff]
        %v2346 = vld [vmem:[%s326 + $0x1240] sm:$0xff]
        %v2347 = vld [vmem:[%s326 + $0x1248] sm:$0xff]
        %v2348 = vld [vmem:[%s326 + $0x1250] sm:$0xff]
        %v2349 = vld [vmem:[%s326 + $0x1258] sm:$0xff]
        %v2350 = vld [vmem:[%s326 + $0x1260] sm:$0xff]
        %v2351 = vld [vmem:[%s326 + $0x1268] sm:$0xff]
        %v2352 = vld [vmem:[%s326 + $0x1270] sm:$0xff]
        %v2353 = vld [vmem:[%s326 + $0x1278] sm:$0xff]
        %v2354 = vld [vmem:[%s326 + $0x1280] sm:$0xff]
        %v2355 = vld [vmem:[%s326 + $0x1288] sm:$0xff]
        %v2356 = vld [vmem:[%s326 + $0x1290] sm:$0xff]
        %v2357 = vld [vmem:[%s326 + $0x1298] sm:$0xff]
        %v2358 = vld [vmem:[%s326 + $0x12a0] sm:$0xff]
        %v2359 = vld [vmem:[%s326 + $0x12a8] sm:$0xff]
        %v2360 = vld [vmem:[%s326 + $0x12b0] sm:$0xff]
        %v2361 = vld [vmem:[%s326 + $0x12b8] sm:$0xff]
        %v2362 = vld [vmem:[%s326 + $0x12c0] sm:$0xff]
        %v2363 = vld [vmem:[%s326 + $0x12c8] sm:$0xff]
        %v2364 = vld [vmem:[%s326 + $0x12d0] sm:$0xff]
        %v2365 = vld [vmem:[%s326 + $0x12d8] sm:$0xff]
        %v2366 = vld [vmem:[%s326 + $0x12e0] sm:$0xff]
        %v2367 = vld [vmem:[%s326 + $0x12e8] sm:$0xff]
        %v2368 = vld [vmem:[%s326 + $0x12f0] sm:$0xff]
        %v2369 = vld [vmem:[%s326 + $0x12f8] sm:$0xff]
        %v2370 = vld [vmem:[%s326 + $0x1300] sm:$0xff]
        %v2371 = vld [vmem:[%s326 + $0x1308] sm:$0xff]
        %v2372 = vld [vmem:[%s326 + $0x1310] sm:$0xff]
        %v2373 = vld [vmem:[%s326 + $0x1318] sm:$0xff]
        %v2374 = vld [vmem:[%s326 + $0x1320] sm:$0xff]
        %v2375 = vld [vmem:[%s326 + $0x1328] sm:$0xff]
        %v2376 = vld [vmem:[%s326 + $0x1330] sm:$0xff]
        %v2377 = vld [vmem:[%s326 + $0x1338] sm:$0xff]
        %v2378 = vld [vmem:[%s326 + $0x1340] sm:$0xff]
        %v2379 = vld [vmem:[%s326 + $0x1348] sm:$0xff]
        %v2380 = vld [vmem:[%s326 + $0x1350] sm:$0xff]
        %v2381 = vld [vmem:[%s326 + $0x1358] sm:$0xff]
        %v2382 = vld [vmem:[%s326 + $0x1360] sm:$0xff]
        %v2383 = vld [vmem:[%s326 + $0x1368] sm:$0xff]
        %v2384 = vld [vmem:[%s326 + $0x1370] sm:$0xff]
        %v2385 = vld [vmem:[%s326 + $0x1378] sm:$0xff]
        %v2386 = vld [vmem:[%s326 + $0x1380] sm:$0xff]
        %v2387 = vld [vmem:[%s326 + $0x1388] sm:$0xff]
        %v2388 = vld [vmem:[%s326 + $0x1390] sm:$0xff]
        %v2389 = vld [vmem:[%s326 + $0x1398] sm:$0xff]
        %v2390 = vld [vmem:[%s326 + $0x13a0] sm:$0xff]
        %v2391 = vld [vmem:[%s326 + $0x13a8] sm:$0xff]
        %v2392 = vld [vmem:[%s326 + $0x13b0] sm:$0xff]
        %v2393 = vld [vmem:[%s326 + $0x13b8] sm:$0xff]
        %v2394 = vld [vmem:[%s326 + $0x13c0] sm:$0xff]
        %v2395 = vld [vmem:[%s326 + $0x13c8] sm:$0xff]
        %v2396 = vld [vmem:[%s326 + $0x13d0] sm:$0xff]
        %v2397 = vld [vmem:[%s326 + $0x13d8] sm:$0xff]
        %v2398 = vld [vmem:[%s326 + $0x13e0] sm:$0xff]
        %v2399 = vld [vmem:[%s326 + $0x13e8] sm:$0xff]
        %v2400 = vld [vmem:[%s326 + $0x13f0] sm:$0xff]
        %v2401 = vld [vmem:[%s326 + $0x13f8] sm:$0xff]
        %v2402 = vld [vmem:[%s326 + $0x1400] sm:$0xff]
        %v2403 = vld [vmem:[%s326 + $0x1408] sm:$0xff]
        %v2404 = vld [vmem:[%s326 + $0x1410] sm:$0xff]
        %v2405 = vld [vmem:[%s326 + $0x1418] sm:$0xff]
        %v2406 = vld [vmem:[%s326 + $0x1420] sm:$0xff]
        %v2407 = vld [vmem:[%s326 + $0x1428] sm:$0xff]
        %v2408 = vld [vmem:[%s326 + $0x1430] sm:$0xff]
        %v2409 = vld [vmem:[%s326 + $0x1438] sm:$0xff]
        %v2410 = vld [vmem:[%s326 + $0x1440] sm:$0xff]
        %v2411 = vld [vmem:[%s326 + $0x1448] sm:$0xff]
        %v2412 = vld [vmem:[%s326 + $0x1450] sm:$0xff]
        %v2413 = vld [vmem:[%s326 + $0x1458] sm:$0xff]
        %v2414 = vld [vmem:[%s326 + $0x1460] sm:$0xff]
        %v2415 = vld [vmem:[%s326 + $0x1468] sm:$0xff]
        %v2416 = vld [vmem:[%s326 + $0x1470] sm:$0xff]
        %v2417 = vld [vmem:[%s326 + $0x1478] sm:$0xff]
        %v2418 = vld [vmem:[%s326 + $0x1480] sm:$0xff]
        %v2419 = vld [vmem:[%s326 + $0x1488] sm:$0xff]
        %v2420 = vld [vmem:[%s326 + $0x1490] sm:$0xff]
        %v2421 = vld [vmem:[%s326 + $0x1498] sm:$0xff]
        %v2422 = vld [vmem:[%s326 + $0x14a0] sm:$0xff]
        %v2423 = vld [vmem:[%s326 + $0x14a8] sm:$0xff]
        %v2424 = vld [vmem:[%s326 + $0x14b0] sm:$0xff]
        %v2425 = vld [vmem:[%s326 + $0x14b8] sm:$0xff]
        %v2426 = vld [vmem:[%s326 + $0x14c0] sm:$0xff]
        %v2427 = vld [vmem:[%s326 + $0x14c8] sm:$0xff]
        %v2428 = vld [vmem:[%s326 + $0x14d0] sm:$0xff]
        %v2429 = vld [vmem:[%s326 + $0x14d8] sm:$0xff]
        %v2430 = vld [vmem:[%s326 + $0x14e0] sm:$0xff]
        %v2431 = vld [vmem:[%s326 + $0x14e8] sm:$0xff]
        %v2432 = vld [vmem:[%s326 + $0x14f0] sm:$0xff]
        %v2433 = vld [vmem:[%s326 + $0x14f8] sm:$0xff]
        %v2434 = vld [vmem:[%s326 + $0x1500] sm:$0xff]
        %v2435 = vld [vmem:[%s326 + $0x1508] sm:$0xff]
        %v2436 = vld [vmem:[%s326 + $0x1510] sm:$0xff]
        %v2437 = vld [vmem:[%s326 + $0x1518] sm:$0xff]
        %v2438 = vld [vmem:[%s326 + $0x1520] sm:$0xff]
        %v2439 = vld [vmem:[%s326 + $0x1528] sm:$0xff]
        %v2440 = vld [vmem:[%s326 + $0x1530] sm:$0xff]
        %v2441 = vld [vmem:[%s326 + $0x1538] sm:$0xff]
        %v2442 = vld [vmem:[%s326 + $0x1540] sm:$0xff]
        %v2443 = vld [vmem:[%s326 + $0x1548] sm:$0xff]
        %v2444 = vld [vmem:[%s326 + $0x1550] sm:$0xff]
        %v2445 = vld [vmem:[%s326 + $0x1558] sm:$0xff]
        %v2446 = vld [vmem:[%s326 + $0x1560] sm:$0xff]
        %v2447 = vld [vmem:[%s326 + $0x1568] sm:$0xff]
        %v2448 = vld [vmem:[%s326 + $0x1570] sm:$0xff]
        %v2449 = vld [vmem:[%s326 + $0x1578] sm:$0xff]
        %v2450 = vld [vmem:[%s326 + $0x1580] sm:$0xff]
        %v2451 = vld [vmem:[%s326 + $0x1588] sm:$0xff]
        %v2452 = vld [vmem:[%s326 + $0x1590] sm:$0xff]
        %v2453 = vld [vmem:[%s326 + $0x1598] sm:$0xff]
        %v2454 = vld [vmem:[%s326 + $0x15a0] sm:$0xff]
        %v2455 = vld [vmem:[%s326 + $0x15a8] sm:$0xff]
        %v2456 = vld [vmem:[%s326 + $0x15b0] sm:$0xff]
        %v2457 = vld [vmem:[%s326 + $0x15b8] sm:$0xff]
        %v2458 = vld [vmem:[%s326 + $0x15c0] sm:$0xff]
        %v2459 = vld [vmem:[%s326 + $0x15c8] sm:$0xff]
        %v2460 = vld [vmem:[%s326 + $0x15d0] sm:$0xff]
        %v2461 = vld [vmem:[%s326 + $0x15d8] sm:$0xff]
        %v2462 = vld [vmem:[%s326 + $0x15e0] sm:$0xff]
        %v2463 = vld [vmem:[%s326 + $0x15e8] sm:$0xff]
        %v2464 = vld [vmem:[%s326 + $0x15f0] sm:$0xff]
        %v2465 = vld [vmem:[%s326 + $0x15f8] sm:$0xff]
        %v2466 = vld [vmem:[%s326 + $0x1600] sm:$0xff]
        %v2467 = vld [vmem:[%s326 + $0x1608] sm:$0xff]
        %v2468 = vld [vmem:[%s326 + $0x1610] sm:$0xff]
        %v2469 = vld [vmem:[%s326 + $0x1618] sm:$0xff]
        %v2470 = vld [vmem:[%s326 + $0x1620] sm:$0xff]
        %v2471 = vld [vmem:[%s326 + $0x1628] sm:$0xff]
        %v2472 = vld [vmem:[%s326 + $0x1630] sm:$0xff]
        %v2473 = vld [vmem:[%s326 + $0x1638] sm:$0xff]
        %v2474 = vld [vmem:[%s326 + $0x1640] sm:$0xff]
        %v2475 = vld [vmem:[%s326 + $0x1648] sm:$0xff]
        %v2476 = vld [vmem:[%s326 + $0x1650] sm:$0xff]
        %v2477 = vld [vmem:[%s326 + $0x1658] sm:$0xff]
        %v2478 = vld [vmem:[%s326 + $0x1660] sm:$0xff]
        %v2479 = vld [vmem:[%s326 + $0x1668] sm:$0xff]
        %v2480 = vld [vmem:[%s326 + $0x1670] sm:$0xff]
        %v2481 = vld [vmem:[%s326 + $0x1678] sm:$0xff]
        %v2482 = vld [vmem:[%s326 + $0x1680] sm:$0xff]
        %v2483 = vld [vmem:[%s326 + $0x1688] sm:$0xff]
        %v2484 = vld [vmem:[%s326 + $0x1690] sm:$0xff]
        %v2485 = vld [vmem:[%s326 + $0x1698] sm:$0xff]
        %v2486 = vld [vmem:[%s326 + $0x16a0] sm:$0xff]
        %v2487 = vld [vmem:[%s326 + $0x16a8] sm:$0xff]
        %v2488 = vld [vmem:[%s326 + $0x16b0] sm:$0xff]
        %v2489 = vld [vmem:[%s326 + $0x16b8] sm:$0xff]
        %v2490 = vld [vmem:[%s326 + $0x16c0] sm:$0xff]
        %v2491 = vld [vmem:[%s326 + $0x16c8] sm:$0xff]
        %v2492 = vld [vmem:[%s326 + $0x16d0] sm:$0xff]
        %v2493 = vld [vmem:[%s326 + $0x16d8] sm:$0xff]
        %v2494 = vld [vmem:[%s326 + $0x16e0] sm:$0xff]
        %v2495 = vld [vmem:[%s326 + $0x16e8] sm:$0xff]
        %v2496 = vld [vmem:[%s326 + $0x16f0] sm:$0xff]
        %v2497 = vld [vmem:[%s326 + $0x16f8] sm:$0xff]
        %v2498 = vld [vmem:[%s326 + $0x1700] sm:$0xff]
        %v2499 = vld [vmem:[%s326 + $0x1708] sm:$0xff]
        %v2500 = vld [vmem:[%s326 + $0x1710] sm:$0xff]
        %v2501 = vld [vmem:[%s326 + $0x1718] sm:$0xff]
        %v2502 = vld [vmem:[%s326 + $0x1720] sm:$0xff]
        %v2503 = vld [vmem:[%s326 + $0x1728] sm:$0xff]
        %v2504 = vld [vmem:[%s326 + $0x1730] sm:$0xff]
        %v2505 = vld [vmem:[%s326 + $0x1738] sm:$0xff]
        %v2506 = vld [vmem:[%s326 + $0x1740] sm:$0xff]
        %v2507 = vld [vmem:[%s326 + $0x1748] sm:$0xff]
        %v2508 = vld [vmem:[%s326 + $0x1750] sm:$0xff]
        %v2509 = vld [vmem:[%s326 + $0x1758] sm:$0xff]
        %v2510 = vld [vmem:[%s326 + $0x1760] sm:$0xff]
        %v2511 = vld [vmem:[%s326 + $0x1768] sm:$0xff]
        %v2512 = vld [vmem:[%s326 + $0x1770] sm:$0xff]
        %v2513 = vld [vmem:[%s326 + $0x1778] sm:$0xff]
        %v2514 = vld [vmem:[%s326 + $0x1780] sm:$0xff]
        %v2515 = vld [vmem:[%s326 + $0x1788] sm:$0xff]
        %v2516 = vld [vmem:[%s326 + $0x1790] sm:$0xff]
        %v2517 = vld [vmem:[%s326 + $0x1798] sm:$0xff]
        %v2518 = vld [vmem:[%s326 + $0x17a0] sm:$0xff]
        %v2519 = vld [vmem:[%s326 + $0x17a8] sm:$0xff]
        %v2520 = vld [vmem:[%s326 + $0x17b0] sm:$0xff]
        %v2521 = vld [vmem:[%s326 + $0x17b8] sm:$0xff]
        %v2522 = vld [vmem:[%s326 + $0x17c0] sm:$0xff]
        %v2523 = vld [vmem:[%s326 + $0x17c8] sm:$0xff]
        %v2524 = vld [vmem:[%s326 + $0x17d0] sm:$0xff]
        %v2525 = vld [vmem:[%s326 + $0x17d8] sm:$0xff]
        %v2526 = vld [vmem:[%s326 + $0x17e0] sm:$0xff]
        %v2527 = vld [vmem:[%s326 + $0x17e8] sm:$0xff]
        %v2528 = vld [vmem:[%s326 + $0x17f0] sm:$0xff]
        %v2529 = vld [vmem:[%s326 + $0x17f8] sm:$0xff]
        %v2530 = vld [vmem:[%s326 + $0x1800] sm:$0xff]
        %v2531 = vld [vmem:[%s326 + $0x1808] sm:$0xff]
        %v2532 = vld [vmem:[%s326 + $0x1810] sm:$0xff]
        %v2533 = vld [vmem:[%s326 + $0x1818] sm:$0xff]
        %v2534 = vld [vmem:[%s326 + $0x1820] sm:$0xff]
        %v2535 = vld [vmem:[%s326 + $0x1828] sm:$0xff]
        %v2536 = vld [vmem:[%s326 + $0x1830] sm:$0xff]
        %v2537 = vld [vmem:[%s326 + $0x1838] sm:$0xff]
        %v2538 = vld [vmem:[%s326 + $0x1840] sm:$0xff]
        %v2539 = vld [vmem:[%s326 + $0x1848] sm:$0xff]
        %v2540 = vld [vmem:[%s326 + $0x1850] sm:$0xff]
        %v2541 = vld [vmem:[%s326 + $0x1858] sm:$0xff]
        %v2542 = vld [vmem:[%s326 + $0x1860] sm:$0xff]
        %v2543 = vld [vmem:[%s326 + $0x1868] sm:$0xff]
        %v2544 = vld [vmem:[%s326 + $0x1870] sm:$0xff]
        %v2545 = vld [vmem:[%s326 + $0x1878] sm:$0xff]
        %v2546 = vld [vmem:[%s326 + $0x1880] sm:$0xff]
        %v2547 = vld [vmem:[%s326 + $0x1888] sm:$0xff]
        %v2548 = vld [vmem:[%s326 + $0x1890] sm:$0xff]
        %v2549 = vld [vmem:[%s326 + $0x1898] sm:$0xff]
        %v2550 = vld [vmem:[%s326 + $0x18a0] sm:$0xff]
        %v2551 = vld [vmem:[%s326 + $0x18a8] sm:$0xff]
        %v2552 = vld [vmem:[%s326 + $0x18b0] sm:$0xff]
        %v2553 = vld [vmem:[%s326 + $0x18b8] sm:$0xff]
        %v2554 = vld [vmem:[%s326 + $0x18c0] sm:$0xff]
        %v2555 = vld [vmem:[%s326 + $0x18c8] sm:$0xff]
        %v2556 = vld [vmem:[%s326 + $0x18d0] sm:$0xff]
        %v2557 = vld [vmem:[%s326 + $0x18d8] sm:$0xff]
        %v2558 = vld [vmem:[%s326 + $0x18e0] sm:$0xff]
        %v2559 = vld [vmem:[%s326 + $0x18e8] sm:$0xff]
        %v2560 = vld [vmem:[%s326 + $0x18f0] sm:$0xff]
        %v2561 = vld [vmem:[%s326 + $0x18f8] sm:$0xff]
        %v2562 = vld [vmem:[%s326 + $0x1900] sm:$0xff]
        %v2563 = vld [vmem:[%s326 + $0x1908] sm:$0xff]
        %v2564 = vld [vmem:[%s326 + $0x1910] sm:$0xff]
        %v2565 = vld [vmem:[%s326 + $0x1918] sm:$0xff]
        %v2566 = vld [vmem:[%s326 + $0x1920] sm:$0xff]
        %v2567 = vld [vmem:[%s326 + $0x1928] sm:$0xff]
        %v2568 = vld [vmem:[%s326 + $0x1930] sm:$0xff]
        %v2569 = vld [vmem:[%s326 + $0x1938] sm:$0xff]
        %v2570 = vld [vmem:[%s326 + $0x1940] sm:$0xff]
        %v2571 = vld [vmem:[%s326 + $0x1948] sm:$0xff]
        %v2572 = vld [vmem:[%s326 + $0x1950] sm:$0xff]
        %v2573 = vld [vmem:[%s326 + $0x1958] sm:$0xff]
        %v2574 = vld [vmem:[%s326 + $0x1960] sm:$0xff]
        %v2575 = vld [vmem:[%s326 + $0x1968] sm:$0xff]
        %v2576 = vld [vmem:[%s326 + $0x1970] sm:$0xff]
        %v2577 = vld [vmem:[%s326 + $0x1978] sm:$0xff]
        %v2578 = vld [vmem:[%s326 + $0x1980] sm:$0xff]
        %v2579 = vld [vmem:[%s326 + $0x1988] sm:$0xff]
        %v2580 = vld [vmem:[%s326 + $0x1990] sm:$0xff]
        %v2581 = vld [vmem:[%s326 + $0x1998] sm:$0xff]
        %v2582 = vld [vmem:[%s326 + $0x19a0] sm:$0xff]
        %v2583 = vld [vmem:[%s326 + $0x19a8] sm:$0xff]
        %v2584 = vld [vmem:[%s326 + $0x19b0] sm:$0xff]
        %v2585 = vld [vmem:[%s326 + $0x19b8] sm:$0xff]
        %v2586 = vld [vmem:[%s326 + $0x19c0] sm:$0xff]
        %v2587 = vld [vmem:[%s326 + $0x19c8] sm:$0xff]
        %v2588 = vld [vmem:[%s326 + $0x19d0] sm:$0xff]
        %v2589 = vld [vmem:[%s326 + $0x19d8] sm:$0xff]
        %v2590 = vld [vmem:[%s326 + $0x19e0] sm:$0xff]
        %v2591 = vld [vmem:[%s326 + $0x19e8] sm:$0xff]
        %v2592 = vld [vmem:[%s326 + $0x19f0] sm:$0xff]
        %v2593 = vld [vmem:[%s326 + $0x19f8] sm:$0xff]
        %v2594 = vld [vmem:[%s326 + $0x1a00] sm:$0xff]
        %v2595 = vld [vmem:[%s326 + $0x1a08] sm:$0xff]
        %v2596 = vld [vmem:[%s326 + $0x1a10] sm:$0xff]
        %v2597 = vld [vmem:[%s326 + $0x1a18] sm:$0xff]
        %v2598 = vld [vmem:[%s326 + $0x1a20] sm:$0xff]
        %v2599 = vld [vmem:[%s326 + $0x1a28] sm:$0xff]
        %v2600 = vld [vmem:[%s326 + $0x1a30] sm:$0xff]
        %v2601 = vld [vmem:[%s326 + $0x1a38] sm:$0xff]
        %v2602 = vld [vmem:[%s326 + $0x1a40] sm:$0xff]
        %v2603 = vld [vmem:[%s326 + $0x1a48] sm:$0xff]
        %v2604 = vld [vmem:[%s326 + $0x1a50] sm:$0xff]
        %v2605 = vld [vmem:[%s326 + $0x1a58] sm:$0xff]
        %v2606 = vld [vmem:[%s326 + $0x1a60] sm:$0xff]
        %v2607 = vld [vmem:[%s326 + $0x1a68] sm:$0xff]
        %v2608 = vld [vmem:[%s326 + $0x1a70] sm:$0xff]
        %v2609 = vld [vmem:[%s326 + $0x1a78] sm:$0xff]
        %v2610 = vld [vmem:[%s326 + $0x1a80] sm:$0xff]
        %v2611 = vld [vmem:[%s326 + $0x1a88] sm:$0xff]
        %v2612 = vld [vmem:[%s326 + $0x1a90] sm:$0xff]
        %v2613 = vld [vmem:[%s326 + $0x1a98] sm:$0xff]
        %v2614 = vld [vmem:[%s326 + $0x1aa0] sm:$0xff]
        %v2615 = vld [vmem:[%s326 + $0x1aa8] sm:$0xff]
        %v2616 = vld [vmem:[%s326 + $0x1ab0] sm:$0xff]
        %v2617 = vld [vmem:[%s326 + $0x1ab8] sm:$0xff]
        %v2618 = vld [vmem:[%s326 + $0x1ac0] sm:$0xff]
        %v2619 = vld [vmem:[%s326 + $0x1ac8] sm:$0xff]
        %v2620 = vld [vmem:[%s326 + $0x1ad0] sm:$0xff]
        %v2621 = vld [vmem:[%s326 + $0x1ad8] sm:$0xff]
        %v2622 = vld [vmem:[%s326 + $0x1ae0] sm:$0xff]
        %v2623 = vld [vmem:[%s326 + $0x1ae8] sm:$0xff]
        %v2624 = vld [vmem:[%s326 + $0x1af0] sm:$0xff]
        %v2625 = vld [vmem:[%s326 + $0x1af8] sm:$0xff]
        %v2626 = vld [vmem:[%s326 + $0x1b00] sm:$0xff]
        %v2627 = vld [vmem:[%s326 + $0x1b08] sm:$0xff]
        %v2628 = vld [vmem:[%s326 + $0x1b10] sm:$0xff]
        %v2629 = vld [vmem:[%s326 + $0x1b18] sm:$0xff]
        %v2630 = vld [vmem:[%s326 + $0x1b20] sm:$0xff]
        %v2631 = vld [vmem:[%s326 + $0x1b28] sm:$0xff]
        %v2632 = vld [vmem:[%s326 + $0x1b30] sm:$0xff]
        %v2633 = vld [vmem:[%s326 + $0x1b38] sm:$0xff]
        %v2634 = vld [vmem:[%s326 + $0x1b40] sm:$0xff]
        %v2635 = vld [vmem:[%s326 + $0x1b48] sm:$0xff]
        %v2636 = vld [vmem:[%s326 + $0x1b50] sm:$0xff]
        %v2637 = vld [vmem:[%s326 + $0x1b58] sm:$0xff]
        %v2638 = vld [vmem:[%s326 + $0x1b60] sm:$0xff]
        %v2639 = vld [vmem:[%s326 + $0x1b68] sm:$0xff]
        %v2640 = vld [vmem:[%s326 + $0x1b70] sm:$0xff]
        %v2641 = vld [vmem:[%s326 + $0x1b78] sm:$0xff]
        %v2642 = vld [vmem:[%s326 + $0x1b80] sm:$0xff]
        %v2643 = vld [vmem:[%s326 + $0x1b88] sm:$0xff]
        %v2644 = vld [vmem:[%s326 + $0x1b90] sm:$0xff]
        %v2645 = vld [vmem:[%s326 + $0x1b98] sm:$0xff]
        %v2646 = vld [vmem:[%s326 + $0x1ba0] sm:$0xff]
        %v2647 = vld [vmem:[%s326 + $0x1ba8] sm:$0xff]
        %v2648 = vld [vmem:[%s326 + $0x1bb0] sm:$0xff]
        %v2649 = vld [vmem:[%s326 + $0x1bb8] sm:$0xff]
        %v2650 = vld [vmem:[%s326 + $0x1bc0] sm:$0xff]
        %v2651 = vld [vmem:[%s326 + $0x1bc8] sm:$0xff]
        %v2652 = vld [vmem:[%s326 + $0x1bd0] sm:$0xff]
        %v2653 = vld [vmem:[%s326 + $0x1bd8] sm:$0xff]
        %v2654 = vld [vmem:[%s326 + $0x1be0] sm:$0xff]
        %v2655 = vld [vmem:[%s326 + $0x1be8] sm:$0xff]
        %v2656 = vld [vmem:[%s326 + $0x1bf0] sm:$0xff]
        %v2657 = vld [vmem:[%s326 + $0x1bf8] sm:$0xff]
        %v2658 = vld [vmem:[%s326 + $0x1c00] sm:$0xff]
        %v2659 = vld [vmem:[%s326 + $0x1c08] sm:$0xff]
        %v2660 = vld [vmem:[%s326 + $0x1c10] sm:$0xff]
        %v2661 = vld [vmem:[%s326 + $0x1c18] sm:$0xff]
        %v2662 = vld [vmem:[%s326 + $0x1c20] sm:$0xff]
        %v2663 = vld [vmem:[%s326 + $0x1c28] sm:$0xff]
        %v2664 = vld [vmem:[%s326 + $0x1c30] sm:$0xff]
        %v2665 = vld [vmem:[%s326 + $0x1c38] sm:$0xff]
        %v2666 = vld [vmem:[%s326 + $0x1c40] sm:$0xff]
        %v2667 = vld [vmem:[%s326 + $0x1c48] sm:$0xff]
        %v2668 = vld [vmem:[%s326 + $0x1c50] sm:$0xff]
        %v2669 = vld [vmem:[%s326 + $0x1c58] sm:$0xff]
        %v2670 = vld [vmem:[%s326 + $0x1c60] sm:$0xff]
        %v2671 = vld [vmem:[%s326 + $0x1c68] sm:$0xff]
        %v2672 = vld [vmem:[%s326 + $0x1c70] sm:$0xff]
        %v2673 = vld [vmem:[%s326 + $0x1c78] sm:$0xff]
        %v2674 = vld [vmem:[%s326 + $0x1c80] sm:$0xff]
        %v2675 = vld [vmem:[%s326 + $0x1c88] sm:$0xff]
        %v2676 = vld [vmem:[%s326 + $0x1c90] sm:$0xff]
        %v2677 = vld [vmem:[%s326 + $0x1c98] sm:$0xff]
        %v2678 = vld [vmem:[%s326 + $0x1ca0] sm:$0xff]
        %v2679 = vld [vmem:[%s326 + $0x1ca8] sm:$0xff]
        %v2680 = vld [vmem:[%s326 + $0x1cb0] sm:$0xff]
        %v2681 = vld [vmem:[%s326 + $0x1cb8] sm:$0xff]
        %v2682 = vld [vmem:[%s326 + $0x1cc0] sm:$0xff]
        %v2683 = vld [vmem:[%s326 + $0x1cc8] sm:$0xff]
        %v2684 = vld [vmem:[%s326 + $0x1cd0] sm:$0xff]
        %v2685 = vld [vmem:[%s326 + $0x1cd8] sm:$0xff]
        %v2686 = vld [vmem:[%s326 + $0x1ce0] sm:$0xff]
        %v2687 = vld [vmem:[%s326 + $0x1ce8] sm:$0xff]
        %v2688 = vld [vmem:[%s326 + $0x1cf0] sm:$0xff]
        %v2689 = vld [vmem:[%s326 + $0x1cf8] sm:$0xff]
        %v2690 = vld [vmem:[%s326 + $0x1d00] sm:$0xff]
        %v2691 = vld [vmem:[%s326 + $0x1d08] sm:$0xff]
        %v2692 = vld [vmem:[%s326 + $0x1d10] sm:$0xff]
        %v2693 = vld [vmem:[%s326 + $0x1d18] sm:$0xff]
        %v2694 = vld [vmem:[%s326 + $0x1d20] sm:$0xff]
        %v2695 = vld [vmem:[%s326 + $0x1d28] sm:$0xff]
        %v2696 = vld [vmem:[%s326 + $0x1d30] sm:$0xff]
        %v2697 = vld [vmem:[%s326 + $0x1d38] sm:$0xff]
        %v2698 = vld [vmem:[%s326 + $0x1d40] sm:$0xff]
        %v2699 = vld [vmem:[%s326 + $0x1d48] sm:$0xff]
        %v2700 = vld [vmem:[%s326 + $0x1d50] sm:$0xff]
        %v2701 = vld [vmem:[%s326 + $0x1d58] sm:$0xff]
        %v2702 = vld [vmem:[%s326 + $0x1d60] sm:$0xff]
        %v2703 = vld [vmem:[%s326 + $0x1d68] sm:$0xff]
        %v2704 = vld [vmem:[%s326 + $0x1d70] sm:$0xff]
        %v2705 = vld [vmem:[%s326 + $0x1d78] sm:$0xff]
        %v2706 = vld [vmem:[%s326 + $0x1d80] sm:$0xff]
        %v2707 = vld [vmem:[%s326 + $0x1d88] sm:$0xff]
        %v2708 = vld [vmem:[%s326 + $0x1d90] sm:$0xff]
        %v2709 = vld [vmem:[%s326 + $0x1d98] sm:$0xff]
        %v2710 = vld [vmem:[%s326 + $0x1da0] sm:$0xff]
        %v2711 = vld [vmem:[%s326 + $0x1da8] sm:$0xff]
        %v2712 = vld [vmem:[%s326 + $0x1db0] sm:$0xff]
        %v2713 = vld [vmem:[%s326 + $0x1db8] sm:$0xff]
        %v2714 = vld [vmem:[%s326 + $0x1dc0] sm:$0xff]
        %v2715 = vld [vmem:[%s326 + $0x1dc8] sm:$0xff]
        %v2716 = vld [vmem:[%s326 + $0x1dd0] sm:$0xff]
        %v2717 = vld [vmem:[%s326 + $0x1dd8] sm:$0xff]
        %v2718 = vld [vmem:[%s326 + $0x1de0] sm:$0xff]
        %v2719 = vld [vmem:[%s326 + $0x1de8] sm:$0xff]
        %v2720 = vld [vmem:[%s326 + $0x1df0] sm:$0xff]
        %v2721 = vld [vmem:[%s326 + $0x1df8] sm:$0xff]
        %v2722 = vld [vmem:[%s326 + $0x1e00] sm:$0xff]
        %v2723 = vld [vmem:[%s326 + $0x1e08] sm:$0xff]
        %v2724 = vld [vmem:[%s326 + $0x1e10] sm:$0xff]
        %v2725 = vld [vmem:[%s326 + $0x1e18] sm:$0xff]
        %v2726 = vld [vmem:[%s326 + $0x1e20] sm:$0xff]
        %v2727 = vld [vmem:[%s326 + $0x1e28] sm:$0xff]
        %v2728 = vld [vmem:[%s326 + $0x1e30] sm:$0xff]
        %v2729 = vld [vmem:[%s326 + $0x1e38] sm:$0xff]
        %v2730 = vld [vmem:[%s326 + $0x1e40] sm:$0xff]
        %v2731 = vld [vmem:[%s326 + $0x1e48] sm:$0xff]
        %v2732 = vld [vmem:[%s326 + $0x1e50] sm:$0xff]
        %v2733 = vld [vmem:[%s326 + $0x1e58] sm:$0xff]
        %v2734 = vld [vmem:[%s326 + $0x1e60] sm:$0xff]
        %v2735 = vld [vmem:[%s326 + $0x1e68] sm:$0xff]
        %v2736 = vld [vmem:[%s326 + $0x1e70] sm:$0xff]
        %v2737 = vld [vmem:[%s326 + $0x1e78] sm:$0xff]
        %v2738 = vld [vmem:[%s326 + $0x1e80] sm:$0xff]
        %v2739 = vld [vmem:[%s326 + $0x1e88] sm:$0xff]
        %v2740 = vld [vmem:[%s326 + $0x1e90] sm:$0xff]
        %v2741 = vld [vmem:[%s326 + $0x1e98] sm:$0xff]
        %v2742 = vld [vmem:[%s326 + $0x1ea0] sm:$0xff]
        %v2743 = vld [vmem:[%s326 + $0x1ea8] sm:$0xff]
        %v2744 = vld [vmem:[%s326 + $0x1eb0] sm:$0xff]
        %v2745 = vld [vmem:[%s326 + $0x1eb8] sm:$0xff]
        %v2746 = vld [vmem:[%s326 + $0x1ec0] sm:$0xff]
        %v2747 = vld [vmem:[%s326 + $0x1ec8] sm:$0xff]
        %v2748 = vld [vmem:[%s326 + $0x1ed0] sm:$0xff]
        %v2749 = vld [vmem:[%s326 + $0x1ed8] sm:$0xff]
        %v2750 = vld [vmem:[%s326 + $0x1ee0] sm:$0xff]
        %v2751 = vld [vmem:[%s326 + $0x1ee8] sm:$0xff]
        %v2752 = vld [vmem:[%s326 + $0x1ef0] sm:$0xff]
        %v2753 = vld [vmem:[%s326 + $0x1ef8] sm:$0xff]
        %v2754 = vld [vmem:[%s326 + $0x1f00] sm:$0xff]
        %v2755 = vld [vmem:[%s326 + $0x1f08] sm:$0xff]
        %v2756 = vld [vmem:[%s326 + $0x1f10] sm:$0xff]
        %v2757 = vld [vmem:[%s326 + $0x1f18] sm:$0xff]
        %v2758 = vld [vmem:[%s326 + $0x1f20] sm:$0xff]
        %v2759 = vld [vmem:[%s326 + $0x1f28] sm:$0xff]
        %v2760 = vld [vmem:[%s326 + $0x1f30] sm:$0xff]
        %v2761 = vld [vmem:[%s326 + $0x1f38] sm:$0xff]
        %v2762 = vld [vmem:[%s326 + $0x1f40] sm:$0xff]
        %v2763 = vld [vmem:[%s326 + $0x1f48] sm:$0xff]
        %v2764 = vld [vmem:[%s326 + $0x1f50] sm:$0xff]
        %v2765 = vld [vmem:[%s326 + $0x1f58] sm:$0xff]
        %v2766 = vld [vmem:[%s326 + $0x1f60] sm:$0xff]
        %v2767 = vld [vmem:[%s326 + $0x1f68] sm:$0xff]
        %v2768 = vld [vmem:[%s326 + $0x1f70] sm:$0xff]
        %v2769 = vld [vmem:[%s326 + $0x1f78] sm:$0xff]
        %v2770 = vld [vmem:[%s326 + $0x1f80] sm:$0xff]
        %v2771 = vld [vmem:[%s326 + $0x1f88] sm:$0xff]
        %v2772 = vld [vmem:[%s326 + $0x1f90] sm:$0xff]
        %v2773 = vld [vmem:[%s326 + $0x1f98] sm:$0xff]
        %v2774 = vld [vmem:[%s326 + $0x1fa0] sm:$0xff]
        %v2775 = vld [vmem:[%s326 + $0x1fa8] sm:$0xff]
        %v2776 = vld [vmem:[%s326 + $0x1fb0] sm:$0xff]
        %v2777 = vld [vmem:[%s326 + $0x1fb8] sm:$0xff]
        %v2778 = vld [vmem:[%s326 + $0x1fc0] sm:$0xff]
        %v2779 = vld [vmem:[%s326 + $0x1fc8] sm:$0xff]
        %v2780 = vld [vmem:[%s326 + $0x1fd0] sm:$0xff]
        %v2781 = vld [vmem:[%s326 + $0x1fd8] sm:$0xff]
        %v2782 = vld [vmem:[%s326 + $0x1fe0] sm:$0xff]
        %v2783 = vld [vmem:[%s326 + $0x1fe8] sm:$0xff]
        %v2784 = vld [vmem:[%s326 + $0x1ff0] sm:$0xff]
        %v2785 = vld [vmem:[%s326 + $0x1ff8] sm:$0xff]
        %v2786 = vld [vmem:[%s335] sm:$0xff]
        %v2788 = vlaneseq
        %v2789 = vshrl.u32 %v2788, 7
        %v2790 = vsub.s32 0, %v2789
        %v2791 = vrot.slane %v2786, %v2790
        %v2792 = vlaneseq
        %v2793 = vshrl.u32 %v2792, 7
        %v2794 = vsub.s32 1, %v2793
        %v2795 = vrot.slane %v2786, %v2794
        %v2796 = vlaneseq
        %v2797 = vshrl.u32 %v2796, 7
        %v2798 = vsub.s32 2, %v2797
        %v2799 = vrot.slane %v2786, %v2798
        %v2800 = vlaneseq
        %v2801 = vshrl.u32 %v2800, 7
        %v2802 = vsub.s32 3, %v2801
        %v2803 = vrot.slane %v2786, %v2802
        %v2804 = vlaneseq
        %v2805 = vshrl.u32 %v2804, 7
        %v2806 = vsub.s32 4, %v2805
        %v2807 = vrot.slane %v2786, %v2806
        %v2808 = vlaneseq
        %v2809 = vshrl.u32 %v2808, 7
        %v2810 = vsub.s32 5, %v2809
        %v2811 = vrot.slane %v2786, %v2810
        %v2812 = vlaneseq
        %v2813 = vshrl.u32 %v2812, 7
        %v2814 = vsub.s32 6, %v2813
        %v2815 = vrot.slane %v2786, %v2814
        %v2816 = vlaneseq
        %v2817 = vshrl.u32 %v2816, 7
        %v2818 = vsub.s32 7, %v2817
        %v2819 = vrot.slane %v2786, %v2818
        %v3852 = vunpack.c.l.b16 %v1762
        %v3853 = vunpack.c.h.b16 %v1762
        %v3854 = vunpack.c.l.b16 %v1763
        %v3855 = vunpack.c.h.b16 %v1763
        %v3856 = vunpack.c.l.b16 %v1764
        %v3857 = vunpack.c.h.b16 %v1764
        %v3858 = vunpack.c.l.b16 %v1765
        %v3859 = vunpack.c.h.b16 %v1765
        %v3860 = vunpack.c.l.b16 %v1766
        %v3861 = vunpack.c.h.b16 %v1766
        %v3862 = vunpack.c.l.b16 %v1767
        %v3863 = vunpack.c.h.b16 %v1767
        %v3864 = vunpack.c.l.b16 %v1768
        %v3865 = vunpack.c.h.b16 %v1768
        %v3866 = vunpack.c.l.b16 %v1769
        %v3867 = vunpack.c.h.b16 %v1769
        %v3868 = vunpack.c.l.b16 %v1770
        %v3869 = vunpack.c.h.b16 %v1770
        %v3870 = vunpack.c.l.b16 %v1771
        %v3871 = vunpack.c.h.b16 %v1771
        %v3872 = vunpack.c.l.b16 %v1772
        %v3873 = vunpack.c.h.b16 %v1772
        %v3874 = vunpack.c.l.b16 %v1773
        %v3875 = vunpack.c.h.b16 %v1773
        %v3876 = vunpack.c.l.b16 %v1774
        %v3877 = vunpack.c.h.b16 %v1774
        %v3878 = vunpack.c.l.b16 %v1775
        %v3879 = vunpack.c.h.b16 %v1775
        %v3880 = vunpack.c.l.b16 %v1776
        %v3881 = vunpack.c.h.b16 %v1776
        %v3882 = vunpack.c.l.b16 %v1777
        %v3883 = vunpack.c.h.b16 %v1777
        %v3884 = vunpack.c.l.b16 %v1778
        %v3885 = vunpack.c.h.b16 %v1778
        %v3886 = vunpack.c.l.b16 %v1779
        %v3887 = vunpack.c.h.b16 %v1779
        %v3888 = vunpack.c.l.b16 %v1780
        %v3889 = vunpack.c.h.b16 %v1780
        %v3890 = vunpack.c.l.b16 %v1781
        %v3891 = vunpack.c.h.b16 %v1781
        %v3892 = vunpack.c.l.b16 %v1782
        %v3893 = vunpack.c.h.b16 %v1782
        %v3894 = vunpack.c.l.b16 %v1783
        %v3895 = vunpack.c.h.b16 %v1783
        %v3896 = vunpack.c.l.b16 %v1784
        %v3897 = vunpack.c.h.b16 %v1784
        %v3898 = vunpack.c.l.b16 %v1785
        %v3899 = vunpack.c.h.b16 %v1785
        %v3900 = vunpack.c.l.b16 %v1786
        %v3901 = vunpack.c.h.b16 %v1786
        %v3902 = vunpack.c.l.b16 %v1787
        %v3903 = vunpack.c.h.b16 %v1787
        %v3904 = vunpack.c.l.b16 %v1788
        %v3905 = vunpack.c.h.b16 %v1788
        %v3906 = vunpack.c.l.b16 %v1789
        %v3907 = vunpack.c.h.b16 %v1789
        %v3908 = vunpack.c.l.b16 %v1790
        %v3909 = vunpack.c.h.b16 %v1790
        %v3910 = vunpack.c.l.b16 %v1791
        %v3911 = vunpack.c.h.b16 %v1791
        %v3912 = vunpack.c.l.b16 %v1792
        %v3913 = vunpack.c.h.b16 %v1792
        %v3914 = vunpack.c.l.b16 %v1793
        %v3915 = vunpack.c.h.b16 %v1793
        %v3916 = vunpack.c.l.b16 %v1794
        %v3917 = vunpack.c.h.b16 %v1794
        %v3918 = vunpack.c.l.b16 %v1795
        %v3919 = vunpack.c.h.b16 %v1795
        %v3920 = vunpack.c.l.b16 %v1796
        %v3921 = vunpack.c.h.b16 %v1796
        %v3922 = vunpack.c.l.b16 %v1797
        %v3923 = vunpack.c.h.b16 %v1797
        %v3924 = vunpack.c.l.b16 %v1798
        %v3925 = vunpack.c.h.b16 %v1798
        %v3926 = vunpack.c.l.b16 %v1799
        %v3927 = vunpack.c.h.b16 %v1799
        %v3928 = vunpack.c.l.b16 %v1800
        %v3929 = vunpack.c.h.b16 %v1800
        %v3930 = vunpack.c.l.b16 %v1801
        %v3931 = vunpack.c.h.b16 %v1801
        %v3932 = vunpack.c.l.b16 %v1802
        %v3933 = vunpack.c.h.b16 %v1802
        %v3934 = vunpack.c.l.b16 %v1803
        %v3935 = vunpack.c.h.b16 %v1803
        %v3936 = vunpack.c.l.b16 %v1804
        %v3937 = vunpack.c.h.b16 %v1804
        %v3938 = vunpack.c.l.b16 %v1805
        %v3939 = vunpack.c.h.b16 %v1805
        %v3940 = vunpack.c.l.b16 %v1806
        %v3941 = vunpack.c.h.b16 %v1806
        %v3942 = vunpack.c.l.b16 %v1807
        %v3943 = vunpack.c.h.b16 %v1807
        %v3944 = vunpack.c.l.b16 %v1808
        %v3945 = vunpack.c.h.b16 %v1808
        %v3946 = vunpack.c.l.b16 %v1809
        %v3947 = vunpack.c.h.b16 %v1809
        %v3948 = vunpack.c.l.b16 %v1810
        %v3949 = vunpack.c.h.b16 %v1810
        %v3950 = vunpack.c.l.b16 %v1811
        %v3951 = vunpack.c.h.b16 %v1811
        %v3952 = vunpack.c.l.b16 %v1812
        %v3953 = vunpack.c.h.b16 %v1812
        %v3954 = vunpack.c.l.b16 %v1813
        %v3955 = vunpack.c.h.b16 %v1813
        %v3956 = vunpack.c.l.b16 %v1814
        %v3957 = vunpack.c.h.b16 %v1814
        %v3958 = vunpack.c.l.b16 %v1815
        %v3959 = vunpack.c.h.b16 %v1815
        %v3960 = vunpack.c.l.b16 %v1816
        %v3961 = vunpack.c.h.b16 %v1816
        %v3962 = vunpack.c.l.b16 %v1817
        %v3963 = vunpack.c.h.b16 %v1817
        %v3964 = vunpack.c.l.b16 %v1818
        %v3965 = vunpack.c.h.b16 %v1818
        %v3966 = vunpack.c.l.b16 %v1819
        %v3967 = vunpack.c.h.b16 %v1819
        %v3968 = vunpack.c.l.b16 %v1820
        %v3969 = vunpack.c.h.b16 %v1820
        %v3970 = vunpack.c.l.b16 %v1821
        %v3971 = vunpack.c.h.b16 %v1821
        %v3972 = vunpack.c.l.b16 %v1822
        %v3973 = vunpack.c.h.b16 %v1822
        %v3974 = vunpack.c.l.b16 %v1823
        %v3975 = vunpack.c.h.b16 %v1823
        %v3976 = vunpack.c.l.b16 %v1824
        %v3977 = vunpack.c.h.b16 %v1824
        %v3978 = vunpack.c.l.b16 %v1825
        %v3979 = vunpack.c.h.b16 %v1825
        %v3980 = vunpack.c.l.b16 %v1826
        %v3981 = vunpack.c.h.b16 %v1826
        %v3982 = vunpack.c.l.b16 %v1827
        %v3983 = vunpack.c.h.b16 %v1827
        %v3984 = vunpack.c.l.b16 %v1828
        %v3985 = vunpack.c.h.b16 %v1828
        %v3986 = vunpack.c.l.b16 %v1829
        %v3987 = vunpack.c.h.b16 %v1829
        %v3988 = vunpack.c.l.b16 %v1830
        %v3989 = vunpack.c.h.b16 %v1830
        %v3990 = vunpack.c.l.b16 %v1831
        %v3991 = vunpack.c.h.b16 %v1831
        %v3992 = vunpack.c.l.b16 %v1832
        %v3993 = vunpack.c.h.b16 %v1832
        %v3994 = vunpack.c.l.b16 %v1833
        %v3995 = vunpack.c.h.b16 %v1833
        %v3996 = vunpack.c.l.b16 %v1834
        %v3997 = vunpack.c.h.b16 %v1834
        %v3998 = vunpack.c.l.b16 %v1835
        %v3999 = vunpack.c.h.b16 %v1835
        %v4000 = vunpack.c.l.b16 %v1836
        %v4001 = vunpack.c.h.b16 %v1836
        %v4002 = vunpack.c.l.b16 %v1837
        %v4003 = vunpack.c.h.b16 %v1837
        %v4004 = vunpack.c.l.b16 %v1838
        %v4005 = vunpack.c.h.b16 %v1838
        %v4006 = vunpack.c.l.b16 %v1839
        %v4007 = vunpack.c.h.b16 %v1839
        %v4008 = vunpack.c.l.b16 %v1840
        %v4009 = vunpack.c.h.b16 %v1840
        %v4010 = vunpack.c.l.b16 %v1841
        %v4011 = vunpack.c.h.b16 %v1841
        %v4012 = vunpack.c.l.b16 %v1842
        %v4013 = vunpack.c.h.b16 %v1842
        %v4014 = vunpack.c.l.b16 %v1843
        %v4015 = vunpack.c.h.b16 %v1843
        %v4016 = vunpack.c.l.b16 %v1844
        %v4017 = vunpack.c.h.b16 %v1844
        %v4018 = vunpack.c.l.b16 %v1845
        %v4019 = vunpack.c.h.b16 %v1845
        %v4020 = vunpack.c.l.b16 %v1846
        %v4021 = vunpack.c.h.b16 %v1846
        %v4022 = vunpack.c.l.b16 %v1847
        %v4023 = vunpack.c.h.b16 %v1847
        %v4024 = vunpack.c.l.b16 %v1848
        %v4025 = vunpack.c.h.b16 %v1848
        %v4026 = vunpack.c.l.b16 %v1849
        %v4027 = vunpack.c.h.b16 %v1849
        %v4028 = vunpack.c.l.b16 %v1850
        %v4029 = vunpack.c.h.b16 %v1850
        %v4030 = vunpack.c.l.b16 %v1851
        %v4031 = vunpack.c.h.b16 %v1851
        %v4032 = vunpack.c.l.b16 %v1852
        %v4033 = vunpack.c.h.b16 %v1852
        %v4034 = vunpack.c.l.b16 %v1853
        %v4035 = vunpack.c.h.b16 %v1853
        %v4036 = vunpack.c.l.b16 %v1854
        %v4037 = vunpack.c.h.b16 %v1854
        %v4038 = vunpack.c.l.b16 %v1855
        %v4039 = vunpack.c.h.b16 %v1855
        %v4040 = vunpack.c.l.b16 %v1856
        %v4041 = vunpack.c.h.b16 %v1856
        %v4042 = vunpack.c.l.b16 %v1857
        %v4043 = vunpack.c.h.b16 %v1857
        %v4044 = vunpack.c.l.b16 %v1858
        %v4045 = vunpack.c.h.b16 %v1858
        %v4046 = vunpack.c.l.b16 %v1859
        %v4047 = vunpack.c.h.b16 %v1859
        %v4048 = vunpack.c.l.b16 %v1860
        %v4049 = vunpack.c.h.b16 %v1860
        %v4050 = vunpack.c.l.b16 %v1861
        %v4051 = vunpack.c.h.b16 %v1861
        %v4052 = vunpack.c.l.b16 %v1862
        %v4053 = vunpack.c.h.b16 %v1862
        %v4054 = vunpack.c.l.b16 %v1863
        %v4055 = vunpack.c.h.b16 %v1863
        %v4056 = vunpack.c.l.b16 %v1864
        %v4057 = vunpack.c.h.b16 %v1864
        %v4058 = vunpack.c.l.b16 %v1865
        %v4059 = vunpack.c.h.b16 %v1865
        %v4060 = vunpack.c.l.b16 %v1866
        %v4061 = vunpack.c.h.b16 %v1866
        %v4062 = vunpack.c.l.b16 %v1867
        %v4063 = vunpack.c.h.b16 %v1867
        %v4064 = vunpack.c.l.b16 %v1868
        %v4065 = vunpack.c.h.b16 %v1868
        %v4066 = vunpack.c.l.b16 %v1869
        %v4067 = vunpack.c.h.b16 %v1869
        %v4068 = vunpack.c.l.b16 %v1870
        %v4069 = vunpack.c.h.b16 %v1870
        %v4070 = vunpack.c.l.b16 %v1871
        %v4071 = vunpack.c.h.b16 %v1871
        %v4072 = vunpack.c.l.b16 %v1872
        %v4073 = vunpack.c.h.b16 %v1872
        %v4074 = vunpack.c.l.b16 %v1873
        %v4075 = vunpack.c.h.b16 %v1873
        %v4076 = vunpack.c.l.b16 %v1874
        %v4077 = vunpack.c.h.b16 %v1874
        %v4078 = vunpack.c.l.b16 %v1875
        %v4079 = vunpack.c.h.b16 %v1875
        %v4080 = vunpack.c.l.b16 %v1876
        %v4081 = vunpack.c.h.b16 %v1876
        %v4082 = vunpack.c.l.b16 %v1877
        %v4083 = vunpack.c.h.b16 %v1877
        %v4084 = vunpack.c.l.b16 %v1878
        %v4085 = vunpack.c.h.b16 %v1878
        %v4086 = vunpack.c.l.b16 %v1879
        %v4087 = vunpack.c.h.b16 %v1879
        %v4088 = vunpack.c.l.b16 %v1880
        %v4089 = vunpack.c.h.b16 %v1880
        %v4090 = vunpack.c.l.b16 %v1881
        %v4091 = vunpack.c.h.b16 %v1881
        %v4092 = vunpack.c.l.b16 %v1882
        %v4093 = vunpack.c.h.b16 %v1882
        %v4094 = vunpack.c.l.b16 %v1883
        %v4095 = vunpack.c.h.b16 %v1883
        %v4096 = vunpack.c.l.b16 %v1884
        %v4097 = vunpack.c.h.b16 %v1884
        %v4098 = vunpack.c.l.b16 %v1885
        %v4099 = vunpack.c.h.b16 %v1885
        %v4100 = vunpack.c.l.b16 %v1886
        %v4101 = vunpack.c.h.b16 %v1886
        %v4102 = vunpack.c.l.b16 %v1887
        %v4103 = vunpack.c.h.b16 %v1887
        %v4104 = vunpack.c.l.b16 %v1888
        %v4105 = vunpack.c.h.b16 %v1888
        %v4106 = vunpack.c.l.b16 %v1889
        %v4107 = vunpack.c.h.b16 %v1889
        %v4108 = vunpack.c.l.b16 %v1890
        %v4109 = vunpack.c.h.b16 %v1890
        %v4110 = vunpack.c.l.b16 %v1891
        %v4111 = vunpack.c.h.b16 %v1891
        %v4112 = vunpack.c.l.b16 %v1892
        %v4113 = vunpack.c.h.b16 %v1892
        %v4114 = vunpack.c.l.b16 %v1893
        %v4115 = vunpack.c.h.b16 %v1893
        %v4116 = vunpack.c.l.b16 %v1894
        %v4117 = vunpack.c.h.b16 %v1894
        %v4118 = vunpack.c.l.b16 %v1895
        %v4119 = vunpack.c.h.b16 %v1895
        %v4120 = vunpack.c.l.b16 %v1896
        %v4121 = vunpack.c.h.b16 %v1896
        %v4122 = vunpack.c.l.b16 %v1897
        %v4123 = vunpack.c.h.b16 %v1897
        %v4124 = vunpack.c.l.b16 %v1898
        %v4125 = vunpack.c.h.b16 %v1898
        %v4126 = vunpack.c.l.b16 %v1899
        %v4127 = vunpack.c.h.b16 %v1899
        %v4128 = vunpack.c.l.b16 %v1900
        %v4129 = vunpack.c.h.b16 %v1900
        %v4130 = vunpack.c.l.b16 %v1901
        %v4131 = vunpack.c.h.b16 %v1901
        %v4132 = vunpack.c.l.b16 %v1902
        %v4133 = vunpack.c.h.b16 %v1902
        %v4134 = vunpack.c.l.b16 %v1903
        %v4135 = vunpack.c.h.b16 %v1903
        %v4136 = vunpack.c.l.b16 %v1904
        %v4137 = vunpack.c.h.b16 %v1904
        %v4138 = vunpack.c.l.b16 %v1905
        %v4139 = vunpack.c.h.b16 %v1905
        %v4140 = vunpack.c.l.b16 %v1906
        %v4141 = vunpack.c.h.b16 %v1906
        %v4142 = vunpack.c.l.b16 %v1907
        %v4143 = vunpack.c.h.b16 %v1907
        %v4144 = vunpack.c.l.b16 %v1908
        %v4145 = vunpack.c.h.b16 %v1908
        %v4146 = vunpack.c.l.b16 %v1909
        %v4147 = vunpack.c.h.b16 %v1909
        %v4148 = vunpack.c.l.b16 %v1910
        %v4149 = vunpack.c.h.b16 %v1910
        %v4150 = vunpack.c.l.b16 %v1911
        %v4151 = vunpack.c.h.b16 %v1911
        %v4152 = vunpack.c.l.b16 %v1912
        %v4153 = vunpack.c.h.b16 %v1912
        %v4154 = vunpack.c.l.b16 %v1913
        %v4155 = vunpack.c.h.b16 %v1913
        %v4156 = vunpack.c.l.b16 %v1914
        %v4157 = vunpack.c.h.b16 %v1914
        %v4158 = vunpack.c.l.b16 %v1915
        %v4159 = vunpack.c.h.b16 %v1915
        %v4160 = vunpack.c.l.b16 %v1916
        %v4161 = vunpack.c.h.b16 %v1916
        %v4162 = vunpack.c.l.b16 %v1917
        %v4163 = vunpack.c.h.b16 %v1917
        %v4164 = vunpack.c.l.b16 %v1918
        %v4165 = vunpack.c.h.b16 %v1918
        %v4166 = vunpack.c.l.b16 %v1919
        %v4167 = vunpack.c.h.b16 %v1919
        %v4168 = vunpack.c.l.b16 %v1920
        %v4169 = vunpack.c.h.b16 %v1920
        %v4170 = vunpack.c.l.b16 %v1921
        %v4171 = vunpack.c.h.b16 %v1921
        %v4172 = vunpack.c.l.b16 %v1922
        %v4173 = vunpack.c.h.b16 %v1922
        %v4174 = vunpack.c.l.b16 %v1923
        %v4175 = vunpack.c.h.b16 %v1923
        %v4176 = vunpack.c.l.b16 %v1924
        %v4177 = vunpack.c.h.b16 %v1924
        %v4178 = vunpack.c.l.b16 %v1925
        %v4179 = vunpack.c.h.b16 %v1925
        %v4180 = vunpack.c.l.b16 %v1926
        %v4181 = vunpack.c.h.b16 %v1926
        %v4182 = vunpack.c.l.b16 %v1927
        %v4183 = vunpack.c.h.b16 %v1927
        %v4184 = vunpack.c.l.b16 %v1928
        %v4185 = vunpack.c.h.b16 %v1928
        %v4186 = vunpack.c.l.b16 %v1929
        %v4187 = vunpack.c.h.b16 %v1929
        %v4188 = vunpack.c.l.b16 %v1930
        %v4189 = vunpack.c.h.b16 %v1930
        %v4190 = vunpack.c.l.b16 %v1931
        %v4191 = vunpack.c.h.b16 %v1931
        %v4192 = vunpack.c.l.b16 %v1932
        %v4193 = vunpack.c.h.b16 %v1932
        %v4194 = vunpack.c.l.b16 %v1933
        %v4195 = vunpack.c.h.b16 %v1933
        %v4196 = vunpack.c.l.b16 %v1934
        %v4197 = vunpack.c.h.b16 %v1934
        %v4198 = vunpack.c.l.b16 %v1935
        %v4199 = vunpack.c.h.b16 %v1935
        %v4200 = vunpack.c.l.b16 %v1936
        %v4201 = vunpack.c.h.b16 %v1936
        %v4202 = vunpack.c.l.b16 %v1937
        %v4203 = vunpack.c.h.b16 %v1937
        %v4204 = vunpack.c.l.b16 %v1938
        %v4205 = vunpack.c.h.b16 %v1938
        %v4206 = vunpack.c.l.b16 %v1939
        %v4207 = vunpack.c.h.b16 %v1939
        %v4208 = vunpack.c.l.b16 %v1940
        %v4209 = vunpack.c.h.b16 %v1940
        %v4210 = vunpack.c.l.b16 %v1941
        %v4211 = vunpack.c.h.b16 %v1941
        %v4212 = vunpack.c.l.b16 %v1942
        %v4213 = vunpack.c.h.b16 %v1942
        %v4214 = vunpack.c.l.b16 %v1943
        %v4215 = vunpack.c.h.b16 %v1943
        %v4216 = vunpack.c.l.b16 %v1944
        %v4217 = vunpack.c.h.b16 %v1944
        %v4218 = vunpack.c.l.b16 %v1945
        %v4219 = vunpack.c.h.b16 %v1945
        %v4220 = vunpack.c.l.b16 %v1946
        %v4221 = vunpack.c.h.b16 %v1946
        %v4222 = vunpack.c.l.b16 %v1947
        %v4223 = vunpack.c.h.b16 %v1947
        %v4224 = vunpack.c.l.b16 %v1948
        %v4225 = vunpack.c.h.b16 %v1948
        %v4226 = vunpack.c.l.b16 %v1949
        %v4227 = vunpack.c.h.b16 %v1949
        %v4228 = vunpack.c.l.b16 %v1950
        %v4229 = vunpack.c.h.b16 %v1950
        %v4230 = vunpack.c.l.b16 %v1951
        %v4231 = vunpack.c.h.b16 %v1951
        %v4232 = vunpack.c.l.b16 %v1952
        %v4233 = vunpack.c.h.b16 %v1952
        %v4234 = vunpack.c.l.b16 %v1953
        %v4235 = vunpack.c.h.b16 %v1953
        %v4236 = vunpack.c.l.b16 %v1954
        %v4237 = vunpack.c.h.b16 %v1954
        %v4238 = vunpack.c.l.b16 %v1955
        %v4239 = vunpack.c.h.b16 %v1955
        %v4240 = vunpack.c.l.b16 %v1956
        %v4241 = vunpack.c.h.b16 %v1956
        %v4242 = vunpack.c.l.b16 %v1957
        %v4243 = vunpack.c.h.b16 %v1957
        %v4244 = vunpack.c.l.b16 %v1958
        %v4245 = vunpack.c.h.b16 %v1958
        %v4246 = vunpack.c.l.b16 %v1959
        %v4247 = vunpack.c.h.b16 %v1959
        %v4248 = vunpack.c.l.b16 %v1960
        %v4249 = vunpack.c.h.b16 %v1960
        %v4250 = vunpack.c.l.b16 %v1961
        %v4251 = vunpack.c.h.b16 %v1961
        %v4252 = vunpack.c.l.b16 %v1962
        %v4253 = vunpack.c.h.b16 %v1962
        %v4254 = vunpack.c.l.b16 %v1963
        %v4255 = vunpack.c.h.b16 %v1963
        %v4256 = vunpack.c.l.b16 %v1964
        %v4257 = vunpack.c.h.b16 %v1964
        %v4258 = vunpack.c.l.b16 %v1965
        %v4259 = vunpack.c.h.b16 %v1965
        %v4260 = vunpack.c.l.b16 %v1966
        %v4261 = vunpack.c.h.b16 %v1966
        %v4262 = vunpack.c.l.b16 %v1967
        %v4263 = vunpack.c.h.b16 %v1967
        %v4264 = vunpack.c.l.b16 %v1968
        %v4265 = vunpack.c.h.b16 %v1968
        %v4266 = vunpack.c.l.b16 %v1969
        %v4267 = vunpack.c.h.b16 %v1969
        %v4268 = vunpack.c.l.b16 %v1970
        %v4269 = vunpack.c.h.b16 %v1970
        %v4270 = vunpack.c.l.b16 %v1971
        %v4271 = vunpack.c.h.b16 %v1971
        %v4272 = vunpack.c.l.b16 %v1972
        %v4273 = vunpack.c.h.b16 %v1972
        %v4274 = vunpack.c.l.b16 %v1973
        %v4275 = vunpack.c.h.b16 %v1973
        %v4276 = vunpack.c.l.b16 %v1974
        %v4277 = vunpack.c.h.b16 %v1974
        %v4278 = vunpack.c.l.b16 %v1975
        %v4279 = vunpack.c.h.b16 %v1975
        %v4280 = vunpack.c.l.b16 %v1976
        %v4281 = vunpack.c.h.b16 %v1976
        %v4282 = vunpack.c.l.b16 %v1977
        %v4283 = vunpack.c.h.b16 %v1977
        %v4284 = vunpack.c.l.b16 %v1978
        %v4285 = vunpack.c.h.b16 %v1978
        %v4286 = vunpack.c.l.b16 %v1979
        %v4287 = vunpack.c.h.b16 %v1979
        %v4288 = vunpack.c.l.b16 %v1980
        %v4289 = vunpack.c.h.b16 %v1980
        %v4290 = vunpack.c.l.b16 %v1981
        %v4291 = vunpack.c.h.b16 %v1981
        %v4292 = vunpack.c.l.b16 %v1982
        %v4293 = vunpack.c.h.b16 %v1982
        %v4294 = vunpack.c.l.b16 %v1983
        %v4295 = vunpack.c.h.b16 %v1983
        %v4296 = vunpack.c.l.b16 %v1984
        %v4297 = vunpack.c.h.b16 %v1984
        %v4298 = vunpack.c.l.b16 %v1985
        %v4299 = vunpack.c.h.b16 %v1985
        %v4300 = vunpack.c.l.b16 %v1986
        %v4301 = vunpack.c.h.b16 %v1986
        %v4302 = vunpack.c.l.b16 %v1987
        %v4303 = vunpack.c.h.b16 %v1987
        %v4304 = vunpack.c.l.b16 %v1988
        %v4305 = vunpack.c.h.b16 %v1988
        %v4306 = vunpack.c.l.b16 %v1989
        %v4307 = vunpack.c.h.b16 %v1989
        %v4308 = vunpack.c.l.b16 %v1990
        %v4309 = vunpack.c.h.b16 %v1990
        %v4310 = vunpack.c.l.b16 %v1991
        %v4311 = vunpack.c.h.b16 %v1991
        %v4312 = vunpack.c.l.b16 %v1992
        %v4313 = vunpack.c.h.b16 %v1992
        %v4314 = vunpack.c.l.b16 %v1993
        %v4315 = vunpack.c.h.b16 %v1993
        %v4316 = vunpack.c.l.b16 %v1994
        %v4317 = vunpack.c.h.b16 %v1994
        %v4318 = vunpack.c.l.b16 %v1995
        %v4319 = vunpack.c.h.b16 %v1995
        %v4320 = vunpack.c.l.b16 %v1996
        %v4321 = vunpack.c.h.b16 %v1996
        %v4322 = vunpack.c.l.b16 %v1997
        %v4323 = vunpack.c.h.b16 %v1997
        %v4324 = vunpack.c.l.b16 %v1998
        %v4325 = vunpack.c.h.b16 %v1998
        %v4326 = vunpack.c.l.b16 %v1999
        %v4327 = vunpack.c.h.b16 %v1999
        %v4328 = vunpack.c.l.b16 %v2000
        %v4329 = vunpack.c.h.b16 %v2000
        %v4330 = vunpack.c.l.b16 %v2001
        %v4331 = vunpack.c.h.b16 %v2001
        %v4332 = vunpack.c.l.b16 %v2002
        %v4333 = vunpack.c.h.b16 %v2002
        %v4334 = vunpack.c.l.b16 %v2003
        %v4335 = vunpack.c.h.b16 %v2003
        %v4336 = vunpack.c.l.b16 %v2004
        %v4337 = vunpack.c.h.b16 %v2004
        %v4338 = vunpack.c.l.b16 %v2005
        %v4339 = vunpack.c.h.b16 %v2005
        %v4340 = vunpack.c.l.b16 %v2006
        %v4341 = vunpack.c.h.b16 %v2006
        %v4342 = vunpack.c.l.b16 %v2007
        %v4343 = vunpack.c.h.b16 %v2007
        %v4344 = vunpack.c.l.b16 %v2008
        %v4345 = vunpack.c.h.b16 %v2008
        %v4346 = vunpack.c.l.b16 %v2009
        %v4347 = vunpack.c.h.b16 %v2009
        %v4348 = vunpack.c.l.b16 %v2010
        %v4349 = vunpack.c.h.b16 %v2010
        %v4350 = vunpack.c.l.b16 %v2011
        %v4351 = vunpack.c.h.b16 %v2011
        %v4352 = vunpack.c.l.b16 %v2012
        %v4353 = vunpack.c.h.b16 %v2012
        %v4354 = vunpack.c.l.b16 %v2013
        %v4355 = vunpack.c.h.b16 %v2013
        %v4356 = vunpack.c.l.b16 %v2014
        %v4357 = vunpack.c.h.b16 %v2014
        %v4358 = vunpack.c.l.b16 %v2015
        %v4359 = vunpack.c.h.b16 %v2015
        %v4360 = vunpack.c.l.b16 %v2016
        %v4361 = vunpack.c.h.b16 %v2016
        %v4362 = vunpack.c.l.b16 %v2017
        %v4363 = vunpack.c.h.b16 %v2017
        %v4364 = vunpack.c.l.b16 %v2018
        %v4365 = vunpack.c.h.b16 %v2018
        %v4366 = vunpack.c.l.b16 %v2019
        %v4367 = vunpack.c.h.b16 %v2019
        %v4368 = vunpack.c.l.b16 %v2020
        %v4369 = vunpack.c.h.b16 %v2020
        %v4370 = vunpack.c.l.b16 %v2021
        %v4371 = vunpack.c.h.b16 %v2021
        %v4372 = vunpack.c.l.b16 %v2022
        %v4373 = vunpack.c.h.b16 %v2022
        %v4374 = vunpack.c.l.b16 %v2023
        %v4375 = vunpack.c.h.b16 %v2023
        %v4376 = vunpack.c.l.b16 %v2024
        %v4377 = vunpack.c.h.b16 %v2024
        %v4378 = vunpack.c.l.b16 %v2025
        %v4379 = vunpack.c.h.b16 %v2025
        %v4380 = vunpack.c.l.b16 %v2026
        %v4381 = vunpack.c.h.b16 %v2026
        %v4382 = vunpack.c.l.b16 %v2027
        %v4383 = vunpack.c.h.b16 %v2027
        %v4384 = vunpack.c.l.b16 %v2028
        %v4385 = vunpack.c.h.b16 %v2028
        %v4386 = vunpack.c.l.b16 %v2029
        %v4387 = vunpack.c.h.b16 %v2029
        %v4388 = vunpack.c.l.b16 %v2030
        %v4389 = vunpack.c.h.b16 %v2030
        %v4390 = vunpack.c.l.b16 %v2031
        %v4391 = vunpack.c.h.b16 %v2031
        %v4392 = vunpack.c.l.b16 %v2032
        %v4393 = vunpack.c.h.b16 %v2032
        %v4394 = vunpack.c.l.b16 %v2033
        %v4395 = vunpack.c.h.b16 %v2033
        %v4396 = vunpack.c.l.b16 %v2034
        %v4397 = vunpack.c.h.b16 %v2034
        %v4398 = vunpack.c.l.b16 %v2035
        %v4399 = vunpack.c.h.b16 %v2035
        %v4400 = vunpack.c.l.b16 %v2036
        %v4401 = vunpack.c.h.b16 %v2036
        %v4402 = vunpack.c.l.b16 %v2037
        %v4403 = vunpack.c.h.b16 %v2037
        %v4404 = vunpack.c.l.b16 %v2038
        %v4405 = vunpack.c.h.b16 %v2038
        %v4406 = vunpack.c.l.b16 %v2039
        %v4407 = vunpack.c.h.b16 %v2039
        %v4408 = vunpack.c.l.b16 %v2040
        %v4409 = vunpack.c.h.b16 %v2040
        %v4410 = vunpack.c.l.b16 %v2041
        %v4411 = vunpack.c.h.b16 %v2041
        %v4412 = vunpack.c.l.b16 %v2042
        %v4413 = vunpack.c.h.b16 %v2042
        %v4414 = vunpack.c.l.b16 %v2043
        %v4415 = vunpack.c.h.b16 %v2043
        %v4416 = vunpack.c.l.b16 %v2044
        %v4417 = vunpack.c.h.b16 %v2044
        %v4418 = vunpack.c.l.b16 %v2045
        %v4419 = vunpack.c.h.b16 %v2045
        %v4420 = vunpack.c.l.b16 %v2046
        %v4421 = vunpack.c.h.b16 %v2046
        %v4422 = vunpack.c.l.b16 %v2047
        %v4423 = vunpack.c.h.b16 %v2047
        %v4424 = vunpack.c.l.b16 %v2048
        %v4425 = vunpack.c.h.b16 %v2048
        %v4426 = vunpack.c.l.b16 %v2049
        %v4427 = vunpack.c.h.b16 %v2049
        %v4428 = vunpack.c.l.b16 %v2050
        %v4429 = vunpack.c.h.b16 %v2050
        %v4430 = vunpack.c.l.b16 %v2051
        %v4431 = vunpack.c.h.b16 %v2051
        %v4432 = vunpack.c.l.b16 %v2052
        %v4433 = vunpack.c.h.b16 %v2052
        %v4434 = vunpack.c.l.b16 %v2053
        %v4435 = vunpack.c.h.b16 %v2053
        %v4436 = vunpack.c.l.b16 %v2054
        %v4437 = vunpack.c.h.b16 %v2054
        %v4438 = vunpack.c.l.b16 %v2055
        %v4439 = vunpack.c.h.b16 %v2055
        %v4440 = vunpack.c.l.b16 %v2056
        %v4441 = vunpack.c.h.b16 %v2056
        %v4442 = vunpack.c.l.b16 %v2057
        %v4443 = vunpack.c.h.b16 %v2057
        %v4444 = vunpack.c.l.b16 %v2058
        %v4445 = vunpack.c.h.b16 %v2058
        %v4446 = vunpack.c.l.b16 %v2059
        %v4447 = vunpack.c.h.b16 %v2059
        %v4448 = vunpack.c.l.b16 %v2060
        %v4449 = vunpack.c.h.b16 %v2060
        %v4450 = vunpack.c.l.b16 %v2061
        %v4451 = vunpack.c.h.b16 %v2061
        %v4452 = vunpack.c.l.b16 %v2062
        %v4453 = vunpack.c.h.b16 %v2062
        %v4454 = vunpack.c.l.b16 %v2063
        %v4455 = vunpack.c.h.b16 %v2063
        %v4456 = vunpack.c.l.b16 %v2064
        %v4457 = vunpack.c.h.b16 %v2064
        %v4458 = vunpack.c.l.b16 %v2065
        %v4459 = vunpack.c.h.b16 %v2065
        %v4460 = vunpack.c.l.b16 %v2066
        %v4461 = vunpack.c.h.b16 %v2066
        %v4462 = vunpack.c.l.b16 %v2067
        %v4463 = vunpack.c.h.b16 %v2067
        %v4464 = vunpack.c.l.b16 %v2068
        %v4465 = vunpack.c.h.b16 %v2068
        %v4466 = vunpack.c.l.b16 %v2069
        %v4467 = vunpack.c.h.b16 %v2069
        %v4468 = vunpack.c.l.b16 %v2070
        %v4469 = vunpack.c.h.b16 %v2070
        %v4470 = vunpack.c.l.b16 %v2071
        %v4471 = vunpack.c.h.b16 %v2071
        %v4472 = vunpack.c.l.b16 %v2072
        %v4473 = vunpack.c.h.b16 %v2072
        %v4474 = vunpack.c.l.b16 %v2073
        %v4475 = vunpack.c.h.b16 %v2073
        %v4476 = vunpack.c.l.b16 %v2074
        %v4477 = vunpack.c.h.b16 %v2074
        %v4478 = vunpack.c.l.b16 %v2075
        %v4479 = vunpack.c.h.b16 %v2075
        %v4480 = vunpack.c.l.b16 %v2076
        %v4481 = vunpack.c.h.b16 %v2076
        %v4482 = vunpack.c.l.b16 %v2077
        %v4483 = vunpack.c.h.b16 %v2077
        %v4484 = vunpack.c.l.b16 %v2078
        %v4485 = vunpack.c.h.b16 %v2078
        %v4486 = vunpack.c.l.b16 %v2079
        %v4487 = vunpack.c.h.b16 %v2079
        %v4488 = vunpack.c.l.b16 %v2080
        %v4489 = vunpack.c.h.b16 %v2080
        %v4490 = vunpack.c.l.b16 %v2081
        %v4491 = vunpack.c.h.b16 %v2081
        %v4492 = vunpack.c.l.b16 %v2082
        %v4493 = vunpack.c.h.b16 %v2082
        %v4494 = vunpack.c.l.b16 %v2083
        %v4495 = vunpack.c.h.b16 %v2083
        %v4496 = vunpack.c.l.b16 %v2084
        %v4497 = vunpack.c.h.b16 %v2084
        %v4498 = vunpack.c.l.b16 %v2085
        %v4499 = vunpack.c.h.b16 %v2085
        %v4500 = vunpack.c.l.b16 %v2086
        %v4501 = vunpack.c.h.b16 %v2086
        %v4502 = vunpack.c.l.b16 %v2087
        %v4503 = vunpack.c.h.b16 %v2087
        %v4504 = vunpack.c.l.b16 %v2088
        %v4505 = vunpack.c.h.b16 %v2088
        %v4506 = vunpack.c.l.b16 %v2089
        %v4507 = vunpack.c.h.b16 %v2089
        %v4508 = vunpack.c.l.b16 %v2090
        %v4509 = vunpack.c.h.b16 %v2090
        %v4510 = vunpack.c.l.b16 %v2091
        %v4511 = vunpack.c.h.b16 %v2091
        %v4512 = vunpack.c.l.b16 %v2092
        %v4513 = vunpack.c.h.b16 %v2092
        %v4514 = vunpack.c.l.b16 %v2093
        %v4515 = vunpack.c.h.b16 %v2093
        %v4516 = vunpack.c.l.b16 %v2094
        %v4517 = vunpack.c.h.b16 %v2094
        %v4518 = vunpack.c.l.b16 %v2095
        %v4519 = vunpack.c.h.b16 %v2095
        %v4520 = vunpack.c.l.b16 %v2096
        %v4521 = vunpack.c.h.b16 %v2096
        %v4522 = vunpack.c.l.b16 %v2097
        %v4523 = vunpack.c.h.b16 %v2097
        %v4524 = vunpack.c.l.b16 %v2098
        %v4525 = vunpack.c.h.b16 %v2098
        %v4526 = vunpack.c.l.b16 %v2099
        %v4527 = vunpack.c.h.b16 %v2099
        %v4528 = vunpack.c.l.b16 %v2100
        %v4529 = vunpack.c.h.b16 %v2100
        %v4530 = vunpack.c.l.b16 %v2101
        %v4531 = vunpack.c.h.b16 %v2101
        %v4532 = vunpack.c.l.b16 %v2102
        %v4533 = vunpack.c.h.b16 %v2102
        %v4534 = vunpack.c.l.b16 %v2103
        %v4535 = vunpack.c.h.b16 %v2103
        %v4536 = vunpack.c.l.b16 %v2104
        %v4537 = vunpack.c.h.b16 %v2104
        %v4538 = vunpack.c.l.b16 %v2105
        %v4539 = vunpack.c.h.b16 %v2105
        %v4540 = vunpack.c.l.b16 %v2106
        %v4541 = vunpack.c.h.b16 %v2106
        %v4542 = vunpack.c.l.b16 %v2107
        %v4543 = vunpack.c.h.b16 %v2107
        %v4544 = vunpack.c.l.b16 %v2108
        %v4545 = vunpack.c.h.b16 %v2108
        %v4546 = vunpack.c.l.b16 %v2109
        %v4547 = vunpack.c.h.b16 %v2109
        %v4548 = vunpack.c.l.b16 %v2110
        %v4549 = vunpack.c.h.b16 %v2110
        %v4550 = vunpack.c.l.b16 %v2111
        %v4551 = vunpack.c.h.b16 %v2111
        %v4552 = vunpack.c.l.b16 %v2112
        %v4553 = vunpack.c.h.b16 %v2112
        %v4554 = vunpack.c.l.b16 %v2113
        %v4555 = vunpack.c.h.b16 %v2113
        %v4556 = vunpack.c.l.b16 %v2114
        %v4557 = vunpack.c.h.b16 %v2114
        %v4558 = vunpack.c.l.b16 %v2115
        %v4559 = vunpack.c.h.b16 %v2115
        %v4560 = vunpack.c.l.b16 %v2116
        %v4561 = vunpack.c.h.b16 %v2116
        %v4562 = vunpack.c.l.b16 %v2117
        %v4563 = vunpack.c.h.b16 %v2117
        %v4564 = vunpack.c.l.b16 %v2118
        %v4565 = vunpack.c.h.b16 %v2118
        %v4566 = vunpack.c.l.b16 %v2119
        %v4567 = vunpack.c.h.b16 %v2119
        %v4568 = vunpack.c.l.b16 %v2120
        %v4569 = vunpack.c.h.b16 %v2120
        %v4570 = vunpack.c.l.b16 %v2121
        %v4571 = vunpack.c.h.b16 %v2121
        %v4572 = vunpack.c.l.b16 %v2122
        %v4573 = vunpack.c.h.b16 %v2122
        %v4574 = vunpack.c.l.b16 %v2123
        %v4575 = vunpack.c.h.b16 %v2123
        %v4576 = vunpack.c.l.b16 %v2124
        %v4577 = vunpack.c.h.b16 %v2124
        %v4578 = vunpack.c.l.b16 %v2125
        %v4579 = vunpack.c.h.b16 %v2125
        %v4580 = vunpack.c.l.b16 %v2126
        %v4581 = vunpack.c.h.b16 %v2126
        %v4582 = vunpack.c.l.b16 %v2127
        %v4583 = vunpack.c.h.b16 %v2127
        %v4584 = vunpack.c.l.b16 %v2128
        %v4585 = vunpack.c.h.b16 %v2128
        %v4586 = vunpack.c.l.b16 %v2129
        %v4587 = vunpack.c.h.b16 %v2129
        %v4588 = vunpack.c.l.b16 %v2130
        %v4589 = vunpack.c.h.b16 %v2130
        %v4590 = vunpack.c.l.b16 %v2131
        %v4591 = vunpack.c.h.b16 %v2131
        %v4592 = vunpack.c.l.b16 %v2132
        %v4593 = vunpack.c.h.b16 %v2132
        %v4594 = vunpack.c.l.b16 %v2133
        %v4595 = vunpack.c.h.b16 %v2133
        %v4596 = vunpack.c.l.b16 %v2134
        %v4597 = vunpack.c.h.b16 %v2134
        %v4598 = vunpack.c.l.b16 %v2135
        %v4599 = vunpack.c.h.b16 %v2135
        %v4600 = vunpack.c.l.b16 %v2136
        %v4601 = vunpack.c.h.b16 %v2136
        %v4602 = vunpack.c.l.b16 %v2137
        %v4603 = vunpack.c.h.b16 %v2137
        %v4604 = vunpack.c.l.b16 %v2138
        %v4605 = vunpack.c.h.b16 %v2138
        %v4606 = vunpack.c.l.b16 %v2139
        %v4607 = vunpack.c.h.b16 %v2139
        %v4608 = vunpack.c.l.b16 %v2140
        %v4609 = vunpack.c.h.b16 %v2140
        %v4610 = vunpack.c.l.b16 %v2141
        %v4611 = vunpack.c.h.b16 %v2141
        %v4612 = vunpack.c.l.b16 %v2142
        %v4613 = vunpack.c.h.b16 %v2142
        %v4614 = vunpack.c.l.b16 %v2143
        %v4615 = vunpack.c.h.b16 %v2143
        %v4616 = vunpack.c.l.b16 %v2144
        %v4617 = vunpack.c.h.b16 %v2144
        %v4618 = vunpack.c.l.b16 %v2145
        %v4619 = vunpack.c.h.b16 %v2145
        %v4620 = vunpack.c.l.b16 %v2146
        %v4621 = vunpack.c.h.b16 %v2146
        %v4622 = vunpack.c.l.b16 %v2147
        %v4623 = vunpack.c.h.b16 %v2147
        %v4624 = vunpack.c.l.b16 %v2148
        %v4625 = vunpack.c.h.b16 %v2148
        %v4626 = vunpack.c.l.b16 %v2149
        %v4627 = vunpack.c.h.b16 %v2149
        %v4628 = vunpack.c.l.b16 %v2150
        %v4629 = vunpack.c.h.b16 %v2150
        %v4630 = vunpack.c.l.b16 %v2151
        %v4631 = vunpack.c.h.b16 %v2151
        %v4632 = vunpack.c.l.b16 %v2152
        %v4633 = vunpack.c.h.b16 %v2152
        %v4634 = vunpack.c.l.b16 %v2153
        %v4635 = vunpack.c.h.b16 %v2153
        %v4636 = vunpack.c.l.b16 %v2154
        %v4637 = vunpack.c.h.b16 %v2154
        %v4638 = vunpack.c.l.b16 %v2155
        %v4639 = vunpack.c.h.b16 %v2155
        %v4640 = vunpack.c.l.b16 %v2156
        %v4641 = vunpack.c.h.b16 %v2156
        %v4642 = vunpack.c.l.b16 %v2157
        %v4643 = vunpack.c.h.b16 %v2157
        %v4644 = vunpack.c.l.b16 %v2158
        %v4645 = vunpack.c.h.b16 %v2158
        %v4646 = vunpack.c.l.b16 %v2159
        %v4647 = vunpack.c.h.b16 %v2159
        %v4648 = vunpack.c.l.b16 %v2160
        %v4649 = vunpack.c.h.b16 %v2160
        %v4650 = vunpack.c.l.b16 %v2161
        %v4651 = vunpack.c.h.b16 %v2161
        %v4652 = vunpack.c.l.b16 %v2162
        %v4653 = vunpack.c.h.b16 %v2162
        %v4654 = vunpack.c.l.b16 %v2163
        %v4655 = vunpack.c.h.b16 %v2163
        %v4656 = vunpack.c.l.b16 %v2164
        %v4657 = vunpack.c.h.b16 %v2164
        %v4658 = vunpack.c.l.b16 %v2165
        %v4659 = vunpack.c.h.b16 %v2165
        %v4660 = vunpack.c.l.b16 %v2166
        %v4661 = vunpack.c.h.b16 %v2166
        %v4662 = vunpack.c.l.b16 %v2167
        %v4663 = vunpack.c.h.b16 %v2167
        %v4664 = vunpack.c.l.b16 %v2168
        %v4665 = vunpack.c.h.b16 %v2168
        %v4666 = vunpack.c.l.b16 %v2169
        %v4667 = vunpack.c.h.b16 %v2169
        %v4668 = vunpack.c.l.b16 %v2170
        %v4669 = vunpack.c.h.b16 %v2170
        %v4670 = vunpack.c.l.b16 %v2171
        %v4671 = vunpack.c.h.b16 %v2171
        %v4672 = vunpack.c.l.b16 %v2172
        %v4673 = vunpack.c.h.b16 %v2172
        %v4674 = vunpack.c.l.b16 %v2173
        %v4675 = vunpack.c.h.b16 %v2173
        %v4676 = vunpack.c.l.b16 %v2174
        %v4677 = vunpack.c.h.b16 %v2174
        %v4678 = vunpack.c.l.b16 %v2175
        %v4679 = vunpack.c.h.b16 %v2175
        %v4680 = vunpack.c.l.b16 %v2176
        %v4681 = vunpack.c.h.b16 %v2176
        %v4682 = vunpack.c.l.b16 %v2177
        %v4683 = vunpack.c.h.b16 %v2177
        %v4684 = vunpack.c.l.b16 %v2178
        %v4685 = vunpack.c.h.b16 %v2178
        %v4686 = vunpack.c.l.b16 %v2179
        %v4687 = vunpack.c.h.b16 %v2179
        %v4688 = vunpack.c.l.b16 %v2180
        %v4689 = vunpack.c.h.b16 %v2180
        %v4690 = vunpack.c.l.b16 %v2181
        %v4691 = vunpack.c.h.b16 %v2181
        %v4692 = vunpack.c.l.b16 %v2182
        %v4693 = vunpack.c.h.b16 %v2182
        %v4694 = vunpack.c.l.b16 %v2183
        %v4695 = vunpack.c.h.b16 %v2183
        %v4696 = vunpack.c.l.b16 %v2184
        %v4697 = vunpack.c.h.b16 %v2184
        %v4698 = vunpack.c.l.b16 %v2185
        %v4699 = vunpack.c.h.b16 %v2185
        %v4700 = vunpack.c.l.b16 %v2186
        %v4701 = vunpack.c.h.b16 %v2186
        %v4702 = vunpack.c.l.b16 %v2187
        %v4703 = vunpack.c.h.b16 %v2187
        %v4704 = vunpack.c.l.b16 %v2188
        %v4705 = vunpack.c.h.b16 %v2188
        %v4706 = vunpack.c.l.b16 %v2189
        %v4707 = vunpack.c.h.b16 %v2189
        %v4708 = vunpack.c.l.b16 %v2190
        %v4709 = vunpack.c.h.b16 %v2190
        %v4710 = vunpack.c.l.b16 %v2191
        %v4711 = vunpack.c.h.b16 %v2191
        %v4712 = vunpack.c.l.b16 %v2192
        %v4713 = vunpack.c.h.b16 %v2192
        %v4714 = vunpack.c.l.b16 %v2193
        %v4715 = vunpack.c.h.b16 %v2193
        %v4716 = vunpack.c.l.b16 %v2194
        %v4717 = vunpack.c.h.b16 %v2194
        %v4718 = vunpack.c.l.b16 %v2195
        %v4719 = vunpack.c.h.b16 %v2195
        %v4720 = vunpack.c.l.b16 %v2196
        %v4721 = vunpack.c.h.b16 %v2196
        %v4722 = vunpack.c.l.b16 %v2197
        %v4723 = vunpack.c.h.b16 %v2197
        %v4724 = vunpack.c.l.b16 %v2198
        %v4725 = vunpack.c.h.b16 %v2198
        %v4726 = vunpack.c.l.b16 %v2199
        %v4727 = vunpack.c.h.b16 %v2199
        %v4728 = vunpack.c.l.b16 %v2200
        %v4729 = vunpack.c.h.b16 %v2200
        %v4730 = vunpack.c.l.b16 %v2201
        %v4731 = vunpack.c.h.b16 %v2201
        %v4732 = vunpack.c.l.b16 %v2202
        %v4733 = vunpack.c.h.b16 %v2202
        %v4734 = vunpack.c.l.b16 %v2203
        %v4735 = vunpack.c.h.b16 %v2203
        %v4736 = vunpack.c.l.b16 %v2204
        %v4737 = vunpack.c.h.b16 %v2204
        %v4738 = vunpack.c.l.b16 %v2205
        %v4739 = vunpack.c.h.b16 %v2205
        %v4740 = vunpack.c.l.b16 %v2206
        %v4741 = vunpack.c.h.b16 %v2206
        %v4742 = vunpack.c.l.b16 %v2207
        %v4743 = vunpack.c.h.b16 %v2207
        %v4744 = vunpack.c.l.b16 %v2208
        %v4745 = vunpack.c.h.b16 %v2208
        %v4746 = vunpack.c.l.b16 %v2209
        %v4747 = vunpack.c.h.b16 %v2209
        %v4748 = vunpack.c.l.b16 %v2210
        %v4749 = vunpack.c.h.b16 %v2210
        %v4750 = vunpack.c.l.b16 %v2211
        %v4751 = vunpack.c.h.b16 %v2211
        %v4752 = vunpack.c.l.b16 %v2212
        %v4753 = vunpack.c.h.b16 %v2212
        %v4754 = vunpack.c.l.b16 %v2213
        %v4755 = vunpack.c.h.b16 %v2213
        %v4756 = vunpack.c.l.b16 %v2214
        %v4757 = vunpack.c.h.b16 %v2214
        %v4758 = vunpack.c.l.b16 %v2215
        %v4759 = vunpack.c.h.b16 %v2215
        %v4760 = vunpack.c.l.b16 %v2216
        %v4761 = vunpack.c.h.b16 %v2216
        %v4762 = vunpack.c.l.b16 %v2217
        %v4763 = vunpack.c.h.b16 %v2217
        %v4764 = vunpack.c.l.b16 %v2218
        %v4765 = vunpack.c.h.b16 %v2218
        %v4766 = vunpack.c.l.b16 %v2219
        %v4767 = vunpack.c.h.b16 %v2219
        %v4768 = vunpack.c.l.b16 %v2220
        %v4769 = vunpack.c.h.b16 %v2220
        %v4770 = vunpack.c.l.b16 %v2221
        %v4771 = vunpack.c.h.b16 %v2221
        %v4772 = vunpack.c.l.b16 %v2222
        %v4773 = vunpack.c.h.b16 %v2222
        %v4774 = vunpack.c.l.b16 %v2223
        %v4775 = vunpack.c.h.b16 %v2223
        %v4776 = vunpack.c.l.b16 %v2224
        %v4777 = vunpack.c.h.b16 %v2224
        %v4778 = vunpack.c.l.b16 %v2225
        %v4779 = vunpack.c.h.b16 %v2225
        %v4780 = vunpack.c.l.b16 %v2226
        %v4781 = vunpack.c.h.b16 %v2226
        %v4782 = vunpack.c.l.b16 %v2227
        %v4783 = vunpack.c.h.b16 %v2227
        %v4784 = vunpack.c.l.b16 %v2228
        %v4785 = vunpack.c.h.b16 %v2228
        %v4786 = vunpack.c.l.b16 %v2229
        %v4787 = vunpack.c.h.b16 %v2229
        %v4788 = vunpack.c.l.b16 %v2230
        %v4789 = vunpack.c.h.b16 %v2230
        %v4790 = vunpack.c.l.b16 %v2231
        %v4791 = vunpack.c.h.b16 %v2231
        %v4792 = vunpack.c.l.b16 %v2232
        %v4793 = vunpack.c.h.b16 %v2232
        %v4794 = vunpack.c.l.b16 %v2233
        %v4795 = vunpack.c.h.b16 %v2233
        %v4796 = vunpack.c.l.b16 %v2234
        %v4797 = vunpack.c.h.b16 %v2234
        %v4798 = vunpack.c.l.b16 %v2235
        %v4799 = vunpack.c.h.b16 %v2235
        %v4800 = vunpack.c.l.b16 %v2236
        %v4801 = vunpack.c.h.b16 %v2236
        %v4802 = vunpack.c.l.b16 %v2237
        %v4803 = vunpack.c.h.b16 %v2237
        %v4804 = vunpack.c.l.b16 %v2238
        %v4805 = vunpack.c.h.b16 %v2238
        %v4806 = vunpack.c.l.b16 %v2239
        %v4807 = vunpack.c.h.b16 %v2239
        %v4808 = vunpack.c.l.b16 %v2240
        %v4809 = vunpack.c.h.b16 %v2240
        %v4810 = vunpack.c.l.b16 %v2241
        %v4811 = vunpack.c.h.b16 %v2241
        %v4812 = vunpack.c.l.b16 %v2242
        %v4813 = vunpack.c.h.b16 %v2242
        %v4814 = vunpack.c.l.b16 %v2243
        %v4815 = vunpack.c.h.b16 %v2243
        %v4816 = vunpack.c.l.b16 %v2244
        %v4817 = vunpack.c.h.b16 %v2244
        %v4818 = vunpack.c.l.b16 %v2245
        %v4819 = vunpack.c.h.b16 %v2245
        %v4820 = vunpack.c.l.b16 %v2246
        %v4821 = vunpack.c.h.b16 %v2246
        %v4822 = vunpack.c.l.b16 %v2247
        %v4823 = vunpack.c.h.b16 %v2247
        %v4824 = vunpack.c.l.b16 %v2248
        %v4825 = vunpack.c.h.b16 %v2248
        %v4826 = vunpack.c.l.b16 %v2249
        %v4827 = vunpack.c.h.b16 %v2249
        %v4828 = vunpack.c.l.b16 %v2250
        %v4829 = vunpack.c.h.b16 %v2250
        %v4830 = vunpack.c.l.b16 %v2251
        %v4831 = vunpack.c.h.b16 %v2251
        %v4832 = vunpack.c.l.b16 %v2252
        %v4833 = vunpack.c.h.b16 %v2252
        %v4834 = vunpack.c.l.b16 %v2253
        %v4835 = vunpack.c.h.b16 %v2253
        %v4836 = vunpack.c.l.b16 %v2254
        %v4837 = vunpack.c.h.b16 %v2254
        %v4838 = vunpack.c.l.b16 %v2255
        %v4839 = vunpack.c.h.b16 %v2255
        %v4840 = vunpack.c.l.b16 %v2256
        %v4841 = vunpack.c.h.b16 %v2256
        %v4842 = vunpack.c.l.b16 %v2257
        %v4843 = vunpack.c.h.b16 %v2257
        %v4844 = vunpack.c.l.b16 %v2258
        %v4845 = vunpack.c.h.b16 %v2258
        %v4846 = vunpack.c.l.b16 %v2259
        %v4847 = vunpack.c.h.b16 %v2259
        %v4848 = vunpack.c.l.b16 %v2260
        %v4849 = vunpack.c.h.b16 %v2260
        %v4850 = vunpack.c.l.b16 %v2261
        %v4851 = vunpack.c.h.b16 %v2261
        %v4852 = vunpack.c.l.b16 %v2262
        %v4853 = vunpack.c.h.b16 %v2262
        %v4854 = vunpack.c.l.b16 %v2263
        %v4855 = vunpack.c.h.b16 %v2263
        %v4856 = vunpack.c.l.b16 %v2264
        %v4857 = vunpack.c.h.b16 %v2264
        %v4858 = vunpack.c.l.b16 %v2265
        %v4859 = vunpack.c.h.b16 %v2265
        %v4860 = vunpack.c.l.b16 %v2266
        %v4861 = vunpack.c.h.b16 %v2266
        %v4862 = vunpack.c.l.b16 %v2267
        %v4863 = vunpack.c.h.b16 %v2267
        %v4864 = vunpack.c.l.b16 %v2268
        %v4865 = vunpack.c.h.b16 %v2268
        %v4866 = vunpack.c.l.b16 %v2269
        %v4867 = vunpack.c.h.b16 %v2269
        %v4868 = vunpack.c.l.b16 %v2270
        %v4869 = vunpack.c.h.b16 %v2270
        %v4870 = vunpack.c.l.b16 %v2271
        %v4871 = vunpack.c.h.b16 %v2271
        %v4872 = vunpack.c.l.b16 %v2272
        %v4873 = vunpack.c.h.b16 %v2272
        %v4874 = vunpack.c.l.b16 %v2273
        %v4875 = vunpack.c.h.b16 %v2273
        %v4876 = vunpack.c.l.b16 %v2274
        %v4877 = vunpack.c.h.b16 %v2274
        %v4878 = vunpack.c.l.b16 %v2275
        %v4879 = vunpack.c.h.b16 %v2275
        %v4880 = vunpack.c.l.b16 %v2276
        %v4881 = vunpack.c.h.b16 %v2276
        %v4882 = vunpack.c.l.b16 %v2277
        %v4883 = vunpack.c.h.b16 %v2277
        %v4884 = vunpack.c.l.b16 %v2278
        %v4885 = vunpack.c.h.b16 %v2278
        %v4886 = vunpack.c.l.b16 %v2279
        %v4887 = vunpack.c.h.b16 %v2279
        %v4888 = vunpack.c.l.b16 %v2280
        %v4889 = vunpack.c.h.b16 %v2280
        %v4890 = vunpack.c.l.b16 %v2281
        %v4891 = vunpack.c.h.b16 %v2281
        %v4892 = vunpack.c.l.b16 %v2282
        %v4893 = vunpack.c.h.b16 %v2282
        %v4894 = vunpack.c.l.b16 %v2283
        %v4895 = vunpack.c.h.b16 %v2283
        %v4896 = vunpack.c.l.b16 %v2284
        %v4897 = vunpack.c.h.b16 %v2284
        %v4898 = vunpack.c.l.b16 %v2285
        %v4899 = vunpack.c.h.b16 %v2285
        %v4900 = vunpack.c.l.b16 %v2286
        %v4901 = vunpack.c.h.b16 %v2286
        %v4902 = vunpack.c.l.b16 %v2287
        %v4903 = vunpack.c.h.b16 %v2287
        %v4904 = vunpack.c.l.b16 %v2288
        %v4905 = vunpack.c.h.b16 %v2288
        %v4906 = vunpack.c.l.b16 %v2289
        %v4907 = vunpack.c.h.b16 %v2289
        %v4908 = vunpack.c.l.b16 %v2290
        %v4909 = vunpack.c.h.b16 %v2290
        %v4910 = vunpack.c.l.b16 %v2291
        %v4911 = vunpack.c.h.b16 %v2291
        %v4912 = vunpack.c.l.b16 %v2292
        %v4913 = vunpack.c.h.b16 %v2292
        %v4914 = vunpack.c.l.b16 %v2293
        %v4915 = vunpack.c.h.b16 %v2293
        %v4916 = vunpack.c.l.b16 %v2294
        %v4917 = vunpack.c.h.b16 %v2294
        %v4918 = vunpack.c.l.b16 %v2295
        %v4919 = vunpack.c.h.b16 %v2295
        %v4920 = vunpack.c.l.b16 %v2296
        %v4921 = vunpack.c.h.b16 %v2296
        %v4922 = vunpack.c.l.b16 %v2297
        %v4923 = vunpack.c.h.b16 %v2297
        %v4924 = vunpack.c.l.b16 %v2298
        %v4925 = vunpack.c.h.b16 %v2298
        %v4926 = vunpack.c.l.b16 %v2299
        %v4927 = vunpack.c.h.b16 %v2299
        %v4928 = vunpack.c.l.b16 %v2300
        %v4929 = vunpack.c.h.b16 %v2300
        %v4930 = vunpack.c.l.b16 %v2301
        %v4931 = vunpack.c.h.b16 %v2301
        %v4932 = vunpack.c.l.b16 %v2302
        %v4933 = vunpack.c.h.b16 %v2302
        %v4934 = vunpack.c.l.b16 %v2303
        %v4935 = vunpack.c.h.b16 %v2303
        %v4936 = vunpack.c.l.b16 %v2304
        %v4937 = vunpack.c.h.b16 %v2304
        %v4938 = vunpack.c.l.b16 %v2305
        %v4939 = vunpack.c.h.b16 %v2305
        %v4940 = vunpack.c.l.b16 %v2306
        %v4941 = vunpack.c.h.b16 %v2306
        %v4942 = vunpack.c.l.b16 %v2307
        %v4943 = vunpack.c.h.b16 %v2307
        %v4944 = vunpack.c.l.b16 %v2308
        %v4945 = vunpack.c.h.b16 %v2308
        %v4946 = vunpack.c.l.b16 %v2309
        %v4947 = vunpack.c.h.b16 %v2309
        %v4948 = vunpack.c.l.b16 %v2310
        %v4949 = vunpack.c.h.b16 %v2310
        %v4950 = vunpack.c.l.b16 %v2311
        %v4951 = vunpack.c.h.b16 %v2311
        %v4952 = vunpack.c.l.b16 %v2312
        %v4953 = vunpack.c.h.b16 %v2312
        %v4954 = vunpack.c.l.b16 %v2313
        %v4955 = vunpack.c.h.b16 %v2313
        %v4956 = vunpack.c.l.b16 %v2314
        %v4957 = vunpack.c.h.b16 %v2314
        %v4958 = vunpack.c.l.b16 %v2315
        %v4959 = vunpack.c.h.b16 %v2315
        %v4960 = vunpack.c.l.b16 %v2316
        %v4961 = vunpack.c.h.b16 %v2316
        %v4962 = vunpack.c.l.b16 %v2317
        %v4963 = vunpack.c.h.b16 %v2317
        %v4964 = vunpack.c.l.b16 %v2318
        %v4965 = vunpack.c.h.b16 %v2318
        %v4966 = vunpack.c.l.b16 %v2319
        %v4967 = vunpack.c.h.b16 %v2319
        %v4968 = vunpack.c.l.b16 %v2320
        %v4969 = vunpack.c.h.b16 %v2320
        %v4970 = vunpack.c.l.b16 %v2321
        %v4971 = vunpack.c.h.b16 %v2321
        %v4972 = vunpack.c.l.b16 %v2322
        %v4973 = vunpack.c.h.b16 %v2322
        %v4974 = vunpack.c.l.b16 %v2323
        %v4975 = vunpack.c.h.b16 %v2323
        %v4976 = vunpack.c.l.b16 %v2324
        %v4977 = vunpack.c.h.b16 %v2324
        %v4978 = vunpack.c.l.b16 %v2325
        %v4979 = vunpack.c.h.b16 %v2325
        %v4980 = vunpack.c.l.b16 %v2326
        %v4981 = vunpack.c.h.b16 %v2326
        %v4982 = vunpack.c.l.b16 %v2327
        %v4983 = vunpack.c.h.b16 %v2327
        %v4984 = vunpack.c.l.b16 %v2328
        %v4985 = vunpack.c.h.b16 %v2328
        %v4986 = vunpack.c.l.b16 %v2329
        %v4987 = vunpack.c.h.b16 %v2329
        %v4988 = vunpack.c.l.b16 %v2330
        %v4989 = vunpack.c.h.b16 %v2330
        %v4990 = vunpack.c.l.b16 %v2331
        %v4991 = vunpack.c.h.b16 %v2331
        %v4992 = vunpack.c.l.b16 %v2332
        %v4993 = vunpack.c.h.b16 %v2332
        %v4994 = vunpack.c.l.b16 %v2333
        %v4995 = vunpack.c.h.b16 %v2333
        %v4996 = vunpack.c.l.b16 %v2334
        %v4997 = vunpack.c.h.b16 %v2334
        %v4998 = vunpack.c.l.b16 %v2335
        %v4999 = vunpack.c.h.b16 %v2335
        %v5000 = vunpack.c.l.b16 %v2336
        %v5001 = vunpack.c.h.b16 %v2336
        %v5002 = vunpack.c.l.b16 %v2337
        %v5003 = vunpack.c.h.b16 %v2337
        %v5004 = vunpack.c.l.b16 %v2338
        %v5005 = vunpack.c.h.b16 %v2338
        %v5006 = vunpack.c.l.b16 %v2339
        %v5007 = vunpack.c.h.b16 %v2339
        %v5008 = vunpack.c.l.b16 %v2340
        %v5009 = vunpack.c.h.b16 %v2340
        %v5010 = vunpack.c.l.b16 %v2341
        %v5011 = vunpack.c.h.b16 %v2341
        %v5012 = vunpack.c.l.b16 %v2342
        %v5013 = vunpack.c.h.b16 %v2342
        %v5014 = vunpack.c.l.b16 %v2343
        %v5015 = vunpack.c.h.b16 %v2343
        %v5016 = vunpack.c.l.b16 %v2344
        %v5017 = vunpack.c.h.b16 %v2344
        %v5018 = vunpack.c.l.b16 %v2345
        %v5019 = vunpack.c.h.b16 %v2345
        %v5020 = vunpack.c.l.b16 %v2346
        %v5021 = vunpack.c.h.b16 %v2346
        %v5022 = vunpack.c.l.b16 %v2347
        %v5023 = vunpack.c.h.b16 %v2347
        %v5024 = vunpack.c.l.b16 %v2348
        %v5025 = vunpack.c.h.b16 %v2348
        %v5026 = vunpack.c.l.b16 %v2349
        %v5027 = vunpack.c.h.b16 %v2349
        %v5028 = vunpack.c.l.b16 %v2350
        %v5029 = vunpack.c.h.b16 %v2350
        %v5030 = vunpack.c.l.b16 %v2351
        %v5031 = vunpack.c.h.b16 %v2351
        %v5032 = vunpack.c.l.b16 %v2352
        %v5033 = vunpack.c.h.b16 %v2352
        %v5034 = vunpack.c.l.b16 %v2353
        %v5035 = vunpack.c.h.b16 %v2353
        %v5036 = vunpack.c.l.b16 %v2354
        %v5037 = vunpack.c.h.b16 %v2354
        %v5038 = vunpack.c.l.b16 %v2355
        %v5039 = vunpack.c.h.b16 %v2355
        %v5040 = vunpack.c.l.b16 %v2356
        %v5041 = vunpack.c.h.b16 %v2356
        %v5042 = vunpack.c.l.b16 %v2357
        %v5043 = vunpack.c.h.b16 %v2357
        %v5044 = vunpack.c.l.b16 %v2358
        %v5045 = vunpack.c.h.b16 %v2358
        %v5046 = vunpack.c.l.b16 %v2359
        %v5047 = vunpack.c.h.b16 %v2359
        %v5048 = vunpack.c.l.b16 %v2360
        %v5049 = vunpack.c.h.b16 %v2360
        %v5050 = vunpack.c.l.b16 %v2361
        %v5051 = vunpack.c.h.b16 %v2361
        %v5052 = vunpack.c.l.b16 %v2362
        %v5053 = vunpack.c.h.b16 %v2362
        %v5054 = vunpack.c.l.b16 %v2363
        %v5055 = vunpack.c.h.b16 %v2363
        %v5056 = vunpack.c.l.b16 %v2364
        %v5057 = vunpack.c.h.b16 %v2364
        %v5058 = vunpack.c.l.b16 %v2365
        %v5059 = vunpack.c.h.b16 %v2365
        %v5060 = vunpack.c.l.b16 %v2366
        %v5061 = vunpack.c.h.b16 %v2366
        %v5062 = vunpack.c.l.b16 %v2367
        %v5063 = vunpack.c.h.b16 %v2367
        %v5064 = vunpack.c.l.b16 %v2368
        %v5065 = vunpack.c.h.b16 %v2368
        %v5066 = vunpack.c.l.b16 %v2369
        %v5067 = vunpack.c.h.b16 %v2369
        %v5068 = vunpack.c.l.b16 %v2370
        %v5069 = vunpack.c.h.b16 %v2370
        %v5070 = vunpack.c.l.b16 %v2371
        %v5071 = vunpack.c.h.b16 %v2371
        %v5072 = vunpack.c.l.b16 %v2372
        %v5073 = vunpack.c.h.b16 %v2372
        %v5074 = vunpack.c.l.b16 %v2373
        %v5075 = vunpack.c.h.b16 %v2373
        %v5076 = vunpack.c.l.b16 %v2374
        %v5077 = vunpack.c.h.b16 %v2374
        %v5078 = vunpack.c.l.b16 %v2375
        %v5079 = vunpack.c.h.b16 %v2375
        %v5080 = vunpack.c.l.b16 %v2376
        %v5081 = vunpack.c.h.b16 %v2376
        %v5082 = vunpack.c.l.b16 %v2377
        %v5083 = vunpack.c.h.b16 %v2377
        %v5084 = vunpack.c.l.b16 %v2378
        %v5085 = vunpack.c.h.b16 %v2378
        %v5086 = vunpack.c.l.b16 %v2379
        %v5087 = vunpack.c.h.b16 %v2379
        %v5088 = vunpack.c.l.b16 %v2380
        %v5089 = vunpack.c.h.b16 %v2380
        %v5090 = vunpack.c.l.b16 %v2381
        %v5091 = vunpack.c.h.b16 %v2381
        %v5092 = vunpack.c.l.b16 %v2382
        %v5093 = vunpack.c.h.b16 %v2382
        %v5094 = vunpack.c.l.b16 %v2383
        %v5095 = vunpack.c.h.b16 %v2383
        %v5096 = vunpack.c.l.b16 %v2384
        %v5097 = vunpack.c.h.b16 %v2384
        %v5098 = vunpack.c.l.b16 %v2385
        %v5099 = vunpack.c.h.b16 %v2385
        %v5100 = vunpack.c.l.b16 %v2386
        %v5101 = vunpack.c.h.b16 %v2386
        %v5102 = vunpack.c.l.b16 %v2387
        %v5103 = vunpack.c.h.b16 %v2387
        %v5104 = vunpack.c.l.b16 %v2388
        %v5105 = vunpack.c.h.b16 %v2388
        %v5106 = vunpack.c.l.b16 %v2389
        %v5107 = vunpack.c.h.b16 %v2389
        %v5108 = vunpack.c.l.b16 %v2390
        %v5109 = vunpack.c.h.b16 %v2390
        %v5110 = vunpack.c.l.b16 %v2391
        %v5111 = vunpack.c.h.b16 %v2391
        %v5112 = vunpack.c.l.b16 %v2392
        %v5113 = vunpack.c.h.b16 %v2392
        %v5114 = vunpack.c.l.b16 %v2393
        %v5115 = vunpack.c.h.b16 %v2393
        %v5116 = vunpack.c.l.b16 %v2394
        %v5117 = vunpack.c.h.b16 %v2394
        %v5118 = vunpack.c.l.b16 %v2395
        %v5119 = vunpack.c.h.b16 %v2395
        %v5120 = vunpack.c.l.b16 %v2396
        %v5121 = vunpack.c.h.b16 %v2396
        %v5122 = vunpack.c.l.b16 %v2397
        %v5123 = vunpack.c.h.b16 %v2397
        %v5124 = vunpack.c.l.b16 %v2398
        %v5125 = vunpack.c.h.b16 %v2398
        %v5126 = vunpack.c.l.b16 %v2399
        %v5127 = vunpack.c.h.b16 %v2399
        %v5128 = vunpack.c.l.b16 %v2400
        %v5129 = vunpack.c.h.b16 %v2400
        %v5130 = vunpack.c.l.b16 %v2401
        %v5131 = vunpack.c.h.b16 %v2401
        %v5132 = vunpack.c.l.b16 %v2402
        %v5133 = vunpack.c.h.b16 %v2402
        %v5134 = vunpack.c.l.b16 %v2403
        %v5135 = vunpack.c.h.b16 %v2403
        %v5136 = vunpack.c.l.b16 %v2404
        %v5137 = vunpack.c.h.b16 %v2404
        %v5138 = vunpack.c.l.b16 %v2405
        %v5139 = vunpack.c.h.b16 %v2405
        %v5140 = vunpack.c.l.b16 %v2406
        %v5141 = vunpack.c.h.b16 %v2406
        %v5142 = vunpack.c.l.b16 %v2407
        %v5143 = vunpack.c.h.b16 %v2407
        %v5144 = vunpack.c.l.b16 %v2408
        %v5145 = vunpack.c.h.b16 %v2408
        %v5146 = vunpack.c.l.b16 %v2409
        %v5147 = vunpack.c.h.b16 %v2409
        %v5148 = vunpack.c.l.b16 %v2410
        %v5149 = vunpack.c.h.b16 %v2410
        %v5150 = vunpack.c.l.b16 %v2411
        %v5151 = vunpack.c.h.b16 %v2411
        %v5152 = vunpack.c.l.b16 %v2412
        %v5153 = vunpack.c.h.b16 %v2412
        %v5154 = vunpack.c.l.b16 %v2413
        %v5155 = vunpack.c.h.b16 %v2413
        %v5156 = vunpack.c.l.b16 %v2414
        %v5157 = vunpack.c.h.b16 %v2414
        %v5158 = vunpack.c.l.b16 %v2415
        %v5159 = vunpack.c.h.b16 %v2415
        %v5160 = vunpack.c.l.b16 %v2416
        %v5161 = vunpack.c.h.b16 %v2416
        %v5162 = vunpack.c.l.b16 %v2417
        %v5163 = vunpack.c.h.b16 %v2417
        %v5164 = vunpack.c.l.b16 %v2418
        %v5165 = vunpack.c.h.b16 %v2418
        %v5166 = vunpack.c.l.b16 %v2419
        %v5167 = vunpack.c.h.b16 %v2419
        %v5168 = vunpack.c.l.b16 %v2420
        %v5169 = vunpack.c.h.b16 %v2420
        %v5170 = vunpack.c.l.b16 %v2421
        %v5171 = vunpack.c.h.b16 %v2421
        %v5172 = vunpack.c.l.b16 %v2422
        %v5173 = vunpack.c.h.b16 %v2422
        %v5174 = vunpack.c.l.b16 %v2423
        %v5175 = vunpack.c.h.b16 %v2423
        %v5176 = vunpack.c.l.b16 %v2424
        %v5177 = vunpack.c.h.b16 %v2424
        %v5178 = vunpack.c.l.b16 %v2425
        %v5179 = vunpack.c.h.b16 %v2425
        %v5180 = vunpack.c.l.b16 %v2426
        %v5181 = vunpack.c.h.b16 %v2426
        %v5182 = vunpack.c.l.b16 %v2427
        %v5183 = vunpack.c.h.b16 %v2427
        %v5184 = vunpack.c.l.b16 %v2428
        %v5185 = vunpack.c.h.b16 %v2428
        %v5186 = vunpack.c.l.b16 %v2429
        %v5187 = vunpack.c.h.b16 %v2429
        %v5188 = vunpack.c.l.b16 %v2430
        %v5189 = vunpack.c.h.b16 %v2430
        %v5190 = vunpack.c.l.b16 %v2431
        %v5191 = vunpack.c.h.b16 %v2431
        %v5192 = vunpack.c.l.b16 %v2432
        %v5193 = vunpack.c.h.b16 %v2432
        %v5194 = vunpack.c.l.b16 %v2433
        %v5195 = vunpack.c.h.b16 %v2433
        %v5196 = vunpack.c.l.b16 %v2434
        %v5197 = vunpack.c.h.b16 %v2434
        %v5198 = vunpack.c.l.b16 %v2435
        %v5199 = vunpack.c.h.b16 %v2435
        %v5200 = vunpack.c.l.b16 %v2436
        %v5201 = vunpack.c.h.b16 %v2436
        %v5202 = vunpack.c.l.b16 %v2437
        %v5203 = vunpack.c.h.b16 %v2437
        %v5204 = vunpack.c.l.b16 %v2438
        %v5205 = vunpack.c.h.b16 %v2438
        %v5206 = vunpack.c.l.b16 %v2439
        %v5207 = vunpack.c.h.b16 %v2439
        %v5208 = vunpack.c.l.b16 %v2440
        %v5209 = vunpack.c.h.b16 %v2440
        %v5210 = vunpack.c.l.b16 %v2441
        %v5211 = vunpack.c.h.b16 %v2441
        %v5212 = vunpack.c.l.b16 %v2442
        %v5213 = vunpack.c.h.b16 %v2442
        %v5214 = vunpack.c.l.b16 %v2443
        %v5215 = vunpack.c.h.b16 %v2443
        %v5216 = vunpack.c.l.b16 %v2444
        %v5217 = vunpack.c.h.b16 %v2444
        %v5218 = vunpack.c.l.b16 %v2445
        %v5219 = vunpack.c.h.b16 %v2445
        %v5220 = vunpack.c.l.b16 %v2446
        %v5221 = vunpack.c.h.b16 %v2446
        %v5222 = vunpack.c.l.b16 %v2447
        %v5223 = vunpack.c.h.b16 %v2447
        %v5224 = vunpack.c.l.b16 %v2448
        %v5225 = vunpack.c.h.b16 %v2448
        %v5226 = vunpack.c.l.b16 %v2449
        %v5227 = vunpack.c.h.b16 %v2449
        %v5228 = vunpack.c.l.b16 %v2450
        %v5229 = vunpack.c.h.b16 %v2450
        %v5230 = vunpack.c.l.b16 %v2451
        %v5231 = vunpack.c.h.b16 %v2451
        %v5232 = vunpack.c.l.b16 %v2452
        %v5233 = vunpack.c.h.b16 %v2452
        %v5234 = vunpack.c.l.b16 %v2453
        %v5235 = vunpack.c.h.b16 %v2453
        %v5236 = vunpack.c.l.b16 %v2454
        %v5237 = vunpack.c.h.b16 %v2454
        %v5238 = vunpack.c.l.b16 %v2455
        %v5239 = vunpack.c.h.b16 %v2455
        %v5240 = vunpack.c.l.b16 %v2456
        %v5241 = vunpack.c.h.b16 %v2456
        %v5242 = vunpack.c.l.b16 %v2457
        %v5243 = vunpack.c.h.b16 %v2457
        %v5244 = vunpack.c.l.b16 %v2458
        %v5245 = vunpack.c.h.b16 %v2458
        %v5246 = vunpack.c.l.b16 %v2459
        %v5247 = vunpack.c.h.b16 %v2459
        %v5248 = vunpack.c.l.b16 %v2460
        %v5249 = vunpack.c.h.b16 %v2460
        %v5250 = vunpack.c.l.b16 %v2461
        %v5251 = vunpack.c.h.b16 %v2461
        %v5252 = vunpack.c.l.b16 %v2462
        %v5253 = vunpack.c.h.b16 %v2462
        %v5254 = vunpack.c.l.b16 %v2463
        %v5255 = vunpack.c.h.b16 %v2463
        %v5256 = vunpack.c.l.b16 %v2464
        %v5257 = vunpack.c.h.b16 %v2464
        %v5258 = vunpack.c.l.b16 %v2465
        %v5259 = vunpack.c.h.b16 %v2465
        %v5260 = vunpack.c.l.b16 %v2466
        %v5261 = vunpack.c.h.b16 %v2466
        %v5262 = vunpack.c.l.b16 %v2467
        %v5263 = vunpack.c.h.b16 %v2467
        %v5264 = vunpack.c.l.b16 %v2468
        %v5265 = vunpack.c.h.b16 %v2468
        %v5266 = vunpack.c.l.b16 %v2469
        %v5267 = vunpack.c.h.b16 %v2469
        %v5268 = vunpack.c.l.b16 %v2470
        %v5269 = vunpack.c.h.b16 %v2470
        %v5270 = vunpack.c.l.b16 %v2471
        %v5271 = vunpack.c.h.b16 %v2471
        %v5272 = vunpack.c.l.b16 %v2472
        %v5273 = vunpack.c.h.b16 %v2472
        %v5274 = vunpack.c.l.b16 %v2473
        %v5275 = vunpack.c.h.b16 %v2473
        %v5276 = vunpack.c.l.b16 %v2474
        %v5277 = vunpack.c.h.b16 %v2474
        %v5278 = vunpack.c.l.b16 %v2475
        %v5279 = vunpack.c.h.b16 %v2475
        %v5280 = vunpack.c.l.b16 %v2476
        %v5281 = vunpack.c.h.b16 %v2476
        %v5282 = vunpack.c.l.b16 %v2477
        %v5283 = vunpack.c.h.b16 %v2477
        %v5284 = vunpack.c.l.b16 %v2478
        %v5285 = vunpack.c.h.b16 %v2478
        %v5286 = vunpack.c.l.b16 %v2479
        %v5287 = vunpack.c.h.b16 %v2479
        %v5288 = vunpack.c.l.b16 %v2480
        %v5289 = vunpack.c.h.b16 %v2480
        %v5290 = vunpack.c.l.b16 %v2481
        %v5291 = vunpack.c.h.b16 %v2481
        %v5292 = vunpack.c.l.b16 %v2482
        %v5293 = vunpack.c.h.b16 %v2482
        %v5294 = vunpack.c.l.b16 %v2483
        %v5295 = vunpack.c.h.b16 %v2483
        %v5296 = vunpack.c.l.b16 %v2484
        %v5297 = vunpack.c.h.b16 %v2484
        %v5298 = vunpack.c.l.b16 %v2485
        %v5299 = vunpack.c.h.b16 %v2485
        %v5300 = vunpack.c.l.b16 %v2486
        %v5301 = vunpack.c.h.b16 %v2486
        %v5302 = vunpack.c.l.b16 %v2487
        %v5303 = vunpack.c.h.b16 %v2487
        %v5304 = vunpack.c.l.b16 %v2488
        %v5305 = vunpack.c.h.b16 %v2488
        %v5306 = vunpack.c.l.b16 %v2489
        %v5307 = vunpack.c.h.b16 %v2489
        %v5308 = vunpack.c.l.b16 %v2490
        %v5309 = vunpack.c.h.b16 %v2490
        %v5310 = vunpack.c.l.b16 %v2491
        %v5311 = vunpack.c.h.b16 %v2491
        %v5312 = vunpack.c.l.b16 %v2492
        %v5313 = vunpack.c.h.b16 %v2492
        %v5314 = vunpack.c.l.b16 %v2493
        %v5315 = vunpack.c.h.b16 %v2493
        %v5316 = vunpack.c.l.b16 %v2494
        %v5317 = vunpack.c.h.b16 %v2494
        %v5318 = vunpack.c.l.b16 %v2495
        %v5319 = vunpack.c.h.b16 %v2495
        %v5320 = vunpack.c.l.b16 %v2496
        %v5321 = vunpack.c.h.b16 %v2496
        %v5322 = vunpack.c.l.b16 %v2497
        %v5323 = vunpack.c.h.b16 %v2497
        %v5324 = vunpack.c.l.b16 %v2498
        %v5325 = vunpack.c.h.b16 %v2498
        %v5326 = vunpack.c.l.b16 %v2499
        %v5327 = vunpack.c.h.b16 %v2499
        %v5328 = vunpack.c.l.b16 %v2500
        %v5329 = vunpack.c.h.b16 %v2500
        %v5330 = vunpack.c.l.b16 %v2501
        %v5331 = vunpack.c.h.b16 %v2501
        %v5332 = vunpack.c.l.b16 %v2502
        %v5333 = vunpack.c.h.b16 %v2502
        %v5334 = vunpack.c.l.b16 %v2503
        %v5335 = vunpack.c.h.b16 %v2503
        %v5336 = vunpack.c.l.b16 %v2504
        %v5337 = vunpack.c.h.b16 %v2504
        %v5338 = vunpack.c.l.b16 %v2505
        %v5339 = vunpack.c.h.b16 %v2505
        %v5340 = vunpack.c.l.b16 %v2506
        %v5341 = vunpack.c.h.b16 %v2506
        %v5342 = vunpack.c.l.b16 %v2507
        %v5343 = vunpack.c.h.b16 %v2507
        %v5344 = vunpack.c.l.b16 %v2508
        %v5345 = vunpack.c.h.b16 %v2508
        %v5346 = vunpack.c.l.b16 %v2509
        %v5347 = vunpack.c.h.b16 %v2509
        %v5348 = vunpack.c.l.b16 %v2510
        %v5349 = vunpack.c.h.b16 %v2510
        %v5350 = vunpack.c.l.b16 %v2511
        %v5351 = vunpack.c.h.b16 %v2511
        %v5352 = vunpack.c.l.b16 %v2512
        %v5353 = vunpack.c.h.b16 %v2512
        %v5354 = vunpack.c.l.b16 %v2513
        %v5355 = vunpack.c.h.b16 %v2513
        %v5356 = vunpack.c.l.b16 %v2514
        %v5357 = vunpack.c.h.b16 %v2514
        %v5358 = vunpack.c.l.b16 %v2515
        %v5359 = vunpack.c.h.b16 %v2515
        %v5360 = vunpack.c.l.b16 %v2516
        %v5361 = vunpack.c.h.b16 %v2516
        %v5362 = vunpack.c.l.b16 %v2517
        %v5363 = vunpack.c.h.b16 %v2517
        %v5364 = vunpack.c.l.b16 %v2518
        %v5365 = vunpack.c.h.b16 %v2518
        %v5366 = vunpack.c.l.b16 %v2519
        %v5367 = vunpack.c.h.b16 %v2519
        %v5368 = vunpack.c.l.b16 %v2520
        %v5369 = vunpack.c.h.b16 %v2520
        %v5370 = vunpack.c.l.b16 %v2521
        %v5371 = vunpack.c.h.b16 %v2521
        %v5372 = vunpack.c.l.b16 %v2522
        %v5373 = vunpack.c.h.b16 %v2522
        %v5374 = vunpack.c.l.b16 %v2523
        %v5375 = vunpack.c.h.b16 %v2523
        %v5376 = vunpack.c.l.b16 %v2524
        %v5377 = vunpack.c.h.b16 %v2524
        %v5378 = vunpack.c.l.b16 %v2525
        %v5379 = vunpack.c.h.b16 %v2525
        %v5380 = vunpack.c.l.b16 %v2526
        %v5381 = vunpack.c.h.b16 %v2526
        %v5382 = vunpack.c.l.b16 %v2527
        %v5383 = vunpack.c.h.b16 %v2527
        %v5384 = vunpack.c.l.b16 %v2528
        %v5385 = vunpack.c.h.b16 %v2528
        %v5386 = vunpack.c.l.b16 %v2529
        %v5387 = vunpack.c.h.b16 %v2529
        %v5388 = vunpack.c.l.b16 %v2530
        %v5389 = vunpack.c.h.b16 %v2530
        %v5390 = vunpack.c.l.b16 %v2531
        %v5391 = vunpack.c.h.b16 %v2531
        %v5392 = vunpack.c.l.b16 %v2532
        %v5393 = vunpack.c.h.b16 %v2532
        %v5394 = vunpack.c.l.b16 %v2533
        %v5395 = vunpack.c.h.b16 %v2533
        %v5396 = vunpack.c.l.b16 %v2534
        %v5397 = vunpack.c.h.b16 %v2534
        %v5398 = vunpack.c.l.b16 %v2535
        %v5399 = vunpack.c.h.b16 %v2535
        %v5400 = vunpack.c.l.b16 %v2536
        %v5401 = vunpack.c.h.b16 %v2536
        %v5402 = vunpack.c.l.b16 %v2537
        %v5403 = vunpack.c.h.b16 %v2537
        %v5404 = vunpack.c.l.b16 %v2538
        %v5405 = vunpack.c.h.b16 %v2538
        %v5406 = vunpack.c.l.b16 %v2539
        %v5407 = vunpack.c.h.b16 %v2539
        %v5408 = vunpack.c.l.b16 %v2540
        %v5409 = vunpack.c.h.b16 %v2540
        %v5410 = vunpack.c.l.b16 %v2541
        %v5411 = vunpack.c.h.b16 %v2541
        %v5412 = vunpack.c.l.b16 %v2542
        %v5413 = vunpack.c.h.b16 %v2542
        %v5414 = vunpack.c.l.b16 %v2543
        %v5415 = vunpack.c.h.b16 %v2543
        %v5416 = vunpack.c.l.b16 %v2544
        %v5417 = vunpack.c.h.b16 %v2544
        %v5418 = vunpack.c.l.b16 %v2545
        %v5419 = vunpack.c.h.b16 %v2545
        %v5420 = vunpack.c.l.b16 %v2546
        %v5421 = vunpack.c.h.b16 %v2546
        %v5422 = vunpack.c.l.b16 %v2547
        %v5423 = vunpack.c.h.b16 %v2547
        %v5424 = vunpack.c.l.b16 %v2548
        %v5425 = vunpack.c.h.b16 %v2548
        %v5426 = vunpack.c.l.b16 %v2549
        %v5427 = vunpack.c.h.b16 %v2549
        %v5428 = vunpack.c.l.b16 %v2550
        %v5429 = vunpack.c.h.b16 %v2550
        %v5430 = vunpack.c.l.b16 %v2551
        %v5431 = vunpack.c.h.b16 %v2551
        %v5432 = vunpack.c.l.b16 %v2552
        %v5433 = vunpack.c.h.b16 %v2552
        %v5434 = vunpack.c.l.b16 %v2553
        %v5435 = vunpack.c.h.b16 %v2553
        %v5436 = vunpack.c.l.b16 %v2554
        %v5437 = vunpack.c.h.b16 %v2554
        %v5438 = vunpack.c.l.b16 %v2555
        %v5439 = vunpack.c.h.b16 %v2555
        %v5440 = vunpack.c.l.b16 %v2556
        %v5441 = vunpack.c.h.b16 %v2556
        %v5442 = vunpack.c.l.b16 %v2557
        %v5443 = vunpack.c.h.b16 %v2557
        %v5444 = vunpack.c.l.b16 %v2558
        %v5445 = vunpack.c.h.b16 %v2558
        %v5446 = vunpack.c.l.b16 %v2559
        %v5447 = vunpack.c.h.b16 %v2559
        %v5448 = vunpack.c.l.b16 %v2560
        %v5449 = vunpack.c.h.b16 %v2560
        %v5450 = vunpack.c.l.b16 %v2561
        %v5451 = vunpack.c.h.b16 %v2561
        %v5452 = vunpack.c.l.b16 %v2562
        %v5453 = vunpack.c.h.b16 %v2562
        %v5454 = vunpack.c.l.b16 %v2563
        %v5455 = vunpack.c.h.b16 %v2563
        %v5456 = vunpack.c.l.b16 %v2564
        %v5457 = vunpack.c.h.b16 %v2564
        %v5458 = vunpack.c.l.b16 %v2565
        %v5459 = vunpack.c.h.b16 %v2565
        %v5460 = vunpack.c.l.b16 %v2566
        %v5461 = vunpack.c.h.b16 %v2566
        %v5462 = vunpack.c.l.b16 %v2567
        %v5463 = vunpack.c.h.b16 %v2567
        %v5464 = vunpack.c.l.b16 %v2568
        %v5465 = vunpack.c.h.b16 %v2568
        %v5466 = vunpack.c.l.b16 %v2569
        %v5467 = vunpack.c.h.b16 %v2569
        %v5468 = vunpack.c.l.b16 %v2570
        %v5469 = vunpack.c.h.b16 %v2570
        %v5470 = vunpack.c.l.b16 %v2571
        %v5471 = vunpack.c.h.b16 %v2571
        %v5472 = vunpack.c.l.b16 %v2572
        %v5473 = vunpack.c.h.b16 %v2572
        %v5474 = vunpack.c.l.b16 %v2573
        %v5475 = vunpack.c.h.b16 %v2573
        %v5476 = vunpack.c.l.b16 %v2574
        %v5477 = vunpack.c.h.b16 %v2574
        %v5478 = vunpack.c.l.b16 %v2575
        %v5479 = vunpack.c.h.b16 %v2575
        %v5480 = vunpack.c.l.b16 %v2576
        %v5481 = vunpack.c.h.b16 %v2576
        %v5482 = vunpack.c.l.b16 %v2577
        %v5483 = vunpack.c.h.b16 %v2577
        %v5484 = vunpack.c.l.b16 %v2578
        %v5485 = vunpack.c.h.b16 %v2578
        %v5486 = vunpack.c.l.b16 %v2579
        %v5487 = vunpack.c.h.b16 %v2579
        %v5488 = vunpack.c.l.b16 %v2580
        %v5489 = vunpack.c.h.b16 %v2580
        %v5490 = vunpack.c.l.b16 %v2581
        %v5491 = vunpack.c.h.b16 %v2581
        %v5492 = vunpack.c.l.b16 %v2582
        %v5493 = vunpack.c.h.b16 %v2582
        %v5494 = vunpack.c.l.b16 %v2583
        %v5495 = vunpack.c.h.b16 %v2583
        %v5496 = vunpack.c.l.b16 %v2584
        %v5497 = vunpack.c.h.b16 %v2584
        %v5498 = vunpack.c.l.b16 %v2585
        %v5499 = vunpack.c.h.b16 %v2585
        %v5500 = vunpack.c.l.b16 %v2586
        %v5501 = vunpack.c.h.b16 %v2586
        %v5502 = vunpack.c.l.b16 %v2587
        %v5503 = vunpack.c.h.b16 %v2587
        %v5504 = vunpack.c.l.b16 %v2588
        %v5505 = vunpack.c.h.b16 %v2588
        %v5506 = vunpack.c.l.b16 %v2589
        %v5507 = vunpack.c.h.b16 %v2589
        %v5508 = vunpack.c.l.b16 %v2590
        %v5509 = vunpack.c.h.b16 %v2590
        %v5510 = vunpack.c.l.b16 %v2591
        %v5511 = vunpack.c.h.b16 %v2591
        %v5512 = vunpack.c.l.b16 %v2592
        %v5513 = vunpack.c.h.b16 %v2592
        %v5514 = vunpack.c.l.b16 %v2593
        %v5515 = vunpack.c.h.b16 %v2593
        %v5516 = vunpack.c.l.b16 %v2594
        %v5517 = vunpack.c.h.b16 %v2594
        %v5518 = vunpack.c.l.b16 %v2595
        %v5519 = vunpack.c.h.b16 %v2595
        %v5520 = vunpack.c.l.b16 %v2596
        %v5521 = vunpack.c.h.b16 %v2596
        %v5522 = vunpack.c.l.b16 %v2597
        %v5523 = vunpack.c.h.b16 %v2597
        %v5524 = vunpack.c.l.b16 %v2598
        %v5525 = vunpack.c.h.b16 %v2598
        %v5526 = vunpack.c.l.b16 %v2599
        %v5527 = vunpack.c.h.b16 %v2599
        %v5528 = vunpack.c.l.b16 %v2600
        %v5529 = vunpack.c.h.b16 %v2600
        %v5530 = vunpack.c.l.b16 %v2601
        %v5531 = vunpack.c.h.b16 %v2601
        %v5532 = vunpack.c.l.b16 %v2602
        %v5533 = vunpack.c.h.b16 %v2602
        %v5534 = vunpack.c.l.b16 %v2603
        %v5535 = vunpack.c.h.b16 %v2603
        %v5536 = vunpack.c.l.b16 %v2604
        %v5537 = vunpack.c.h.b16 %v2604
        %v5538 = vunpack.c.l.b16 %v2605
        %v5539 = vunpack.c.h.b16 %v2605
        %v5540 = vunpack.c.l.b16 %v2606
        %v5541 = vunpack.c.h.b16 %v2606
        %v5542 = vunpack.c.l.b16 %v2607
        %v5543 = vunpack.c.h.b16 %v2607
        %v5544 = vunpack.c.l.b16 %v2608
        %v5545 = vunpack.c.h.b16 %v2608
        %v5546 = vunpack.c.l.b16 %v2609
        %v5547 = vunpack.c.h.b16 %v2609
        %v5548 = vunpack.c.l.b16 %v2610
        %v5549 = vunpack.c.h.b16 %v2610
        %v5550 = vunpack.c.l.b16 %v2611
        %v5551 = vunpack.c.h.b16 %v2611
        %v5552 = vunpack.c.l.b16 %v2612
        %v5553 = vunpack.c.h.b16 %v2612
        %v5554 = vunpack.c.l.b16 %v2613
        %v5555 = vunpack.c.h.b16 %v2613
        %v5556 = vunpack.c.l.b16 %v2614
        %v5557 = vunpack.c.h.b16 %v2614
        %v5558 = vunpack.c.l.b16 %v2615
        %v5559 = vunpack.c.h.b16 %v2615
        %v5560 = vunpack.c.l.b16 %v2616
        %v5561 = vunpack.c.h.b16 %v2616
        %v5562 = vunpack.c.l.b16 %v2617
        %v5563 = vunpack.c.h.b16 %v2617
        %v5564 = vunpack.c.l.b16 %v2618
        %v5565 = vunpack.c.h.b16 %v2618
        %v5566 = vunpack.c.l.b16 %v2619
        %v5567 = vunpack.c.h.b16 %v2619
        %v5568 = vunpack.c.l.b16 %v2620
        %v5569 = vunpack.c.h.b16 %v2620
        %v5570 = vunpack.c.l.b16 %v2621
        %v5571 = vunpack.c.h.b16 %v2621
        %v5572 = vunpack.c.l.b16 %v2622
        %v5573 = vunpack.c.h.b16 %v2622
        %v5574 = vunpack.c.l.b16 %v2623
        %v5575 = vunpack.c.h.b16 %v2623
        %v5576 = vunpack.c.l.b16 %v2624
        %v5577 = vunpack.c.h.b16 %v2624
        %v5578 = vunpack.c.l.b16 %v2625
        %v5579 = vunpack.c.h.b16 %v2625
        %v5580 = vunpack.c.l.b16 %v2626
        %v5581 = vunpack.c.h.b16 %v2626
        %v5582 = vunpack.c.l.b16 %v2627
        %v5583 = vunpack.c.h.b16 %v2627
        %v5584 = vunpack.c.l.b16 %v2628
        %v5585 = vunpack.c.h.b16 %v2628
        %v5586 = vunpack.c.l.b16 %v2629
        %v5587 = vunpack.c.h.b16 %v2629
        %v5588 = vunpack.c.l.b16 %v2630
        %v5589 = vunpack.c.h.b16 %v2630
        %v5590 = vunpack.c.l.b16 %v2631
        %v5591 = vunpack.c.h.b16 %v2631
        %v5592 = vunpack.c.l.b16 %v2632
        %v5593 = vunpack.c.h.b16 %v2632
        %v5594 = vunpack.c.l.b16 %v2633
        %v5595 = vunpack.c.h.b16 %v2633
        %v5596 = vunpack.c.l.b16 %v2634
        %v5597 = vunpack.c.h.b16 %v2634
        %v5598 = vunpack.c.l.b16 %v2635
        %v5599 = vunpack.c.h.b16 %v2635
        %v5600 = vunpack.c.l.b16 %v2636
        %v5601 = vunpack.c.h.b16 %v2636
        %v5602 = vunpack.c.l.b16 %v2637
        %v5603 = vunpack.c.h.b16 %v2637
        %v5604 = vunpack.c.l.b16 %v2638
        %v5605 = vunpack.c.h.b16 %v2638
        %v5606 = vunpack.c.l.b16 %v2639
        %v5607 = vunpack.c.h.b16 %v2639
        %v5608 = vunpack.c.l.b16 %v2640
        %v5609 = vunpack.c.h.b16 %v2640
        %v5610 = vunpack.c.l.b16 %v2641
        %v5611 = vunpack.c.h.b16 %v2641
        %v5612 = vunpack.c.l.b16 %v2642
        %v5613 = vunpack.c.h.b16 %v2642
        %v5614 = vunpack.c.l.b16 %v2643
        %v5615 = vunpack.c.h.b16 %v2643
        %v5616 = vunpack.c.l.b16 %v2644
        %v5617 = vunpack.c.h.b16 %v2644
        %v5618 = vunpack.c.l.b16 %v2645
        %v5619 = vunpack.c.h.b16 %v2645
        %v5620 = vunpack.c.l.b16 %v2646
        %v5621 = vunpack.c.h.b16 %v2646
        %v5622 = vunpack.c.l.b16 %v2647
        %v5623 = vunpack.c.h.b16 %v2647
        %v5624 = vunpack.c.l.b16 %v2648
        %v5625 = vunpack.c.h.b16 %v2648
        %v5626 = vunpack.c.l.b16 %v2649
        %v5627 = vunpack.c.h.b16 %v2649
        %v5628 = vunpack.c.l.b16 %v2650
        %v5629 = vunpack.c.h.b16 %v2650
        %v5630 = vunpack.c.l.b16 %v2651
        %v5631 = vunpack.c.h.b16 %v2651
        %v5632 = vunpack.c.l.b16 %v2652
        %v5633 = vunpack.c.h.b16 %v2652
        %v5634 = vunpack.c.l.b16 %v2653
        %v5635 = vunpack.c.h.b16 %v2653
        %v5636 = vunpack.c.l.b16 %v2654
        %v5637 = vunpack.c.h.b16 %v2654
        %v5638 = vunpack.c.l.b16 %v2655
        %v5639 = vunpack.c.h.b16 %v2655
        %v5640 = vunpack.c.l.b16 %v2656
        %v5641 = vunpack.c.h.b16 %v2656
        %v5642 = vunpack.c.l.b16 %v2657
        %v5643 = vunpack.c.h.b16 %v2657
        %v5644 = vunpack.c.l.b16 %v2658
        %v5645 = vunpack.c.h.b16 %v2658
        %v5646 = vunpack.c.l.b16 %v2659
        %v5647 = vunpack.c.h.b16 %v2659
        %v5648 = vunpack.c.l.b16 %v2660
        %v5649 = vunpack.c.h.b16 %v2660
        %v5650 = vunpack.c.l.b16 %v2661
        %v5651 = vunpack.c.h.b16 %v2661
        %v5652 = vunpack.c.l.b16 %v2662
        %v5653 = vunpack.c.h.b16 %v2662
        %v5654 = vunpack.c.l.b16 %v2663
        %v5655 = vunpack.c.h.b16 %v2663
        %v5656 = vunpack.c.l.b16 %v2664
        %v5657 = vunpack.c.h.b16 %v2664
        %v5658 = vunpack.c.l.b16 %v2665
        %v5659 = vunpack.c.h.b16 %v2665
        %v5660 = vunpack.c.l.b16 %v2666
        %v5661 = vunpack.c.h.b16 %v2666
        %v5662 = vunpack.c.l.b16 %v2667
        %v5663 = vunpack.c.h.b16 %v2667
        %v5664 = vunpack.c.l.b16 %v2668
        %v5665 = vunpack.c.h.b16 %v2668
        %v5666 = vunpack.c.l.b16 %v2669
        %v5667 = vunpack.c.h.b16 %v2669
        %v5668 = vunpack.c.l.b16 %v2670
        %v5669 = vunpack.c.h.b16 %v2670
        %v5670 = vunpack.c.l.b16 %v2671
        %v5671 = vunpack.c.h.b16 %v2671
        %v5672 = vunpack.c.l.b16 %v2672
        %v5673 = vunpack.c.h.b16 %v2672
        %v5674 = vunpack.c.l.b16 %v2673
        %v5675 = vunpack.c.h.b16 %v2673
        %v5676 = vunpack.c.l.b16 %v2674
        %v5677 = vunpack.c.h.b16 %v2674
        %v5678 = vunpack.c.l.b16 %v2675
        %v5679 = vunpack.c.h.b16 %v2675
        %v5680 = vunpack.c.l.b16 %v2676
        %v5681 = vunpack.c.h.b16 %v2676
        %v5682 = vunpack.c.l.b16 %v2677
        %v5683 = vunpack.c.h.b16 %v2677
        %v5684 = vunpack.c.l.b16 %v2678
        %v5685 = vunpack.c.h.b16 %v2678
        %v5686 = vunpack.c.l.b16 %v2679
        %v5687 = vunpack.c.h.b16 %v2679
        %v5688 = vunpack.c.l.b16 %v2680
        %v5689 = vunpack.c.h.b16 %v2680
        %v5690 = vunpack.c.l.b16 %v2681
        %v5691 = vunpack.c.h.b16 %v2681
        %v5692 = vunpack.c.l.b16 %v2682
        %v5693 = vunpack.c.h.b16 %v2682
        %v5694 = vunpack.c.l.b16 %v2683
        %v5695 = vunpack.c.h.b16 %v2683
        %v5696 = vunpack.c.l.b16 %v2684
        %v5697 = vunpack.c.h.b16 %v2684
        %v5698 = vunpack.c.l.b16 %v2685
        %v5699 = vunpack.c.h.b16 %v2685
        %v5700 = vunpack.c.l.b16 %v2686
        %v5701 = vunpack.c.h.b16 %v2686
        %v5702 = vunpack.c.l.b16 %v2687
        %v5703 = vunpack.c.h.b16 %v2687
        %v5704 = vunpack.c.l.b16 %v2688
        %v5705 = vunpack.c.h.b16 %v2688
        %v5706 = vunpack.c.l.b16 %v2689
        %v5707 = vunpack.c.h.b16 %v2689
        %v5708 = vunpack.c.l.b16 %v2690
        %v5709 = vunpack.c.h.b16 %v2690
        %v5710 = vunpack.c.l.b16 %v2691
        %v5711 = vunpack.c.h.b16 %v2691
        %v5712 = vunpack.c.l.b16 %v2692
        %v5713 = vunpack.c.h.b16 %v2692
        %v5714 = vunpack.c.l.b16 %v2693
        %v5715 = vunpack.c.h.b16 %v2693
        %v5716 = vunpack.c.l.b16 %v2694
        %v5717 = vunpack.c.h.b16 %v2694
        %v5718 = vunpack.c.l.b16 %v2695
        %v5719 = vunpack.c.h.b16 %v2695
        %v5720 = vunpack.c.l.b16 %v2696
        %v5721 = vunpack.c.h.b16 %v2696
        %v5722 = vunpack.c.l.b16 %v2697
        %v5723 = vunpack.c.h.b16 %v2697
        %v5724 = vunpack.c.l.b16 %v2698
        %v5725 = vunpack.c.h.b16 %v2698
        %v5726 = vunpack.c.l.b16 %v2699
        %v5727 = vunpack.c.h.b16 %v2699
        %v5728 = vunpack.c.l.b16 %v2700
        %v5729 = vunpack.c.h.b16 %v2700
        %v5730 = vunpack.c.l.b16 %v2701
        %v5731 = vunpack.c.h.b16 %v2701
        %v5732 = vunpack.c.l.b16 %v2702
        %v5733 = vunpack.c.h.b16 %v2702
        %v5734 = vunpack.c.l.b16 %v2703
        %v5735 = vunpack.c.h.b16 %v2703
        %v5736 = vunpack.c.l.b16 %v2704
        %v5737 = vunpack.c.h.b16 %v2704
        %v5738 = vunpack.c.l.b16 %v2705
        %v5739 = vunpack.c.h.b16 %v2705
        %v5740 = vunpack.c.l.b16 %v2706
        %v5741 = vunpack.c.h.b16 %v2706
        %v5742 = vunpack.c.l.b16 %v2707
        %v5743 = vunpack.c.h.b16 %v2707
        %v5744 = vunpack.c.l.b16 %v2708
        %v5745 = vunpack.c.h.b16 %v2708
        %v5746 = vunpack.c.l.b16 %v2709
        %v5747 = vunpack.c.h.b16 %v2709
        %v5748 = vunpack.c.l.b16 %v2710
        %v5749 = vunpack.c.h.b16 %v2710
        %v5750 = vunpack.c.l.b16 %v2711
        %v5751 = vunpack.c.h.b16 %v2711
        %v5752 = vunpack.c.l.b16 %v2712
        %v5753 = vunpack.c.h.b16 %v2712
        %v5754 = vunpack.c.l.b16 %v2713
        %v5755 = vunpack.c.h.b16 %v2713
        %v5756 = vunpack.c.l.b16 %v2714
        %v5757 = vunpack.c.h.b16 %v2714
        %v5758 = vunpack.c.l.b16 %v2715
        %v5759 = vunpack.c.h.b16 %v2715
        %v5760 = vunpack.c.l.b16 %v2716
        %v5761 = vunpack.c.h.b16 %v2716
        %v5762 = vunpack.c.l.b16 %v2717
        %v5763 = vunpack.c.h.b16 %v2717
        %v5764 = vunpack.c.l.b16 %v2718
        %v5765 = vunpack.c.h.b16 %v2718
        %v5766 = vunpack.c.l.b16 %v2719
        %v5767 = vunpack.c.h.b16 %v2719
        %v5768 = vunpack.c.l.b16 %v2720
        %v5769 = vunpack.c.h.b16 %v2720
        %v5770 = vunpack.c.l.b16 %v2721
        %v5771 = vunpack.c.h.b16 %v2721
        %v5772 = vunpack.c.l.b16 %v2722
        %v5773 = vunpack.c.h.b16 %v2722
        %v5774 = vunpack.c.l.b16 %v2723
        %v5775 = vunpack.c.h.b16 %v2723
        %v5776 = vunpack.c.l.b16 %v2724
        %v5777 = vunpack.c.h.b16 %v2724
        %v5778 = vunpack.c.l.b16 %v2725
        %v5779 = vunpack.c.h.b16 %v2725
        %v5780 = vunpack.c.l.b16 %v2726
        %v5781 = vunpack.c.h.b16 %v2726
        %v5782 = vunpack.c.l.b16 %v2727
        %v5783 = vunpack.c.h.b16 %v2727
        %v5784 = vunpack.c.l.b16 %v2728
        %v5785 = vunpack.c.h.b16 %v2728
        %v5786 = vunpack.c.l.b16 %v2729
        %v5787 = vunpack.c.h.b16 %v2729
        %v5788 = vunpack.c.l.b16 %v2730
        %v5789 = vunpack.c.h.b16 %v2730
        %v5790 = vunpack.c.l.b16 %v2731
        %v5791 = vunpack.c.h.b16 %v2731
        %v5792 = vunpack.c.l.b16 %v2732
        %v5793 = vunpack.c.h.b16 %v2732
        %v5794 = vunpack.c.l.b16 %v2733
        %v5795 = vunpack.c.h.b16 %v2733
        %v5796 = vunpack.c.l.b16 %v2734
        %v5797 = vunpack.c.h.b16 %v2734
        %v5798 = vunpack.c.l.b16 %v2735
        %v5799 = vunpack.c.h.b16 %v2735
        %v5800 = vunpack.c.l.b16 %v2736
        %v5801 = vunpack.c.h.b16 %v2736
        %v5802 = vunpack.c.l.b16 %v2737
        %v5803 = vunpack.c.h.b16 %v2737
        %v5804 = vunpack.c.l.b16 %v2738
        %v5805 = vunpack.c.h.b16 %v2738
        %v5806 = vunpack.c.l.b16 %v2739
        %v5807 = vunpack.c.h.b16 %v2739
        %v5808 = vunpack.c.l.b16 %v2740
        %v5809 = vunpack.c.h.b16 %v2740
        %v5810 = vunpack.c.l.b16 %v2741
        %v5811 = vunpack.c.h.b16 %v2741
        %v5812 = vunpack.c.l.b16 %v2742
        %v5813 = vunpack.c.h.b16 %v2742
        %v5814 = vunpack.c.l.b16 %v2743
        %v5815 = vunpack.c.h.b16 %v2743
        %v5816 = vunpack.c.l.b16 %v2744
        %v5817 = vunpack.c.h.b16 %v2744
        %v5818 = vunpack.c.l.b16 %v2745
        %v5819 = vunpack.c.h.b16 %v2745
        %v5820 = vunpack.c.l.b16 %v2746
        %v5821 = vunpack.c.h.b16 %v2746
        %v5822 = vunpack.c.l.b16 %v2747
        %v5823 = vunpack.c.h.b16 %v2747
        %v5824 = vunpack.c.l.b16 %v2748
        %v5825 = vunpack.c.h.b16 %v2748
        %v5826 = vunpack.c.l.b16 %v2749
        %v5827 = vunpack.c.h.b16 %v2749
        %v5828 = vunpack.c.l.b16 %v2750
        %v5829 = vunpack.c.h.b16 %v2750
        %v5830 = vunpack.c.l.b16 %v2751
        %v5831 = vunpack.c.h.b16 %v2751
        %v5832 = vunpack.c.l.b16 %v2752
        %v5833 = vunpack.c.h.b16 %v2752
        %v5834 = vunpack.c.l.b16 %v2753
        %v5835 = vunpack.c.h.b16 %v2753
        %v5836 = vunpack.c.l.b16 %v2754
        %v5837 = vunpack.c.h.b16 %v2754
        %v5838 = vunpack.c.l.b16 %v2755
        %v5839 = vunpack.c.h.b16 %v2755
        %v5840 = vunpack.c.l.b16 %v2756
        %v5841 = vunpack.c.h.b16 %v2756
        %v5842 = vunpack.c.l.b16 %v2757
        %v5843 = vunpack.c.h.b16 %v2757
        %v5844 = vunpack.c.l.b16 %v2758
        %v5845 = vunpack.c.h.b16 %v2758
        %v5846 = vunpack.c.l.b16 %v2759
        %v5847 = vunpack.c.h.b16 %v2759
        %v5848 = vunpack.c.l.b16 %v2760
        %v5849 = vunpack.c.h.b16 %v2760
        %v5850 = vunpack.c.l.b16 %v2761
        %v5851 = vunpack.c.h.b16 %v2761
        %v5852 = vunpack.c.l.b16 %v2762
        %v5853 = vunpack.c.h.b16 %v2762
        %v5854 = vunpack.c.l.b16 %v2763
        %v5855 = vunpack.c.h.b16 %v2763
        %v5856 = vunpack.c.l.b16 %v2764
        %v5857 = vunpack.c.h.b16 %v2764
        %v5858 = vunpack.c.l.b16 %v2765
        %v5859 = vunpack.c.h.b16 %v2765
        %v5860 = vunpack.c.l.b16 %v2766
        %v5861 = vunpack.c.h.b16 %v2766
        %v5862 = vunpack.c.l.b16 %v2767
        %v5863 = vunpack.c.h.b16 %v2767
        %v5864 = vunpack.c.l.b16 %v2768
        %v5865 = vunpack.c.h.b16 %v2768
        %v5866 = vunpack.c.l.b16 %v2769
        %v5867 = vunpack.c.h.b16 %v2769
        %v5868 = vunpack.c.l.b16 %v2770
        %v5869 = vunpack.c.h.b16 %v2770
        %v5870 = vunpack.c.l.b16 %v2771
        %v5871 = vunpack.c.h.b16 %v2771
        %v5872 = vunpack.c.l.b16 %v2772
        %v5873 = vunpack.c.h.b16 %v2772
        %v5874 = vunpack.c.l.b16 %v2773
        %v5875 = vunpack.c.h.b16 %v2773
        %v5876 = vunpack.c.l.b16 %v2774
        %v5877 = vunpack.c.h.b16 %v2774
        %v5878 = vunpack.c.l.b16 %v2775
        %v5879 = vunpack.c.h.b16 %v2775
        %v5880 = vunpack.c.l.b16 %v2776
        %v5881 = vunpack.c.h.b16 %v2776
        %v5882 = vunpack.c.l.b16 %v2777
        %v5883 = vunpack.c.h.b16 %v2777
        %v5884 = vunpack.c.l.b16 %v2778
        %v5885 = vunpack.c.h.b16 %v2778
        %v5886 = vunpack.c.l.b16 %v2779
        %v5887 = vunpack.c.h.b16 %v2779
        %v5888 = vunpack.c.l.b16 %v2780
        %v5889 = vunpack.c.h.b16 %v2780
        %v5890 = vunpack.c.l.b16 %v2781
        %v5891 = vunpack.c.h.b16 %v2781
        %v5892 = vunpack.c.l.b16 %v2782
        %v5893 = vunpack.c.h.b16 %v2782
        %v5894 = vunpack.c.l.b16 %v2783
        %v5895 = vunpack.c.h.b16 %v2783
        %v5896 = vunpack.c.l.b16 %v2784
        %v5897 = vunpack.c.h.b16 %v2784
        %v5898 = vunpack.c.l.b16 %v2785
        %v5899 = vunpack.c.h.b16 %v2785
        %v5900 = vpack.c.b16 %v3860, %v3852
        %v5901 = vpack.c.b16 %v3861, %v3853
        %v5902 = vpack.c.b16 %v3862, %v3854
        %v5903 = vpack.c.b16 %v3863, %v3855
        %v5904 = vpack.c.b16 %v3864, %v3856
        %v5905 = vpack.c.b16 %v3865, %v3857
        %v5906 = vpack.c.b16 %v3866, %v3858
        %v5907 = vpack.c.b16 %v3867, %v3859
        %v5908 = vpack.c.b16 %v3876, %v3868
        %v5909 = vpack.c.b16 %v3877, %v3869
        %v5910 = vpack.c.b16 %v3878, %v3870
        %v5911 = vpack.c.b16 %v3879, %v3871
        %v5912 = vpack.c.b16 %v3880, %v3872
        %v5913 = vpack.c.b16 %v3881, %v3873
        %v5914 = vpack.c.b16 %v3882, %v3874
        %v5915 = vpack.c.b16 %v3883, %v3875
        %v5916 = vpack.c.b16 %v3892, %v3884
        %v5917 = vpack.c.b16 %v3893, %v3885
        %v5918 = vpack.c.b16 %v3894, %v3886
        %v5919 = vpack.c.b16 %v3895, %v3887
        %v5920 = vpack.c.b16 %v3896, %v3888
        %v5921 = vpack.c.b16 %v3897, %v3889
        %v5922 = vpack.c.b16 %v3898, %v3890
        %v5923 = vpack.c.b16 %v3899, %v3891
        %v5924 = vpack.c.b16 %v3908, %v3900
        %v5925 = vpack.c.b16 %v3909, %v3901
        %v5926 = vpack.c.b16 %v3910, %v3902
        %v5927 = vpack.c.b16 %v3911, %v3903
        %v5928 = vpack.c.b16 %v3912, %v3904
        %v5929 = vpack.c.b16 %v3913, %v3905
        %v5930 = vpack.c.b16 %v3914, %v3906
        %v5931 = vpack.c.b16 %v3915, %v3907
        %v5932 = vpack.c.b16 %v3924, %v3916
        %v5933 = vpack.c.b16 %v3925, %v3917
        %v5934 = vpack.c.b16 %v3926, %v3918
        %v5935 = vpack.c.b16 %v3927, %v3919
        %v5936 = vpack.c.b16 %v3928, %v3920
        %v5937 = vpack.c.b16 %v3929, %v3921
        %v5938 = vpack.c.b16 %v3930, %v3922
        %v5939 = vpack.c.b16 %v3931, %v3923
        %v5940 = vpack.c.b16 %v3940, %v3932
        %v5941 = vpack.c.b16 %v3941, %v3933
        %v5942 = vpack.c.b16 %v3942, %v3934
        %v5943 = vpack.c.b16 %v3943, %v3935
        %v5944 = vpack.c.b16 %v3944, %v3936
        %v5945 = vpack.c.b16 %v3945, %v3937
        %v5946 = vpack.c.b16 %v3946, %v3938
        %v5947 = vpack.c.b16 %v3947, %v3939
        %v5948 = vpack.c.b16 %v3956, %v3948
        %v5949 = vpack.c.b16 %v3957, %v3949
        %v5950 = vpack.c.b16 %v3958, %v3950
        %v5951 = vpack.c.b16 %v3959, %v3951
        %v5952 = vpack.c.b16 %v3960, %v3952
        %v5953 = vpack.c.b16 %v3961, %v3953
        %v5954 = vpack.c.b16 %v3962, %v3954
        %v5955 = vpack.c.b16 %v3963, %v3955
        %v5956 = vpack.c.b16 %v3972, %v3964
        %v5957 = vpack.c.b16 %v3973, %v3965
        %v5958 = vpack.c.b16 %v3974, %v3966
        %v5959 = vpack.c.b16 %v3975, %v3967
        %v5960 = vpack.c.b16 %v3976, %v3968
        %v5961 = vpack.c.b16 %v3977, %v3969
        %v5962 = vpack.c.b16 %v3978, %v3970
        %v5963 = vpack.c.b16 %v3979, %v3971
        %v5964 = vpack.c.b16 %v3988, %v3980
        %v5965 = vpack.c.b16 %v3989, %v3981
        %v5966 = vpack.c.b16 %v3990, %v3982
        %v5967 = vpack.c.b16 %v3991, %v3983
        %v5968 = vpack.c.b16 %v3992, %v3984
        %v5969 = vpack.c.b16 %v3993, %v3985
        %v5970 = vpack.c.b16 %v3994, %v3986
        %v5971 = vpack.c.b16 %v3995, %v3987
        %v5972 = vpack.c.b16 %v4004, %v3996
        %v5973 = vpack.c.b16 %v4005, %v3997
        %v5974 = vpack.c.b16 %v4006, %v3998
        %v5975 = vpack.c.b16 %v4007, %v3999
        %v5976 = vpack.c.b16 %v4008, %v4000
        %v5977 = vpack.c.b16 %v4009, %v4001
        %v5978 = vpack.c.b16 %v4010, %v4002
        %v5979 = vpack.c.b16 %v4011, %v4003
        %v5980 = vpack.c.b16 %v4020, %v4012
        %v5981 = vpack.c.b16 %v4021, %v4013
        %v5982 = vpack.c.b16 %v4022, %v4014
        %v5983 = vpack.c.b16 %v4023, %v4015
        %v5984 = vpack.c.b16 %v4024, %v4016
        %v5985 = vpack.c.b16 %v4025, %v4017
        %v5986 = vpack.c.b16 %v4026, %v4018
        %v5987 = vpack.c.b16 %v4027, %v4019
        %v5988 = vpack.c.b16 %v4036, %v4028
        %v5989 = vpack.c.b16 %v4037, %v4029
        %v5990 = vpack.c.b16 %v4038, %v4030
        %v5991 = vpack.c.b16 %v4039, %v4031
        %v5992 = vpack.c.b16 %v4040, %v4032
        %v5993 = vpack.c.b16 %v4041, %v4033
        %v5994 = vpack.c.b16 %v4042, %v4034
        %v5995 = vpack.c.b16 %v4043, %v4035
        %v5996 = vpack.c.b16 %v4052, %v4044
        %v5997 = vpack.c.b16 %v4053, %v4045
        %v5998 = vpack.c.b16 %v4054, %v4046
        %v5999 = vpack.c.b16 %v4055, %v4047
        %v6000 = vpack.c.b16 %v4056, %v4048
        %v6001 = vpack.c.b16 %v4057, %v4049
        %v6002 = vpack.c.b16 %v4058, %v4050
        %v6003 = vpack.c.b16 %v4059, %v4051
        %v6004 = vpack.c.b16 %v4068, %v4060
        %v6005 = vpack.c.b16 %v4069, %v4061
        %v6006 = vpack.c.b16 %v4070, %v4062
        %v6007 = vpack.c.b16 %v4071, %v4063
        %v6008 = vpack.c.b16 %v4072, %v4064
        %v6009 = vpack.c.b16 %v4073, %v4065
        %v6010 = vpack.c.b16 %v4074, %v4066
        %v6011 = vpack.c.b16 %v4075, %v4067
        %v6012 = vpack.c.b16 %v4084, %v4076
        %v6013 = vpack.c.b16 %v4085, %v4077
        %v6014 = vpack.c.b16 %v4086, %v4078
        %v6015 = vpack.c.b16 %v4087, %v4079
        %v6016 = vpack.c.b16 %v4088, %v4080
        %v6017 = vpack.c.b16 %v4089, %v4081
        %v6018 = vpack.c.b16 %v4090, %v4082
        %v6019 = vpack.c.b16 %v4091, %v4083
        %v6020 = vpack.c.b16 %v4100, %v4092
        %v6021 = vpack.c.b16 %v4101, %v4093
        %v6022 = vpack.c.b16 %v4102, %v4094
        %v6023 = vpack.c.b16 %v4103, %v4095
        %v6024 = vpack.c.b16 %v4104, %v4096
        %v6025 = vpack.c.b16 %v4105, %v4097
        %v6026 = vpack.c.b16 %v4106, %v4098
        %v6027 = vpack.c.b16 %v4107, %v4099
        %v6028 = vpack.c.b16 %v4116, %v4108
        %v6029 = vpack.c.b16 %v4117, %v4109
        %v6030 = vpack.c.b16 %v4118, %v4110
        %v6031 = vpack.c.b16 %v4119, %v4111
        %v6032 = vpack.c.b16 %v4120, %v4112
        %v6033 = vpack.c.b16 %v4121, %v4113
        %v6034 = vpack.c.b16 %v4122, %v4114
        %v6035 = vpack.c.b16 %v4123, %v4115
        %v6036 = vpack.c.b16 %v4132, %v4124
        %v6037 = vpack.c.b16 %v4133, %v4125
        %v6038 = vpack.c.b16 %v4134, %v4126
        %v6039 = vpack.c.b16 %v4135, %v4127
        %v6040 = vpack.c.b16 %v4136, %v4128
        %v6041 = vpack.c.b16 %v4137, %v4129
        %v6042 = vpack.c.b16 %v4138, %v4130
        %v6043 = vpack.c.b16 %v4139, %v4131
        %v6044 = vpack.c.b16 %v4148, %v4140
        %v6045 = vpack.c.b16 %v4149, %v4141
        %v6046 = vpack.c.b16 %v4150, %v4142
        %v6047 = vpack.c.b16 %v4151, %v4143
        %v6048 = vpack.c.b16 %v4152, %v4144
        %v6049 = vpack.c.b16 %v4153, %v4145
        %v6050 = vpack.c.b16 %v4154, %v4146
        %v6051 = vpack.c.b16 %v4155, %v4147
        %v6052 = vpack.c.b16 %v4164, %v4156
        %v6053 = vpack.c.b16 %v4165, %v4157
        %v6054 = vpack.c.b16 %v4166, %v4158
        %v6055 = vpack.c.b16 %v4167, %v4159
        %v6056 = vpack.c.b16 %v4168, %v4160
        %v6057 = vpack.c.b16 %v4169, %v4161
        %v6058 = vpack.c.b16 %v4170, %v4162
        %v6059 = vpack.c.b16 %v4171, %v4163
        %v6060 = vpack.c.b16 %v4180, %v4172
        %v6061 = vpack.c.b16 %v4181, %v4173
        %v6062 = vpack.c.b16 %v4182, %v4174
        %v6063 = vpack.c.b16 %v4183, %v4175
        %v6064 = vpack.c.b16 %v4184, %v4176
        %v6065 = vpack.c.b16 %v4185, %v4177
        %v6066 = vpack.c.b16 %v4186, %v4178
        %v6067 = vpack.c.b16 %v4187, %v4179
        %v6068 = vpack.c.b16 %v4196, %v4188
        %v6069 = vpack.c.b16 %v4197, %v4189
        %v6070 = vpack.c.b16 %v4198, %v4190
        %v6071 = vpack.c.b16 %v4199, %v4191
        %v6072 = vpack.c.b16 %v4200, %v4192
        %v6073 = vpack.c.b16 %v4201, %v4193
        %v6074 = vpack.c.b16 %v4202, %v4194
        %v6075 = vpack.c.b16 %v4203, %v4195
        %v6076 = vpack.c.b16 %v4212, %v4204
        %v6077 = vpack.c.b16 %v4213, %v4205
        %v6078 = vpack.c.b16 %v4214, %v4206
        %v6079 = vpack.c.b16 %v4215, %v4207
        %v6080 = vpack.c.b16 %v4216, %v4208
        %v6081 = vpack.c.b16 %v4217, %v4209
        %v6082 = vpack.c.b16 %v4218, %v4210
        %v6083 = vpack.c.b16 %v4219, %v4211
        %v6084 = vpack.c.b16 %v4228, %v4220
        %v6085 = vpack.c.b16 %v4229, %v4221
        %v6086 = vpack.c.b16 %v4230, %v4222
        %v6087 = vpack.c.b16 %v4231, %v4223
        %v6088 = vpack.c.b16 %v4232, %v4224
        %v6089 = vpack.c.b16 %v4233, %v4225
        %v6090 = vpack.c.b16 %v4234, %v4226
        %v6091 = vpack.c.b16 %v4235, %v4227
        %v6092 = vpack.c.b16 %v4244, %v4236
        %v6093 = vpack.c.b16 %v4245, %v4237
        %v6094 = vpack.c.b16 %v4246, %v4238
        %v6095 = vpack.c.b16 %v4247, %v4239
        %v6096 = vpack.c.b16 %v4248, %v4240
        %v6097 = vpack.c.b16 %v4249, %v4241
        %v6098 = vpack.c.b16 %v4250, %v4242
        %v6099 = vpack.c.b16 %v4251, %v4243
        %v6100 = vpack.c.b16 %v4260, %v4252
        %v6101 = vpack.c.b16 %v4261, %v4253
        %v6102 = vpack.c.b16 %v4262, %v4254
        %v6103 = vpack.c.b16 %v4263, %v4255
        %v6104 = vpack.c.b16 %v4264, %v4256
        %v6105 = vpack.c.b16 %v4265, %v4257
        %v6106 = vpack.c.b16 %v4266, %v4258
        %v6107 = vpack.c.b16 %v4267, %v4259
        %v6108 = vpack.c.b16 %v4276, %v4268
        %v6109 = vpack.c.b16 %v4277, %v4269
        %v6110 = vpack.c.b16 %v4278, %v4270
        %v6111 = vpack.c.b16 %v4279, %v4271
        %v6112 = vpack.c.b16 %v4280, %v4272
        %v6113 = vpack.c.b16 %v4281, %v4273
        %v6114 = vpack.c.b16 %v4282, %v4274
        %v6115 = vpack.c.b16 %v4283, %v4275
        %v6116 = vpack.c.b16 %v4292, %v4284
        %v6117 = vpack.c.b16 %v4293, %v4285
        %v6118 = vpack.c.b16 %v4294, %v4286
        %v6119 = vpack.c.b16 %v4295, %v4287
        %v6120 = vpack.c.b16 %v4296, %v4288
        %v6121 = vpack.c.b16 %v4297, %v4289
        %v6122 = vpack.c.b16 %v4298, %v4290
        %v6123 = vpack.c.b16 %v4299, %v4291
        %v6124 = vpack.c.b16 %v4308, %v4300
        %v6125 = vpack.c.b16 %v4309, %v4301
        %v6126 = vpack.c.b16 %v4310, %v4302
        %v6127 = vpack.c.b16 %v4311, %v4303
        %v6128 = vpack.c.b16 %v4312, %v4304
        %v6129 = vpack.c.b16 %v4313, %v4305
        %v6130 = vpack.c.b16 %v4314, %v4306
        %v6131 = vpack.c.b16 %v4315, %v4307
        %v6132 = vpack.c.b16 %v4324, %v4316
        %v6133 = vpack.c.b16 %v4325, %v4317
        %v6134 = vpack.c.b16 %v4326, %v4318
        %v6135 = vpack.c.b16 %v4327, %v4319
        %v6136 = vpack.c.b16 %v4328, %v4320
        %v6137 = vpack.c.b16 %v4329, %v4321
        %v6138 = vpack.c.b16 %v4330, %v4322
        %v6139 = vpack.c.b16 %v4331, %v4323
        %v6140 = vpack.c.b16 %v4340, %v4332
        %v6141 = vpack.c.b16 %v4341, %v4333
        %v6142 = vpack.c.b16 %v4342, %v4334
        %v6143 = vpack.c.b16 %v4343, %v4335
        %v6144 = vpack.c.b16 %v4344, %v4336
        %v6145 = vpack.c.b16 %v4345, %v4337
        %v6146 = vpack.c.b16 %v4346, %v4338
        %v6147 = vpack.c.b16 %v4347, %v4339
        %v6148 = vpack.c.b16 %v4356, %v4348
        %v6149 = vpack.c.b16 %v4357, %v4349
        %v6150 = vpack.c.b16 %v4358, %v4350
        %v6151 = vpack.c.b16 %v4359, %v4351
        %v6152 = vpack.c.b16 %v4360, %v4352
        %v6153 = vpack.c.b16 %v4361, %v4353
        %v6154 = vpack.c.b16 %v4362, %v4354
        %v6155 = vpack.c.b16 %v4363, %v4355
        %v6156 = vpack.c.b16 %v4372, %v4364
        %v6157 = vpack.c.b16 %v4373, %v4365
        %v6158 = vpack.c.b16 %v4374, %v4366
        %v6159 = vpack.c.b16 %v4375, %v4367
        %v6160 = vpack.c.b16 %v4376, %v4368
        %v6161 = vpack.c.b16 %v4377, %v4369
        %v6162 = vpack.c.b16 %v4378, %v4370
        %v6163 = vpack.c.b16 %v4379, %v4371
        %v6164 = vpack.c.b16 %v4388, %v4380
        %v6165 = vpack.c.b16 %v4389, %v4381
        %v6166 = vpack.c.b16 %v4390, %v4382
        %v6167 = vpack.c.b16 %v4391, %v4383
        %v6168 = vpack.c.b16 %v4392, %v4384
        %v6169 = vpack.c.b16 %v4393, %v4385
        %v6170 = vpack.c.b16 %v4394, %v4386
        %v6171 = vpack.c.b16 %v4395, %v4387
        %v6172 = vpack.c.b16 %v4404, %v4396
        %v6173 = vpack.c.b16 %v4405, %v4397
        %v6174 = vpack.c.b16 %v4406, %v4398
        %v6175 = vpack.c.b16 %v4407, %v4399
        %v6176 = vpack.c.b16 %v4408, %v4400
        %v6177 = vpack.c.b16 %v4409, %v4401
        %v6178 = vpack.c.b16 %v4410, %v4402
        %v6179 = vpack.c.b16 %v4411, %v4403
        %v6180 = vpack.c.b16 %v4420, %v4412
        %v6181 = vpack.c.b16 %v4421, %v4413
        %v6182 = vpack.c.b16 %v4422, %v4414
        %v6183 = vpack.c.b16 %v4423, %v4415
        %v6184 = vpack.c.b16 %v4424, %v4416
        %v6185 = vpack.c.b16 %v4425, %v4417
        %v6186 = vpack.c.b16 %v4426, %v4418
        %v6187 = vpack.c.b16 %v4427, %v4419
        %v6188 = vpack.c.b16 %v4436, %v4428
        %v6189 = vpack.c.b16 %v4437, %v4429
        %v6190 = vpack.c.b16 %v4438, %v4430
        %v6191 = vpack.c.b16 %v4439, %v4431
        %v6192 = vpack.c.b16 %v4440, %v4432
        %v6193 = vpack.c.b16 %v4441, %v4433
        %v6194 = vpack.c.b16 %v4442, %v4434
        %v6195 = vpack.c.b16 %v4443, %v4435
        %v6196 = vpack.c.b16 %v4452, %v4444
        %v6197 = vpack.c.b16 %v4453, %v4445
        %v6198 = vpack.c.b16 %v4454, %v4446
        %v6199 = vpack.c.b16 %v4455, %v4447
        %v6200 = vpack.c.b16 %v4456, %v4448
        %v6201 = vpack.c.b16 %v4457, %v4449
        %v6202 = vpack.c.b16 %v4458, %v4450
        %v6203 = vpack.c.b16 %v4459, %v4451
        %v6204 = vpack.c.b16 %v4468, %v4460
        %v6205 = vpack.c.b16 %v4469, %v4461
        %v6206 = vpack.c.b16 %v4470, %v4462
        %v6207 = vpack.c.b16 %v4471, %v4463
        %v6208 = vpack.c.b16 %v4472, %v4464
        %v6209 = vpack.c.b16 %v4473, %v4465
        %v6210 = vpack.c.b16 %v4474, %v4466
        %v6211 = vpack.c.b16 %v4475, %v4467
        %v6212 = vpack.c.b16 %v4484, %v4476
        %v6213 = vpack.c.b16 %v4485, %v4477
        %v6214 = vpack.c.b16 %v4486, %v4478
        %v6215 = vpack.c.b16 %v4487, %v4479
        %v6216 = vpack.c.b16 %v4488, %v4480
        %v6217 = vpack.c.b16 %v4489, %v4481
        %v6218 = vpack.c.b16 %v4490, %v4482
        %v6219 = vpack.c.b16 %v4491, %v4483
        %v6220 = vpack.c.b16 %v4500, %v4492
        %v6221 = vpack.c.b16 %v4501, %v4493
        %v6222 = vpack.c.b16 %v4502, %v4494
        %v6223 = vpack.c.b16 %v4503, %v4495
        %v6224 = vpack.c.b16 %v4504, %v4496
        %v6225 = vpack.c.b16 %v4505, %v4497
        %v6226 = vpack.c.b16 %v4506, %v4498
        %v6227 = vpack.c.b16 %v4507, %v4499
        %v6228 = vpack.c.b16 %v4516, %v4508
        %v6229 = vpack.c.b16 %v4517, %v4509
        %v6230 = vpack.c.b16 %v4518, %v4510
        %v6231 = vpack.c.b16 %v4519, %v4511
        %v6232 = vpack.c.b16 %v4520, %v4512
        %v6233 = vpack.c.b16 %v4521, %v4513
        %v6234 = vpack.c.b16 %v4522, %v4514
        %v6235 = vpack.c.b16 %v4523, %v4515
        %v6236 = vpack.c.b16 %v4532, %v4524
        %v6237 = vpack.c.b16 %v4533, %v4525
        %v6238 = vpack.c.b16 %v4534, %v4526
        %v6239 = vpack.c.b16 %v4535, %v4527
        %v6240 = vpack.c.b16 %v4536, %v4528
        %v6241 = vpack.c.b16 %v4537, %v4529
        %v6242 = vpack.c.b16 %v4538, %v4530
        %v6243 = vpack.c.b16 %v4539, %v4531
        %v6244 = vpack.c.b16 %v4548, %v4540
        %v6245 = vpack.c.b16 %v4549, %v4541
        %v6246 = vpack.c.b16 %v4550, %v4542
        %v6247 = vpack.c.b16 %v4551, %v4543
        %v6248 = vpack.c.b16 %v4552, %v4544
        %v6249 = vpack.c.b16 %v4553, %v4545
        %v6250 = vpack.c.b16 %v4554, %v4546
        %v6251 = vpack.c.b16 %v4555, %v4547
        %v6252 = vpack.c.b16 %v4564, %v4556
        %v6253 = vpack.c.b16 %v4565, %v4557
        %v6254 = vpack.c.b16 %v4566, %v4558
        %v6255 = vpack.c.b16 %v4567, %v4559
        %v6256 = vpack.c.b16 %v4568, %v4560
        %v6257 = vpack.c.b16 %v4569, %v4561
        %v6258 = vpack.c.b16 %v4570, %v4562
        %v6259 = vpack.c.b16 %v4571, %v4563
        %v6260 = vpack.c.b16 %v4580, %v4572
        %v6261 = vpack.c.b16 %v4581, %v4573
        %v6262 = vpack.c.b16 %v4582, %v4574
        %v6263 = vpack.c.b16 %v4583, %v4575
        %v6264 = vpack.c.b16 %v4584, %v4576
        %v6265 = vpack.c.b16 %v4585, %v4577
        %v6266 = vpack.c.b16 %v4586, %v4578
        %v6267 = vpack.c.b16 %v4587, %v4579
        %v6268 = vpack.c.b16 %v4596, %v4588
        %v6269 = vpack.c.b16 %v4597, %v4589
        %v6270 = vpack.c.b16 %v4598, %v4590
        %v6271 = vpack.c.b16 %v4599, %v4591
        %v6272 = vpack.c.b16 %v4600, %v4592
        %v6273 = vpack.c.b16 %v4601, %v4593
        %v6274 = vpack.c.b16 %v4602, %v4594
        %v6275 = vpack.c.b16 %v4603, %v4595
        %v6276 = vpack.c.b16 %v4612, %v4604
        %v6277 = vpack.c.b16 %v4613, %v4605
        %v6278 = vpack.c.b16 %v4614, %v4606
        %v6279 = vpack.c.b16 %v4615, %v4607
        %v6280 = vpack.c.b16 %v4616, %v4608
        %v6281 = vpack.c.b16 %v4617, %v4609
        %v6282 = vpack.c.b16 %v4618, %v4610
        %v6283 = vpack.c.b16 %v4619, %v4611
        %v6284 = vpack.c.b16 %v4628, %v4620
        %v6285 = vpack.c.b16 %v4629, %v4621
        %v6286 = vpack.c.b16 %v4630, %v4622
        %v6287 = vpack.c.b16 %v4631, %v4623
        %v6288 = vpack.c.b16 %v4632, %v4624
        %v6289 = vpack.c.b16 %v4633, %v4625
        %v6290 = vpack.c.b16 %v4634, %v4626
        %v6291 = vpack.c.b16 %v4635, %v4627
        %v6292 = vpack.c.b16 %v4644, %v4636
        %v6293 = vpack.c.b16 %v4645, %v4637
        %v6294 = vpack.c.b16 %v4646, %v4638
        %v6295 = vpack.c.b16 %v4647, %v4639
        %v6296 = vpack.c.b16 %v4648, %v4640
        %v6297 = vpack.c.b16 %v4649, %v4641
        %v6298 = vpack.c.b16 %v4650, %v4642
        %v6299 = vpack.c.b16 %v4651, %v4643
        %v6300 = vpack.c.b16 %v4660, %v4652
        %v6301 = vpack.c.b16 %v4661, %v4653
        %v6302 = vpack.c.b16 %v4662, %v4654
        %v6303 = vpack.c.b16 %v4663, %v4655
        %v6304 = vpack.c.b16 %v4664, %v4656
        %v6305 = vpack.c.b16 %v4665, %v4657
        %v6306 = vpack.c.b16 %v4666, %v4658
        %v6307 = vpack.c.b16 %v4667, %v4659
        %v6308 = vpack.c.b16 %v4676, %v4668
        %v6309 = vpack.c.b16 %v4677, %v4669
        %v6310 = vpack.c.b16 %v4678, %v4670
        %v6311 = vpack.c.b16 %v4679, %v4671
        %v6312 = vpack.c.b16 %v4680, %v4672
        %v6313 = vpack.c.b16 %v4681, %v4673
        %v6314 = vpack.c.b16 %v4682, %v4674
        %v6315 = vpack.c.b16 %v4683, %v4675
        %v6316 = vpack.c.b16 %v4692, %v4684
        %v6317 = vpack.c.b16 %v4693, %v4685
        %v6318 = vpack.c.b16 %v4694, %v4686
        %v6319 = vpack.c.b16 %v4695, %v4687
        %v6320 = vpack.c.b16 %v4696, %v4688
        %v6321 = vpack.c.b16 %v4697, %v4689
        %v6322 = vpack.c.b16 %v4698, %v4690
        %v6323 = vpack.c.b16 %v4699, %v4691
        %v6324 = vpack.c.b16 %v4708, %v4700
        %v6325 = vpack.c.b16 %v4709, %v4701
        %v6326 = vpack.c.b16 %v4710, %v4702
        %v6327 = vpack.c.b16 %v4711, %v4703
        %v6328 = vpack.c.b16 %v4712, %v4704
        %v6329 = vpack.c.b16 %v4713, %v4705
        %v6330 = vpack.c.b16 %v4714, %v4706
        %v6331 = vpack.c.b16 %v4715, %v4707
        %v6332 = vpack.c.b16 %v4724, %v4716
        %v6333 = vpack.c.b16 %v4725, %v4717
        %v6334 = vpack.c.b16 %v4726, %v4718
        %v6335 = vpack.c.b16 %v4727, %v4719
        %v6336 = vpack.c.b16 %v4728, %v4720
        %v6337 = vpack.c.b16 %v4729, %v4721
        %v6338 = vpack.c.b16 %v4730, %v4722
        %v6339 = vpack.c.b16 %v4731, %v4723
        %v6340 = vpack.c.b16 %v4740, %v4732
        %v6341 = vpack.c.b16 %v4741, %v4733
        %v6342 = vpack.c.b16 %v4742, %v4734
        %v6343 = vpack.c.b16 %v4743, %v4735
        %v6344 = vpack.c.b16 %v4744, %v4736
        %v6345 = vpack.c.b16 %v4745, %v4737
        %v6346 = vpack.c.b16 %v4746, %v4738
        %v6347 = vpack.c.b16 %v4747, %v4739
        %v6348 = vpack.c.b16 %v4756, %v4748
        %v6349 = vpack.c.b16 %v4757, %v4749
        %v6350 = vpack.c.b16 %v4758, %v4750
        %v6351 = vpack.c.b16 %v4759, %v4751
        %v6352 = vpack.c.b16 %v4760, %v4752
        %v6353 = vpack.c.b16 %v4761, %v4753
        %v6354 = vpack.c.b16 %v4762, %v4754
        %v6355 = vpack.c.b16 %v4763, %v4755
        %v6356 = vpack.c.b16 %v4772, %v4764
        %v6357 = vpack.c.b16 %v4773, %v4765
        %v6358 = vpack.c.b16 %v4774, %v4766
        %v6359 = vpack.c.b16 %v4775, %v4767
        %v6360 = vpack.c.b16 %v4776, %v4768
        %v6361 = vpack.c.b16 %v4777, %v4769
        %v6362 = vpack.c.b16 %v4778, %v4770
        %v6363 = vpack.c.b16 %v4779, %v4771
        %v6364 = vpack.c.b16 %v4788, %v4780
        %v6365 = vpack.c.b16 %v4789, %v4781
        %v6366 = vpack.c.b16 %v4790, %v4782
        %v6367 = vpack.c.b16 %v4791, %v4783
        %v6368 = vpack.c.b16 %v4792, %v4784
        %v6369 = vpack.c.b16 %v4793, %v4785
        %v6370 = vpack.c.b16 %v4794, %v4786
        %v6371 = vpack.c.b16 %v4795, %v4787
        %v6372 = vpack.c.b16 %v4804, %v4796
        %v6373 = vpack.c.b16 %v4805, %v4797
        %v6374 = vpack.c.b16 %v4806, %v4798
        %v6375 = vpack.c.b16 %v4807, %v4799
        %v6376 = vpack.c.b16 %v4808, %v4800
        %v6377 = vpack.c.b16 %v4809, %v4801
        %v6378 = vpack.c.b16 %v4810, %v4802
        %v6379 = vpack.c.b16 %v4811, %v4803
        %v6380 = vpack.c.b16 %v4820, %v4812
        %v6381 = vpack.c.b16 %v4821, %v4813
        %v6382 = vpack.c.b16 %v4822, %v4814
        %v6383 = vpack.c.b16 %v4823, %v4815
        %v6384 = vpack.c.b16 %v4824, %v4816
        %v6385 = vpack.c.b16 %v4825, %v4817
        %v6386 = vpack.c.b16 %v4826, %v4818
        %v6387 = vpack.c.b16 %v4827, %v4819
        %v6388 = vpack.c.b16 %v4836, %v4828
        %v6389 = vpack.c.b16 %v4837, %v4829
        %v6390 = vpack.c.b16 %v4838, %v4830
        %v6391 = vpack.c.b16 %v4839, %v4831
        %v6392 = vpack.c.b16 %v4840, %v4832
        %v6393 = vpack.c.b16 %v4841, %v4833
        %v6394 = vpack.c.b16 %v4842, %v4834
        %v6395 = vpack.c.b16 %v4843, %v4835
        %v6396 = vpack.c.b16 %v4852, %v4844
        %v6397 = vpack.c.b16 %v4853, %v4845
        %v6398 = vpack.c.b16 %v4854, %v4846
        %v6399 = vpack.c.b16 %v4855, %v4847
        %v6400 = vpack.c.b16 %v4856, %v4848
        %v6401 = vpack.c.b16 %v4857, %v4849
        %v6402 = vpack.c.b16 %v4858, %v4850
        %v6403 = vpack.c.b16 %v4859, %v4851
        %v6404 = vpack.c.b16 %v4868, %v4860
        %v6405 = vpack.c.b16 %v4869, %v4861
        %v6406 = vpack.c.b16 %v4870, %v4862
        %v6407 = vpack.c.b16 %v4871, %v4863
        %v6408 = vpack.c.b16 %v4872, %v4864
        %v6409 = vpack.c.b16 %v4873, %v4865
        %v6410 = vpack.c.b16 %v4874, %v4866
        %v6411 = vpack.c.b16 %v4875, %v4867
        %v6412 = vpack.c.b16 %v4884, %v4876
        %v6413 = vpack.c.b16 %v4885, %v4877
        %v6414 = vpack.c.b16 %v4886, %v4878
        %v6415 = vpack.c.b16 %v4887, %v4879
        %v6416 = vpack.c.b16 %v4888, %v4880
        %v6417 = vpack.c.b16 %v4889, %v4881
        %v6418 = vpack.c.b16 %v4890, %v4882
        %v6419 = vpack.c.b16 %v4891, %v4883
        %v6420 = vpack.c.b16 %v4900, %v4892
        %v6421 = vpack.c.b16 %v4901, %v4893
        %v6422 = vpack.c.b16 %v4902, %v4894
        %v6423 = vpack.c.b16 %v4903, %v4895
        %v6424 = vpack.c.b16 %v4904, %v4896
        %v6425 = vpack.c.b16 %v4905, %v4897
        %v6426 = vpack.c.b16 %v4906, %v4898
        %v6427 = vpack.c.b16 %v4907, %v4899
        %v6428 = vpack.c.b16 %v4916, %v4908
        %v6429 = vpack.c.b16 %v4917, %v4909
        %v6430 = vpack.c.b16 %v4918, %v4910
        %v6431 = vpack.c.b16 %v4919, %v4911
        %v6432 = vpack.c.b16 %v4920, %v4912
        %v6433 = vpack.c.b16 %v4921, %v4913
        %v6434 = vpack.c.b16 %v4922, %v4914
        %v6435 = vpack.c.b16 %v4923, %v4915
        %v6436 = vpack.c.b16 %v4932, %v4924
        %v6437 = vpack.c.b16 %v4933, %v4925
        %v6438 = vpack.c.b16 %v4934, %v4926
        %v6439 = vpack.c.b16 %v4935, %v4927
        %v6440 = vpack.c.b16 %v4936, %v4928
        %v6441 = vpack.c.b16 %v4937, %v4929
        %v6442 = vpack.c.b16 %v4938, %v4930
        %v6443 = vpack.c.b16 %v4939, %v4931
        %v6444 = vpack.c.b16 %v4948, %v4940
        %v6445 = vpack.c.b16 %v4949, %v4941
        %v6446 = vpack.c.b16 %v4950, %v4942
        %v6447 = vpack.c.b16 %v4951, %v4943
        %v6448 = vpack.c.b16 %v4952, %v4944
        %v6449 = vpack.c.b16 %v4953, %v4945
        %v6450 = vpack.c.b16 %v4954, %v4946
        %v6451 = vpack.c.b16 %v4955, %v4947
        %v6452 = vpack.c.b16 %v4964, %v4956
        %v6453 = vpack.c.b16 %v4965, %v4957
        %v6454 = vpack.c.b16 %v4966, %v4958
        %v6455 = vpack.c.b16 %v4967, %v4959
        %v6456 = vpack.c.b16 %v4968, %v4960
        %v6457 = vpack.c.b16 %v4969, %v4961
        %v6458 = vpack.c.b16 %v4970, %v4962
        %v6459 = vpack.c.b16 %v4971, %v4963
        %v6460 = vpack.c.b16 %v4980, %v4972
        %v6461 = vpack.c.b16 %v4981, %v4973
        %v6462 = vpack.c.b16 %v4982, %v4974
        %v6463 = vpack.c.b16 %v4983, %v4975
        %v6464 = vpack.c.b16 %v4984, %v4976
        %v6465 = vpack.c.b16 %v4985, %v4977
        %v6466 = vpack.c.b16 %v4986, %v4978
        %v6467 = vpack.c.b16 %v4987, %v4979
        %v6468 = vpack.c.b16 %v4996, %v4988
        %v6469 = vpack.c.b16 %v4997, %v4989
        %v6470 = vpack.c.b16 %v4998, %v4990
        %v6471 = vpack.c.b16 %v4999, %v4991
        %v6472 = vpack.c.b16 %v5000, %v4992
        %v6473 = vpack.c.b16 %v5001, %v4993
        %v6474 = vpack.c.b16 %v5002, %v4994
        %v6475 = vpack.c.b16 %v5003, %v4995
        %v6476 = vpack.c.b16 %v5012, %v5004
        %v6477 = vpack.c.b16 %v5013, %v5005
        %v6478 = vpack.c.b16 %v5014, %v5006
        %v6479 = vpack.c.b16 %v5015, %v5007
        %v6480 = vpack.c.b16 %v5016, %v5008
        %v6481 = vpack.c.b16 %v5017, %v5009
        %v6482 = vpack.c.b16 %v5018, %v5010
        %v6483 = vpack.c.b16 %v5019, %v5011
        %v6484 = vpack.c.b16 %v5028, %v5020
        %v6485 = vpack.c.b16 %v5029, %v5021
        %v6486 = vpack.c.b16 %v5030, %v5022
        %v6487 = vpack.c.b16 %v5031, %v5023
        %v6488 = vpack.c.b16 %v5032, %v5024
        %v6489 = vpack.c.b16 %v5033, %v5025
        %v6490 = vpack.c.b16 %v5034, %v5026
        %v6491 = vpack.c.b16 %v5035, %v5027
        %v6492 = vpack.c.b16 %v5044, %v5036
        %v6493 = vpack.c.b16 %v5045, %v5037
        %v6494 = vpack.c.b16 %v5046, %v5038
        %v6495 = vpack.c.b16 %v5047, %v5039
        %v6496 = vpack.c.b16 %v5048, %v5040
        %v6497 = vpack.c.b16 %v5049, %v5041
        %v6498 = vpack.c.b16 %v5050, %v5042
        %v6499 = vpack.c.b16 %v5051, %v5043
        %v6500 = vpack.c.b16 %v5060, %v5052
        %v6501 = vpack.c.b16 %v5061, %v5053
        %v6502 = vpack.c.b16 %v5062, %v5054
        %v6503 = vpack.c.b16 %v5063, %v5055
        %v6504 = vpack.c.b16 %v5064, %v5056
        %v6505 = vpack.c.b16 %v5065, %v5057
        %v6506 = vpack.c.b16 %v5066, %v5058
        %v6507 = vpack.c.b16 %v5067, %v5059
        %v6508 = vpack.c.b16 %v5076, %v5068
        %v6509 = vpack.c.b16 %v5077, %v5069
        %v6510 = vpack.c.b16 %v5078, %v5070
        %v6511 = vpack.c.b16 %v5079, %v5071
        %v6512 = vpack.c.b16 %v5080, %v5072
        %v6513 = vpack.c.b16 %v5081, %v5073
        %v6514 = vpack.c.b16 %v5082, %v5074
        %v6515 = vpack.c.b16 %v5083, %v5075
        %v6516 = vpack.c.b16 %v5092, %v5084
        %v6517 = vpack.c.b16 %v5093, %v5085
        %v6518 = vpack.c.b16 %v5094, %v5086
        %v6519 = vpack.c.b16 %v5095, %v5087
        %v6520 = vpack.c.b16 %v5096, %v5088
        %v6521 = vpack.c.b16 %v5097, %v5089
        %v6522 = vpack.c.b16 %v5098, %v5090
        %v6523 = vpack.c.b16 %v5099, %v5091
        %v6524 = vpack.c.b16 %v5108, %v5100
        %v6525 = vpack.c.b16 %v5109, %v5101
        %v6526 = vpack.c.b16 %v5110, %v5102
        %v6527 = vpack.c.b16 %v5111, %v5103
        %v6528 = vpack.c.b16 %v5112, %v5104
        %v6529 = vpack.c.b16 %v5113, %v5105
        %v6530 = vpack.c.b16 %v5114, %v5106
        %v6531 = vpack.c.b16 %v5115, %v5107
        %v6532 = vpack.c.b16 %v5124, %v5116
        %v6533 = vpack.c.b16 %v5125, %v5117
        %v6534 = vpack.c.b16 %v5126, %v5118
        %v6535 = vpack.c.b16 %v5127, %v5119
        %v6536 = vpack.c.b16 %v5128, %v5120
        %v6537 = vpack.c.b16 %v5129, %v5121
        %v6538 = vpack.c.b16 %v5130, %v5122
        %v6539 = vpack.c.b16 %v5131, %v5123
        %v6540 = vpack.c.b16 %v5140, %v5132
        %v6541 = vpack.c.b16 %v5141, %v5133
        %v6542 = vpack.c.b16 %v5142, %v5134
        %v6543 = vpack.c.b16 %v5143, %v5135
        %v6544 = vpack.c.b16 %v5144, %v5136
        %v6545 = vpack.c.b16 %v5145, %v5137
        %v6546 = vpack.c.b16 %v5146, %v5138
        %v6547 = vpack.c.b16 %v5147, %v5139
        %v6548 = vpack.c.b16 %v5156, %v5148
        %v6549 = vpack.c.b16 %v5157, %v5149
        %v6550 = vpack.c.b16 %v5158, %v5150
        %v6551 = vpack.c.b16 %v5159, %v5151
        %v6552 = vpack.c.b16 %v5160, %v5152
        %v6553 = vpack.c.b16 %v5161, %v5153
        %v6554 = vpack.c.b16 %v5162, %v5154
        %v6555 = vpack.c.b16 %v5163, %v5155
        %v6556 = vpack.c.b16 %v5172, %v5164
        %v6557 = vpack.c.b16 %v5173, %v5165
        %v6558 = vpack.c.b16 %v5174, %v5166
        %v6559 = vpack.c.b16 %v5175, %v5167
        %v6560 = vpack.c.b16 %v5176, %v5168
        %v6561 = vpack.c.b16 %v5177, %v5169
        %v6562 = vpack.c.b16 %v5178, %v5170
        %v6563 = vpack.c.b16 %v5179, %v5171
        %v6564 = vpack.c.b16 %v5188, %v5180
        %v6565 = vpack.c.b16 %v5189, %v5181
        %v6566 = vpack.c.b16 %v5190, %v5182
        %v6567 = vpack.c.b16 %v5191, %v5183
        %v6568 = vpack.c.b16 %v5192, %v5184
        %v6569 = vpack.c.b16 %v5193, %v5185
        %v6570 = vpack.c.b16 %v5194, %v5186
        %v6571 = vpack.c.b16 %v5195, %v5187
        %v6572 = vpack.c.b16 %v5204, %v5196
        %v6573 = vpack.c.b16 %v5205, %v5197
        %v6574 = vpack.c.b16 %v5206, %v5198
        %v6575 = vpack.c.b16 %v5207, %v5199
        %v6576 = vpack.c.b16 %v5208, %v5200
        %v6577 = vpack.c.b16 %v5209, %v5201
        %v6578 = vpack.c.b16 %v5210, %v5202
        %v6579 = vpack.c.b16 %v5211, %v5203
        %v6580 = vpack.c.b16 %v5220, %v5212
        %v6581 = vpack.c.b16 %v5221, %v5213
        %v6582 = vpack.c.b16 %v5222, %v5214
        %v6583 = vpack.c.b16 %v5223, %v5215
        %v6584 = vpack.c.b16 %v5224, %v5216
        %v6585 = vpack.c.b16 %v5225, %v5217
        %v6586 = vpack.c.b16 %v5226, %v5218
        %v6587 = vpack.c.b16 %v5227, %v5219
        %v6588 = vpack.c.b16 %v5236, %v5228
        %v6589 = vpack.c.b16 %v5237, %v5229
        %v6590 = vpack.c.b16 %v5238, %v5230
        %v6591 = vpack.c.b16 %v5239, %v5231
        %v6592 = vpack.c.b16 %v5240, %v5232
        %v6593 = vpack.c.b16 %v5241, %v5233
        %v6594 = vpack.c.b16 %v5242, %v5234
        %v6595 = vpack.c.b16 %v5243, %v5235
        %v6596 = vpack.c.b16 %v5252, %v5244
        %v6597 = vpack.c.b16 %v5253, %v5245
        %v6598 = vpack.c.b16 %v5254, %v5246
        %v6599 = vpack.c.b16 %v5255, %v5247
        %v6600 = vpack.c.b16 %v5256, %v5248
        %v6601 = vpack.c.b16 %v5257, %v5249
        %v6602 = vpack.c.b16 %v5258, %v5250
        %v6603 = vpack.c.b16 %v5259, %v5251
        %v6604 = vpack.c.b16 %v5268, %v5260
        %v6605 = vpack.c.b16 %v5269, %v5261
        %v6606 = vpack.c.b16 %v5270, %v5262
        %v6607 = vpack.c.b16 %v5271, %v5263
        %v6608 = vpack.c.b16 %v5272, %v5264
        %v6609 = vpack.c.b16 %v5273, %v5265
        %v6610 = vpack.c.b16 %v5274, %v5266
        %v6611 = vpack.c.b16 %v5275, %v5267
        %v6612 = vpack.c.b16 %v5284, %v5276
        %v6613 = vpack.c.b16 %v5285, %v5277
        %v6614 = vpack.c.b16 %v5286, %v5278
        %v6615 = vpack.c.b16 %v5287, %v5279
        %v6616 = vpack.c.b16 %v5288, %v5280
        %v6617 = vpack.c.b16 %v5289, %v5281
        %v6618 = vpack.c.b16 %v5290, %v5282
        %v6619 = vpack.c.b16 %v5291, %v5283
        %v6620 = vpack.c.b16 %v5300, %v5292
        %v6621 = vpack.c.b16 %v5301, %v5293
        %v6622 = vpack.c.b16 %v5302, %v5294
        %v6623 = vpack.c.b16 %v5303, %v5295
        %v6624 = vpack.c.b16 %v5304, %v5296
        %v6625 = vpack.c.b16 %v5305, %v5297
        %v6626 = vpack.c.b16 %v5306, %v5298
        %v6627 = vpack.c.b16 %v5307, %v5299
        %v6628 = vpack.c.b16 %v5316, %v5308
        %v6629 = vpack.c.b16 %v5317, %v5309
        %v6630 = vpack.c.b16 %v5318, %v5310
        %v6631 = vpack.c.b16 %v5319, %v5311
        %v6632 = vpack.c.b16 %v5320, %v5312
        %v6633 = vpack.c.b16 %v5321, %v5313
        %v6634 = vpack.c.b16 %v5322, %v5314
        %v6635 = vpack.c.b16 %v5323, %v5315
        %v6636 = vpack.c.b16 %v5332, %v5324
        %v6637 = vpack.c.b16 %v5333, %v5325
        %v6638 = vpack.c.b16 %v5334, %v5326
        %v6639 = vpack.c.b16 %v5335, %v5327
        %v6640 = vpack.c.b16 %v5336, %v5328
        %v6641 = vpack.c.b16 %v5337, %v5329
        %v6642 = vpack.c.b16 %v5338, %v5330
        %v6643 = vpack.c.b16 %v5339, %v5331
        %v6644 = vpack.c.b16 %v5348, %v5340
        %v6645 = vpack.c.b16 %v5349, %v5341
        %v6646 = vpack.c.b16 %v5350, %v5342
        %v6647 = vpack.c.b16 %v5351, %v5343
        %v6648 = vpack.c.b16 %v5352, %v5344
        %v6649 = vpack.c.b16 %v5353, %v5345
        %v6650 = vpack.c.b16 %v5354, %v5346
        %v6651 = vpack.c.b16 %v5355, %v5347
        %v6652 = vpack.c.b16 %v5364, %v5356
        %v6653 = vpack.c.b16 %v5365, %v5357
        %v6654 = vpack.c.b16 %v5366, %v5358
        %v6655 = vpack.c.b16 %v5367, %v5359
        %v6656 = vpack.c.b16 %v5368, %v5360
        %v6657 = vpack.c.b16 %v5369, %v5361
        %v6658 = vpack.c.b16 %v5370, %v5362
        %v6659 = vpack.c.b16 %v5371, %v5363
        %v6660 = vpack.c.b16 %v5380, %v5372
        %v6661 = vpack.c.b16 %v5381, %v5373
        %v6662 = vpack.c.b16 %v5382, %v5374
        %v6663 = vpack.c.b16 %v5383, %v5375
        %v6664 = vpack.c.b16 %v5384, %v5376
        %v6665 = vpack.c.b16 %v5385, %v5377
        %v6666 = vpack.c.b16 %v5386, %v5378
        %v6667 = vpack.c.b16 %v5387, %v5379
        %v6668 = vpack.c.b16 %v5396, %v5388
        %v6669 = vpack.c.b16 %v5397, %v5389
        %v6670 = vpack.c.b16 %v5398, %v5390
        %v6671 = vpack.c.b16 %v5399, %v5391
        %v6672 = vpack.c.b16 %v5400, %v5392
        %v6673 = vpack.c.b16 %v5401, %v5393
        %v6674 = vpack.c.b16 %v5402, %v5394
        %v6675 = vpack.c.b16 %v5403, %v5395
        %v6676 = vpack.c.b16 %v5412, %v5404
        %v6677 = vpack.c.b16 %v5413, %v5405
        %v6678 = vpack.c.b16 %v5414, %v5406
        %v6679 = vpack.c.b16 %v5415, %v5407
        %v6680 = vpack.c.b16 %v5416, %v5408
        %v6681 = vpack.c.b16 %v5417, %v5409
        %v6682 = vpack.c.b16 %v5418, %v5410
        %v6683 = vpack.c.b16 %v5419, %v5411
        %v6684 = vpack.c.b16 %v5428, %v5420
        %v6685 = vpack.c.b16 %v5429, %v5421
        %v6686 = vpack.c.b16 %v5430, %v5422
        %v6687 = vpack.c.b16 %v5431, %v5423
        %v6688 = vpack.c.b16 %v5432, %v5424
        %v6689 = vpack.c.b16 %v5433, %v5425
        %v6690 = vpack.c.b16 %v5434, %v5426
        %v6691 = vpack.c.b16 %v5435, %v5427
        %v6692 = vpack.c.b16 %v5444, %v5436
        %v6693 = vpack.c.b16 %v5445, %v5437
        %v6694 = vpack.c.b16 %v5446, %v5438
        %v6695 = vpack.c.b16 %v5447, %v5439
        %v6696 = vpack.c.b16 %v5448, %v5440
        %v6697 = vpack.c.b16 %v5449, %v5441
        %v6698 = vpack.c.b16 %v5450, %v5442
        %v6699 = vpack.c.b16 %v5451, %v5443
        %v6700 = vpack.c.b16 %v5460, %v5452
        %v6701 = vpack.c.b16 %v5461, %v5453
        %v6702 = vpack.c.b16 %v5462, %v5454
        %v6703 = vpack.c.b16 %v5463, %v5455
        %v6704 = vpack.c.b16 %v5464, %v5456
        %v6705 = vpack.c.b16 %v5465, %v5457
        %v6706 = vpack.c.b16 %v5466, %v5458
        %v6707 = vpack.c.b16 %v5467, %v5459
        %v6708 = vpack.c.b16 %v5476, %v5468
        %v6709 = vpack.c.b16 %v5477, %v5469
        %v6710 = vpack.c.b16 %v5478, %v5470
        %v6711 = vpack.c.b16 %v5479, %v5471
        %v6712 = vpack.c.b16 %v5480, %v5472
        %v6713 = vpack.c.b16 %v5481, %v5473
        %v6714 = vpack.c.b16 %v5482, %v5474
        %v6715 = vpack.c.b16 %v5483, %v5475
        %v6716 = vpack.c.b16 %v5492, %v5484
        %v6717 = vpack.c.b16 %v5493, %v5485
        %v6718 = vpack.c.b16 %v5494, %v5486
        %v6719 = vpack.c.b16 %v5495, %v5487
        %v6720 = vpack.c.b16 %v5496, %v5488
        %v6721 = vpack.c.b16 %v5497, %v5489
        %v6722 = vpack.c.b16 %v5498, %v5490
        %v6723 = vpack.c.b16 %v5499, %v5491
        %v6724 = vpack.c.b16 %v5508, %v5500
        %v6725 = vpack.c.b16 %v5509, %v5501
        %v6726 = vpack.c.b16 %v5510, %v5502
        %v6727 = vpack.c.b16 %v5511, %v5503
        %v6728 = vpack.c.b16 %v5512, %v5504
        %v6729 = vpack.c.b16 %v5513, %v5505
        %v6730 = vpack.c.b16 %v5514, %v5506
        %v6731 = vpack.c.b16 %v5515, %v5507
        %v6732 = vpack.c.b16 %v5524, %v5516
        %v6733 = vpack.c.b16 %v5525, %v5517
        %v6734 = vpack.c.b16 %v5526, %v5518
        %v6735 = vpack.c.b16 %v5527, %v5519
        %v6736 = vpack.c.b16 %v5528, %v5520
        %v6737 = vpack.c.b16 %v5529, %v5521
        %v6738 = vpack.c.b16 %v5530, %v5522
        %v6739 = vpack.c.b16 %v5531, %v5523
        %v6740 = vpack.c.b16 %v5540, %v5532
        %v6741 = vpack.c.b16 %v5541, %v5533
        %v6742 = vpack.c.b16 %v5542, %v5534
        %v6743 = vpack.c.b16 %v5543, %v5535
        %v6744 = vpack.c.b16 %v5544, %v5536
        %v6745 = vpack.c.b16 %v5545, %v5537
        %v6746 = vpack.c.b16 %v5546, %v5538
        %v6747 = vpack.c.b16 %v5547, %v5539
        %v6748 = vpack.c.b16 %v5556, %v5548
        %v6749 = vpack.c.b16 %v5557, %v5549
        %v6750 = vpack.c.b16 %v5558, %v5550
        %v6751 = vpack.c.b16 %v5559, %v5551
        %v6752 = vpack.c.b16 %v5560, %v5552
        %v6753 = vpack.c.b16 %v5561, %v5553
        %v6754 = vpack.c.b16 %v5562, %v5554
        %v6755 = vpack.c.b16 %v5563, %v5555
        %v6756 = vpack.c.b16 %v5572, %v5564
        %v6757 = vpack.c.b16 %v5573, %v5565
        %v6758 = vpack.c.b16 %v5574, %v5566
        %v6759 = vpack.c.b16 %v5575, %v5567
        %v6760 = vpack.c.b16 %v5576, %v5568
        %v6761 = vpack.c.b16 %v5577, %v5569
        %v6762 = vpack.c.b16 %v5578, %v5570
        %v6763 = vpack.c.b16 %v5579, %v5571
        %v6764 = vpack.c.b16 %v5588, %v5580
        %v6765 = vpack.c.b16 %v5589, %v5581
        %v6766 = vpack.c.b16 %v5590, %v5582
        %v6767 = vpack.c.b16 %v5591, %v5583
        %v6768 = vpack.c.b16 %v5592, %v5584
        %v6769 = vpack.c.b16 %v5593, %v5585
        %v6770 = vpack.c.b16 %v5594, %v5586
        %v6771 = vpack.c.b16 %v5595, %v5587
        %v6772 = vpack.c.b16 %v5604, %v5596
        %v6773 = vpack.c.b16 %v5605, %v5597
        %v6774 = vpack.c.b16 %v5606, %v5598
        %v6775 = vpack.c.b16 %v5607, %v5599
        %v6776 = vpack.c.b16 %v5608, %v5600
        %v6777 = vpack.c.b16 %v5609, %v5601
        %v6778 = vpack.c.b16 %v5610, %v5602
        %v6779 = vpack.c.b16 %v5611, %v5603
        %v6780 = vpack.c.b16 %v5620, %v5612
        %v6781 = vpack.c.b16 %v5621, %v5613
        %v6782 = vpack.c.b16 %v5622, %v5614
        %v6783 = vpack.c.b16 %v5623, %v5615
        %v6784 = vpack.c.b16 %v5624, %v5616
        %v6785 = vpack.c.b16 %v5625, %v5617
        %v6786 = vpack.c.b16 %v5626, %v5618
        %v6787 = vpack.c.b16 %v5627, %v5619
        %v6788 = vpack.c.b16 %v5636, %v5628
        %v6789 = vpack.c.b16 %v5637, %v5629
        %v6790 = vpack.c.b16 %v5638, %v5630
        %v6791 = vpack.c.b16 %v5639, %v5631
        %v6792 = vpack.c.b16 %v5640, %v5632
        %v6793 = vpack.c.b16 %v5641, %v5633
        %v6794 = vpack.c.b16 %v5642, %v5634
        %v6795 = vpack.c.b16 %v5643, %v5635
        %v6796 = vpack.c.b16 %v5652, %v5644
        %v6797 = vpack.c.b16 %v5653, %v5645
        %v6798 = vpack.c.b16 %v5654, %v5646
        %v6799 = vpack.c.b16 %v5655, %v5647
        %v6800 = vpack.c.b16 %v5656, %v5648
        %v6801 = vpack.c.b16 %v5657, %v5649
        %v6802 = vpack.c.b16 %v5658, %v5650
        %v6803 = vpack.c.b16 %v5659, %v5651
        %v6804 = vpack.c.b16 %v5668, %v5660
        %v6805 = vpack.c.b16 %v5669, %v5661
        %v6806 = vpack.c.b16 %v5670, %v5662
        %v6807 = vpack.c.b16 %v5671, %v5663
        %v6808 = vpack.c.b16 %v5672, %v5664
        %v6809 = vpack.c.b16 %v5673, %v5665
        %v6810 = vpack.c.b16 %v5674, %v5666
        %v6811 = vpack.c.b16 %v5675, %v5667
        %v6812 = vpack.c.b16 %v5684, %v5676
        %v6813 = vpack.c.b16 %v5685, %v5677
        %v6814 = vpack.c.b16 %v5686, %v5678
        %v6815 = vpack.c.b16 %v5687, %v5679
        %v6816 = vpack.c.b16 %v5688, %v5680
        %v6817 = vpack.c.b16 %v5689, %v5681
        %v6818 = vpack.c.b16 %v5690, %v5682
        %v6819 = vpack.c.b16 %v5691, %v5683
        %v6820 = vpack.c.b16 %v5700, %v5692
        %v6821 = vpack.c.b16 %v5701, %v5693
        %v6822 = vpack.c.b16 %v5702, %v5694
        %v6823 = vpack.c.b16 %v5703, %v5695
        %v6824 = vpack.c.b16 %v5704, %v5696
        %v6825 = vpack.c.b16 %v5705, %v5697
        %v6826 = vpack.c.b16 %v5706, %v5698
        %v6827 = vpack.c.b16 %v5707, %v5699
        %v6828 = vpack.c.b16 %v5716, %v5708
        %v6829 = vpack.c.b16 %v5717, %v5709
        %v6830 = vpack.c.b16 %v5718, %v5710
        %v6831 = vpack.c.b16 %v5719, %v5711
        %v6832 = vpack.c.b16 %v5720, %v5712
        %v6833 = vpack.c.b16 %v5721, %v5713
        %v6834 = vpack.c.b16 %v5722, %v5714
        %v6835 = vpack.c.b16 %v5723, %v5715
        %v6836 = vpack.c.b16 %v5732, %v5724
        %v6837 = vpack.c.b16 %v5733, %v5725
        %v6838 = vpack.c.b16 %v5734, %v5726
        %v6839 = vpack.c.b16 %v5735, %v5727
        %v6840 = vpack.c.b16 %v5736, %v5728
        %v6841 = vpack.c.b16 %v5737, %v5729
        %v6842 = vpack.c.b16 %v5738, %v5730
        %v6843 = vpack.c.b16 %v5739, %v5731
        %v6844 = vpack.c.b16 %v5748, %v5740
        %v6845 = vpack.c.b16 %v5749, %v5741
        %v6846 = vpack.c.b16 %v5750, %v5742
        %v6847 = vpack.c.b16 %v5751, %v5743
        %v6848 = vpack.c.b16 %v5752, %v5744
        %v6849 = vpack.c.b16 %v5753, %v5745
        %v6850 = vpack.c.b16 %v5754, %v5746
        %v6851 = vpack.c.b16 %v5755, %v5747
        %v6852 = vpack.c.b16 %v5764, %v5756
        %v6853 = vpack.c.b16 %v5765, %v5757
        %v6854 = vpack.c.b16 %v5766, %v5758
        %v6855 = vpack.c.b16 %v5767, %v5759
        %v6856 = vpack.c.b16 %v5768, %v5760
        %v6857 = vpack.c.b16 %v5769, %v5761
        %v6858 = vpack.c.b16 %v5770, %v5762
        %v6859 = vpack.c.b16 %v5771, %v5763
        %v6860 = vpack.c.b16 %v5780, %v5772
        %v6861 = vpack.c.b16 %v5781, %v5773
        %v6862 = vpack.c.b16 %v5782, %v5774
        %v6863 = vpack.c.b16 %v5783, %v5775
        %v6864 = vpack.c.b16 %v5784, %v5776
        %v6865 = vpack.c.b16 %v5785, %v5777
        %v6866 = vpack.c.b16 %v5786, %v5778
        %v6867 = vpack.c.b16 %v5787, %v5779
        %v6868 = vpack.c.b16 %v5796, %v5788
        %v6869 = vpack.c.b16 %v5797, %v5789
        %v6870 = vpack.c.b16 %v5798, %v5790
        %v6871 = vpack.c.b16 %v5799, %v5791
        %v6872 = vpack.c.b16 %v5800, %v5792
        %v6873 = vpack.c.b16 %v5801, %v5793
        %v6874 = vpack.c.b16 %v5802, %v5794
        %v6875 = vpack.c.b16 %v5803, %v5795
        %v6876 = vpack.c.b16 %v5812, %v5804
        %v6877 = vpack.c.b16 %v5813, %v5805
        %v6878 = vpack.c.b16 %v5814, %v5806
        %v6879 = vpack.c.b16 %v5815, %v5807
        %v6880 = vpack.c.b16 %v5816, %v5808
        %v6881 = vpack.c.b16 %v5817, %v5809
        %v6882 = vpack.c.b16 %v5818, %v5810
        %v6883 = vpack.c.b16 %v5819, %v5811
        %v6884 = vpack.c.b16 %v5828, %v5820
        %v6885 = vpack.c.b16 %v5829, %v5821
        %v6886 = vpack.c.b16 %v5830, %v5822
        %v6887 = vpack.c.b16 %v5831, %v5823
        %v6888 = vpack.c.b16 %v5832, %v5824
        %v6889 = vpack.c.b16 %v5833, %v5825
        %v6890 = vpack.c.b16 %v5834, %v5826
        %v6891 = vpack.c.b16 %v5835, %v5827
        %v6892 = vpack.c.b16 %v5844, %v5836
        %v6893 = vpack.c.b16 %v5845, %v5837
        %v6894 = vpack.c.b16 %v5846, %v5838
        %v6895 = vpack.c.b16 %v5847, %v5839
        %v6896 = vpack.c.b16 %v5848, %v5840
        %v6897 = vpack.c.b16 %v5849, %v5841
        %v6898 = vpack.c.b16 %v5850, %v5842
        %v6899 = vpack.c.b16 %v5851, %v5843
        %v6900 = vpack.c.b16 %v5860, %v5852
        %v6901 = vpack.c.b16 %v5861, %v5853
        %v6902 = vpack.c.b16 %v5862, %v5854
        %v6903 = vpack.c.b16 %v5863, %v5855
        %v6904 = vpack.c.b16 %v5864, %v5856
        %v6905 = vpack.c.b16 %v5865, %v5857
        %v6906 = vpack.c.b16 %v5866, %v5858
        %v6907 = vpack.c.b16 %v5867, %v5859
        %v6908 = vpack.c.b16 %v5876, %v5868
        %v6909 = vpack.c.b16 %v5877, %v5869
        %v6910 = vpack.c.b16 %v5878, %v5870
        %v6911 = vpack.c.b16 %v5879, %v5871
        %v6912 = vpack.c.b16 %v5880, %v5872
        %v6913 = vpack.c.b16 %v5881, %v5873
        %v6914 = vpack.c.b16 %v5882, %v5874
        %v6915 = vpack.c.b16 %v5883, %v5875
        %v6916 = vpack.c.b16 %v5892, %v5884
        %v6917 = vpack.c.b16 %v5893, %v5885
        %v6918 = vpack.c.b16 %v5894, %v5886
        %v6919 = vpack.c.b16 %v5895, %v5887
        %v6920 = vpack.c.b16 %v5896, %v5888
        %v6921 = vpack.c.b16 %v5897, %v5889
        %v6922 = vpack.c.b16 %v5898, %v5890
        %v6923 = vpack.c.b16 %v5899, %v5891
        %7948 = vmatprep.subr.bf16.mxu0 %v5901
        %7949 = vmatpush1.bf16.msra.mxu0 %v5900
        %7950 = vmatprep.subr.bf16.mxu0 %v5909
        %7951 = vmatpush1.bf16.msra.mxu0 %v5908
        %7952 = vmatprep.subr.bf16.mxu0 %v5917
        %7953 = vmatpush1.bf16.msra.mxu0 %v5916
        %7954 = vmatprep.subr.bf16.mxu0 %v5925
        %7955 = vmatpush1.bf16.msra.mxu0 %v5924
        %7956 = vmatprep.subr.bf16.mxu0 %v5933
        %7957 = vmatpush1.bf16.msra.mxu0 %v5932
        %7958 = vmatprep.subr.bf16.mxu0 %v5941
        %7959 = vmatpush1.bf16.msra.mxu0 %v5940
        %7960 = vmatprep.subr.bf16.mxu0 %v5949
        %7961 = vmatpush1.bf16.msra.mxu0 %v5948
        %7962 = vmatprep.subr.bf16.mxu0 %v5957
        %7963 = vmatpush1.bf16.msra.mxu0 %v5956
        %7964 = vmatprep.subr.bf16.mxu0 %v5965
        %7965 = vmatpush1.bf16.msra.mxu0 %v5964
        %7966 = vmatprep.subr.bf16.mxu0 %v5973
        %7967 = vmatpush1.bf16.msra.mxu0 %v5972
        %7968 = vmatprep.subr.bf16.mxu0 %v5981
        %7969 = vmatpush1.bf16.msra.mxu0 %v5980
        %7970 = vmatprep.subr.bf16.mxu0 %v5989
        %7971 = vmatpush1.bf16.msra.mxu0 %v5988
        %7972 = vmatprep.subr.bf16.mxu0 %v5997
        %7973 = vmatpush1.bf16.msra.mxu0 %v5996
        %7974 = vmatprep.subr.bf16.mxu0 %v6005
        %7975 = vmatpush1.bf16.msra.mxu0 %v6004
        %7976 = vmatprep.subr.bf16.mxu0 %v6013
        %7977 = vmatpush1.bf16.msra.mxu0 %v6012
        %7978 = vmatprep.subr.bf16.mxu0 %v6021
        %7979 = vmatpush1.bf16.msra.mxu0 %v6020
        %7980 = vmatprep.mubr.bf16.mxu0 %v1747
        %7981 = vmatmul.mubr.bf16.gmra.mrb[0].mxu0 %v1746
        %v7982 = vpop.f32.mrb[0].mxu0
        %v7983 = vadd.f32 %v2791, %v7982
        %v7984 = vpop.f32.mrb[0].mxu0
        %v7985 = vadd.f32 %v2795, %v7984
        %v7986 = vpop.f32.mrb[0].mxu0
        %v7987 = vadd.f32 %v2791, %v7986
        %v7988 = vpop.f32.mrb[0].mxu0
        %v7989 = vadd.f32 %v2795, %v7988
        %7990 = vdwg.mxu0
        %7991 = vmatprep.subr.bf16.mxu0 %v6029
        %7992 = vmatpush1.bf16.msra.mxu0 %v6028
        %7993 = vmatprep.subr.bf16.mxu0 %v6037
        %7994 = vmatpush1.bf16.msra.mxu0 %v6036
        %7995 = vmatprep.subr.bf16.mxu0 %v6045
        %7996 = vmatpush1.bf16.msra.mxu0 %v6044
        %7997 = vmatprep.subr.bf16.mxu0 %v6053
        %7998 = vmatpush1.bf16.msra.mxu0 %v6052
        %7999 = vmatprep.subr.bf16.mxu0 %v6061
        %8000 = vmatpush1.bf16.msra.mxu0 %v6060
        %8001 = vmatprep.subr.bf16.mxu0 %v6069
        %8002 = vmatpush1.bf16.msra.mxu0 %v6068
        %8003 = vmatprep.subr.bf16.mxu0 %v6077
        %8004 = vmatpush1.bf16.msra.mxu0 %v6076
        %8005 = vmatprep.subr.bf16.mxu0 %v6085
        %8006 = vmatpush1.bf16.msra.mxu0 %v6084
        %8007 = vmatprep.subr.bf16.mxu0 %v6093
        %8008 = vmatpush1.bf16.msra.mxu0 %v6092
        %8009 = vmatprep.subr.bf16.mxu0 %v6101
        %8010 = vmatpush1.bf16.msra.mxu0 %v6100
        %8011 = vmatprep.subr.bf16.mxu0 %v6109
        %8012 = vmatpush1.bf16.msra.mxu0 %v6108
        %8013 = vmatprep.subr.bf16.mxu0 %v6117
        %8014 = vmatpush1.bf16.msra.mxu0 %v6116
        %8015 = vmatprep.subr.bf16.mxu0 %v6125
        %8016 = vmatpush1.bf16.msra.mxu0 %v6124
        %8017 = vmatprep.subr.bf16.mxu0 %v6133
        %8018 = vmatpush1.bf16.msra.mxu0 %v6132
        %8019 = vmatprep.subr.bf16.mxu0 %v6141
        %8020 = vmatpush1.bf16.msra.mxu0 %v6140
        %8021 = vmatprep.subr.bf16.mxu0 %v6149
        %8022 = vmatpush1.bf16.msra.mxu0 %v6148
        %8023 = vmatprep.mubr.bf16.mxu0 %v1749
        %8024 = vmatmul.mubr.bf16.gmra.mrb[0].mxu0 %v1748
        %v8025 = vpop.f32.mrb[0].mxu0
        %v8026 = vadd.f32 %v7983, %v8025
        %v8027 = vpop.f32.mrb[0].mxu0
        %v8028 = vadd.f32 %v7985, %v8027
        %v8029 = vpop.f32.mrb[0].mxu0
        %v8030 = vadd.f32 %v7987, %v8029
        %v8031 = vpop.f32.mrb[0].mxu0
        %v8032 = vadd.f32 %v7989, %v8031
        %8033 = vdwg.mxu0
        %8034 = vmatprep.subr.bf16.mxu0 %v6157
        %8035 = vmatpush1.bf16.msra.mxu0 %v6156
        %8036 = vmatprep.subr.bf16.mxu0 %v6165
        %8037 = vmatpush1.bf16.msra.mxu0 %v6164
        %8038 = vmatprep.subr.bf16.mxu0 %v6173
        %8039 = vmatpush1.bf16.msra.mxu0 %v6172
        %8040 = vmatprep.subr.bf16.mxu0 %v6181
        %8041 = vmatpush1.bf16.msra.mxu0 %v6180
        %8042 = vmatprep.subr.bf16.mxu0 %v6189
        %8043 = vmatpush1.bf16.msra.mxu0 %v6188
        %8044 = vmatprep.subr.bf16.mxu0 %v6197
        %8045 = vmatpush1.bf16.msra.mxu0 %v6196
        %8046 = vmatprep.subr.bf16.mxu0 %v6205
        %8047 = vmatpush1.bf16.msra.mxu0 %v6204
        %8048 = vmatprep.subr.bf16.mxu0 %v6213
        %8049 = vmatpush1.bf16.msra.mxu0 %v6212
        %8050 = vmatprep.subr.bf16.mxu0 %v6221
        %8051 = vmatpush1.bf16.msra.mxu0 %v6220
        %8052 = vmatprep.subr.bf16.mxu0 %v6229
        %8053 = vmatpush1.bf16.msra.mxu0 %v6228
        %8054 = vmatprep.subr.bf16.mxu0 %v6237
        %8055 = vmatpush1.bf16.msra.mxu0 %v6236
        %8056 = vmatprep.subr.bf16.mxu0 %v6245
        %8057 = vmatpush1.bf16.msra.mxu0 %v6244
        %8058 = vmatprep.subr.bf16.mxu0 %v6253
        %8059 = vmatpush1.bf16.msra.mxu0 %v6252
        %8060 = vmatprep.subr.bf16.mxu0 %v6261
        %8061 = vmatpush1.bf16.msra.mxu0 %v6260
        %8062 = vmatprep.subr.bf16.mxu0 %v6269
        %8063 = vmatpush1.bf16.msra.mxu0 %v6268
        %8064 = vmatprep.subr.bf16.mxu0 %v6277
        %8065 = vmatpush1.bf16.msra.mxu0 %v6276
        %8066 = vmatprep.mubr.bf16.mxu0 %v1751
        %8067 = vmatmul.mubr.bf16.gmra.mrb[0].mxu0 %v1750
        %v8068 = vpop.f32.mrb[0].mxu0
        %v8069 = vadd.f32 %v8026, %v8068
        %v8070 = vpop.f32.mrb[0].mxu0
        %v8071 = vadd.f32 %v8028, %v8070
        %v8072 = vpop.f32.mrb[0].mxu0
        %v8073 = vadd.f32 %v8030, %v8072
        %v8074 = vpop.f32.mrb[0].mxu0
        %v8075 = vadd.f32 %v8032, %v8074
        %8076 = vdwg.mxu0
        %8077 = vmatprep.subr.bf16.mxu0 %v6285
        %8078 = vmatpush1.bf16.msra.mxu0 %v6284
        %8079 = vmatprep.subr.bf16.mxu0 %v6293
        %8080 = vmatpush1.bf16.msra.mxu0 %v6292
        %8081 = vmatprep.subr.bf16.mxu0 %v6301
        %8082 = vmatpush1.bf16.msra.mxu0 %v6300
        %8083 = vmatprep.subr.bf16.mxu0 %v6309
        %8084 = vmatpush1.bf16.msra.mxu0 %v6308
        %8085 = vmatprep.subr.bf16.mxu0 %v6317
        %8086 = vmatpush1.bf16.msra.mxu0 %v6316
        %8087 = vmatprep.subr.bf16.mxu0 %v6325
        %8088 = vmatpush1.bf16.msra.mxu0 %v6324
        %8089 = vmatprep.subr.bf16.mxu0 %v6333
        %8090 = vmatpush1.bf16.msra.mxu0 %v6332
        %8091 = vmatprep.subr.bf16.mxu0 %v6341
        %8092 = vmatpush1.bf16.msra.mxu0 %v6340
        %8093 = vmatprep.subr.bf16.mxu0 %v6349
        %8094 = vmatpush1.bf16.msra.mxu0 %v6348
        %8095 = vmatprep.subr.bf16.mxu0 %v6357
        %8096 = vmatpush1.bf16.msra.mxu0 %v6356
        %8097 = vmatprep.subr.bf16.mxu0 %v6365
        %8098 = vmatpush1.bf16.msra.mxu0 %v6364
        %8099 = vmatprep.subr.bf16.mxu0 %v6373
        %8100 = vmatpush1.bf16.msra.mxu0 %v6372
        %8101 = vmatprep.subr.bf16.mxu0 %v6381
        %8102 = vmatpush1.bf16.msra.mxu0 %v6380
        %8103 = vmatprep.subr.bf16.mxu0 %v6389
        %8104 = vmatpush1.bf16.msra.mxu0 %v6388
        %8105 = vmatprep.subr.bf16.mxu0 %v6397
        %8106 = vmatpush1.bf16.msra.mxu0 %v6396
        %8107 = vmatprep.subr.bf16.mxu0 %v6405
        %8108 = vmatpush1.bf16.msra.mxu0 %v6404
        %8109 = vmatprep.mubr.bf16.mxu0 %v1753
        %8110 = vmatmul.mubr.bf16.gmra.mrb[0].mxu0 %v1752
        %v8111 = vpop.f32.mrb[0].mxu0
        %v8112 = vadd.f32 %v8069, %v8111
        %v8113 = vpop.f32.mrb[0].mxu0
        %v8114 = vadd.f32 %v8071, %v8113
        %v8115 = vpop.f32.mrb[0].mxu0
        %v8116 = vadd.f32 %v8073, %v8115
        %v8117 = vpop.f32.mrb[0].mxu0
        %v8118 = vadd.f32 %v8075, %v8117
        %8119 = vdwg.mxu0
        %8120 = vmatprep.subr.bf16.mxu0 %v6413
        %8121 = vmatpush1.bf16.msra.mxu0 %v6412
        %8122 = vmatprep.subr.bf16.mxu0 %v6421
        %8123 = vmatpush1.bf16.msra.mxu0 %v6420
        %8124 = vmatprep.subr.bf16.mxu0 %v6429
        %8125 = vmatpush1.bf16.msra.mxu0 %v6428
        %8126 = vmatprep.subr.bf16.mxu0 %v6437
        %8127 = vmatpush1.bf16.msra.mxu0 %v6436
        %8128 = vmatprep.subr.bf16.mxu0 %v6445
        %8129 = vmatpush1.bf16.msra.mxu0 %v6444
        %8130 = vmatprep.subr.bf16.mxu0 %v6453
        %8131 = vmatpush1.bf16.msra.mxu0 %v6452
        %8132 = vmatprep.subr.bf16.mxu0 %v6461
        %8133 = vmatpush1.bf16.msra.mxu0 %v6460
        %8134 = vmatprep.subr.bf16.mxu0 %v6469
        %8135 = vmatpush1.bf16.msra.mxu0 %v6468
        %8136 = vmatprep.subr.bf16.mxu0 %v6477
        %8137 = vmatpush1.bf16.msra.mxu0 %v6476
        %8138 = vmatprep.subr.bf16.mxu0 %v6485
        %8139 = vmatpush1.bf16.msra.mxu0 %v6484
        %8140 = vmatprep.subr.bf16.mxu0 %v6493
        %8141 = vmatpush1.bf16.msra.mxu0 %v6492
        %8142 = vmatprep.subr.bf16.mxu0 %v6501
        %8143 = vmatpush1.bf16.msra.mxu0 %v6500
        %8144 = vmatprep.subr.bf16.mxu0 %v6509
        %8145 = vmatpush1.bf16.msra.mxu0 %v6508
        %8146 = vmatprep.subr.bf16.mxu0 %v6517
        %8147 = vmatpush1.bf16.msra.mxu0 %v6516
        %8148 = vmatprep.subr.bf16.mxu0 %v6525
        %8149 = vmatpush1.bf16.msra.mxu0 %v6524
        %8150 = vmatprep.subr.bf16.mxu0 %v6533
        %8151 = vmatpush1.bf16.msra.mxu0 %v6532
        %8152 = vmatprep.mubr.bf16.mxu0 %v1755
        %8153 = vmatmul.mubr.bf16.gmra.mrb[0].mxu0 %v1754
        %v8154 = vpop.f32.mrb[0].mxu0
        %v8155 = vadd.f32 %v8112, %v8154
        %v8156 = vpop.f32.mrb[0].mxu0
        %v8157 = vadd.f32 %v8114, %v8156
        %v8158 = vpop.f32.mrb[0].mxu0
        %v8159 = vadd.f32 %v8116, %v8158
        %v8160 = vpop.f32.mrb[0].mxu0
        %v8161 = vadd.f32 %v8118, %v8160
        %8162 = vdwg.mxu0
        %8163 = vmatprep.subr.bf16.mxu0 %v6541
        %8164 = vmatpush1.bf16.msra.mxu0 %v6540
        %8165 = vmatprep.subr.bf16.mxu0 %v6549
        %8166 = vmatpush1.bf16.msra.mxu0 %v6548
        %8167 = vmatprep.subr.bf16.mxu0 %v6557
        %8168 = vmatpush1.bf16.msra.mxu0 %v6556
        %8169 = vmatprep.subr.bf16.mxu0 %v6565
        %8170 = vmatpush1.bf16.msra.mxu0 %v6564
        %8171 = vmatprep.subr.bf16.mxu0 %v6573
        %8172 = vmatpush1.bf16.msra.mxu0 %v6572
        %8173 = vmatprep.subr.bf16.mxu0 %v6581
        %8174 = vmatpush1.bf16.msra.mxu0 %v6580
        %8175 = vmatprep.subr.bf16.mxu0 %v6589
        %8176 = vmatpush1.bf16.msra.mxu0 %v6588
        %8177 = vmatprep.subr.bf16.mxu0 %v6597
        %8178 = vmatpush1.bf16.msra.mxu0 %v6596
        %8179 = vmatprep.subr.bf16.mxu0 %v6605
        %8180 = vmatpush1.bf16.msra.mxu0 %v6604
        %8181 = vmatprep.subr.bf16.mxu0 %v6613
        %8182 = vmatpush1.bf16.msra.mxu0 %v6612
        %8183 = vmatprep.subr.bf16.mxu0 %v6621
        %8184 = vmatpush1.bf16.msra.mxu0 %v6620
        %8185 = vmatprep.subr.bf16.mxu0 %v6629
        %8186 = vmatpush1.bf16.msra.mxu0 %v6628
        %8187 = vmatprep.subr.bf16.mxu0 %v6637
        %8188 = vmatpush1.bf16.msra.mxu0 %v6636
        %8189 = vmatprep.subr.bf16.mxu0 %v6645
        %8190 = vmatpush1.bf16.msra.mxu0 %v6644
        %8191 = vmatprep.subr.bf16.mxu0 %v6653
        %8192 = vmatpush1.bf16.msra.mxu0 %v6652
        %8193 = vmatprep.subr.bf16.mxu0 %v6661
        %8194 = vmatpush1.bf16.msra.mxu0 %v6660
        %8195 = vmatprep.mubr.bf16.mxu0 %v1757
        %8196 = vmatmul.mubr.bf16.gmra.mrb[0].mxu0 %v1756
        %v8197 = vpop.f32.mrb[0].mxu0
        %v8198 = vadd.f32 %v8155, %v8197
        %v8199 = vpop.f32.mrb[0].mxu0
        %v8200 = vadd.f32 %v8157, %v8199
        %v8201 = vpop.f32.mrb[0].mxu0
        %v8202 = vadd.f32 %v8159, %v8201
        %v8203 = vpop.f32.mrb[0].mxu0
        %v8204 = vadd.f32 %v8161, %v8203
        %8205 = vdwg.mxu0
        %8206 = vmatprep.subr.bf16.mxu0 %v6669
        %8207 = vmatpush1.bf16.msra.mxu0 %v6668
        %8208 = vmatprep.subr.bf16.mxu0 %v6677
        %8209 = vmatpush1.bf16.msra.mxu0 %v6676
        %8210 = vmatprep.subr.bf16.mxu0 %v6685
        %8211 = vmatpush1.bf16.msra.mxu0 %v6684
        %8212 = vmatprep.subr.bf16.mxu0 %v6693
        %8213 = vmatpush1.bf16.msra.mxu0 %v6692
        %8214 = vmatprep.subr.bf16.mxu0 %v6701
        %8215 = vmatpush1.bf16.msra.mxu0 %v6700
        %8216 = vmatprep.subr.bf16.mxu0 %v6709
        %8217 = vmatpush1.bf16.msra.mxu0 %v6708
        %8218 = vmatprep.subr.bf16.mxu0 %v6717
        %8219 = vmatpush1.bf16.msra.mxu0 %v6716
        %8220 = vmatprep.subr.bf16.mxu0 %v6725
        %8221 = vmatpush1.bf16.msra.mxu0 %v6724
        %8222 = vmatprep.subr.bf16.mxu0 %v6733
        %8223 = vmatpush1.bf16.msra.mxu0 %v6732
        %8224 = vmatprep.subr.bf16.mxu0 %v6741
        %8225 = vmatpush1.bf16.msra.mxu0 %v6740
        %8226 = vmatprep.subr.bf16.mxu0 %v6749
        %8227 = vmatpush1.bf16.msra.mxu0 %v6748
        %8228 = vmatprep.subr.bf16.mxu0 %v6757
        %8229 = vmatpush1.bf16.msra.mxu0 %v6756
        %8230 = vmatprep.subr.bf16.mxu0 %v6765
        %8231 = vmatpush1.bf16.msra.mxu0 %v6764
        %8232 = vmatprep.subr.bf16.mxu0 %v6773
        %8233 = vmatpush1.bf16.msra.mxu0 %v6772
        %8234 = vmatprep.subr.bf16.mxu0 %v6781
        %8235 = vmatpush1.bf16.msra.mxu0 %v6780
        %8236 = vmatprep.subr.bf16.mxu0 %v6789
        %8237 = vmatpush1.bf16.msra.mxu0 %v6788
        %8238 = vmatprep.mubr.bf16.mxu0 %v1759
        %8239 = vmatmul.mubr.bf16.gmra.mrb[0].mxu0 %v1758
        %v8240 = vpop.f32.mrb[0].mxu0
        %v8241 = vadd.f32 %v8198, %v8240
        %v8242 = vpop.f32.mrb[0].mxu0
        %v8243 = vadd.f32 %v8200, %v8242
        %v8244 = vpop.f32.mrb[0].mxu0
        %v8245 = vadd.f32 %v8202, %v8244
        %v8246 = vpop.f32.mrb[0].mxu0
        %v8247 = vadd.f32 %v8204, %v8246
        %8248 = vdwg.mxu0
        %8249 = vmatprep.subr.bf16.mxu0 %v6797
        %8250 = vmatpush1.bf16.msra.mxu0 %v6796
        %8251 = vmatprep.subr.bf16.mxu0 %v6805
        %8252 = vmatpush1.bf16.msra.mxu0 %v6804
        %8253 = vmatprep.subr.bf16.mxu0 %v6813
        %8254 = vmatpush1.bf16.msra.mxu0 %v6812
        %8255 = vmatprep.subr.bf16.mxu0 %v6821
        %8256 = vmatpush1.bf16.msra.mxu0 %v6820
        %8257 = vmatprep.subr.bf16.mxu0 %v6829
        %8258 = vmatpush1.bf16.msra.mxu0 %v6828
        %8259 = vmatprep.subr.bf16.mxu0 %v6837
        %8260 = vmatpush1.bf16.msra.mxu0 %v6836
        %8261 = vmatprep.subr.bf16.mxu0 %v6845
        %8262 = vmatpush1.bf16.msra.mxu0 %v6844
        %8263 = vmatprep.subr.bf16.mxu0 %v6853
        %8264 = vmatpush1.bf16.msra.mxu0 %v6852
        %8265 = vmatprep.subr.bf16.mxu0 %v6861
        %8266 = vmatpush1.bf16.msra.mxu0 %v6860
        %8267 = vmatprep.subr.bf16.mxu0 %v6869
        %8268 = vmatpush1.bf16.msra.mxu0 %v6868
        %8269 = vmatprep.subr.bf16.mxu0 %v6877
        %8270 = vmatpush1.bf16.msra.mxu0 %v6876
        %8271 = vmatprep.subr.bf16.mxu0 %v6885
        %8272 = vmatpush1.bf16.msra.mxu0 %v6884
        %8273 = vmatprep.subr.bf16.mxu0 %v6893
        %8274 = vmatpush1.bf16.msra.mxu0 %v6892
        %8275 = vmatprep.subr.bf16.mxu0 %v6901
        %8276 = vmatpush1.bf16.msra.mxu0 %v6900
        %8277 = vmatprep.subr.bf16.mxu0 %v6909
        %8278 = vmatpush1.bf16.msra.mxu0 %v6908
        %8279 = vmatprep.subr.bf16.mxu0 %v6917
        %8280 = vmatpush1.bf16.msra.mxu0 %v6916
        %8281 = vmatprep.mubr.bf16.mxu0 %v1761
        %8282 = vmatmul.mubr.bf16.gmra.mrb[0].mxu0 %v1760
        %v8283 = vpop.f32.mrb[0].mxu0
        %v8284 = vadd.f32 %v8241, %v8283
        %v8285 = vpop.f32.mrb[0].mxu0
        %v8286 = vadd.f32 %v8243, %v8285
        %v8287 = vpop.f32.mrb[0].mxu0
        %v8288 = vadd.f32 %v8245, %v8287
        %v8289 = vpop.f32.mrb[0].mxu0
        %v8290 = vadd.f32 %v8247, %v8289
        %8291 = vdwg.mxu0
        %8292 = vmatprep.subr.bf16.mxu0 %v5903
        %8293 = vmatpush1.bf16.msra.mxu0 %v5902
        %8294 = vmatprep.subr.bf16.mxu0 %v5911
        %8295 = vmatpush1.bf16.msra.mxu0 %v5910
        %8296 = vmatprep.subr.bf16.mxu0 %v5919
        %8297 = vmatpush1.bf16.msra.mxu0 %v5918
        %8298 = vmatprep.subr.bf16.mxu0 %v5927
        %8299 = vmatpush1.bf16.msra.mxu0 %v5926
        %8300 = vmatprep.subr.bf16.mxu0 %v5935
        %8301 = vmatpush1.bf16.msra.mxu0 %v5934
        %8302 = vmatprep.subr.bf16.mxu0 %v5943
        %8303 = vmatpush1.bf16.msra.mxu0 %v5942
        %8304 = vmatprep.subr.bf16.mxu0 %v5951
        %8305 = vmatpush1.bf16.msra.mxu0 %v5950
        %8306 = vmatprep.subr.bf16.mxu0 %v5959
        %8307 = vmatpush1.bf16.msra.mxu0 %v5958
        %8308 = vmatprep.subr.bf16.mxu0 %v5967
        %8309 = vmatpush1.bf16.msra.mxu0 %v5966
        %8310 = vmatprep.subr.bf16.mxu0 %v5975
        %8311 = vmatpush1.bf16.msra.mxu0 %v5974
        %8312 = vmatprep.subr.bf16.mxu0 %v5983
        %8313 = vmatpush1.bf16.msra.mxu0 %v5982
        %8314 = vmatprep.subr.bf16.mxu0 %v5991
        %8315 = vmatpush1.bf16.msra.mxu0 %v5990
        %8316 = vmatprep.subr.bf16.mxu0 %v5999
        %8317 = vmatpush1.bf16.msra.mxu0 %v5998
        %8318 = vmatprep.subr.bf16.mxu0 %v6007
        %8319 = vmatpush1.bf16.msra.mxu0 %v6006
        %8320 = vmatprep.subr.bf16.mxu0 %v6015
        %8321 = vmatpush1.bf16.msra.mxu0 %v6014
        %8322 = vmatprep.subr.bf16.mxu0 %v6023
        %8323 = vmatpush1.bf16.msra.mxu0 %v6022
        %8324 = vmatprep.mubr.bf16.mxu0 %v1747
        %8325 = vmatmul.mubr.bf16.gmra.mrb[0].mxu0 %v1746
        %v8326 = vpop.f32.mrb[0].mxu0
        %v8327 = vadd.f32 %v2799, %v8326
        %v8328 = vpop.f32.mrb[0].mxu0
        %v8329 = vadd.f32 %v2803, %v8328
        %v8330 = vpop.f32.mrb[0].mxu0
        %v8331 = vadd.f32 %v2799, %v8330
        %v8332 = vpop.f32.mrb[0].mxu0
        %v8333 = vadd.f32 %v2803, %v8332
        %8334 = vdwg.mxu0
        %8335 = vmatprep.subr.bf16.mxu0 %v6031
        %8336 = vmatpush1.bf16.msra.mxu0 %v6030
        %8337 = vmatprep.subr.bf16.mxu0 %v6039
        %8338 = vmatpush1.bf16.msra.mxu0 %v6038
        %8339 = vmatprep.subr.bf16.mxu0 %v6047
        %8340 = vmatpush1.bf16.msra.mxu0 %v6046
        %8341 = vmatprep.subr.bf16.mxu0 %v6055
        %8342 = vmatpush1.bf16.msra.mxu0 %v6054
        %8343 = vmatprep.subr.bf16.mxu0 %v6063
        %8344 = vmatpush1.bf16.msra.mxu0 %v6062
        %8345 = vmatprep.subr.bf16.mxu0 %v6071
        %8346 = vmatpush1.bf16.msra.mxu0 %v6070
        %8347 = vmatprep.subr.bf16.mxu0 %v6079
        %8348 = vmatpush1.bf16.msra.mxu0 %v6078
        %8349 = vmatprep.subr.bf16.mxu0 %v6087
        %8350 = vmatpush1.bf16.msra.mxu0 %v6086
        %8351 = vmatprep.subr.bf16.mxu0 %v6095
        %8352 = vmatpush1.bf16.msra.mxu0 %v6094
        %8353 = vmatprep.subr.bf16.mxu0 %v6103
        %8354 = vmatpush1.bf16.msra.mxu0 %v6102
        %8355 = vmatprep.subr.bf16.mxu0 %v6111
        %8356 = vmatpush1.bf16.msra.mxu0 %v6110
        %8357 = vmatprep.subr.bf16.mxu0 %v6119
        %8358 = vmatpush1.bf16.msra.mxu0 %v6118
        %8359 = vmatprep.subr.bf16.mxu0 %v6127
        %8360 = vmatpush1.bf16.msra.mxu0 %v6126
        %8361 = vmatprep.subr.bf16.mxu0 %v6135
        %8362 = vmatpush1.bf16.msra.mxu0 %v6134
        %8363 = vmatprep.subr.bf16.mxu0 %v6143
        %8364 = vmatpush1.bf16.msra.mxu0 %v6142
        %8365 = vmatprep.subr.bf16.mxu0 %v6151
        %8366 = vmatpush1.bf16.msra.mxu0 %v6150
        %8367 = vmatprep.mubr.bf16.mxu0 %v1749
        %8368 = vmatmul.mubr.bf16.gmra.mrb[0].mxu0 %v1748
        %v8369 = vpop.f32.mrb[0].mxu0
        %v8370 = vadd.f32 %v8327, %v8369
        %v8371 = vpop.f32.mrb[0].mxu0
        %v8372 = vadd.f32 %v8329, %v8371
        %v8373 = vpop.f32.mrb[0].mxu0
        %v8374 = vadd.f32 %v8331, %v8373
        %v8375 = vpop.f32.mrb[0].mxu0
        %v8376 = vadd.f32 %v8333, %v8375
        %8377 = vdwg.mxu0
        %8378 = vmatprep.subr.bf16.mxu0 %v6159
        %8379 = vmatpush1.bf16.msra.mxu0 %v6158
        %8380 = vmatprep.subr.bf16.mxu0 %v6167
        %8381 = vmatpush1.bf16.msra.mxu0 %v6166
        %8382 = vmatprep.subr.bf16.mxu0 %v6175
        %8383 = vmatpush1.bf16.msra.mxu0 %v6174
        %8384 = vmatprep.subr.bf16.mxu0 %v6183
        %8385 = vmatpush1.bf16.msra.mxu0 %v6182
        %8386 = vmatprep.subr.bf16.mxu0 %v6191
        %8387 = vmatpush1.bf16.msra.mxu0 %v6190
        %8388 = vmatprep.subr.bf16.mxu0 %v6199
        %8389 = vmatpush1.bf16.msra.mxu0 %v6198
        %8390 = vmatprep.subr.bf16.mxu0 %v6207
        %8391 = vmatpush1.bf16.msra.mxu0 %v6206
        %8392 = vmatprep.subr.bf16.mxu0 %v6215
        %8393 = vmatpush1.bf16.msra.mxu0 %v6214
        %8394 = vmatprep.subr.bf16.mxu0 %v6223
        %8395 = vmatpush1.bf16.msra.mxu0 %v6222
        %8396 = vmatprep.subr.bf16.mxu0 %v6231
        %8397 = vmatpush1.bf16.msra.mxu0 %v6230
        %8398 = vmatprep.subr.bf16.mxu0 %v6239
        %8399 = vmatpush1.bf16.msra.mxu0 %v6238
        %8400 = vmatprep.subr.bf16.mxu0 %v6247
        %8401 = vmatpush1.bf16.msra.mxu0 %v6246
        %8402 = vmatprep.subr.bf16.mxu0 %v6255
        %8403 = vmatpush1.bf16.msra.mxu0 %v6254
        %8404 = vmatprep.subr.bf16.mxu0 %v6263
        %8405 = vmatpush1.bf16.msra.mxu0 %v6262
        %8406 = vmatprep.subr.bf16.mxu0 %v6271
        %8407 = vmatpush1.bf16.msra.mxu0 %v6270
        %8408 = vmatprep.subr.bf16.mxu0 %v6279
        %8409 = vmatpush1.bf16.msra.mxu0 %v6278
        %8410 = vmatprep.mubr.bf16.mxu0 %v1751
        %8411 = vmatmul.mubr.bf16.gmra.mrb[0].mxu0 %v1750
        %v8412 = vpop.f32.mrb[0].mxu0
        %v8413 = vadd.f32 %v8370, %v8412
        %v8414 = vpop.f32.mrb[0].mxu0
        %v8415 = vadd.f32 %v8372, %v8414
        %v8416 = vpop.f32.mrb[0].mxu0
        %v8417 = vadd.f32 %v8374, %v8416
        %v8418 = vpop.f32.mrb[0].mxu0
        %v8419 = vadd.f32 %v8376, %v8418
        %8420 = vdwg.mxu0
        %8421 = vmatprep.subr.bf16.mxu0 %v6287
        %8422 = vmatpush1.bf16.msra.mxu0 %v6286
        %8423 = vmatprep.subr.bf16.mxu0 %v6295
        %8424 = vmatpush1.bf16.msra.mxu0 %v6294
        %8425 = vmatprep.subr.bf16.mxu0 %v6303
        %8426 = vmatpush1.bf16.msra.mxu0 %v6302
        %8427 = vmatprep.subr.bf16.mxu0 %v6311
        %8428 = vmatpush1.bf16.msra.mxu0 %v6310
        %8429 = vmatprep.subr.bf16.mxu0 %v6319
        %8430 = vmatpush1.bf16.msra.mxu0 %v6318
        %8431 = vmatprep.subr.bf16.mxu0 %v6327
        %8432 = vmatpush1.bf16.msra.mxu0 %v6326
        %8433 = vmatprep.subr.bf16.mxu0 %v6335
        %8434 = vmatpush1.bf16.msra.mxu0 %v6334
        %8435 = vmatprep.subr.bf16.mxu0 %v6343
        %8436 = vmatpush1.bf16.msra.mxu0 %v6342
        %8437 = vmatprep.subr.bf16.mxu0 %v6351
        %8438 = vmatpush1.bf16.msra.mxu0 %v6350
        %8439 = vmatprep.subr.bf16.mxu0 %v6359
        %8440 = vmatpush1.bf16.msra.mxu0 %v6358
        %8441 = vmatprep.subr.bf16.mxu0 %v6367
        %8442 = vmatpush1.bf16.msra.mxu0 %v6366
        %8443 = vmatprep.subr.bf16.mxu0 %v6375
        %8444 = vmatpush1.bf16.msra.mxu0 %v6374
        %8445 = vmatprep.subr.bf16.mxu0 %v6383
        %8446 = vmatpush1.bf16.msra.mxu0 %v6382
        %8447 = vmatprep.subr.bf16.mxu0 %v6391
        %8448 = vmatpush1.bf16.msra.mxu0 %v6390
        %8449 = vmatprep.subr.bf16.mxu0 %v6399
        %8450 = vmatpush1.bf16.msra.mxu0 %v6398
        %8451 = vmatprep.subr.bf16.mxu0 %v6407
        %8452 = vmatpush1.bf16.msra.mxu0 %v6406
        %8453 = vmatprep.mubr.bf16.mxu0 %v1753
        %8454 = vmatmul.mubr.bf16.gmra.mrb[0].mxu0 %v1752
        %v8455 = vpop.f32.mrb[0].mxu0
        %v8456 = vadd.f32 %v8413, %v8455
        %v8457 = vpop.f32.mrb[0].mxu0
        %v8458 = vadd.f32 %v8415, %v8457
        %v8459 = vpop.f32.mrb[0].mxu0
        %v8460 = vadd.f32 %v8417, %v8459
        %v8461 = vpop.f32.mrb[0].mxu0
        %v8462 = vadd.f32 %v8419, %v8461
        %8463 = vdwg.mxu0
        %8464 = vmatprep.subr.bf16.mxu0 %v6415
        %8465 = vmatpush1.bf16.msra.mxu0 %v6414
        %8466 = vmatprep.subr.bf16.mxu0 %v6423
        %8467 = vmatpush1.bf16.msra.mxu0 %v6422
        %8468 = vmatprep.subr.bf16.mxu0 %v6431
        %8469 = vmatpush1.bf16.msra.mxu0 %v6430
        %8470 = vmatprep.subr.bf16.mxu0 %v6439
        %8471 = vmatpush1.bf16.msra.mxu0 %v6438
        %8472 = vmatprep.subr.bf16.mxu0 %v6447
        %8473 = vmatpush1.bf16.msra.mxu0 %v6446
        %8474 = vmatprep.subr.bf16.mxu0 %v6455
        %8475 = vmatpush1.bf16.msra.mxu0 %v6454
        %8476 = vmatprep.subr.bf16.mxu0 %v6463
        %8477 = vmatpush1.bf16.msra.mxu0 %v6462
        %8478 = vmatprep.subr.bf16.mxu0 %v6471
        %8479 = vmatpush1.bf16.msra.mxu0 %v6470
        %8480 = vmatprep.subr.bf16.mxu0 %v6479
        %8481 = vmatpush1.bf16.msra.mxu0 %v6478
        %8482 = vmatprep.subr.bf16.mxu0 %v6487
        %8483 = vmatpush1.bf16.msra.mxu0 %v6486
        %8484 = vmatprep.subr.bf16.mxu0 %v6495
        %8485 = vmatpush1.bf16.msra.mxu0 %v6494
        %8486 = vmatprep.subr.bf16.mxu0 %v6503
        %8487 = vmatpush1.bf16.msra.mxu0 %v6502
        %8488 = vmatprep.subr.bf16.mxu0 %v6511
        %8489 = vmatpush1.bf16.msra.mxu0 %v6510
        %8490 = vmatprep.subr.bf16.mxu0 %v6519
        %8491 = vmatpush1.bf16.msra.mxu0 %v6518
        %8492 = vmatprep.subr.bf16.mxu0 %v6527
        %8493 = vmatpush1.bf16.msra.mxu0 %v6526
        %8494 = vmatprep.subr.bf16.mxu0 %v6535
        %8495 = vmatpush1.bf16.msra.mxu0 %v6534
        %8496 = vmatprep.mubr.bf16.mxu0 %v1755
        %8497 = vmatmul.mubr.bf16.gmra.mrb[0].mxu0 %v1754
        %v8498 = vpop.f32.mrb[0].mxu0
        %v8499 = vadd.f32 %v8456, %v8498
        %v8500 = vpop.f32.mrb[0].mxu0
        %v8501 = vadd.f32 %v8458, %v8500
        %v8502 = vpop.f32.mrb[0].mxu0
        %v8503 = vadd.f32 %v8460, %v8502
        %v8504 = vpop.f32.mrb[0].mxu0
        %v8505 = vadd.f32 %v8462, %v8504
        %8506 = vdwg.mxu0
        %8507 = vmatprep.subr.bf16.mxu0 %v6543
        %8508 = vmatpush1.bf16.msra.mxu0 %v6542
        %8509 = vmatprep.subr.bf16.mxu0 %v6551
        %8510 = vmatpush1.bf16.msra.mxu0 %v6550
        %8511 = vmatprep.subr.bf16.mxu0 %v6559
        %8512 = vmatpush1.bf16.msra.mxu0 %v6558
        %8513 = vmatprep.subr.bf16.mxu0 %v6567
        %8514 = vmatpush1.bf16.msra.mxu0 %v6566
        %8515 = vmatprep.subr.bf16.mxu0 %v6575
        %8516 = vmatpush1.bf16.msra.mxu0 %v6574
        %8517 = vmatprep.subr.bf16.mxu0 %v6583
        %8518 = vmatpush1.bf16.msra.mxu0 %v6582
        %8519 = vmatprep.subr.bf16.mxu0 %v6591
        %8520 = vmatpush1.bf16.msra.mxu0 %v6590
        %8521 = vmatprep.subr.bf16.mxu0 %v6599
        %8522 = vmatpush1.bf16.msra.mxu0 %v6598
        %8523 = vmatprep.subr.bf16.mxu0 %v6607
        %8524 = vmatpush1.bf16.msra.mxu0 %v6606
        %8525 = vmatprep.subr.bf16.mxu0 %v6615
        %8526 = vmatpush1.bf16.msra.mxu0 %v6614
        %8527 = vmatprep.subr.bf16.mxu0 %v6623
        %8528 = vmatpush1.bf16.msra.mxu0 %v6622
        %8529 = vmatprep.subr.bf16.mxu0 %v6631
        %8530 = vmatpush1.bf16.msra.mxu0 %v6630
        %8531 = vmatprep.subr.bf16.mxu0 %v6639
        %8532 = vmatpush1.bf16.msra.mxu0 %v6638
        %8533 = vmatprep.subr.bf16.mxu0 %v6647
        %8534 = vmatpush1.bf16.msra.mxu0 %v6646
        %8535 = vmatprep.subr.bf16.mxu0 %v6655
        %8536 = vmatpush1.bf16.msra.mxu0 %v6654
        %8537 = vmatprep.subr.bf16.mxu0 %v6663
        %8538 = vmatpush1.bf16.msra.mxu0 %v6662
        %8539 = vmatprep.mubr.bf16.mxu0 %v1757
        %8540 = vmatmul.mubr.bf16.gmra.mrb[0].mxu0 %v1756
        %v8541 = vpop.f32.mrb[0].mxu0
        %v8542 = vadd.f32 %v8499, %v8541
        %v8543 = vpop.f32.mrb[0].mxu0
        %v8544 = vadd.f32 %v8501, %v8543
        %v8545 = vpop.f32.mrb[0].mxu0
        %v8546 = vadd.f32 %v8503, %v8545
        %v8547 = vpop.f32.mrb[0].mxu0
        %v8548 = vadd.f32 %v8505, %v8547
        %8549 = vdwg.mxu0
        %8550 = vmatprep.subr.bf16.mxu0 %v6671
        %8551 = vmatpush1.bf16.msra.mxu0 %v6670
        %8552 = vmatprep.subr.bf16.mxu0 %v6679
        %8553 = vmatpush1.bf16.msra.mxu0 %v6678
        %8554 = vmatprep.subr.bf16.mxu0 %v6687
        %8555 = vmatpush1.bf16.msra.mxu0 %v6686
        %8556 = vmatprep.subr.bf16.mxu0 %v6695
        %8557 = vmatpush1.bf16.msra.mxu0 %v6694
        %8558 = vmatprep.subr.bf16.mxu0 %v6703
        %8559 = vmatpush1.bf16.msra.mxu0 %v6702
        %8560 = vmatprep.subr.bf16.mxu0 %v6711
        %8561 = vmatpush1.bf16.msra.mxu0 %v6710
        %8562 = vmatprep.subr.bf16.mxu0 %v6719
        %8563 = vmatpush1.bf16.msra.mxu0 %v6718
        %8564 = vmatprep.subr.bf16.mxu0 %v6727
        %8565 = vmatpush1.bf16.msra.mxu0 %v6726
        %8566 = vmatprep.subr.bf16.mxu0 %v6735
        %8567 = vmatpush1.bf16.msra.mxu0 %v6734
        %8568 = vmatprep.subr.bf16.mxu0 %v6743
        %8569 = vmatpush1.bf16.msra.mxu0 %v6742
        %8570 = vmatprep.subr.bf16.mxu0 %v6751
        %8571 = vmatpush1.bf16.msra.mxu0 %v6750
        %8572 = vmatprep.subr.bf16.mxu0 %v6759
        %8573 = vmatpush1.bf16.msra.mxu0 %v6758
        %8574 = vmatprep.subr.bf16.mxu0 %v6767
        %8575 = vmatpush1.bf16.msra.mxu0 %v6766
        %8576 = vmatprep.subr.bf16.mxu0 %v6775
        %8577 = vmatpush1.bf16.msra.mxu0 %v6774
        %8578 = vmatprep.subr.bf16.mxu0 %v6783
        %8579 = vmatpush1.bf16.msra.mxu0 %v6782
        %8580 = vmatprep.subr.bf16.mxu0 %v6791
        %8581 = vmatpush1.bf16.msra.mxu0 %v6790
        %8582 = vmatprep.mubr.bf16.mxu0 %v1759
        %8583 = vmatmul.mubr.bf16.gmra.mrb[0].mxu0 %v1758
        %v8584 = vpop.f32.mrb[0].mxu0
        %v8585 = vadd.f32 %v8542, %v8584
        %v8586 = vpop.f32.mrb[0].mxu0
        %v8587 = vadd.f32 %v8544, %v8586
        %v8588 = vpop.f32.mrb[0].mxu0
        %v8589 = vadd.f32 %v8546, %v8588
        %v8590 = vpop.f32.mrb[0].mxu0
        %v8591 = vadd.f32 %v8548, %v8590
        %8592 = vdwg.mxu0
        %8593 = vmatprep.subr.bf16.mxu0 %v6799
        %8594 = vmatpush1.bf16.msra.mxu0 %v6798
        %8595 = vmatprep.subr.bf16.mxu0 %v6807
        %8596 = vmatpush1.bf16.msra.mxu0 %v6806
        %8597 = vmatprep.subr.bf16.mxu0 %v6815
        %8598 = vmatpush1.bf16.msra.mxu0 %v6814
        %8599 = vmatprep.subr.bf16.mxu0 %v6823
        %8600 = vmatpush1.bf16.msra.mxu0 %v6822
        %8601 = vmatprep.subr.bf16.mxu0 %v6831
        %8602 = vmatpush1.bf16.msra.mxu0 %v6830
        %8603 = vmatprep.subr.bf16.mxu0 %v6839
        %8604 = vmatpush1.bf16.msra.mxu0 %v6838
        %8605 = vmatprep.subr.bf16.mxu0 %v6847
        %8606 = vmatpush1.bf16.msra.mxu0 %v6846
        %8607 = vmatprep.subr.bf16.mxu0 %v6855
        %8608 = vmatpush1.bf16.msra.mxu0 %v6854
        %8609 = vmatprep.subr.bf16.mxu0 %v6863
        %8610 = vmatpush1.bf16.msra.mxu0 %v6862
        %8611 = vmatprep.subr.bf16.mxu0 %v6871
        %8612 = vmatpush1.bf16.msra.mxu0 %v6870
        %8613 = vmatprep.subr.bf16.mxu0 %v6879
        %8614 = vmatpush1.bf16.msra.mxu0 %v6878
        %8615 = vmatprep.subr.bf16.mxu0 %v6887
        %8616 = vmatpush1.bf16.msra.mxu0 %v6886
        %8617 = vmatprep.subr.bf16.mxu0 %v6895
        %8618 = vmatpush1.bf16.msra.mxu0 %v6894
        %8619 = vmatprep.subr.bf16.mxu0 %v6903
        %8620 = vmatpush1.bf16.msra.mxu0 %v6902
        %8621 = vmatprep.subr.bf16.mxu0 %v6911
        %8622 = vmatpush1.bf16.msra.mxu0 %v6910
        %8623 = vmatprep.subr.bf16.mxu0 %v6919
        %8624 = vmatpush1.bf16.msra.mxu0 %v6918
        %8625 = vmatprep.mubr.bf16.mxu0 %v1761
        %8626 = vmatmul.mubr.bf16.gmra.mrb[0].mxu0 %v1760
        %v8627 = vpop.f32.mrb[0].mxu0
        %v8628 = vadd.f32 %v8585, %v8627
        %v8629 = vpop.f32.mrb[0].mxu0
        %v8630 = vadd.f32 %v8587, %v8629
        %v8631 = vpop.f32.mrb[0].mxu0
        %v8632 = vadd.f32 %v8589, %v8631
        %v8633 = vpop.f32.mrb[0].mxu0
        %v8634 = vadd.f32 %v8591, %v8633
        %8635 = vdwg.mxu0
        %8636 = vmatprep.subr.bf16.mxu0 %v5905
        %8637 = vmatpush1.bf16.msra.mxu0 %v5904
        %8638 = vmatprep.subr.bf16.mxu0 %v5913
        %8639 = vmatpush1.bf16.msra.mxu0 %v5912
        %8640 = vmatprep.subr.bf16.mxu0 %v5921
        %8641 = vmatpush1.bf16.msra.mxu0 %v5920
        %8642 = vmatprep.subr.bf16.mxu0 %v5929
        %8643 = vmatpush1.bf16.msra.mxu0 %v5928
        %8644 = vmatprep.subr.bf16.mxu0 %v5937
        %8645 = vmatpush1.bf16.msra.mxu0 %v5936
        %8646 = vmatprep.subr.bf16.mxu0 %v5945
        %8647 = vmatpush1.bf16.msra.mxu0 %v5944
        %8648 = vmatprep.subr.bf16.mxu0 %v5953
        %8649 = vmatpush1.bf16.msra.mxu0 %v5952
        %8650 = vmatprep.subr.bf16.mxu0 %v5961
        %8651 = vmatpush1.bf16.msra.mxu0 %v5960
        %8652 = vmatprep.subr.bf16.mxu0 %v5969
        %8653 = vmatpush1.bf16.msra.mxu0 %v5968
        %8654 = vmatprep.subr.bf16.mxu0 %v5977
        %8655 = vmatpush1.bf16.msra.mxu0 %v5976
        %8656 = vmatprep.subr.bf16.mxu0 %v5985
        %8657 = vmatpush1.bf16.msra.mxu0 %v5984
        %8658 = vmatprep.subr.bf16.mxu0 %v5993
        %8659 = vmatpush1.bf16.msra.mxu0 %v5992
        %8660 = vmatprep.subr.bf16.mxu0 %v6001
        %8661 = vmatpush1.bf16.msra.mxu0 %v6000
        %8662 = vmatprep.subr.bf16.mxu0 %v6009
        %8663 = vmatpush1.bf16.msra.mxu0 %v6008
        %8664 = vmatprep.subr.bf16.mxu0 %v6017
        %8665 = vmatpush1.bf16.msra.mxu0 %v6016
        %8666 = vmatprep.subr.bf16.mxu0 %v6025
        %8667 = vmatpush1.bf16.msra.mxu0 %v6024
        %8668 = vmatprep.mubr.bf16.mxu0 %v1747
        %8669 = vmatmul.mubr.bf16.gmra.mrb[0].mxu0 %v1746
        %v8670 = vpop.f32.mrb[0].mxu0
        %v8671 = vadd.f32 %v2807, %v8670
        %v8672 = vpop.f32.mrb[0].mxu0
        %v8673 = vadd.f32 %v2811, %v8672
        %v8674 = vpop.f32.mrb[0].mxu0
        %v8675 = vadd.f32 %v2807, %v8674
        %v8676 = vpop.f32.mrb[0].mxu0
        %v8677 = vadd.f32 %v2811, %v8676
        %8678 = vdwg.mxu0
        %8679 = vmatprep.subr.bf16.mxu0 %v6033
        %8680 = vmatpush1.bf16.msra.mxu0 %v6032
        %8681 = vmatprep.subr.bf16.mxu0 %v6041
        %8682 = vmatpush1.bf16.msra.mxu0 %v6040
        %8683 = vmatprep.subr.bf16.mxu0 %v6049
        %8684 = vmatpush1.bf16.msra.mxu0 %v6048
        %8685 = vmatprep.subr.bf16.mxu0 %v6057
        %8686 = vmatpush1.bf16.msra.mxu0 %v6056
        %8687 = vmatprep.subr.bf16.mxu0 %v6065
        %8688 = vmatpush1.bf16.msra.mxu0 %v6064
        %8689 = vmatprep.subr.bf16.mxu0 %v6073
        %8690 = vmatpush1.bf16.msra.mxu0 %v6072
        %8691 = vmatprep.subr.bf16.mxu0 %v6081
        %8692 = vmatpush1.bf16.msra.mxu0 %v6080
        %8693 = vmatprep.subr.bf16.mxu0 %v6089
        %8694 = vmatpush1.bf16.msra.mxu0 %v6088
        %8695 = vmatprep.subr.bf16.mxu0 %v6097
        %8696 = vmatpush1.bf16.msra.mxu0 %v6096
        %8697 = vmatprep.subr.bf16.mxu0 %v6105
        %8698 = vmatpush1.bf16.msra.mxu0 %v6104
        %8699 = vmatprep.subr.bf16.mxu0 %v6113
        %8700 = vmatpush1.bf16.msra.mxu0 %v6112
        %8701 = vmatprep.subr.bf16.mxu0 %v6121
        %8702 = vmatpush1.bf16.msra.mxu0 %v6120
        %8703 = vmatprep.subr.bf16.mxu0 %v6129
        %8704 = vmatpush1.bf16.msra.mxu0 %v6128
        %8705 = vmatprep.subr.bf16.mxu0 %v6137
        %8706 = vmatpush1.bf16.msra.mxu0 %v6136
        %8707 = vmatprep.subr.bf16.mxu0 %v6145
        %8708 = vmatpush1.bf16.msra.mxu0 %v6144
        %8709 = vmatprep.subr.bf16.mxu0 %v6153
        %8710 = vmatpush1.bf16.msra.mxu0 %v6152
        %8711 = vmatprep.mubr.bf16.mxu0 %v1749
        %8712 = vmatmul.mubr.bf16.gmra.mrb[0].mxu0 %v1748
        %v8713 = vpop.f32.mrb[0].mxu0
        %v8714 = vadd.f32 %v8671, %v8713
        %v8715 = vpop.f32.mrb[0].mxu0
        %v8716 = vadd.f32 %v8673, %v8715
        %v8717 = vpop.f32.mrb[0].mxu0
        %v8718 = vadd.f32 %v8675, %v8717
        %v8719 = vpop.f32.mrb[0].mxu0
        %v8720 = vadd.f32 %v8677, %v8719
        %8721 = vdwg.mxu0
        %8722 = vmatprep.subr.bf16.mxu0 %v6161
        %8723 = vmatpush1.bf16.msra.mxu0 %v6160
        %8724 = vmatprep.subr.bf16.mxu0 %v6169
        %8725 = vmatpush1.bf16.msra.mxu0 %v6168
        %8726 = vmatprep.subr.bf16.mxu0 %v6177
        %8727 = vmatpush1.bf16.msra.mxu0 %v6176
        %8728 = vmatprep.subr.bf16.mxu0 %v6185
        %8729 = vmatpush1.bf16.msra.mxu0 %v6184
        %8730 = vmatprep.subr.bf16.mxu0 %v6193
        %8731 = vmatpush1.bf16.msra.mxu0 %v6192
        %8732 = vmatprep.subr.bf16.mxu0 %v6201
        %8733 = vmatpush1.bf16.msra.mxu0 %v6200
        %8734 = vmatprep.subr.bf16.mxu0 %v6209
        %8735 = vmatpush1.bf16.msra.mxu0 %v6208
        %8736 = vmatprep.subr.bf16.mxu0 %v6217
        %8737 = vmatpush1.bf16.msra.mxu0 %v6216
        %8738 = vmatprep.subr.bf16.mxu0 %v6225
        %8739 = vmatpush1.bf16.msra.mxu0 %v6224
        %8740 = vmatprep.subr.bf16.mxu0 %v6233
        %8741 = vmatpush1.bf16.msra.mxu0 %v6232
        %8742 = vmatprep.subr.bf16.mxu0 %v6241
        %8743 = vmatpush1.bf16.msra.mxu0 %v6240
        %8744 = vmatprep.subr.bf16.mxu0 %v6249
        %8745 = vmatpush1.bf16.msra.mxu0 %v6248
        %8746 = vmatprep.subr.bf16.mxu0 %v6257
        %8747 = vmatpush1.bf16.msra.mxu0 %v6256
        %8748 = vmatprep.subr.bf16.mxu0 %v6265
        %8749 = vmatpush1.bf16.msra.mxu0 %v6264
        %8750 = vmatprep.subr.bf16.mxu0 %v6273
        %8751 = vmatpush1.bf16.msra.mxu0 %v6272
        %8752 = vmatprep.subr.bf16.mxu0 %v6281
        %8753 = vmatpush1.bf16.msra.mxu0 %v6280
        %8754 = vmatprep.mubr.bf16.mxu0 %v1751
        %8755 = vmatmul.mubr.bf16.gmra.mrb[0].mxu0 %v1750
        %v8756 = vpop.f32.mrb[0].mxu0
        %v8757 = vadd.f32 %v8714, %v8756
        %v8758 = vpop.f32.mrb[0].mxu0
        %v8759 = vadd.f32 %v8716, %v8758
        %v8760 = vpop.f32.mrb[0].mxu0
        %v8761 = vadd.f32 %v8718, %v8760
        %v8762 = vpop.f32.mrb[0].mxu0
        %v8763 = vadd.f32 %v8720, %v8762
        %8764 = vdwg.mxu0
        %8765 = vmatprep.subr.bf16.mxu0 %v6289
        %8766 = vmatpush1.bf16.msra.mxu0 %v6288
        %8767 = vmatprep.subr.bf16.mxu0 %v6297
        %8768 = vmatpush1.bf16.msra.mxu0 %v6296
        %8769 = vmatprep.subr.bf16.mxu0 %v6305
        %8770 = vmatpush1.bf16.msra.mxu0 %v6304
        %8771 = vmatprep.subr.bf16.mxu0 %v6313
        %8772 = vmatpush1.bf16.msra.mxu0 %v6312
        %8773 = vmatprep.subr.bf16.mxu0 %v6321
        %8774 = vmatpush1.bf16.msra.mxu0 %v6320
        %8775 = vmatprep.subr.bf16.mxu0 %v6329
        %8776 = vmatpush1.bf16.msra.mxu0 %v6328
        %8777 = vmatprep.subr.bf16.mxu0 %v6337
        %8778 = vmatpush1.bf16.msra.mxu0 %v6336
        %8779 = vmatprep.subr.bf16.mxu0 %v6345
        %8780 = vmatpush1.bf16.msra.mxu0 %v6344
        %8781 = vmatprep.subr.bf16.mxu0 %v6353
        %8782 = vmatpush1.bf16.msra.mxu0 %v6352
        %8783 = vmatprep.subr.bf16.mxu0 %v6361
        %8784 = vmatpush1.bf16.msra.mxu0 %v6360
        %8785 = vmatprep.subr.bf16.mxu0 %v6369
        %8786 = vmatpush1.bf16.msra.mxu0 %v6368
        %8787 = vmatprep.subr.bf16.mxu0 %v6377
        %8788 = vmatpush1.bf16.msra.mxu0 %v6376
        %8789 = vmatprep.subr.bf16.mxu0 %v6385
        %8790 = vmatpush1.bf16.msra.mxu0 %v6384
        %8791 = vmatprep.subr.bf16.mxu0 %v6393
        %8792 = vmatpush1.bf16.msra.mxu0 %v6392
        %8793 = vmatprep.subr.bf16.mxu0 %v6401
        %8794 = vmatpush1.bf16.msra.mxu0 %v6400
        %8795 = vmatprep.subr.bf16.mxu0 %v6409
        %8796 = vmatpush1.bf16.msra.mxu0 %v6408
        %8797 = vmatprep.mubr.bf16.mxu0 %v1753
        %8798 = vmatmul.mubr.bf16.gmra.mrb[0].mxu0 %v1752
        %v8799 = vpop.f32.mrb[0].mxu0
        %v8800 = vadd.f32 %v8757, %v8799
        %v8801 = vpop.f32.mrb[0].mxu0
        %v8802 = vadd.f32 %v8759, %v8801
        %v8803 = vpop.f32.mrb[0].mxu0
        %v8804 = vadd.f32 %v8761, %v8803
        %v8805 = vpop.f32.mrb[0].mxu0
        %v8806 = vadd.f32 %v8763, %v8805
        %8807 = vdwg.mxu0
        %8808 = vmatprep.subr.bf16.mxu0 %v6417
        %8809 = vmatpush1.bf16.msra.mxu0 %v6416
        %8810 = vmatprep.subr.bf16.mxu0 %v6425
        %8811 = vmatpush1.bf16.msra.mxu0 %v6424
        %8812 = vmatprep.subr.bf16.mxu0 %v6433
        %8813 = vmatpush1.bf16.msra.mxu0 %v6432
        %8814 = vmatprep.subr.bf16.mxu0 %v6441
        %8815 = vmatpush1.bf16.msra.mxu0 %v6440
        %8816 = vmatprep.subr.bf16.mxu0 %v6449
        %8817 = vmatpush1.bf16.msra.mxu0 %v6448
        %8818 = vmatprep.subr.bf16.mxu0 %v6457
        %8819 = vmatpush1.bf16.msra.mxu0 %v6456
        %8820 = vmatprep.subr.bf16.mxu0 %v6465
        %8821 = vmatpush1.bf16.msra.mxu0 %v6464
        %8822 = vmatprep.subr.bf16.mxu0 %v6473
        %8823 = vmatpush1.bf16.msra.mxu0 %v6472
        %8824 = vmatprep.subr.bf16.mxu0 %v6481
        %8825 = vmatpush1.bf16.msra.mxu0 %v6480
        %8826 = vmatprep.subr.bf16.mxu0 %v6489
        %8827 = vmatpush1.bf16.msra.mxu0 %v6488
        %8828 = vmatprep.subr.bf16.mxu0 %v6497
        %8829 = vmatpush1.bf16.msra.mxu0 %v6496
        %8830 = vmatprep.subr.bf16.mxu0 %v6505
        %8831 = vmatpush1.bf16.msra.mxu0 %v6504
        %8832 = vmatprep.subr.bf16.mxu0 %v6513
        %8833 = vmatpush1.bf16.msra.mxu0 %v6512
        %8834 = vmatprep.subr.bf16.mxu0 %v6521
        %8835 = vmatpush1.bf16.msra.mxu0 %v6520
        %8836 = vmatprep.subr.bf16.mxu0 %v6529
        %8837 = vmatpush1.bf16.msra.mxu0 %v6528
        %8838 = vmatprep.subr.bf16.mxu0 %v6537
        %8839 = vmatpush1.bf16.msra.mxu0 %v6536
        %8840 = vmatprep.mubr.bf16.mxu0 %v1755
        %8841 = vmatmul.mubr.bf16.gmra.mrb[0].mxu0 %v1754
        %v8842 = vpop.f32.mrb[0].mxu0
        %v8843 = vadd.f32 %v8800, %v8842
        %v8844 = vpop.f32.mrb[0].mxu0
        %v8845 = vadd.f32 %v8802, %v8844
        %v8846 = vpop.f32.mrb[0].mxu0
        %v8847 = vadd.f32 %v8804, %v8846
        %v8848 = vpop.f32.mrb[0].mxu0
        %v8849 = vadd.f32 %v8806, %v8848
        %8850 = vdwg.mxu0
        %8851 = vmatprep.subr.bf16.mxu0 %v6545
        %8852 = vmatpush1.bf16.msra.mxu0 %v6544
        %8853 = vmatprep.subr.bf16.mxu0 %v6553
        %8854 = vmatpush1.bf16.msra.mxu0 %v6552
        %8855 = vmatprep.subr.bf16.mxu0 %v6561
        %8856 = vmatpush1.bf16.msra.mxu0 %v6560
        %8857 = vmatprep.subr.bf16.mxu0 %v6569
        %8858 = vmatpush1.bf16.msra.mxu0 %v6568
        %8859 = vmatprep.subr.bf16.mxu0 %v6577
        %8860 = vmatpush1.bf16.msra.mxu0 %v6576
        %8861 = vmatprep.subr.bf16.mxu0 %v6585
        %8862 = vmatpush1.bf16.msra.mxu0 %v6584
        %8863 = vmatprep.subr.bf16.mxu0 %v6593
        %8864 = vmatpush1.bf16.msra.mxu0 %v6592
        %8865 = vmatprep.subr.bf16.mxu0 %v6601
        %8866 = vmatpush1.bf16.msra.mxu0 %v6600
        %8867 = vmatprep.subr.bf16.mxu0 %v6609
        %8868 = vmatpush1.bf16.msra.mxu0 %v6608
        %8869 = vmatprep.subr.bf16.mxu0 %v6617
        %8870 = vmatpush1.bf16.msra.mxu0 %v6616
        %8871 = vmatprep.subr.bf16.mxu0 %v6625
        %8872 = vmatpush1.bf16.msra.mxu0 %v6624
        %8873 = vmatprep.subr.bf16.mxu0 %v6633
        %8874 = vmatpush1.bf16.msra.mxu0 %v6632
        %8875 = vmatprep.subr.bf16.mxu0 %v6641
        %8876 = vmatpush1.bf16.msra.mxu0 %v6640
        %8877 = vmatprep.subr.bf16.mxu0 %v6649
        %8878 = vmatpush1.bf16.msra.mxu0 %v6648
        %8879 = vmatprep.subr.bf16.mxu0 %v6657
        %8880 = vmatpush1.bf16.msra.mxu0 %v6656
        %8881 = vmatprep.subr.bf16.mxu0 %v6665
        %8882 = vmatpush1.bf16.msra.mxu0 %v6664
        %8883 = vmatprep.mubr.bf16.mxu0 %v1757
        %8884 = vmatmul.mubr.bf16.gmra.mrb[0].mxu0 %v1756
        %v8885 = vpop.f32.mrb[0].mxu0
        %v8886 = vadd.f32 %v8843, %v8885
        %v8887 = vpop.f32.mrb[0].mxu0
        %v8888 = vadd.f32 %v8845, %v8887
        %v8889 = vpop.f32.mrb[0].mxu0
        %v8890 = vadd.f32 %v8847, %v8889
        %v8891 = vpop.f32.mrb[0].mxu0
        %v8892 = vadd.f32 %v8849, %v8891
        %8893 = vdwg.mxu0
        %8894 = vmatprep.subr.bf16.mxu0 %v6673
        %8895 = vmatpush1.bf16.msra.mxu0 %v6672
        %8896 = vmatprep.subr.bf16.mxu0 %v6681
        %8897 = vmatpush1.bf16.msra.mxu0 %v6680
        %8898 = vmatprep.subr.bf16.mxu0 %v6689
        %8899 = vmatpush1.bf16.msra.mxu0 %v6688
        %8900 = vmatprep.subr.bf16.mxu0 %v6697
        %8901 = vmatpush1.bf16.msra.mxu0 %v6696
        %8902 = vmatprep.subr.bf16.mxu0 %v6705
        %8903 = vmatpush1.bf16.msra.mxu0 %v6704
        %8904 = vmatprep.subr.bf16.mxu0 %v6713
        %8905 = vmatpush1.bf16.msra.mxu0 %v6712
        %8906 = vmatprep.subr.bf16.mxu0 %v6721
        %8907 = vmatpush1.bf16.msra.mxu0 %v6720
        %8908 = vmatprep.subr.bf16.mxu0 %v6729
        %8909 = vmatpush1.bf16.msra.mxu0 %v6728
        %8910 = vmatprep.subr.bf16.mxu0 %v6737
        %8911 = vmatpush1.bf16.msra.mxu0 %v6736
        %8912 = vmatprep.subr.bf16.mxu0 %v6745
        %8913 = vmatpush1.bf16.msra.mxu0 %v6744
        %8914 = vmatprep.subr.bf16.mxu0 %v6753
        %8915 = vmatpush1.bf16.msra.mxu0 %v6752
        %8916 = vmatprep.subr.bf16.mxu0 %v6761
        %8917 = vmatpush1.bf16.msra.mxu0 %v6760
        %8918 = vmatprep.subr.bf16.mxu0 %v6769
        %8919 = vmatpush1.bf16.msra.mxu0 %v6768
        %8920 = vmatprep.subr.bf16.mxu0 %v6777
        %8921 = vmatpush1.bf16.msra.mxu0 %v6776
        %8922 = vmatprep.subr.bf16.mxu0 %v6785
        %8923 = vmatpush1.bf16.msra.mxu0 %v6784
        %8924 = vmatprep.subr.bf16.mxu0 %v6793
        %8925 = vmatpush1.bf16.msra.mxu0 %v6792
        %8926 = vmatprep.mubr.bf16.mxu0 %v1759
        %8927 = vmatmul.mubr.bf16.gmra.mrb[0].mxu0 %v1758
        %v8928 = vpop.f32.mrb[0].mxu0
        %v8929 = vadd.f32 %v8886, %v8928
        %v8930 = vpop.f32.mrb[0].mxu0
        %v8931 = vadd.f32 %v8888, %v8930
        %v8932 = vpop.f32.mrb[0].mxu0
        %v8933 = vadd.f32 %v8890, %v8932
        %v8934 = vpop.f32.mrb[0].mxu0
        %v8935 = vadd.f32 %v8892, %v8934
        %8936 = vdwg.mxu0
        %8937 = vmatprep.subr.bf16.mxu0 %v6801
        %8938 = vmatpush1.bf16.msra.mxu0 %v6800
        %8939 = vmatprep.subr.bf16.mxu0 %v6809
        %8940 = vmatpush1.bf16.msra.mxu0 %v6808
        %8941 = vmatprep.subr.bf16.mxu0 %v6817
        %8942 = vmatpush1.bf16.msra.mxu0 %v6816
        %8943 = vmatprep.subr.bf16.mxu0 %v6825
        %8944 = vmatpush1.bf16.msra.mxu0 %v6824
        %8945 = vmatprep.subr.bf16.mxu0 %v6833
        %8946 = vmatpush1.bf16.msra.mxu0 %v6832
        %8947 = vmatprep.subr.bf16.mxu0 %v6841
        %8948 = vmatpush1.bf16.msra.mxu0 %v6840
        %8949 = vmatprep.subr.bf16.mxu0 %v6849
        %8950 = vmatpush1.bf16.msra.mxu0 %v6848
        %8951 = vmatprep.subr.bf16.mxu0 %v6857
        %8952 = vmatpush1.bf16.msra.mxu0 %v6856
        %8953 = vmatprep.subr.bf16.mxu0 %v6865
        %8954 = vmatpush1.bf16.msra.mxu0 %v6864
        %8955 = vmatprep.subr.bf16.mxu0 %v6873
        %8956 = vmatpush1.bf16.msra.mxu0 %v6872
        %8957 = vmatprep.subr.bf16.mxu0 %v6881
        %8958 = vmatpush1.bf16.msra.mxu0 %v6880
        %8959 = vmatprep.subr.bf16.mxu0 %v6889
        %8960 = vmatpush1.bf16.msra.mxu0 %v6888
        %8961 = vmatprep.subr.bf16.mxu0 %v6897
        %8962 = vmatpush1.bf16.msra.mxu0 %v6896
        %8963 = vmatprep.subr.bf16.mxu0 %v6905
        %8964 = vmatpush1.bf16.msra.mxu0 %v6904
        %8965 = vmatprep.subr.bf16.mxu0 %v6913
        %8966 = vmatpush1.bf16.msra.mxu0 %v6912
        %8967 = vmatprep.subr.bf16.mxu0 %v6921
        %8968 = vmatpush1.bf16.msra.mxu0 %v6920
        %8969 = vmatprep.mubr.bf16.mxu0 %v1761
        %8970 = vmatmul.mubr.bf16.gmra.mrb[0].mxu0 %v1760
        %v8971 = vpop.f32.mrb[0].mxu0
        %v8972 = vadd.f32 %v8929, %v8971
        %v8973 = vpop.f32.mrb[0].mxu0
        %v8974 = vadd.f32 %v8931, %v8973
        %v8975 = vpop.f32.mrb[0].mxu0
        %v8976 = vadd.f32 %v8933, %v8975
        %v8977 = vpop.f32.mrb[0].mxu0
        %v8978 = vadd.f32 %v8935, %v8977
        %8979 = vdwg.mxu0
        %8980 = vmatprep.subr.bf16.mxu0 %v5907
        %8981 = vmatpush1.bf16.msra.mxu0 %v5906
        %8982 = vmatprep.subr.bf16.mxu0 %v5915
        %8983 = vmatpush1.bf16.msra.mxu0 %v5914
        %8984 = vmatprep.subr.bf16.mxu0 %v5923
        %8985 = vmatpush1.bf16.msra.mxu0 %v5922
        %8986 = vmatprep.subr.bf16.mxu0 %v5931
        %8987 = vmatpush1.bf16.msra.mxu0 %v5930
        %8988 = vmatprep.subr.bf16.mxu0 %v5939
        %8989 = vmatpush1.bf16.msra.mxu0 %v5938
        %8990 = vmatprep.subr.bf16.mxu0 %v5947
        %8991 = vmatpush1.bf16.msra.mxu0 %v5946
        %8992 = vmatprep.subr.bf16.mxu0 %v5955
        %8993 = vmatpush1.bf16.msra.mxu0 %v5954
        %8994 = vmatprep.subr.bf16.mxu0 %v5963
        %8995 = vmatpush1.bf16.msra.mxu0 %v5962
        %8996 = vmatprep.subr.bf16.mxu0 %v5971
        %8997 = vmatpush1.bf16.msra.mxu0 %v5970
        %8998 = vmatprep.subr.bf16.mxu0 %v5979
        %8999 = vmatpush1.bf16.msra.mxu0 %v5978
        %9000 = vmatprep.subr.bf16.mxu0 %v5987
        %9001 = vmatpush1.bf16.msra.mxu0 %v5986
        %9002 = vmatprep.subr.bf16.mxu0 %v5995
        %9003 = vmatpush1.bf16.msra.mxu0 %v5994
        %9004 = vmatprep.subr.bf16.mxu0 %v6003
        %9005 = vmatpush1.bf16.msra.mxu0 %v6002
        %9006 = vmatprep.subr.bf16.mxu0 %v6011
        %9007 = vmatpush1.bf16.msra.mxu0 %v6010
        %9008 = vmatprep.subr.bf16.mxu0 %v6019
        %9009 = vmatpush1.bf16.msra.mxu0 %v6018
        %9010 = vmatprep.subr.bf16.mxu0 %v6027
        %9011 = vmatpush1.bf16.msra.mxu0 %v6026
        %9012 = vmatprep.mubr.bf16.mxu0 %v1747
        %9013 = vmatmul.mubr.bf16.gmra.mrb[0].mxu0 %v1746
        %v9014 = vpop.f32.mrb[0].mxu0
        %v9015 = vadd.f32 %v2815, %v9014
        %v9016 = vpop.f32.mrb[0].mxu0
        %v9017 = vadd.f32 %v2819, %v9016
        %v9018 = vpop.f32.mrb[0].mxu0
        %v9019 = vadd.f32 %v2815, %v9018
        %v9020 = vpop.f32.mrb[0].mxu0
        %v9021 = vadd.f32 %v2819, %v9020
        %9022 = vdwg.mxu0
        %9023 = vmatprep.subr.bf16.mxu0 %v6035
        %9024 = vmatpush1.bf16.msra.mxu0 %v6034
        %9025 = vmatprep.subr.bf16.mxu0 %v6043
        %9026 = vmatpush1.bf16.msra.mxu0 %v6042
        %9027 = vmatprep.subr.bf16.mxu0 %v6051
        %9028 = vmatpush1.bf16.msra.mxu0 %v6050
        %9029 = vmatprep.subr.bf16.mxu0 %v6059
        %9030 = vmatpush1.bf16.msra.mxu0 %v6058
        %9031 = vmatprep.subr.bf16.mxu0 %v6067
        %9032 = vmatpush1.bf16.msra.mxu0 %v6066
        %9033 = vmatprep.subr.bf16.mxu0 %v6075
        %9034 = vmatpush1.bf16.msra.mxu0 %v6074
        %9035 = vmatprep.subr.bf16.mxu0 %v6083
        %9036 = vmatpush1.bf16.msra.mxu0 %v6082
        %9037 = vmatprep.subr.bf16.mxu0 %v6091
        %9038 = vmatpush1.bf16.msra.mxu0 %v6090
        %9039 = vmatprep.subr.bf16.mxu0 %v6099
        %9040 = vmatpush1.bf16.msra.mxu0 %v6098
        %9041 = vmatprep.subr.bf16.mxu0 %v6107
        %9042 = vmatpush1.bf16.msra.mxu0 %v6106
        %9043 = vmatprep.subr.bf16.mxu0 %v6115
        %9044 = vmatpush1.bf16.msra.mxu0 %v6114
        %9045 = vmatprep.subr.bf16.mxu0 %v6123
        %9046 = vmatpush1.bf16.msra.mxu0 %v6122
        %9047 = vmatprep.subr.bf16.mxu0 %v6131
        %9048 = vmatpush1.bf16.msra.mxu0 %v6130
        %9049 = vmatprep.subr.bf16.mxu0 %v6139
        %9050 = vmatpush1.bf16.msra.mxu0 %v6138
        %9051 = vmatprep.subr.bf16.mxu0 %v6147
        %9052 = vmatpush1.bf16.msra.mxu0 %v6146
        %9053 = vmatprep.subr.bf16.mxu0 %v6155
        %9054 = vmatpush1.bf16.msra.mxu0 %v6154
        %9055 = vmatprep.mubr.bf16.mxu0 %v1749
        %9056 = vmatmul.mubr.bf16.gmra.mrb[0].mxu0 %v1748
        %v9057 = vpop.f32.mrb[0].mxu0
        %v9058 = vadd.f32 %v9015, %v9057
        %v9059 = vpop.f32.mrb[0].mxu0
        %v9060 = vadd.f32 %v9017, %v9059
        %v9061 = vpop.f32.mrb[0].mxu0
        %v9062 = vadd.f32 %v9019, %v9061
        %v9063 = vpop.f32.mrb[0].mxu0
        %v9064 = vadd.f32 %v9021, %v9063
        %9065 = vdwg.mxu0
        %9066 = vmatprep.subr.bf16.mxu0 %v6163
        %9067 = vmatpush1.bf16.msra.mxu0 %v6162
        %9068 = vmatprep.subr.bf16.mxu0 %v6171
        %9069 = vmatpush1.bf16.msra.mxu0 %v6170
        %9070 = vmatprep.subr.bf16.mxu0 %v6179
        %9071 = vmatpush1.bf16.msra.mxu0 %v6178
        %9072 = vmatprep.subr.bf16.mxu0 %v6187
        %9073 = vmatpush1.bf16.msra.mxu0 %v6186
        %9074 = vmatprep.subr.bf16.mxu0 %v6195
        %9075 = vmatpush1.bf16.msra.mxu0 %v6194
        %9076 = vmatprep.subr.bf16.mxu0 %v6203
        %9077 = vmatpush1.bf16.msra.mxu0 %v6202
        %9078 = vmatprep.subr.bf16.mxu0 %v6211
        %9079 = vmatpush1.bf16.msra.mxu0 %v6210
        %9080 = vmatprep.subr.bf16.mxu0 %v6219
        %9081 = vmatpush1.bf16.msra.mxu0 %v6218
        %9082 = vmatprep.subr.bf16.mxu0 %v6227
        %9083 = vmatpush1.bf16.msra.mxu0 %v6226
        %9084 = vmatprep.subr.bf16.mxu0 %v6235
        %9085 = vmatpush1.bf16.msra.mxu0 %v6234
        %9086 = vmatprep.subr.bf16.mxu0 %v6243
        %9087 = vmatpush1.bf16.msra.mxu0 %v6242
        %9088 = vmatprep.subr.bf16.mxu0 %v6251
        %9089 = vmatpush1.bf16.msra.mxu0 %v6250
        %9090 = vmatprep.subr.bf16.mxu0 %v6259
        %9091 = vmatpush1.bf16.msra.mxu0 %v6258
        %9092 = vmatprep.subr.bf16.mxu0 %v6267
        %9093 = vmatpush1.bf16.msra.mxu0 %v6266
        %9094 = vmatprep.subr.bf16.mxu0 %v6275
        %9095 = vmatpush1.bf16.msra.mxu0 %v6274
        %9096 = vmatprep.subr.bf16.mxu0 %v6283
        %9097 = vmatpush1.bf16.msra.mxu0 %v6282
        %9098 = vmatprep.mubr.bf16.mxu0 %v1751
        %9099 = vmatmul.mubr.bf16.gmra.mrb[0].mxu0 %v1750
        %v9100 = vpop.f32.mrb[0].mxu0
        %v9101 = vadd.f32 %v9058, %v9100
        %v9102 = vpop.f32.mrb[0].mxu0
        %v9103 = vadd.f32 %v9060, %v9102
        %v9104 = vpop.f32.mrb[0].mxu0
        %v9105 = vadd.f32 %v9062, %v9104
        %v9106 = vpop.f32.mrb[0].mxu0
        %v9107 = vadd.f32 %v9064, %v9106
        %9108 = vdwg.mxu0
        %9109 = vmatprep.subr.bf16.mxu0 %v6291
        %9110 = vmatpush1.bf16.msra.mxu0 %v6290
        %9111 = vmatprep.subr.bf16.mxu0 %v6299
        %9112 = vmatpush1.bf16.msra.mxu0 %v6298
        %9113 = vmatprep.subr.bf16.mxu0 %v6307
        %9114 = vmatpush1.bf16.msra.mxu0 %v6306
        %9115 = vmatprep.subr.bf16.mxu0 %v6315
        %9116 = vmatpush1.bf16.msra.mxu0 %v6314
        %9117 = vmatprep.subr.bf16.mxu0 %v6323
        %9118 = vmatpush1.bf16.msra.mxu0 %v6322
        %9119 = vmatprep.subr.bf16.mxu0 %v6331
        %9120 = vmatpush1.bf16.msra.mxu0 %v6330
        %9121 = vmatprep.subr.bf16.mxu0 %v6339
        %9122 = vmatpush1.bf16.msra.mxu0 %v6338
        %9123 = vmatprep.subr.bf16.mxu0 %v6347
        %9124 = vmatpush1.bf16.msra.mxu0 %v6346
        %9125 = vmatprep.subr.bf16.mxu0 %v6355
        %9126 = vmatpush1.bf16.msra.mxu0 %v6354
        %9127 = vmatprep.subr.bf16.mxu0 %v6363
        %9128 = vmatpush1.bf16.msra.mxu0 %v6362
        %9129 = vmatprep.subr.bf16.mxu0 %v6371
        %9130 = vmatpush1.bf16.msra.mxu0 %v6370
        %9131 = vmatprep.subr.bf16.mxu0 %v6379
        %9132 = vmatpush1.bf16.msra.mxu0 %v6378
        %9133 = vmatprep.subr.bf16.mxu0 %v6387
        %9134 = vmatpush1.bf16.msra.mxu0 %v6386
        %9135 = vmatprep.subr.bf16.mxu0 %v6395
        %9136 = vmatpush1.bf16.msra.mxu0 %v6394
        %9137 = vmatprep.subr.bf16.mxu0 %v6403
        %9138 = vmatpush1.bf16.msra.mxu0 %v6402
        %9139 = vmatprep.subr.bf16.mxu0 %v6411
        %9140 = vmatpush1.bf16.msra.mxu0 %v6410
        %9141 = vmatprep.mubr.bf16.mxu0 %v1753
        %9142 = vmatmul.mubr.bf16.gmra.mrb[0].mxu0 %v1752
        %v9143 = vpop.f32.mrb[0].mxu0
        %v9144 = vadd.f32 %v9101, %v9143
        %v9145 = vpop.f32.mrb[0].mxu0
        %v9146 = vadd.f32 %v9103, %v9145
        %v9147 = vpop.f32.mrb[0].mxu0
        %v9148 = vadd.f32 %v9105, %v9147
        %v9149 = vpop.f32.mrb[0].mxu0
        %v9150 = vadd.f32 %v9107, %v9149
        %9151 = vdwg.mxu0
        %9152 = vmatprep.subr.bf16.mxu0 %v6419
        %9153 = vmatpush1.bf16.msra.mxu0 %v6418
        %9154 = vmatprep.subr.bf16.mxu0 %v6427
        %9155 = vmatpush1.bf16.msra.mxu0 %v6426
        %9156 = vmatprep.subr.bf16.mxu0 %v6435
        %9157 = vmatpush1.bf16.msra.mxu0 %v6434
        %9158 = vmatprep.subr.bf16.mxu0 %v6443
        %9159 = vmatpush1.bf16.msra.mxu0 %v6442
        %9160 = vmatprep.subr.bf16.mxu0 %v6451
        %9161 = vmatpush1.bf16.msra.mxu0 %v6450
        %9162 = vmatprep.subr.bf16.mxu0 %v6459
        %9163 = vmatpush1.bf16.msra.mxu0 %v6458
        %9164 = vmatprep.subr.bf16.mxu0 %v6467
        %9165 = vmatpush1.bf16.msra.mxu0 %v6466
        %9166 = vmatprep.subr.bf16.mxu0 %v6475
        %9167 = vmatpush1.bf16.msra.mxu0 %v6474
        %9168 = vmatprep.subr.bf16.mxu0 %v6483
        %9169 = vmatpush1.bf16.msra.mxu0 %v6482
        %9170 = vmatprep.subr.bf16.mxu0 %v6491
        %9171 = vmatpush1.bf16.msra.mxu0 %v6490
        %9172 = vmatprep.subr.bf16.mxu0 %v6499
        %9173 = vmatpush1.bf16.msra.mxu0 %v6498
        %9174 = vmatprep.subr.bf16.mxu0 %v6507
        %9175 = vmatpush1.bf16.msra.mxu0 %v6506
        %9176 = vmatprep.subr.bf16.mxu0 %v6515
        %9177 = vmatpush1.bf16.msra.mxu0 %v6514
        %9178 = vmatprep.subr.bf16.mxu0 %v6523
        %9179 = vmatpush1.bf16.msra.mxu0 %v6522
        %9180 = vmatprep.subr.bf16.mxu0 %v6531
        %9181 = vmatpush1.bf16.msra.mxu0 %v6530
        %9182 = vmatprep.subr.bf16.mxu0 %v6539
        %9183 = vmatpush1.bf16.msra.mxu0 %v6538
        %9184 = vmatprep.mubr.bf16.mxu0 %v1755
        %9185 = vmatmul.mubr.bf16.gmra.mrb[0].mxu0 %v1754
        %v9186 = vpop.f32.mrb[0].mxu0
        %v9187 = vadd.f32 %v9144, %v9186
        %v9188 = vpop.f32.mrb[0].mxu0
        %v9189 = vadd.f32 %v9146, %v9188
        %v9190 = vpop.f32.mrb[0].mxu0
        %v9191 = vadd.f32 %v9148, %v9190
        %v9192 = vpop.f32.mrb[0].mxu0
        %v9193 = vadd.f32 %v9150, %v9192
        %9194 = vdwg.mxu0
        %9195 = vmatprep.subr.bf16.mxu0 %v6547
        %9196 = vmatpush1.bf16.msra.mxu0 %v6546
        %9197 = vmatprep.subr.bf16.mxu0 %v6555
        %9198 = vmatpush1.bf16.msra.mxu0 %v6554
        %9199 = vmatprep.subr.bf16.mxu0 %v6563
        %9200 = vmatpush1.bf16.msra.mxu0 %v6562
        %9201 = vmatprep.subr.bf16.mxu0 %v6571
        %9202 = vmatpush1.bf16.msra.mxu0 %v6570
        %9203 = vmatprep.subr.bf16.mxu0 %v6579
        %9204 = vmatpush1.bf16.msra.mxu0 %v6578
        %9205 = vmatprep.subr.bf16.mxu0 %v6587
        %9206 = vmatpush1.bf16.msra.mxu0 %v6586
        %9207 = vmatprep.subr.bf16.mxu0 %v6595
        %9208 = vmatpush1.bf16.msra.mxu0 %v6594
        %9209 = vmatprep.subr.bf16.mxu0 %v6603
        %9210 = vmatpush1.bf16.msra.mxu0 %v6602
        %9211 = vmatprep.subr.bf16.mxu0 %v6611
        %9212 = vmatpush1.bf16.msra.mxu0 %v6610
        %9213 = vmatprep.subr.bf16.mxu0 %v6619
        %9214 = vmatpush1.bf16.msra.mxu0 %v6618
        %9215 = vmatprep.subr.bf16.mxu0 %v6627
        %9216 = vmatpush1.bf16.msra.mxu0 %v6626
        %9217 = vmatprep.subr.bf16.mxu0 %v6635
        %9218 = vmatpush1.bf16.msra.mxu0 %v6634
        %9219 = vmatprep.subr.bf16.mxu0 %v6643
        %9220 = vmatpush1.bf16.msra.mxu0 %v6642
        %9221 = vmatprep.subr.bf16.mxu0 %v6651
        %9222 = vmatpush1.bf16.msra.mxu0 %v6650
        %9223 = vmatprep.subr.bf16.mxu0 %v6659
        %9224 = vmatpush1.bf16.msra.mxu0 %v6658
        %9225 = vmatprep.subr.bf16.mxu0 %v6667
        %9226 = vmatpush1.bf16.msra.mxu0 %v6666
        %9227 = vmatprep.mubr.bf16.mxu0 %v1757
        %9228 = vmatmul.mubr.bf16.gmra.mrb[0].mxu0 %v1756
        %v9229 = vpop.f32.mrb[0].mxu0
        %v9230 = vadd.f32 %v9187, %v9229
        %v9231 = vpop.f32.mrb[0].mxu0
        %v9232 = vadd.f32 %v9189, %v9231
        %v9233 = vpop.f32.mrb[0].mxu0
        %v9234 = vadd.f32 %v9191, %v9233
        %v9235 = vpop.f32.mrb[0].mxu0
        %v9236 = vadd.f32 %v9193, %v9235
        %9237 = vdwg.mxu0
        %9238 = vmatprep.subr.bf16.mxu0 %v6675
        %9239 = vmatpush1.bf16.msra.mxu0 %v6674
        %9240 = vmatprep.subr.bf16.mxu0 %v6683
        %9241 = vmatpush1.bf16.msra.mxu0 %v6682
        %9242 = vmatprep.subr.bf16.mxu0 %v6691
        %9243 = vmatpush1.bf16.msra.mxu0 %v6690
        %9244 = vmatprep.subr.bf16.mxu0 %v6699
        %9245 = vmatpush1.bf16.msra.mxu0 %v6698
        %9246 = vmatprep.subr.bf16.mxu0 %v6707
        %9247 = vmatpush1.bf16.msra.mxu0 %v6706
        %9248 = vmatprep.subr.bf16.mxu0 %v6715
        %9249 = vmatpush1.bf16.msra.mxu0 %v6714
        %9250 = vmatprep.subr.bf16.mxu0 %v6723
        %9251 = vmatpush1.bf16.msra.mxu0 %v6722
        %9252 = vmatprep.subr.bf16.mxu0 %v6731
        %9253 = vmatpush1.bf16.msra.mxu0 %v6730
        %9254 = vmatprep.subr.bf16.mxu0 %v6739
        %9255 = vmatpush1.bf16.msra.mxu0 %v6738
        %9256 = vmatprep.subr.bf16.mxu0 %v6747
        %9257 = vmatpush1.bf16.msra.mxu0 %v6746
        %9258 = vmatprep.subr.bf16.mxu0 %v6755
        %9259 = vmatpush1.bf16.msra.mxu0 %v6754
        %9260 = vmatprep.subr.bf16.mxu0 %v6763
        %9261 = vmatpush1.bf16.msra.mxu0 %v6762
        %9262 = vmatprep.subr.bf16.mxu0 %v6771
        %9263 = vmatpush1.bf16.msra.mxu0 %v6770
        %9264 = vmatprep.subr.bf16.mxu0 %v6779
        %9265 = vmatpush1.bf16.msra.mxu0 %v6778
        %9266 = vmatprep.subr.bf16.mxu0 %v6787
        %9267 = vmatpush1.bf16.msra.mxu0 %v6786
        %9268 = vmatprep.subr.bf16.mxu0 %v6795
        %9269 = vmatpush1.bf16.msra.mxu0 %v6794
        %9270 = vmatprep.mubr.bf16.mxu0 %v1759
        %9271 = vmatmul.mubr.bf16.gmra.mrb[0].mxu0 %v1758
        %v9272 = vpop.f32.mrb[0].mxu0
        %v9273 = vadd.f32 %v9230, %v9272
        %v9274 = vpop.f32.mrb[0].mxu0
        %v9275 = vadd.f32 %v9232, %v9274
        %v9276 = vpop.f32.mrb[0].mxu0
        %v9277 = vadd.f32 %v9234, %v9276
        %v9278 = vpop.f32.mrb[0].mxu0
        %v9279 = vadd.f32 %v9236, %v9278
        %9280 = vdwg.mxu0
        %9281 = vmatprep.subr.bf16.mxu0 %v6803
        %9282 = vmatpush1.bf16.msra.mxu0 %v6802
        %9283 = vmatprep.subr.bf16.mxu0 %v6811
        %9284 = vmatpush1.bf16.msra.mxu0 %v6810
        %9285 = vmatprep.subr.bf16.mxu0 %v6819
        %9286 = vmatpush1.bf16.msra.mxu0 %v6818
        %9287 = vmatprep.subr.bf16.mxu0 %v6827
        %9288 = vmatpush1.bf16.msra.mxu0 %v6826
        %9289 = vmatprep.subr.bf16.mxu0 %v6835
        %9290 = vmatpush1.bf16.msra.mxu0 %v6834
        %9291 = vmatprep.subr.bf16.mxu0 %v6843
        %9292 = vmatpush1.bf16.msra.mxu0 %v6842
        %9293 = vmatprep.subr.bf16.mxu0 %v6851
        %9294 = vmatpush1.bf16.msra.mxu0 %v6850
        %9295 = vmatprep.subr.bf16.mxu0 %v6859
        %9296 = vmatpush1.bf16.msra.mxu0 %v6858
        %9297 = vmatprep.subr.bf16.mxu0 %v6867
        %9298 = vmatpush1.bf16.msra.mxu0 %v6866
        %9299 = vmatprep.subr.bf16.mxu0 %v6875
        %9300 = vmatpush1.bf16.msra.mxu0 %v6874
        %9301 = vmatprep.subr.bf16.mxu0 %v6883
        %9302 = vmatpush1.bf16.msra.mxu0 %v6882
        %9303 = vmatprep.subr.bf16.mxu0 %v6891
        %9304 = vmatpush1.bf16.msra.mxu0 %v6890
        %9305 = vmatprep.subr.bf16.mxu0 %v6899
        %9306 = vmatpush1.bf16.msra.mxu0 %v6898
        %9307 = vmatprep.subr.bf16.mxu0 %v6907
        %9308 = vmatpush1.bf16.msra.mxu0 %v6906
        %9309 = vmatprep.subr.bf16.mxu0 %v6915
        %9310 = vmatpush1.bf16.msra.mxu0 %v6914
        %9311 = vmatprep.subr.bf16.mxu0 %v6923
        %9312 = vmatpush1.bf16.msra.mxu0 %v6922
        %9313 = vmatprep.mubr.bf16.mxu0 %v1761
        %9314 = vmatmul.mubr.bf16.gmra.mrb[0].mxu0 %v1760
        %v9315 = vpop.f32.mrb[0].mxu0
        %v9316 = vadd.f32 %v9273, %v9315
        %v9317 = vpop.f32.mrb[0].mxu0
        %v9318 = vadd.f32 %v9275, %v9317
        %v9319 = vpop.f32.mrb[0].mxu0
        %v9320 = vadd.f32 %v9277, %v9319
        %v9321 = vpop.f32.mrb[0].mxu0
        %v9322 = vadd.f32 %v9279, %v9321
        %9323 = vdwg.mxu0
        %vm9324 = vcmp.gt.f32.partialorder %v8284, 0.0
        %vm9325 = vcmp.gt.f32.partialorder %v8286, 0.0
        %vm9326 = vcmp.gt.f32.partialorder %v8628, 0.0
        %vm9327 = vcmp.gt.f32.partialorder %v8630, 0.0
        %vm9328 = vcmp.gt.f32.partialorder %v8972, 0.0
        %vm9329 = vcmp.gt.f32.partialorder %v8974, 0.0
        %vm9330 = vcmp.gt.f32.partialorder %v9316, 0.0
        %vm9331 = vcmp.gt.f32.partialorder %v9318, 0.0
        %vm9332 = vcmp.gt.f32.partialorder %v8288, 0.0
        %vm9333 = vcmp.gt.f32.partialorder %v8290, 0.0
        %vm9334 = vcmp.gt.f32.partialorder %v8632, 0.0
        %vm9335 = vcmp.gt.f32.partialorder %v8634, 0.0
        %vm9336 = vcmp.gt.f32.partialorder %v8976, 0.0
        %vm9337 = vcmp.gt.f32.partialorder %v8978, 0.0
        %vm9338 = vcmp.gt.f32.partialorder %v9320, 0.0
        %vm9339 = vcmp.gt.f32.partialorder %v9322, 0.0
        %v9340 = vmul.f32 %v8284, 0.2
        %v9341 = vmul.f32 %v8286, 0.2
        %v9342 = vmul.f32 %v8628, 0.2
        %v9343 = vmul.f32 %v8630, 0.2
        %v9344 = vmul.f32 %v8972, 0.2
        %v9345 = vmul.f32 %v8974, 0.2
        %v9346 = vmul.f32 %v9316, 0.2
        %v9347 = vmul.f32 %v9318, 0.2
        %v9348 = vmul.f32 %v8288, 0.2
        %v9349 = vmul.f32 %v8290, 0.2
        %v9350 = vmul.f32 %v8632, 0.2
        %v9351 = vmul.f32 %v8634, 0.2
        %v9352 = vmul.f32 %v8976, 0.2
        %v9353 = vmul.f32 %v8978, 0.2
        %v9354 = vmul.f32 %v9320, 0.2
        %v9355 = vmul.f32 %v9322, 0.2
        %v9356 = vsel %vm9324, %v8284, %v9340
        %v9357 = vsel %vm9325, %v8286, %v9341
        %v9358 = vsel %vm9326, %v8628, %v9342
        %v9359 = vsel %vm9327, %v8630, %v9343
        %v9360 = vsel %vm9328, %v8972, %v9344
        %v9361 = vsel %vm9329, %v8974, %v9345
        %v9362 = vsel %vm9330, %v9316, %v9346
        %v9363 = vsel %vm9331, %v9318, %v9347
        %v9364 = vsel %vm9332, %v8288, %v9348
        %v9365 = vsel %vm9333, %v8290, %v9349
        %v9366 = vsel %vm9334, %v8632, %v9350
        %v9367 = vsel %vm9335, %v8634, %v9351
        %v9368 = vsel %vm9336, %v8976, %v9352
        %v9369 = vsel %vm9337, %v8978, %v9353
        %v9370 = vsel %vm9338, %v9320, %v9354
        %v9371 = vsel %vm9339, %v9322, %v9355
        %v9372 = vld [vmem:[#allocation3] sm:$0xff]
        %v9373 = vld [vmem:[#allocation3 + $0x8] sm:$0xff]
        %v9374 = vld [vmem:[#allocation3 + $0x10] sm:$0xff]
        %v9375 = vld [vmem:[#allocation3 + $0x18] sm:$0xff]
        %v9376 = vld [vmem:[#allocation3 + $0x20] sm:$0xff]
        %v9377 = vld [vmem:[#allocation3 + $0x28] sm:$0xff]
        %v9378 = vld [vmem:[#allocation3 + $0x30] sm:$0xff]
        %v9379 = vld [vmem:[#allocation3 + $0x38] sm:$0xff]
        %v9380 = vld [vmem:[#allocation3 + $0x40] sm:$0xff]
        %v9381 = vld [vmem:[#allocation3 + $0x48] sm:$0xff]
        %v9382 = vld [vmem:[#allocation3 + $0x50] sm:$0xff]
        %v9383 = vld [vmem:[#allocation3 + $0x58] sm:$0xff]
        %v9384 = vld [vmem:[#allocation3 + $0x60] sm:$0xff]
        %v9385 = vld [vmem:[#allocation3 + $0x68] sm:$0xff]
        %v9386 = vld [vmem:[#allocation3 + $0x70] sm:$0xff]
        %v9387 = vld [vmem:[#allocation3 + $0x78] sm:$0xff]
        %v9388 = vld [vmem:[%s344] sm:$0xff]
        %v9389 = vunpack.c.l.bf16 %v9388
        %v9390 = vunpack.c.h.bf16 %v9388
        %v9393 = vlaneseq
        %v9394 = vshrl.u32 %v9393, 7
        %v9395 = vsub.s32 0, %v9394
        %v9396 = vrot.slane %v9389, %v9395
        %v9397 = vlaneseq
        %v9398 = vshrl.u32 %v9397, 7
        %v9399 = vsub.s32 2, %v9398
        %v9400 = vrot.slane %v9389, %v9399
        %v9401 = vlaneseq
        %v9402 = vshrl.u32 %v9401, 7
        %v9403 = vsub.s32 4, %v9402
        %v9404 = vrot.slane %v9389, %v9403
        %v9405 = vlaneseq
        %v9406 = vshrl.u32 %v9405, 7
        %v9407 = vsub.s32 6, %v9406
        %v9408 = vrot.slane %v9389, %v9407
        %v9409 = vlaneseq
        %v9410 = vshrl.u32 %v9409, 7
        %v9411 = vsub.s32 0, %v9410
        %v9412 = vrot.slane %v9390, %v9411
        %v9413 = vlaneseq
        %v9414 = vshrl.u32 %v9413, 7
        %v9415 = vsub.s32 2, %v9414
        %v9416 = vrot.slane %v9390, %v9415
        %v9417 = vlaneseq
        %v9418 = vshrl.u32 %v9417, 7
        %v9419 = vsub.s32 4, %v9418
        %v9420 = vrot.slane %v9390, %v9419
        %v9421 = vlaneseq
        %v9422 = vshrl.u32 %v9421, 7
        %v9423 = vsub.s32 6, %v9422
        %v9424 = vrot.slane %v9390, %v9423
        %v9433 = vlaneseq
        %v9434 = vshrl.u32 %v9433, 7
        %v9435 = vsub.s32 0, %v9434
        %v9436 = vrot.slane %v9396, %v9435
        %v9437 = vlaneseq
        %v9438 = vshrl.u32 %v9437, 7
        %v9439 = vsub.s32 0, %v9438
        %v9440 = vrot.slane %v9400, %v9439
        %v9441 = vlaneseq
        %v9442 = vshrl.u32 %v9441, 7
        %v9443 = vsub.s32 0, %v9442
        %v9444 = vrot.slane %v9404, %v9443
        %v9445 = vlaneseq
        %v9446 = vshrl.u32 %v9445, 7
        %v9447 = vsub.s32 0, %v9446
        %v9448 = vrot.slane %v9408, %v9447
        %v9449 = vlaneseq
        %v9450 = vshrl.u32 %v9449, 7
        %v9451 = vsub.s32 0, %v9450
        %v9452 = vrot.slane %v9412, %v9451
        %v9453 = vlaneseq
        %v9454 = vshrl.u32 %v9453, 7
        %v9455 = vsub.s32 0, %v9454
        %v9456 = vrot.slane %v9416, %v9455
        %v9457 = vlaneseq
        %v9458 = vshrl.u32 %v9457, 7
        %v9459 = vsub.s32 0, %v9458
        %v9460 = vrot.slane %v9420, %v9459
        %v9461 = vlaneseq
        %v9462 = vshrl.u32 %v9461, 7
        %v9463 = vsub.s32 0, %v9462
        %v9464 = vrot.slane %v9424, %v9463
        %v9465 = vmul.f32 %v9356, %v9436
        %v9466 = vmul.f32 %v9357, %v9440
        %v9467 = vmul.f32 %v9358, %v9444
        %v9468 = vmul.f32 %v9359, %v9448
        %v9469 = vmul.f32 %v9360, %v9452
        %v9470 = vmul.f32 %v9361, %v9456
        %v9471 = vmul.f32 %v9362, %v9460
        %v9472 = vmul.f32 %v9363, %v9464
        %v9473 = vmul.f32 %v9364, %v9436
        %v9474 = vmul.f32 %v9365, %v9440
        %v9475 = vmul.f32 %v9366, %v9444
        %v9476 = vmul.f32 %v9367, %v9448
        %v9477 = vmul.f32 %v9368, %v9452
        %v9478 = vmul.f32 %v9369, %v9456
        %v9479 = vmul.f32 %v9370, %v9460
        %v9480 = vmul.f32 %v9371, %v9464
        %v9481 = vadd.f32 %v9372, %v9465
        %v9482 = vadd.f32 %v9373, %v9466
        %v9483 = vadd.f32 %v9374, %v9467
        %v9484 = vadd.f32 %v9375, %v9468
        %v9485 = vadd.f32 %v9376, %v9469
        %v9486 = vadd.f32 %v9377, %v9470
        %v9487 = vadd.f32 %v9378, %v9471
        %v9488 = vadd.f32 %v9379, %v9472
        %v9489 = vadd.f32 %v9380, %v9473
        %v9490 = vadd.f32 %v9381, %v9474
        %v9491 = vadd.f32 %v9382, %v9475
        %v9492 = vadd.f32 %v9383, %v9476
        %v9493 = vadd.f32 %v9384, %v9477
        %v9494 = vadd.f32 %v9385, %v9478
        %v9495 = vadd.f32 %v9386, %v9479
        %v9496 = vadd.f32 %v9387, %v9480
        %9497 = vst [vmem:[#allocation3] sm:$0xff] %v9481
        %9498 = vst [vmem:[#allocation3 + $0x8] sm:$0xff] %v9482
        %9499 = vst [vmem:[#allocation3 + $0x10] sm:$0xff] %v9483
        %9500 = vst [vmem:[#allocation3 + $0x18] sm:$0xff] %v9484
        %9501 = vst [vmem:[#allocation3 + $0x20] sm:$0xff] %v9485
        %9502 = vst [vmem:[#allocation3 + $0x28] sm:$0xff] %v9486
        %9503 = vst [vmem:[#allocation3 + $0x30] sm:$0xff] %v9487
        %9504 = vst [vmem:[#allocation3 + $0x38] sm:$0xff] %v9488
        %9505 = vst [vmem:[#allocation3 + $0x40] sm:$0xff] %v9489
        %9506 = vst [vmem:[#allocation3 + $0x48] sm:$0xff] %v9490
        %9507 = vst [vmem:[#allocation3 + $0x50] sm:$0xff] %v9491
        %9508 = vst [vmem:[#allocation3 + $0x58] sm:$0xff] %v9492
        %9509 = vst [vmem:[#allocation3 + $0x60] sm:$0xff] %v9493
        %9510 = vst [vmem:[#allocation3 + $0x68] sm:$0xff] %v9494
        %9511 = vst [vmem:[#allocation3 + $0x70] sm:$0xff] %v9495
        %9512 = vst [vmem:[#allocation3 + $0x78] sm:$0xff] %v9496
        // Predicated region
        $region69: #{regularizer_forward.1} parent=43 // pred_check
          %p9513 = pneg %p394
        $region70: #{regularizer_forward.1} parent=43 // pred_check_branch
          %9515 = sbr.rel (%p9513) target = $region72
        $region71: #{regularizer_forward.1} parent=43 // pred_region
          %v9516 = vld [vmem:[#allocation3] sm:$0xff]
          %v9517 = vld [vmem:[#allocation3 + $0x8] sm:$0xff]
          %v9518 = vld [vmem:[#allocation3 + $0x10] sm:$0xff]
          %v9519 = vld [vmem:[#allocation3 + $0x18] sm:$0xff]
          %v9520 = vld [vmem:[#allocation3 + $0x20] sm:$0xff]
          %v9521 = vld [vmem:[#allocation3 + $0x28] sm:$0xff]
          %v9522 = vld [vmem:[#allocation3 + $0x30] sm:$0xff]
          %v9523 = vld [vmem:[#allocation3 + $0x38] sm:$0xff]
          %v9524 = vld [vmem:[#allocation3 + $0x40] sm:$0xff]
          %v9525 = vld [vmem:[#allocation3 + $0x48] sm:$0xff]
          %v9526 = vld [vmem:[#allocation3 + $0x50] sm:$0xff]
          %v9527 = vld [vmem:[#allocation3 + $0x58] sm:$0xff]
          %v9528 = vld [vmem:[#allocation3 + $0x60] sm:$0xff]
          %v9529 = vld [vmem:[#allocation3 + $0x68] sm:$0xff]
          %v9530 = vld [vmem:[#allocation3 + $0x70] sm:$0xff]
          %v9531 = vld [vmem:[#allocation3 + $0x78] sm:$0xff]
          %v9532 = vadd.f32 %v9516, %v9517
          %v9533 = vadd.f32 %v9532, %v9518
          %v9534 = vadd.f32 %v9533, %v9519
          %v9535 = vadd.f32 %v9534, %v9520
          %v9536 = vadd.f32 %v9535, %v9521
          %v9537 = vadd.f32 %v9536, %v9522
          %v9538 = vadd.f32 %v9537, %v9523
          %9539 = vadd.xlane.f32.xlu0 %v9538
          %v9540 = vpop.xlane.xlu0 %9539
          %v9541 = vadd.f32 %v9524, %v9525
          %v9542 = vadd.f32 %v9541, %v9526
          %v9543 = vadd.f32 %v9542, %v9527
          %v9544 = vadd.f32 %v9543, %v9528
          %v9545 = vadd.f32 %v9544, %v9529
          %v9546 = vadd.f32 %v9545, %v9530
          %v9547 = vadd.f32 %v9546, %v9531
          %9548 = vadd.xlane.f32.xlu0 %v9547
          %v9549 = vpop.xlane.xlu0 %9548
          %vm9550 = vcmask 7168
          %9551 = vst.msk [vmem:[%s392] sm:$0xff] %vm9550, %v9540
          %9552 = vst.msk [vmem:[%s392 + $0x8] sm:$0xff] %vm9550, %v9549
        $region72: #{regularizer_forward.1} parent=43 // pred_fallthru
          _
        %p9553 = scmp.lt.s32.totalorder %s23, 1
        %s9554 = scalar_select %p9553, %s23, 1
        %s9555 = smul.addr %s9554, 2
        %s9556 = smul.addr %s9555, 8
        %s9557 = scalar_lea.vmem %s6, %s9556
        // Predicated region
        $region73: #{regularizer_forward.1} parent=43 // pred_check
          %p9558 = pneg %p196
        $region74: #{regularizer_forward.1} parent=43 // pred_check_branch
          %9560 = sbr.rel (%p9558) target = $region76
        $region75: #{regularizer_forward.1} parent=43 // pred_region
          _
        $region76: #{regularizer_forward.1} parent=43 // pred_fallthru
          _
      $region44: #{regularizer_forward.1} parent=5 // pred_fallthru
        _
      %p9561 = scmp.le.s32.totalorder 2, %s14
      // Predicated region
      $region77: #{regularizer_forward.1} parent=5 // pred_check
        %p9562 = pneg %p9561
      $region78: #{regularizer_forward.1} parent=5 // pred_check_branch
        %9564 = sbr.rel (%p9562) target = $region80
      $region79: #{regularizer_forward.1} parent=5 // pred_region
        %s9565 = ssub.s32 %s14, 2
        // Predicated region
        $region81: #{regularizer_forward.1} parent=79 // pred_check
          %p9566 = pneg %p202
        $region82: #{regularizer_forward.1} parent=79 // pred_check_branch
          %9568 = sbr.rel (%p9566) target = $region84
        $region83: #{regularizer_forward.1} parent=79 // pred_region
          %p9569 = scmp.lt.s32.totalorder %s25, 1
          %s9570 = scalar_select %p9569, %s25, 1
          %s9571 = smul.addr %s9570, 2
          %s9572 = smul.addr %s9571, 8
          %s9573 = scalar_lea.vmem %s6, %s9572
        $region84: #{regularizer_forward.1} parent=79 // pred_fallthru
          _
      $region80: #{regularizer_forward.1} parent=5 // pred_fallthru
        _
    $region6: #{regularizer_forward.1} parent=1 // loop_footer
      %s18 = sadd.s32 1, %s14
    $region7: #{regularizer_forward.1} parent=1 // loop_footer_branch
      %13 = sbr.rel target = $region3
    $region8: #{regularizer_forward.1} parent=1 // loop_exit
      _
    %9574 = vsyncpa [#allocation5], 1
    %s9575 = scalar_lea.sflag [#allocation5], 1
    %9576 = vsyncpa %s9575, 1
    %9577 = vsyncpa [#allocation7], 1

</llo_original>
